<compile_context>
chip_gen: v7x
topology: tpu7x:2x2x1
jax: 0.10.0
libtpu: 0.0.40
codegen_flags: <defaults>
</compile_context>

<pallas_src>
import numpy as np
import jax
import jax.numpy as jnp
from jax import lax
from jax.experimental import pallas as pl
from jax.experimental.pallas import tpu as pltpu

# ----------------------------- small T5 config ------------------------------
VOCAB = 64
D_MODEL = 32
N_HEADS = 2
D_KV = 16                       # head dim; inner = N_HEADS * D_KV = 32
INNER = N_HEADS * D_KV
D_FF = 64
N_LAYERS = 2
REL_BUCKETS = 32
REL_MAX_DIST = 128
EPS = 1e-6
PAD_ID = 0                      # decoder_start_token_id == pad_token_id == 0
NEG_INF = float(jnp.finfo(jnp.float32).min)

# ------------------------- in-kernel helper functions ------------------------
# (pure functions of values; traced inside the pallas kernels)

def _rms(x, w):
    """T5 LayerNorm: no mean subtraction, no bias. x: (S, D), w: (1, D)."""
    var = jnp.mean(x * x, axis=-1, keepdims=True)
    return x * lax.rsqrt(var + EPS) * w


def _mha(q_all, k_all, v_all, w_o, pos_bias=None, mask_bias=None):
    """Multi-head attention with fused output projection.
    q_all: (Sq, H*Dh), k_all/v_all: (Sk, H*Dh), w_o: (H*Dh, D)
    pos_bias: (H, Sq, Sk) or None, mask_bias: (1, Sk) or None -> (Sq, D).
    T5 does NOT scale scores by 1/sqrt(d_k)."""
    out = None
    for h in range(N_HEADS):
        sl = slice(h * D_KV, (h + 1) * D_KV)
        q, k, v = q_all[:, sl], k_all[:, sl], v_all[:, sl]
        # contract the head dim directly (no explicit transpose of k)
        scores = lax.dot_general(q, k, (((1,), (1,)), ((), ())),
                                 preferred_element_type=jnp.float32)   # (Sq, Sk)
        if pos_bias is not None:
            scores = scores + pos_bias[h]
        if mask_bias is not None:
            scores = scores + mask_bias
        m = jnp.max(scores, axis=-1, keepdims=True)
        p = jnp.exp(scores - m)
        attn = p / jnp.sum(p, axis=-1, keepdims=True)
        ctx = jnp.dot(attn, v, preferred_element_type=jnp.float32)     # (Sq, Dh)
        # fused per-head slice of the output projection (== concat(heads) @ w_o)
        proj = jnp.dot(ctx, w_o[sl, :], preferred_element_type=jnp.float32)  # (Sq, D)
        out = proj if out is None else out + proj
    return out

# ------------------------------ Pallas kernels ------------------------------

def _encoder_kernel(hid_ref, maskb_ref, posb_ref,
                    wqkv_ref, wo_ref, wi_ref, woff_ref, ln_ref, fln_ref,
                    out_ref):
    """Full encoder stack for one batch element (grid over batch)."""
    hidden = hid_ref[0]                     # (S, D)  embedded inputs
    mask_bias = maskb_ref[0]                # (1, S)  (1-attn_mask)*NEG_INF over keys
    pos_bias = posb_ref[...]                # (H, S, S) relative position bias
    for l in range(N_LAYERS):
        lns = ln_ref[l]                     # (2, D): [ln_self_attn, ln_ff]
        # --- self-attention block ---
        normed = _rms(hidden, lns[0:1, :])
        qkv = jnp.dot(normed, wqkv_ref[l], preferred_element_type=jnp.float32)  # (S, 3*inner)
        hidden = hidden + _mha(qkv[:, :INNER], qkv[:, INNER:2 * INNER],
                               qkv[:, 2 * INNER:], wo_ref[l],
                               pos_bias=pos_bias, mask_bias=mask_bias)
        # --- FFN block (DenseReluDense) ---
        normed = _rms(hidden, lns[1:2, :])
        h = jnp.maximum(jnp.dot(normed, wi_ref[l],
                                preferred_element_type=jnp.float32), 0.0)
        hidden = hidden + jnp.dot(h, woff_ref[l], preferred_element_type=jnp.float32)
    out_ref[0] = _rms(hidden, fln_ref[...])


def _decoder_kernel(hid_ref, ench_ref, crossb_ref, selfb_ref,
                    sa_wqkv_ref, sa_wo_ref, ca_wq_ref, ca_wkv_ref, ca_wo_ref,
                    wi_ref, woff_ref, ln_ref, fln_ref,
                    out_ref):
    """Full decoder stack for one batch element (grid over batch)."""
    hidden = hid_ref[0]                     # (Sd, D)  embedded decoder inputs
    enc_h = ench_ref[0]                     # (Se, D)  encoder final hidden states
    cross_bias = crossb_ref[0]              # (1, Se)  encoder-padding mask bias
    self_bias = selfb_ref[...]              # (H, Sd, Sd) rel-pos + causal bias
    for l in range(N_LAYERS):
        lns = ln_ref[l]                     # (3, D): [ln_self, ln_cross, ln_ff]
        # --- causal self-attention ---
        normed = _rms(hidden, lns[0:1, :])
        qkv = jnp.dot(normed, sa_wqkv_ref[l], preferred_element_type=jnp.float32)
        hidden = hidden + _mha(qkv[:, :INNER], qkv[:, INNER:2 * INNER],
                               qkv[:, 2 * INNER:], sa_wo_ref[l],
                               pos_bias=self_bias, mask_bias=None)
        # --- cross-attention over encoder states (no positional bias) ---
        normed = _rms(hidden, lns[1:2, :])
        q = jnp.dot(normed, ca_wq_ref[l], preferred_element_type=jnp.float32)   # (Sd, inner)
        kv = jnp.dot(enc_h, ca_wkv_ref[l], preferred_element_type=jnp.float32)  # (Se, 2*inner)
        hidden = hidden + _mha(q, kv[:, :INNER], kv[:, INNER:], ca_wo_ref[l],
                               pos_bias=None, mask_bias=cross_bias)
        # --- FFN block ---
        normed = _rms(hidden, lns[2:3, :])
        h = jnp.maximum(jnp.dot(normed, wi_ref[l],
                                preferred_element_type=jnp.float32), 0.0)
        hidden = hidden + jnp.dot(h, woff_ref[l], preferred_element_type=jnp.float32)
    out_ref[0] = _rms(hidden, fln_ref[...])


def _lmhead_ce_kernel(hid_ref, shared_ref, labels_ref, loss_ref):
    """Tied lm_head (with d_model**-0.5 rescale) + masked mean cross-entropy."""
    x = hid_ref[...] * (D_MODEL ** -0.5)                    # (N, D)
    # logits = x @ shared.T   (contract D without materializing a transpose)
    logits = lax.dot_general(x, shared_ref[...], (((1,), (1,)), ((), ())),
                             preferred_element_type=jnp.float32)   # (N, V)
    labels = labels_ref[...]                                # (N, 1) int32, -100 = ignore
    m = jnp.max(logits, axis=-1, keepdims=True)
    lse = jnp.log(jnp.sum(jnp.exp(logits - m), axis=-1, keepdims=True)) + m
    vocab_ids = lax.broadcasted_iota(jnp.int32, logits.shape, 1)
    onehot = (vocab_ids == labels).astype(jnp.float32)
    picked = jnp.sum(onehot * logits, axis=-1, keepdims=True)
    per_tok = lse - picked                                  # (N, 1)
    valid = (labels != -100).astype(jnp.float32)
    loss_sum = jnp.sum(per_tok * valid)
    count = jnp.maximum(jnp.sum(valid), 1.0)                # guard: no NaN if all ignored
    loss_ref[...] = (loss_sum / count).reshape(1, 1)

# --------------------------- BlockSpec helpers -------------------------------

def _rep(shape):
    """Full-array block, replicated across the (rank-1) grid."""
    n = len(shape)
    return pl.BlockSpec(shape, lambda b, n=n: (0,) * n)


def _batched(shape):
    """Leading dim indexed by the batch grid axis; rest full."""
    n = len(shape)
    return pl.BlockSpec(shape, lambda b, n=n: (b,) + (0,) * (n - 1))

# -------------------------- plain-JAX glue (tiny) -----------------------------

def _relative_position_bucket(relative_position, bidirectional, num_buckets, max_distance):
    # Faithful to HF T5Attention._relative_position_bucket (integer semantics).
    relative_buckets = jnp.zeros_like(relative_position)
    if bidirectional:
        num_buckets //= 2
        relative_buckets = relative_buckets + (relative_position > 0).astype(jnp.int32) * num_buckets
        relative_position = jnp.abs(relative_position)
    else:
        relative_position = -jnp.minimum(relative_position, 0)
    max_exact = num_buckets // 2
    is_small = relative_position < max_exact
    rp_f = jnp.maximum(relative_position, 1).astype(jnp.float32)
    rel_if_large = max_exact + (
        jnp.log(rp_f / max_exact) / np.log(max_distance / max_exact) * (num_buckets - max_exact)
    ).astype(jnp.int32)
    rel_if_large = jnp.minimum(rel_if_large, num_buckets - 1)
    relative_buckets = relative_buckets + jnp.where(is_small, relative_position, rel_if_large)
    return relative_buckets


def compute_position_bias(rel_emb, q_len, k_len, bidirectional):
    ctx = jnp.arange(q_len)[:, None]
    mem = jnp.arange(k_len)[None, :]
    buckets = _relative_position_bucket(mem - ctx, bidirectional, REL_BUCKETS, REL_MAX_DIST)
    values = rel_emb[buckets]                       # (Sq, Sk, H)
    return jnp.transpose(values, (2, 0, 1))         # (H, Sq, Sk)


def shift_right(labels):
    B, S = labels.shape
    shifted = jnp.concatenate([jnp.full((B, 1), PAD_ID, labels.dtype), labels[:, :-1]], axis=1)
    return jnp.where(shifted == -100, PAD_ID, shifted)

# ------------------------------ fused stages ---------------------------------

def run_encoder(params, input_ids, attention_mask):
    B, S = input_ids.shape
    enc = params["enc"]
    hidden_in = params["shared"][input_ids]                                   # (B, S, D) embed gather
    pos_bias = compute_position_bias(params["enc_rel_bias"], S, S, bidirectional=True)  # (H, S, S)
    mask_bias = ((1.0 - attention_mask.astype(jnp.float32)) * NEG_INF).reshape(B, 1, S)
    return pl.pallas_call(
        _encoder_kernel,
        out_shape=jax.ShapeDtypeStruct((B, S, D_MODEL), jnp.float32),
        grid=(B,),
        in_specs=[
            _batched((1, S, D_MODEL)),                  # embedded inputs
            _batched((1, 1, S)),                        # padding-mask bias
            _rep((N_HEADS, S, S)),                      # relative-position bias
            _rep((N_LAYERS, D_MODEL, 3 * INNER)),       # fused QKV weights (all layers)
            _rep((N_LAYERS, INNER, D_MODEL)),           # attn out proj
            _rep((N_LAYERS, D_MODEL, D_FF)),            # FFN wi
            _rep((N_LAYERS, D_FF, D_MODEL)),            # FFN wo
            _rep((N_LAYERS, 2, D_MODEL)),               # layernorm weights
            _rep((1, D_MODEL)),                         # final layernorm
        ],
        out_specs=_batched((1, S, D_MODEL)),
        compiler_params=pltpu.CompilerParams(dimension_semantics=("parallel",)),
    )(hidden_in, mask_bias, pos_bias,
      enc["wqkv"], enc["wo"], enc["wi"], enc["wo_ff"], enc["ln"], enc["final_ln"])


def run_decoder(params, dec_input_ids, enc_hidden, enc_attention_mask):
    B, Sd = dec_input_ids.shape
    Se = enc_hidden.shape[1]
    dec = params["dec"]
    hidden_in = params["shared"][dec_input_ids]                               # (B, Sd, D)
    pos_bias = compute_position_bias(params["dec_rel_bias"], Sd, Sd, bidirectional=False)
    causal = jnp.tril(jnp.ones((Sd, Sd), jnp.float32))
    self_bias = pos_bias + ((1.0 - causal) * NEG_INF)[None]                   # (H, Sd, Sd)
    cross_bias = ((1.0 - enc_attention_mask.astype(jnp.float32)) * NEG_INF).reshape(B, 1, Se)
    return pl.pallas_call(
        _decoder_kernel,
        out_shape=jax.ShapeDtypeStruct((B, Sd, D_MODEL), jnp.float32),
        grid=(B,),
        in_specs=[
            _batched((1, Sd, D_MODEL)),                 # embedded decoder inputs
            _batched((1, Se, D_MODEL)),                 # encoder hidden states
            _batched((1, 1, Se)),                       # cross-attention mask bias
            _rep((N_HEADS, Sd, Sd)),                    # self-attn rel-pos + causal bias
            _rep((N_LAYERS, D_MODEL, 3 * INNER)),       # self-attn fused QKV
            _rep((N_LAYERS, INNER, D_MODEL)),           # self-attn out proj
            _rep((N_LAYERS, D_MODEL, INNER)),           # cross-attn Q
            _rep((N_LAYERS, D_MODEL, 2 * INNER)),       # cross-attn fused KV
            _rep((N_LAYERS, INNER, D_MODEL)),           # cross-attn out proj
            _rep((N_LAYERS, D_MODEL, D_FF)),            # FFN wi
            _rep((N_LAYERS, D_FF, D_MODEL)),            # FFN wo
            _rep((N_LAYERS, 3, D_MODEL)),               # layernorm weights
            _rep((1, D_MODEL)),                         # final layernorm
        ],
        out_specs=_batched((1, Sd, D_MODEL)),
        compiler_params=pltpu.CompilerParams(dimension_semantics=("parallel",)),
    )(hidden_in, enc_hidden, cross_bias, self_bias,
      dec["sa_wqkv"], dec["sa_wo"], dec["ca_wq"], dec["ca_wkv"], dec["ca_wo"],
      dec["wi"], dec["wo_ff"], dec["ln"], dec["final_ln"])


def lm_head_cross_entropy(dec_hidden, shared, labels):
    B, Sd, D = dec_hidden.shape
    N = B * Sd
    out = pl.pallas_call(
        _lmhead_ce_kernel,
        out_shape=jax.ShapeDtypeStruct((1, 1), jnp.float32),
        grid=(1,),
        in_specs=[_rep((N, D)), _rep((VOCAB, D)), _rep((N, 1))],
        out_specs=_rep((1, 1)),
    )(dec_hidden.reshape(N, D), shared, labels.reshape(N, 1).astype(jnp.int32))
    return out[0, 0]


def t5_generation_loss(params, input_ids_gen, gen_labels, gen_attention_mask):
    """Equivalent of T5_generation.forward -> gen_loss (scalar)."""
    dec_input_ids = shift_right(gen_labels)
    enc_hidden = run_encoder(params, input_ids_gen, gen_attention_mask)
    dec_hidden = run_decoder(params, dec_input_ids, enc_hidden, gen_attention_mask)
    return lm_head_cross_entropy(dec_hidden, params["shared"], gen_labels)

# ------------------------------ parameter init -------------------------------

def init_params(key):
    # QKV / KV weights are concatenated and per-layer weights stacked at init time
    # so the fused kernels see a single VMEM-resident ref per weight kind.
    def nrm(k, shape, scale=0.02):
        return scale * jax.random.normal(k, shape, jnp.float32)
    keys = iter(jax.random.split(key, 64))
    return {
        "shared": nrm(next(keys), (VOCAB, D_MODEL)),
        "enc_rel_bias": nrm(next(keys), (REL_BUCKETS, N_HEADS)),
        "dec_rel_bias": nrm(next(keys), (REL_BUCKETS, N_HEADS)),
        "enc": {
            "wqkv": nrm(next(keys), (N_LAYERS, D_MODEL, 3 * INNER)),
            "wo": nrm(next(keys), (N_LAYERS, INNER, D_MODEL)),
            "wi": nrm(next(keys), (N_LAYERS, D_MODEL, D_FF)),
            "wo_ff": nrm(next(keys), (N_LAYERS, D_FF, D_MODEL)),
            "ln": jnp.ones((N_LAYERS, 2, D_MODEL), jnp.float32),
            "final_ln": jnp.ones((1, D_MODEL), jnp.float32),
        },
        "dec": {
            "sa_wqkv": nrm(next(keys), (N_LAYERS, D_MODEL, 3 * INNER)),
            "sa_wo": nrm(next(keys), (N_LAYERS, INNER, D_MODEL)),
            "ca_wq": nrm(next(keys), (N_LAYERS, D_MODEL, INNER)),
            "ca_wkv": nrm(next(keys), (N_LAYERS, D_MODEL, 2 * INNER)),
            "ca_wo": nrm(next(keys), (N_LAYERS, INNER, D_MODEL)),
            "wi": nrm(next(keys), (N_LAYERS, D_MODEL, D_FF)),
            "wo_ff": nrm(next(keys), (N_LAYERS, D_FF, D_MODEL)),
            "ln": jnp.ones((N_LAYERS, 3, D_MODEL), jnp.float32),
            "final_ln": jnp.ones((1, D_MODEL), jnp.float32),
        },
    }

# ----------------------------------- main ------------------------------------

if __name__ == "__main__":
    key = jax.random.PRNGKey(0)
    k_p, k_in, k_lab = jax.random.split(key, 3)

    B, S_ENC, S_DEC = 2, 8, 8
    params = init_params(k_p)

    input_ids_gen = jax.random.randint(k_in, (B, S_ENC), 1, VOCAB, dtype=jnp.int32)
    gen_attention_mask = jnp.ones((B, S_ENC), jnp.int32).at[1, 6:].set(0)   # some padding
    gen_labels = jax.random.randint(k_lab, (B, S_DEC), 1, VOCAB, dtype=jnp.int32)
    gen_labels = gen_labels.at[1, -2:].set(-100)                            # ignore_index tokens

    loss_fn = jax.jit(t5_generation_loss)
    loss = loss_fn(params, input_ids_gen, gen_labels, gen_attention_mask)
    loss = jax.block_until_ready(loss)
    assert jnp.isfinite(loss), "loss is not finite"
    # TODO(synk): beam-search `inference()` path (t5.generate) not implemented — control-flow heavy.
    print("KERNEL_OK")
</pallas_src>

<mosaic_0001>
module attributes {stable_mosaic.version = 11 : i64} {
  func.func @_lmhead_ce_kernel(%arg0: i32, %arg1: memref<16x32xf32, #tpu.memory_space<vmem>>, %arg2: memref<64x32xf32, #tpu.memory_space<vmem>>, %arg3: memref<16x1xi32, #tpu.memory_space<vmem>>, %arg4: memref<1x1xf32, #tpu.memory_space<vmem>>) attributes {dimension_semantics = [#tpu.dimension_semantics<arbitrary>], iteration_bounds = array<i64: 1>, scalar_prefetch = 0 : i64, scratch_operands = 0 : i64, tpu.core_type = #tpu.core_type<tc>, window_params = [{pipeline_mode = #tpu.pipeline_mode<synchronous>, transform_indices = @transform_0, window_bounds = array<i64: 16, 32>}, {pipeline_mode = #tpu.pipeline_mode<synchronous>, transform_indices = @transform_1, window_bounds = array<i64: 64, 32>}, {pipeline_mode = #tpu.pipeline_mode<synchronous>, transform_indices = @transform_2, window_bounds = array<i64: 16, 1>}, {pipeline_mode = #tpu.pipeline_mode<synchronous>, transform_indices = @transform_3, window_bounds = array<i64: 1, 1>}]} {
    %c0 = arith.constant 0 : index
    %c0_0 = arith.constant 0 : index
    %0 = vector.load %arg1[%c0, %c0_0] : memref<16x32xf32, #tpu.memory_space<vmem>>, vector<16x32xf32>
    %cst = arith.constant 0.176776692 : f32
    %1 = vector.broadcast %cst : f32 to vector<16x32xf32>
    %2 = arith.mulf %0, %1 : vector<16x32xf32>
    %c0_1 = arith.constant 0 : index
    %c0_2 = arith.constant 0 : index
    %3 = vector.load %arg2[%c0_1, %c0_2] : memref<64x32xf32, #tpu.memory_space<vmem>>, vector<64x32xf32>
    %cst_3 = arith.constant dense<0.000000e+00> : vector<16x64xf32>
    %4 = tpu.matmul %2, %3, %cst_3 {dimension_numbers = #tpu.dot_dimension_numbers<[1], [1], [0], [0], [0, 0, 1, 0], [], []>} : vector<16x32xf32>, vector<64x32xf32>, vector<16x64xf32> -> vector<16x64xf32>
    %c0_4 = arith.constant 0 : index
    %c0_5 = arith.constant 0 : index
    %5 = vector.load %arg3[%c0_4, %c0_5] : memref<16x1xi32, #tpu.memory_space<vmem>>, vector<16x1xi32>
    %cst_6 = arith.constant dense<0xFF800000> : vector<16xf32>
    %6 = vector.multi_reduction <maximumf>, %4, %cst_6 [1] : vector<16x64xf32> to vector<16xf32>
    %7 = vector.shape_cast %6 : vector<16xf32> to vector<16x1xf32>
    %8 = vector.broadcast %7 : vector<16x1xf32> to vector<16x64xf32>
    %9 = arith.subf %4, %8 : vector<16x64xf32>
    %10 = math.exp %9 : vector<16x64xf32>
    %cst_7 = arith.constant dense<0.000000e+00> : vector<16xf32>
    %11 = vector.multi_reduction <add>, %10, %cst_7 [1] : vector<16x64xf32> to vector<16xf32>
    %12 = vector.shape_cast %11 : vector<16xf32> to vector<16x1xf32>
    %13 = math.log %12 : vector<16x1xf32>
    %14 = arith.addf %13, %7 : vector<16x1xf32>
    %15 = tpu.iota {dimensions = array<i32: 1>} : vector<16x64xi32>
    %16 = vector.broadcast %5 : vector<16x1xi32> to vector<16x64xi32>
    %17 = arith.cmpi eq, %15, %16 : vector<16x64xi32>
    %18 = arith.extui %17 : vector<16x64xi1> to vector<16x64xi32>
    %19 = arith.sitofp %18 : vector<16x64xi32> to vector<16x64xf32>
    %20 = arith.mulf %19, %4 : vector<16x64xf32>
    %cst_8 = arith.constant dense<0.000000e+00> : vector<16xf32>
    %21 = vector.multi_reduction <add>, %20, %cst_8 [1] : vector<16x64xf32> to vector<16xf32>
    %22 = vector.shape_cast %21 : vector<16xf32> to vector<16x1xf32>
    %23 = arith.subf %14, %22 : vector<16x1xf32>
    %c-100_i32 = arith.constant -100 : i32
    %24 = vector.broadcast %c-100_i32 : i32 to vector<16x1xi32>
    %25 = arith.cmpi ne, %5, %24 : vector<16x1xi32>
    %26 = arith.extui %25 : vector<16x1xi1> to vector<16x1xi32>
    %27 = arith.sitofp %26 : vector<16x1xi32> to vector<16x1xf32>
    %28 = arith.mulf %23, %27 : vector<16x1xf32>
    %29 = vector.shape_cast %28 : vector<16x1xf32> to vector<1x16x1xf32>
    %cst_9 = arith.constant dense<0.000000e+00> : vector<1xf32>
    %30 = vector.multi_reduction <add>, %29, %cst_9 [1, 2] : vector<1x16x1xf32> to vector<1xf32>
    %31 = vector.shape_cast %30 : vector<1xf32> to vector<1x1x1xf32>
    %32 = vector.extract %31[0, 0, 0] : f32 from vector<1x1x1xf32>
    %33 = vector.shape_cast %27 : vector<16x1xf32> to vector<1x16x1xf32>
    %cst_10 = arith.constant dense<0.000000e+00> : vector<1xf32>
    %34 = vector.multi_reduction <add>, %33, %cst_10 [1, 2] : vector<1x16x1xf32> to vector<1xf32>
    %35 = vector.shape_cast %34 : vector<1xf32> to vector<1x1x1xf32>
    %36 = vector.extract %35[0, 0, 0] : f32 from vector<1x1x1xf32>
    %cst_11 = arith.constant 1.000000e+00 : f32
    %37 = arith.maximumf %36, %cst_11 : f32
    %38 = arith.divf %32, %37 : f32
    %39 = vector.broadcast %38 : f32 to vector<1x1xf32>
    %c0_12 = arith.constant 0 : index
    %c0_13 = arith.constant 0 : index
    %40 = vector.load %arg4[%c0_12, %c0_13] : memref<1x1xf32, #tpu.memory_space<vmem>>, vector<1x1xf32>
    tpu.vector_store %arg4[%c0_12, %c0_13], %39 {strides = array<i32>} : memref<1x1xf32, #tpu.memory_space<vmem>>, vector<1x1xf32>,
    return
  }
  func.func @transform_0(%arg0: i32) -> (i32, i32) {
    %c0_i32 = arith.constant 0 : i32
    %c0_i32_0 = arith.constant 0 : i32
    %c0_i32_1 = arith.constant 0 : i32
    return %c0_i32, %c0_i32_0 : i32, i32
  }
  func.func @transform_1(%arg0: i32) -> (i32, i32) {
    %c0_i32 = arith.constant 0 : i32
    %c0_i32_0 = arith.constant 0 : i32
    %c0_i32_1 = arith.constant 0 : i32
    return %c0_i32, %c0_i32_0 : i32, i32
  }
  func.func @transform_2(%arg0: i32) -> (i32, i32) {
    %c0_i32 = arith.constant 0 : i32
    %c0_i32_0 = arith.constant 0 : i32
    %c0_i32_1 = arith.constant 0 : i32
    return %c0_i32, %c0_i32_0 : i32, i32
  }
  func.func @transform_3(%arg0: i32) -> (i32, i32) {
    %c0_i32 = arith.constant 0 : i32
    %c0_i32_0 = arith.constant 0 : i32
    %c0_i32_1 = arith.constant 0 : i32
    return %c0_i32, %c0_i32_0 : i32, i32
  }
}

module attributes {stable_mosaic.version = 11 : i64} {
  func.func @_decoder_kernel(%arg0: i32, %arg1: memref<1x8x32xf32, #tpu.memory_space<vmem>>, %arg2: memref<1x8x32xf32, #tpu.memory_space<vmem>>, %arg3: memref<1x1x8xf32, #tpu.memory_space<vmem>>, %arg4: memref<2x8x8xf32, #tpu.memory_space<vmem>>, %arg5: memref<2x32x96xf32, #tpu.memory_space<vmem>>, %arg6: memref<2x32x32xf32, #tpu.memory_space<vmem>>, %arg7: memref<2x32x32xf32, #tpu.memory_space<vmem>>, %arg8: memref<2x32x64xf32, #tpu.memory_space<vmem>>, %arg9: memref<2x32x32xf32, #tpu.memory_space<vmem>>, %arg10: memref<2x32x64xf32, #tpu.memory_space<vmem>>, %arg11: memref<2x64x32xf32, #tpu.memory_space<vmem>>, %arg12: memref<2x3x32xf32, #tpu.memory_space<vmem>>, %arg13: memref<1x32xf32, #tpu.memory_space<vmem>>, %arg14: memref<1x8x32xf32, #tpu.memory_space<vmem>>) attributes {dimension_semantics = [#tpu.dimension_semantics<parallel>], iteration_bounds = array<i64: 2>, scalar_prefetch = 0 : i64, scratch_operands = 0 : i64, tpu.core_type = #tpu.core_type<tc>, window_params = [{transform_indices = @transform_0, window_bounds = array<i64: 1, 8, 32>}, {transform_indices = @transform_1, window_bounds = array<i64: 1, 8, 32>}, {transform_indices = @transform_2, window_bounds = array<i64: 1, 1, 8>}, {pipeline_mode = #tpu.pipeline_mode<synchronous>, transform_indices = @transform_3, window_bounds = array<i64: 2, 8, 8>}, {pipeline_mode = #tpu.pipeline_mode<synchronous>, transform_indices = @transform_4, window_bounds = array<i64: 2, 32, 96>}, {pipeline_mode = #tpu.pipeline_mode<synchronous>, transform_indices = @transform_5, window_bounds = array<i64: 2, 32, 32>}, {pipeline_mode = #tpu.pipeline_mode<synchronous>, transform_indices = @transform_6, window_bounds = array<i64: 2, 32, 32>}, {pipeline_mode = #tpu.pipeline_mode<synchronous>, transform_indices = @transform_7, window_bounds = array<i64: 2, 32, 64>}, {pipeline_mode = #tpu.pipeline_mode<synchronous>, transform_indices = @transform_8, window_bounds = array<i64: 2, 32, 32>}, {pipeline_mode = #tpu.pipeline_mode<synchronous>, transform_indices = @transform_9, window_bounds = array<i64: 2, 32, 64>}, {pipeline_mode = #tpu.pipeline_mode<synchronous>, transform_indices = @transform_10, window_bounds = array<i64: 2, 64, 32>}, {pipeline_mode = #tpu.pipeline_mode<synchronous>, transform_indices = @transform_11, window_bounds = array<i64: 2, 3, 32>}, {pipeline_mode = #tpu.pipeline_mode<synchronous>, transform_indices = @transform_12, window_bounds = array<i64: 1, 32>}, {transform_indices = @transform_13, window_bounds = array<i64: 1, 8, 32>}]} {
    %c0 = arith.constant 0 : index
    %c0_0 = arith.constant 0 : index
    %c0_1 = arith.constant 0 : index
    %0 = vector.load %arg1[%c0, %c0_0, %c0_1] : memref<1x8x32xf32, #tpu.memory_space<vmem>>, vector<1x8x32xf32>
    %1 = vector.shape_cast %0 : vector<1x8x32xf32> to vector<8x32xf32>
    %c0_2 = arith.constant 0 : index
    %c0_3 = arith.constant 0 : index
    %c0_4 = arith.constant 0 : index
    %2 = vector.load %arg2[%c0_2, %c0_3, %c0_4] : memref<1x8x32xf32, #tpu.memory_space<vmem>>, vector<1x8x32xf32>
    %3 = vector.shape_cast %2 : vector<1x8x32xf32> to vector<8x32xf32>
    %c0_5 = arith.constant 0 : index
    %c0_6 = arith.constant 0 : index
    %c0_7 = arith.constant 0 : index
    %4 = vector.load %arg3[%c0_5, %c0_6, %c0_7] : memref<1x1x8xf32, #tpu.memory_space<vmem>>, vector<1x1x8xf32>
    %5 = vector.shape_cast %4 : vector<1x1x8xf32> to vector<1x8xf32>
    %c0_8 = arith.constant 0 : index
    %c0_9 = arith.constant 0 : index
    %c0_10 = arith.constant 0 : index
    %6 = vector.load %arg4[%c0_8, %c0_9, %c0_10] : memref<2x8x8xf32, #tpu.memory_space<vmem>>, vector<2x8x8xf32>
    %c0_11 = arith.constant 0 : index
    %c0_12 = arith.constant 0 : index
    %c0_13 = arith.constant 0 : index
    %7 = vector.load %arg12[%c0_11, %c0_12, %c0_13] : memref<2x3x32xf32, #tpu.memory_space<vmem>>, vector<1x3x32xf32>
    %8 = vector.shape_cast %7 : vector<1x3x32xf32> to vector<3x32xf32>
    %9 = vector.extract_strided_slice %8 {offsets = [0, 0], sizes = [1, 32], strides = [1, 1]} : vector<3x32xf32> to vector<1x32xf32>
    %10 = arith.mulf %1, %1 : vector<8x32xf32>
    %cst = arith.constant dense<0.000000e+00> : vector<8xf32>
    %11 = vector.multi_reduction <add>, %10, %cst [1] : vector<8x32xf32> to vector<8xf32>
    %12 = vector.shape_cast %11 : vector<8xf32> to vector<8x1xf32>
    %cst_14 = arith.constant 3.200000e+01 : f32
    %13 = vector.broadcast %cst_14 : f32 to vector<8x1xf32>
    %14 = arith.divf %12, %13 : vector<8x1xf32>
    %cst_15 = arith.constant 9.99999997E-7 : f32
    %15 = vector.broadcast %cst_15 : f32 to vector<8x1xf32>
    %16 = arith.addf %14, %15 : vector<8x1xf32>
    %17 = math.rsqrt %16 : vector<8x1xf32>
    %18 = vector.broadcast %17 : vector<8x1xf32> to vector<8x32xf32>
    %19 = arith.mulf %1, %18 : vector<8x32xf32>
    %20 = vector.broadcast %9 : vector<1x32xf32> to vector<8x32xf32>
    %21 = arith.mulf %19, %20 : vector<8x32xf32>
    %c0_16 = arith.constant 0 : index
    %c0_17 = arith.constant 0 : index
    %c0_18 = arith.constant 0 : index
    %22 = vector.load %arg5[%c0_16, %c0_17, %c0_18] : memref<2x32x96xf32, #tpu.memory_space<vmem>>, vector<1x32x96xf32>
    %23 = vector.shape_cast %22 : vector<1x32x96xf32> to vector<32x96xf32>
    %cst_19 = arith.constant dense<0.000000e+00> : vector<8x96xf32>
    %24 = tpu.matmul %21, %23, %cst_19 {dimension_numbers = #tpu.dot_dimension_numbers<[1], [0], [0], [1], [0, 0, 1, 1], [], []>} : vector<8x32xf32>, vector<32x96xf32>, vector<8x96xf32> -> vector<8x96xf32>
    %25 = vector.extract_strided_slice %24 {offsets = [0, 0], sizes = [8, 32], strides = [1, 1]} : vector<8x96xf32> to vector<8x32xf32>
    %26 = vector.extract_strided_slice %24 {offsets = [0, 32], sizes = [8, 32], strides = [1, 1]} : vector<8x96xf32> to vector<8x32xf32>
    %27 = vector.extract_strided_slice %24 {offsets = [0, 64], sizes = [8, 32], strides = [1, 1]} : vector<8x96xf32> to vector<8x32xf32>
    %c0_20 = arith.constant 0 : index
    %c0_21 = arith.constant 0 : index
    %c0_22 = arith.constant 0 : index
    %28 = vector.load %arg6[%c0_20, %c0_21, %c0_22] : memref<2x32x32xf32, #tpu.memory_space<vmem>>, vector<1x32x32xf32>
    %29 = vector.shape_cast %28 : vector<1x32x32xf32> to vector<32x32xf32>
    %30 = vector.extract_strided_slice %25 {offsets = [0, 0], sizes = [8, 16], strides = [1, 1]} : vector<8x32xf32> to vector<8x16xf32>
    %31 = vector.extract_strided_slice %26 {offsets = [0, 0], sizes = [8, 16], strides = [1, 1]} : vector<8x32xf32> to vector<8x16xf32>
    %32 = vector.extract_strided_slice %27 {offsets = [0, 0], sizes = [8, 16], strides = [1, 1]} : vector<8x32xf32> to vector<8x16xf32>
    %cst_23 = arith.constant dense<0.000000e+00> : vector<8x8xf32>
    %33 = tpu.matmul %30, %31, %cst_23 {dimension_numbers = #tpu.dot_dimension_numbers<[1], [1], [0], [0], [0, 0, 1, 0], [], []>} : vector<8x16xf32>, vector<8x16xf32>, vector<8x8xf32> -> vector<8x8xf32>
    %34 = vector.extract_strided_slice %6 {offsets = [0, 0, 0], sizes = [1, 8, 8], strides = [1, 1, 1]} : vector<2x8x8xf32> to vector<1x8x8xf32>
    %35 = vector.shape_cast %34 : vector<1x8x8xf32> to vector<8x8xf32>
    %36 = arith.addf %33, %35 : vector<8x8xf32>
    %cst_24 = arith.constant dense<0xFF800000> : vector<8xf32>
    %37 = vector.multi_reduction <maximumf>, %36, %cst_24 [1] : vector<8x8xf32> to vector<8xf32>
    %38 = vector.shape_cast %37 : vector<8xf32> to vector<8x1xf32>
    %39 = vector.broadcast %38 : vector<8x1xf32> to vector<8x8xf32>
    %40 = arith.subf %36, %39 : vector<8x8xf32>
    %41 = math.exp %40 : vector<8x8xf32>
    %cst_25 = arith.constant dense<0.000000e+00> : vector<8xf32>
    %42 = vector.multi_reduction <add>, %41, %cst_25 [1] : vector<8x8xf32> to vector<8xf32>
    %43 = vector.shape_cast %42 : vector<8xf32> to vector<8x1xf32>
    %44 = vector.broadcast %43 : vector<8x1xf32> to vector<8x8xf32>
    %45 = arith.divf %41, %44 : vector<8x8xf32>
    %cst_26 = arith.constant dense<0.000000e+00> : vector<8x16xf32>
    %46 = tpu.matmul %45, %32, %cst_26 {dimension_numbers = #tpu.dot_dimension_numbers<[1], [0], [0], [1], [0, 0, 1, 1], [], []>} : vector<8x8xf32>, vector<8x16xf32>, vector<8x16xf32> -> vector<8x16xf32>
    %47 = vector.extract_strided_slice %29 {offsets = [0, 0], sizes = [16, 32], strides = [1, 1]} : vector<32x32xf32> to vector<16x32xf32>
    %cst_27 = arith.constant dense<0.000000e+00> : vector<8x32xf32>
    %48 = tpu.matmul %46, %47, %cst_27 {dimension_numbers = #tpu.dot_dimension_numbers<[1], [0], [0], [1], [0, 0, 1, 1], [], []>} : vector<8x16xf32>, vector<16x32xf32>, vector<8x32xf32> -> vector<8x32xf32>
    %49 = vector.extract_strided_slice %25 {offsets = [0, 16], sizes = [8, 16], strides = [1, 1]} : vector<8x32xf32> to vector<8x16xf32>
    %50 = vector.extract_strided_slice %26 {offsets = [0, 16], sizes = [8, 16], strides = [1, 1]} : vector<8x32xf32> to vector<8x16xf32>
    %51 = vector.extract_strided_slice %27 {offsets = [0, 16], sizes = [8, 16], strides = [1, 1]} : vector<8x32xf32> to vector<8x16xf32>
    %cst_28 = arith.constant dense<0.000000e+00> : vector<8x8xf32>
    %52 = tpu.matmul %49, %50, %cst_28 {dimension_numbers = #tpu.dot_dimension_numbers<[1], [1], [0], [0], [0, 0, 1, 0], [], []>} : vector<8x16xf32>, vector<8x16xf32>, vector<8x8xf32> -> vector<8x8xf32>
    %53 = vector.extract_strided_slice %6 {offsets = [1, 0, 0], sizes = [1, 8, 8], strides = [1, 1, 1]} : vector<2x8x8xf32> to vector<1x8x8xf32>
    %54 = vector.shape_cast %53 : vector<1x8x8xf32> to vector<8x8xf32>
    %55 = arith.addf %52, %54 : vector<8x8xf32>
    %cst_29 = arith.constant dense<0xFF800000> : vector<8xf32>
    %56 = vector.multi_reduction <maximumf>, %55, %cst_29 [1] : vector<8x8xf32> to vector<8xf32>
    %57 = vector.shape_cast %56 : vector<8xf32> to vector<8x1xf32>
    %58 = vector.broadcast %57 : vector<8x1xf32> to vector<8x8xf32>
    %59 = arith.subf %55, %58 : vector<8x8xf32>
    %60 = math.exp %59 : vector<8x8xf32>
    %cst_30 = arith.constant dense<0.000000e+00> : vector<8xf32>
    %61 = vector.multi_reduction <add>, %60, %cst_30 [1] : vector<8x8xf32> to vector<8xf32>
    %62 = vector.shape_cast %61 : vector<8xf32> to vector<8x1xf32>
    %63 = vector.broadcast %62 : vector<8x1xf32> to vector<8x8xf32>
    %64 = arith.divf %60, %63 : vector<8x8xf32>
    %cst_31 = arith.constant dense<0.000000e+00> : vector<8x16xf32>
    %65 = tpu.matmul %64, %51, %cst_31 {dimension_numbers = #tpu.dot_dimension_numbers<[1], [0], [0], [1], [0, 0, 1, 1], [], []>} : vector<8x8xf32>, vector<8x16xf32>, vector<8x16xf32> -> vector<8x16xf32>
    %66 = vector.extract_strided_slice %29 {offsets = [16, 0], sizes = [16, 32], strides = [1, 1]} : vector<32x32xf32> to vector<16x32xf32>
    %cst_32 = arith.constant dense<0.000000e+00> : vector<8x32xf32>
    %67 = tpu.matmul %65, %66, %cst_32 {dimension_numbers = #tpu.dot_dimension_numbers<[1], [0], [0], [1], [0, 0, 1, 1], [], []>} : vector<8x16xf32>, vector<16x32xf32>, vector<8x32xf32> -> vector<8x32xf32>
    %68 = arith.addf %48, %67 : vector<8x32xf32>
    %69 = arith.addf %1, %68 : vector<8x32xf32>
    %70 = vector.extract_strided_slice %8 {offsets = [1, 0], sizes = [1, 32], strides = [1, 1]} : vector<3x32xf32> to vector<1x32xf32>
    %71 = arith.mulf %69, %69 : vector<8x32xf32>
    %cst_33 = arith.constant dense<0.000000e+00> : vector<8xf32>
    %72 = vector.multi_reduction <add>, %71, %cst_33 [1] : vector<8x32xf32> to vector<8xf32>
    %73 = vector.shape_cast %72 : vector<8xf32> to vector<8x1xf32>
    %cst_34 = arith.constant 3.200000e+01 : f32
    %74 = vector.broadcast %cst_34 : f32 to vector<8x1xf32>
    %75 = arith.divf %73, %74 : vector<8x1xf32>
    %cst_35 = arith.constant 9.99999997E-7 : f32
    %76 = vector.broadcast %cst_35 : f32 to vector<8x1xf32>
    %77 = arith.addf %75, %76 : vector<8x1xf32>
    %78 = math.rsqrt %77 : vector<8x1xf32>
    %79 = vector.broadcast %78 : vector<8x1xf32> to vector<8x32xf32>
    %80 = arith.mulf %69, %79 : vector<8x32xf32>
    %81 = vector.broadcast %70 : vector<1x32xf32> to vector<8x32xf32>
    %82 = arith.mulf %80, %81 : vector<8x32xf32>
    %c0_36 = arith.constant 0 : index
    %c0_37 = arith.constant 0 : index
    %c0_38 = arith.constant 0 : index
    %83 = vector.load %arg7[%c0_36, %c0_37, %c0_38] : memref<2x32x32xf32, #tpu.memory_space<vmem>>, vector<1x32x32xf32>
    %84 = vector.shape_cast %83 : vector<1x32x32xf32> to vector<32x32xf32>
    %cst_39 = arith.constant dense<0.000000e+00> : vector<8x32xf32>
    %85 = tpu.matmul %82, %84, %cst_39 {dimension_numbers = #tpu.dot_dimension_numbers<[1], [0], [0], [1], [0, 0, 1, 1], [], []>} : vector<8x32xf32>, vector<32x32xf32>, vector<8x32xf32> -> vector<8x32xf32>
    %c0_40 = arith.constant 0 : index
    %c0_41 = arith.constant 0 : index
    %c0_42 = arith.constant 0 : index
    %86 = vector.load %arg8[%c0_40, %c0_41, %c0_42] : memref<2x32x64xf32, #tpu.memory_space<vmem>>, vector<1x32x64xf32>
    %87 = vector.shape_cast %86 : vector<1x32x64xf32> to vector<32x64xf32>
    %cst_43 = arith.constant dense<0.000000e+00> : vector<8x64xf32>
    %88 = tpu.matmul %3, %87, %cst_43 {dimension_numbers = #tpu.dot_dimension_numbers<[1], [0], [0], [1], [0, 0, 1, 1], [], []>} : vector<8x32xf32>, vector<32x64xf32>, vector<8x64xf32> -> vector<8x64xf32>
    %89 = vector.extract_strided_slice %88 {offsets = [0, 0], sizes = [8, 32], strides = [1, 1]} : vector<8x64xf32> to vector<8x32xf32>
    %90 = vector.extract_strided_slice %88 {offsets = [0, 32], sizes = [8, 32], strides = [1, 1]} : vector<8x64xf32> to vector<8x32xf32>
    %c0_44 = arith.constant 0 : index
    %c0_45 = arith.constant 0 : index
    %c0_46 = arith.constant 0 : index
    %91 = vector.load %arg9[%c0_44, %c0_45, %c0_46] : memref<2x32x32xf32, #tpu.memory_space<vmem>>, vector<1x32x32xf32>
    %92 = vector.shape_cast %91 : vector<1x32x32xf32> to vector<32x32xf32>
    %93 = vector.extract_strided_slice %85 {offsets = [0, 0], sizes = [8, 16], strides = [1, 1]} : vector<8x32xf32> to vector<8x16xf32>
    %94 = vector.extract_strided_slice %89 {offsets = [0, 0], sizes = [8, 16], strides = [1, 1]} : vector<8x32xf32> to vector<8x16xf32>
    %95 = vector.extract_strided_slice %90 {offsets = [0, 0], sizes = [8, 16], strides = [1, 1]} : vector<8x32xf32> to vector<8x16xf32>
    %cst_47 = arith.constant dense<0.000000e+00> : vector<8x8xf32>
    %96 = tpu.matmul %93, %94, %cst_47 {dimension_numbers = #tpu.dot_dimension_numbers<[1], [1], [0], [0], [0, 0, 1, 0], [], []>} : vector<8x16xf32>, vector<8x16xf32>, vector<8x8xf32> -> vector<8x8xf32>
    %97 = vector.broadcast %5 : vector<1x8xf32> to vector<8x8xf32>
    %98 = arith.addf %96, %97 : vector<8x8xf32>
    %cst_48 = arith.constant dense<0xFF800000> : vector<8xf32>
    %99 = vector.multi_reduction <maximumf>, %98, %cst_48 [1] : vector<8x8xf32> to vector<8xf32>
    %100 = vector.shape_cast %99 : vector<8xf32> to vector<8x1xf32>
    %101 = vector.broadcast %100 : vector<8x1xf32> to vector<8x8xf32>
    %102 = arith.subf %98, %101 : vector<8x8xf32>
    %103 = math.exp %102 : vector<8x8xf32>
    %cst_49 = arith.constant dense<0.000000e+00> : vector<8xf32>
    %104 = vector.multi_reduction <add>, %103, %cst_49 [1] : vector<8x8xf32> to vector<8xf32>
    %105 = vector.shape_cast %104 : vector<8xf32> to vector<8x1xf32>
    %106 = vector.broadcast %105 : vector<8x1xf32> to vector<8x8xf32>
    %107 = arith.divf %103, %106 : vector<8x8xf32>
    %cst_50 = arith.constant dense<0.000000e+00> : vector<8x16xf32>
    %108 = tpu.matmul %107, %95, %cst_50 {dimension_numbers = #tpu.dot_dimension_numbers<[1], [0], [0], [1], [0, 0, 1, 1], [], []>} : vector<8x8xf32>, vector<8x16xf32>, vector<8x16xf32> -> vector<8x16xf32>
    %109 = vector.extract_strided_slice %92 {offsets = [0, 0], sizes = [16, 32], strides = [1, 1]} : vector<32x32xf32> to vector<16x32xf32>
    %cst_51 = arith.constant dense<0.000000e+00> : vector<8x32xf32>
    %110 = tpu.matmul %108, %109, %cst_51 {dimension_numbers = #tpu.dot_dimension_numbers<[1], [0], [0], [1], [0, 0, 1, 1], [], []>} : vector<8x16xf32>, vector<16x32xf32>, vector<8x32xf32> -> vector<8x32xf32>
    %111 = vector.extract_strided_slice %85 {offsets = [0, 16], sizes = [8, 16], strides = [1, 1]} : vector<8x32xf32> to vector<8x16xf32>
    %112 = vector.extract_strided_slice %89 {offsets = [0, 16], sizes = [8, 16], strides = [1, 1]} : vector<8x32xf32> to vector<8x16xf32>
    %113 = vector.extract_strided_slice %90 {offsets = [0, 16], sizes = [8, 16], strides = [1, 1]} : vector<8x32xf32> to vector<8x16xf32>
    %cst_52 = arith.constant dense<0.000000e+00> : vector<8x8xf32>
    %114 = tpu.matmul %111, %112, %cst_52 {dimension_numbers = #tpu.dot_dimension_numbers<[1], [1], [0], [0], [0, 0, 1, 0], [], []>} : vector<8x16xf32>, vector<8x16xf32>, vector<8x8xf32> -> vector<8x8xf32>
    %115 = vector.broadcast %5 : vector<1x8xf32> to vector<8x8xf32>
    %116 = arith.addf %114, %115 : vector<8x8xf32>
    %cst_53 = arith.constant dense<0xFF800000> : vector<8xf32>
    %117 = vector.multi_reduction <maximumf>, %116, %cst_53 [1] : vector<8x8xf32> to vector<8xf32>
    %118 = vector.shape_cast %117 : vector<8xf32> to vector<8x1xf32>
    %119 = vector.broadcast %118 : vector<8x1xf32> to vector<8x8xf32>
    %120 = arith.subf %116, %119 : vector<8x8xf32>
    %121 = math.exp %120 : vector<8x8xf32>
    %cst_54 = arith.constant dense<0.000000e+00> : vector<8xf32>
    %122 = vector.multi_reduction <add>, %121, %cst_54 [1] : vector<8x8xf32> to vector<8xf32>
    %123 = vector.shape_cast %122 : vector<8xf32> to vector<8x1xf32>
    %124 = vector.broadcast %123 : vector<8x1xf32> to vector<8x8xf32>
    %125 = arith.divf %121, %124 : vector<8x8xf32>
    %cst_55 = arith.constant dense<0.000000e+00> : vector<8x16xf32>
    %126 = tpu.matmul %125, %113, %cst_55 {dimension_numbers = #tpu.dot_dimension_numbers<[1], [0], [0], [1], [0, 0, 1, 1], [], []>} : vector<8x8xf32>, vector<8x16xf32>, vector<8x16xf32> -> vector<8x16xf32>
    %127 = vector.extract_strided_slice %92 {offsets = [16, 0], sizes = [16, 32], strides = [1, 1]} : vector<32x32xf32> to vector<16x32xf32>
    %cst_56 = arith.constant dense<0.000000e+00> : vector<8x32xf32>
    %128 = tpu.matmul %126, %127, %cst_56 {dimension_numbers = #tpu.dot_dimension_numbers<[1], [0], [0], [1], [0, 0, 1, 1], [], []>} : vector<8x16xf32>, vector<16x32xf32>, vector<8x32xf32> -> vector<8x32xf32>
    %129 = arith.addf %110, %128 : vector<8x32xf32>
    %130 = arith.addf %69, %129 : vector<8x32xf32>
    %131 = vector.extract_strided_slice %8 {offsets = [2, 0], sizes = [1, 32], strides = [1, 1]} : vector<3x32xf32> to vector<1x32xf32>
    %132 = arith.mulf %130, %130 : vector<8x32xf32>
    %cst_57 = arith.constant dense<0.000000e+00> : vector<8xf32>
    %133 = vector.multi_reduction <add>, %132, %cst_57 [1] : vector<8x32xf32> to vector<8xf32>
    %134 = vector.shape_cast %133 : vector<8xf32> to vector<8x1xf32>
    %cst_58 = arith.constant 3.200000e+01 : f32
    %135 = vector.broadcast %cst_58 : f32 to vector<8x1xf32>
    %136 = arith.divf %134, %135 : vector<8x1xf32>
    %cst_59 = arith.constant 9.99999997E-7 : f32
    %137 = vector.broadcast %cst_59 : f32 to vector<8x1xf32>
    %138 = arith.addf %136, %137 : vector<8x1xf32>
    %139 = math.rsqrt %138 : vector<8x1xf32>
    %140 = vector.broadcast %139 : vector<8x1xf32> to vector<8x32xf32>
    %141 = arith.mulf %130, %140 : vector<8x32xf32>
    %142 = vector.broadcast %131 : vector<1x32xf32> to vector<8x32xf32>
    %143 = arith.mulf %141, %142 : vector<8x32xf32>
    %c0_60 = arith.constant 0 : index
    %c0_61 = arith.constant 0 : index
    %c0_62 = arith.constant 0 : index
    %144 = vector.load %arg10[%c0_60, %c0_61, %c0_62] : memref<2x32x64xf32, #tpu.memory_space<vmem>>, vector<1x32x64xf32>
    %145 = vector.shape_cast %144 : vector<1x32x64xf32> to vector<32x64xf32>
    %cst_63 = arith.constant dense<0.000000e+00> : vector<8x64xf32>
    %146 = tpu.matmul %143, %145, %cst_63 {dimension_numbers = #tpu.dot_dimension_numbers<[1], [0], [0], [1], [0, 0, 1, 1], [], []>} : vector<8x32xf32>, vector<32x64xf32>, vector<8x64xf32> -> vector<8x64xf32>
    %cst_64 = arith.constant 0.000000e+00 : f32
    %147 = vector.broadcast %cst_64 : f32 to vector<8x64xf32>
    %148 = arith.maximumf %146, %147 : vector<8x64xf32>
    %c0_65 = arith.constant 0 : index
    %c0_66 = arith.constant 0 : index
    %c0_67 = arith.constant 0 : index
    %149 = vector.load %arg11[%c0_65, %c0_66, %c0_67] : memref<2x64x32xf32, #tpu.memory_space<vmem>>, vector<1x64x32xf32>
    %150 = vector.shape_cast %149 : vector<1x64x32xf32> to vector<64x32xf32>
    %cst_68 = arith.constant dense<0.000000e+00> : vector<8x32xf32>
    %151 = tpu.matmul %148, %150, %cst_68 {dimension_numbers = #tpu.dot_dimension_numbers<[1], [0], [0], [1], [0, 0, 1, 1], [], []>} : vector<8x64xf32>, vector<64x32xf32>, vector<8x32xf32> -> vector<8x32xf32>
    %152 = arith.addf %130, %151 : vector<8x32xf32>
    %c1 = arith.constant 1 : index
    %c0_69 = arith.constant 0 : index
    %c0_70 = arith.constant 0 : index
    %153 = vector.load %arg12[%c1, %c0_69, %c0_70] : memref<2x3x32xf32, #tpu.memory_space<vmem>>, vector<1x3x32xf32>
    %154 = vector.shape_cast %153 : vector<1x3x32xf32> to vector<3x32xf32>
    %155 = vector.extract_strided_slice %154 {offsets = [0, 0], sizes = [1, 32], strides = [1, 1]} : vector<3x32xf32> to vector<1x32xf32>
    %156 = arith.mulf %152, %152 : vector<8x32xf32>
    %cst_71 = arith.constant dense<0.000000e+00> : vector<8xf32>
    %157 = vector.multi_reduction <add>, %156, %cst_71 [1] : vector<8x32xf32> to vector<8xf32>
    %158 = vector.shape_cast %157 : vector<8xf32> to vector<8x1xf32>
    %cst_72 = arith.constant 3.200000e+01 : f32
    %159 = vector.broadcast %cst_72 : f32 to vector<8x1xf32>
    %160 = arith.divf %158, %159 : vector<8x1xf32>
    %cst_73 = arith.constant 9.99999997E-7 : f32
    %161 = vector.broadcast %cst_73 : f32 to vector<8x1xf32>
    %162 = arith.addf %160, %161 : vector<8x1xf32>
    %163 = math.rsqrt %162 : vector<8x1xf32>
    %164 = vector.broadcast %163 : vector<8x1xf32> to vector<8x32xf32>
    %165 = arith.mulf %152, %164 : vector<8x32xf32>
    %166 = vector.broadcast %155 : vector<1x32xf32> to vector<8x32xf32>
    %167 = arith.mulf %165, %166 : vector<8x32xf32>
    %c1_74 = arith.constant 1 : index
    %c0_75 = arith.constant 0 : index
    %c0_76 = arith.constant 0 : index
    %168 = vector.load %arg5[%c1_74, %c0_75, %c0_76] : memref<2x32x96xf32, #tpu.memory_space<vmem>>, vector<1x32x96xf32>
    %169 = vector.shape_cast %168 : vector<1x32x96xf32> to vector<32x96xf32>
    %cst_77 = arith.constant dense<0.000000e+00> : vector<8x96xf32>
    %170 = tpu.matmul %167, %169, %cst_77 {dimension_numbers = #tpu.dot_dimension_numbers<[1], [0], [0], [1], [0, 0, 1, 1], [], []>} : vector<8x32xf32>, vector<32x96xf32>, vector<8x96xf32> -> vector<8x96xf32>
    %171 = vector.extract_strided_slice %170 {offsets = [0, 0], sizes = [8, 32], strides = [1, 1]} : vector<8x96xf32> to vector<8x32xf32>
    %172 = vector.extract_strided_slice %170 {offsets = [0, 32], sizes = [8, 32], strides = [1, 1]} : vector<8x96xf32> to vector<8x32xf32>
    %173 = vector.extract_strided_slice %170 {offsets = [0, 64], sizes = [8, 32], strides = [1, 1]} : vector<8x96xf32> to vector<8x32xf32>
    %c1_78 = arith.constant 1 : index
    %c0_79 = arith.constant 0 : index
    %c0_80 = arith.constant 0 : index
    %174 = vector.load %arg6[%c1_78, %c0_79, %c0_80] : memref<2x32x32xf32, #tpu.memory_space<vmem>>, vector<1x32x32xf32>
    %175 = vector.shape_cast %174 : vector<1x32x32xf32> to vector<32x32xf32>
    %176 = vector.extract_strided_slice %171 {offsets = [0, 0], sizes = [8, 16], strides = [1, 1]} : vector<8x32xf32> to vector<8x16xf32>
    %177 = vector.extract_strided_slice %172 {offsets = [0, 0], sizes = [8, 16], strides = [1, 1]} : vector<8x32xf32> to vector<8x16xf32>
    %178 = vector.extract_strided_slice %173 {offsets = [0, 0], sizes = [8, 16], strides = [1, 1]} : vector<8x32xf32> to vector<8x16xf32>
    %cst_81 = arith.constant dense<0.000000e+00> : vector<8x8xf32>
    %179 = tpu.matmul %176, %177, %cst_81 {dimension_numbers = #tpu.dot_dimension_numbers<[1], [1], [0], [0], [0, 0, 1, 0], [], []>} : vector<8x16xf32>, vector<8x16xf32>, vector<8x8xf32> -> vector<8x8xf32>
    %180 = vector.extract_strided_slice %6 {offsets = [0, 0, 0], sizes = [1, 8, 8], strides = [1, 1, 1]} : vector<2x8x8xf32> to vector<1x8x8xf32>
    %181 = vector.shape_cast %180 : vector<1x8x8xf32> to vector<8x8xf32>
    %182 = arith.addf %179, %181 : vector<8x8xf32>
    %cst_82 = arith.constant dense<0xFF800000> : vector<8xf32>
    %183 = vector.multi_reduction <maximumf>, %182, %cst_82 [1] : vector<8x8xf32> to vector<8xf32>
    %184 = vector.shape_cast %183 : vector<8xf32> to vector<8x1xf32>
    %185 = vector.broadcast %184 : vector<8x1xf32> to vector<8x8xf32>
    %186 = arith.subf %182, %185 : vector<8x8xf32>
    %187 = math.exp %186 : vector<8x8xf32>
    %cst_83 = arith.constant dense<0.000000e+00> : vector<8xf32>
    %188 = vector.multi_reduction <add>, %187, %cst_83 [1] : vector<8x8xf32> to vector<8xf32>
    %189 = vector.shape_cast %188 : vector<8xf32> to vector<8x1xf32>
    %190 = vector.broadcast %189 : vector<8x1xf32> to vector<8x8xf32>
    %191 = arith.divf %187, %190 : vector<8x8xf32>
    %cst_84 = arith.constant dense<0.000000e+00> : vector<8x16xf32>
    %192 = tpu.matmul %191, %178, %cst_84 {dimension_numbers = #tpu.dot_dimension_numbers<[1], [0], [0], [1], [0, 0, 1, 1], [], []>} : vector<8x8xf32>, vector<8x16xf32>, vector<8x16xf32> -> vector<8x16xf32>
    %193 = vector.extract_strided_slice %175 {offsets = [0, 0], sizes = [16, 32], strides = [1, 1]} : vector<32x32xf32> to vector<16x32xf32>
    %cst_85 = arith.constant dense<0.000000e+00> : vector<8x32xf32>
    %194 = tpu.matmul %192, %193, %cst_85 {dimension_numbers = #tpu.dot_dimension_numbers<[1], [0], [0], [1], [0, 0, 1, 1], [], []>} : vector<8x16xf32>, vector<16x32xf32>, vector<8x32xf32> -> vector<8x32xf32>
    %195 = vector.extract_strided_slice %171 {offsets = [0, 16], sizes = [8, 16], strides = [1, 1]} : vector<8x32xf32> to vector<8x16xf32>
    %196 = vector.extract_strided_slice %172 {offsets = [0, 16], sizes = [8, 16], strides = [1, 1]} : vector<8x32xf32> to vector<8x16xf32>
    %197 = vector.extract_strided_slice %173 {offsets = [0, 16], sizes = [8, 16], strides = [1, 1]} : vector<8x32xf32> to vector<8x16xf32>
    %cst_86 = arith.constant dense<0.000000e+00> : vector<8x8xf32>
    %198 = tpu.matmul %195, %196, %cst_86 {dimension_numbers = #tpu.dot_dimension_numbers<[1], [1], [0], [0], [0, 0, 1, 0], [], []>} : vector<8x16xf32>, vector<8x16xf32>, vector<8x8xf32> -> vector<8x8xf32>
    %199 = vector.extract_strided_slice %6 {offsets = [1, 0, 0], sizes = [1, 8, 8], strides = [1, 1, 1]} : vector<2x8x8xf32> to vector<1x8x8xf32>
    %200 = vector.shape_cast %199 : vector<1x8x8xf32> to vector<8x8xf32>
    %201 = arith.addf %198, %200 : vector<8x8xf32>
    %cst_87 = arith.constant dense<0xFF800000> : vector<8xf32>
    %202 = vector.multi_reduction <maximumf>, %201, %cst_87 [1] : vector<8x8xf32> to vector<8xf32>
    %203 = vector.shape_cast %202 : vector<8xf32> to vector<8x1xf32>
    %204 = vector.broadcast %203 : vector<8x1xf32> to vector<8x8xf32>
    %205 = arith.subf %201, %204 : vector<8x8xf32>
    %206 = math.exp %205 : vector<8x8xf32>
    %cst_88 = arith.constant dense<0.000000e+00> : vector<8xf32>
    %207 = vector.multi_reduction <add>, %206, %cst_88 [1] : vector<8x8xf32> to vector<8xf32>
    %208 = vector.shape_cast %207 : vector<8xf32> to vector<8x1xf32>
    %209 = vector.broadcast %208 : vector<8x1xf32> to vector<8x8xf32>
    %210 = arith.divf %206, %209 : vector<8x8xf32>
    %cst_89 = arith.constant dense<0.000000e+00> : vector<8x16xf32>
    %211 = tpu.matmul %210, %197, %cst_89 {dimension_numbers = #tpu.dot_dimension_numbers<[1], [0], [0], [1], [0, 0, 1, 1], [], []>} : vector<8x8xf32>, vector<8x16xf32>, vector<8x16xf32> -> vector<8x16xf32>
    %212 = vector.extract_strided_slice %175 {offsets = [16, 0], sizes = [16, 32], strides = [1, 1]} : vector<32x32xf32> to vector<16x32xf32>
    %cst_90 = arith.constant dense<0.000000e+00> : vector<8x32xf32>
    %213 = tpu.matmul %211, %212, %cst_90 {dimension_numbers = #tpu.dot_dimension_numbers<[1], [0], [0], [1], [0, 0, 1, 1], [], []>} : vector<8x16xf32>, vector<16x32xf32>, vector<8x32xf32> -> vector<8x32xf32>
    %214 = arith.addf %194, %213 : vector<8x32xf32>
    %215 = arith.addf %152, %214 : vector<8x32xf32>
    %216 = vector.extract_strided_slice %154 {offsets = [1, 0], sizes = [1, 32], strides = [1, 1]} : vector<3x32xf32> to vector<1x32xf32>
    %217 = arith.mulf %215, %215 : vector<8x32xf32>
    %cst_91 = arith.constant dense<0.000000e+00> : vector<8xf32>
    %218 = vector.multi_reduction <add>, %217, %cst_91 [1] : vector<8x32xf32> to vector<8xf32>
    %219 = vector.shape_cast %218 : vector<8xf32> to vector<8x1xf32>
    %cst_92 = arith.constant 3.200000e+01 : f32
    %220 = vector.broadcast %cst_92 : f32 to vector<8x1xf32>
    %221 = arith.divf %219, %220 : vector<8x1xf32>
    %cst_93 = arith.constant 9.99999997E-7 : f32
    %222 = vector.broadcast %cst_93 : f32 to vector<8x1xf32>
    %223 = arith.addf %221, %222 : vector<8x1xf32>
    %224 = math.rsqrt %223 : vector<8x1xf32>
    %225 = vector.broadcast %224 : vector<8x1xf32> to vector<8x32xf32>
    %226 = arith.mulf %215, %225 : vector<8x32xf32>
    %227 = vector.broadcast %216 : vector<1x32xf32> to vector<8x32xf32>
    %228 = arith.mulf %226, %227 : vector<8x32xf32>
    %c1_94 = arith.constant 1 : index
    %c0_95 = arith.constant 0 : index
    %c0_96 = arith.constant 0 : index
    %229 = vector.load %arg7[%c1_94, %c0_95, %c0_96] : memref<2x32x32xf32, #tpu.memory_space<vmem>>, vector<1x32x32xf32>
    %230 = vector.shape_cast %229 : vector<1x32x32xf32> to vector<32x32xf32>
    %cst_97 = arith.constant dense<0.000000e+00> : vector<8x32xf32>
    %231 = tpu.matmul %228, %230, %cst_97 {dimension_numbers = #tpu.dot_dimension_numbers<[1], [0], [0], [1], [0, 0, 1, 1], [], []>} : vector<8x32xf32>, vector<32x32xf32>, vector<8x32xf32> -> vector<8x32xf32>
    %c1_98 = arith.constant 1 : index
    %c0_99 = arith.constant 0 : index
    %c0_100 = arith.constant 0 : index
    %232 = vector.load %arg8[%c1_98, %c0_99, %c0_100] : memref<2x32x64xf32, #tpu.memory_space<vmem>>, vector<1x32x64xf32>
    %233 = vector.shape_cast %232 : vector<1x32x64xf32> to vector<32x64xf32>
    %cst_101 = arith.constant dense<0.000000e+00> : vector<8x64xf32>
    %234 = tpu.matmul %3, %233, %cst_101 {dimension_numbers = #tpu.dot_dimension_numbers<[1], [0], [0], [1], [0, 0, 1, 1], [], []>} : vector<8x32xf32>, vector<32x64xf32>, vector<8x64xf32> -> vector<8x64xf32>
    %235 = vector.extract_strided_slice %234 {offsets = [0, 0], sizes = [8, 32], strides = [1, 1]} : vector<8x64xf32> to vector<8x32xf32>
    %236 = vector.extract_strided_slice %234 {offsets = [0, 32], sizes = [8, 32], strides = [1, 1]} : vector<8x64xf32> to vector<8x32xf32>
    %c1_102 = arith.constant 1 : index
    %c0_103 = arith.constant 0 : index
    %c0_104 = arith.constant 0 : index
    %237 = vector.load %arg9[%c1_102, %c0_103, %c0_104] : memref<2x32x32xf32, #tpu.memory_space<vmem>>, vector<1x32x32xf32>
    %238 = vector.shape_cast %237 : vector<1x32x32xf32> to vector<32x32xf32>
    %239 = vector.extract_strided_slice %231 {offsets = [0, 0], sizes = [8, 16], strides = [1, 1]} : vector<8x32xf32> to vector<8x16xf32>
    %240 = vector.extract_strided_slice %235 {offsets = [0, 0], sizes = [8, 16], strides = [1, 1]} : vector<8x32xf32> to vector<8x16xf32>
    %241 = vector.extract_strided_slice %236 {offsets = [0, 0], sizes = [8, 16], strides = [1, 1]} : vector<8x32xf32> to vector<8x16xf32>
    %cst_105 = arith.constant dense<0.000000e+00> : vector<8x8xf32>
    %242 = tpu.matmul %239, %240, %cst_105 {dimension_numbers = #tpu.dot_dimension_numbers<[1], [1], [0], [0], [0, 0, 1, 0], [], []>} : vector<8x16xf32>, vector<8x16xf32>, vector<8x8xf32> -> vector<8x8xf32>
    %243 = vector.broadcast %5 : vector<1x8xf32> to vector<8x8xf32>
    %244 = arith.addf %242, %243 : vector<8x8xf32>
    %cst_106 = arith.constant dense<0xFF800000> : vector<8xf32>
    %245 = vector.multi_reduction <maximumf>, %244, %cst_106 [1] : vector<8x8xf32> to vector<8xf32>
    %246 = vector.shape_cast %245 : vector<8xf32> to vector<8x1xf32>
    %247 = vector.broadcast %246 : vector<8x1xf32> to vector<8x8xf32>
    %248 = arith.subf %244, %247 : vector<8x8xf32>
    %249 = math.exp %248 : vector<8x8xf32>
    %cst_107 = arith.constant dense<0.000000e+00> : vector<8xf32>
    %250 = vector.multi_reduction <add>, %249, %cst_107 [1] : vector<8x8xf32> to vector<8xf32>
    %251 = vector.shape_cast %250 : vector<8xf32> to vector<8x1xf32>
    %252 = vector.broadcast %251 : vector<8x1xf32> to vector<8x8xf32>
    %253 = arith.divf %249, %252 : vector<8x8xf32>
    %cst_108 = arith.constant dense<0.000000e+00> : vector<8x16xf32>
    %254 = tpu.matmul %253, %241, %cst_108 {dimension_numbers = #tpu.dot_dimension_numbers<[1], [0], [0], [1], [0, 0, 1, 1], [], []>} : vector<8x8xf32>, vector<8x16xf32>, vector<8x16xf32> -> vector<8x16xf32>
    %255 = vector.extract_strided_slice %238 {offsets = [0, 0], sizes = [16, 32], strides = [1, 1]} : vector<32x32xf32> to vector<16x32xf32>
    %cst_109 = arith.constant dense<0.000000e+00> : vector<8x32xf32>
    %256 = tpu.matmul %254, %255, %cst_109 {dimension_numbers = #tpu.dot_dimension_numbers<[1], [0], [0], [1], [0, 0, 1, 1], [], []>} : vector<8x16xf32>, vector<16x32xf32>, vector<8x32xf32> -> vector<8x32xf32>
    %257 = vector.extract_strided_slice %231 {offsets = [0, 16], sizes = [8, 16], strides = [1, 1]} : vector<8x32xf32> to vector<8x16xf32>
    %258 = vector.extract_strided_slice %235 {offsets = [0, 16], sizes = [8, 16], strides = [1, 1]} : vector<8x32xf32> to vector<8x16xf32>
    %259 = vector.extract_strided_slice %236 {offsets = [0, 16], sizes = [8, 16], strides = [1, 1]} : vector<8x32xf32> to vector<8x16xf32>
    %cst_110 = arith.constant dense<0.000000e+00> : vector<8x8xf32>
    %260 = tpu.matmul %257, %258, %cst_110 {dimension_numbers = #tpu.dot_dimension_numbers<[1], [1], [0], [0], [0, 0, 1, 0], [], []>} : vector<8x16xf32>, vector<8x16xf32>, vector<8x8xf32> -> vector<8x8xf32>
    %261 = vector.broadcast %5 : vector<1x8xf32> to vector<8x8xf32>
    %262 = arith.addf %260, %261 : vector<8x8xf32>
    %cst_111 = arith.constant dense<0xFF800000> : vector<8xf32>
    %263 = vector.multi_reduction <maximumf>, %262, %cst_111 [1] : vector<8x8xf32> to vector<8xf32>
    %264 = vector.shape_cast %263 : vector<8xf32> to vector<8x1xf32>
    %265 = vector.broadcast %264 : vector<8x1xf32> to vector<8x8xf32>
    %266 = arith.subf %262, %265 : vector<8x8xf32>
    %267 = math.exp %266 : vector<8x8xf32>
    %cst_112 = arith.constant dense<0.000000e+00> : vector<8xf32>
    %268 = vector.multi_reduction <add>, %267, %cst_112 [1] : vector<8x8xf32> to vector<8xf32>
    %269 = vector.shape_cast %268 : vector<8xf32> to vector<8x1xf32>
    %270 = vector.broadcast %269 : vector<8x1xf32> to vector<8x8xf32>
    %271 = arith.divf %267, %270 : vector<8x8xf32>
    %cst_113 = arith.constant dense<0.000000e+00> : vector<8x16xf32>
    %272 = tpu.matmul %271, %259, %cst_113 {dimension_numbers = #tpu.dot_dimension_numbers<[1], [0], [0], [1], [0, 0, 1, 1], [], []>} : vector<8x8xf32>, vector<8x16xf32>, vector<8x16xf32> -> vector<8x16xf32>
    %273 = vector.extract_strided_slice %238 {offsets = [16, 0], sizes = [16, 32], strides = [1, 1]} : vector<32x32xf32> to vector<16x32xf32>
    %cst_114 = arith.constant dense<0.000000e+00> : vector<8x32xf32>
    %274 = tpu.matmul %272, %273, %cst_114 {dimension_numbers = #tpu.dot_dimension_numbers<[1], [0], [0], [1], [0, 0, 1, 1], [], []>} : vector<8x16xf32>, vector<16x32xf32>, vector<8x32xf32> -> vector<8x32xf32>
    %275 = arith.addf %256, %274 : vector<8x32xf32>
    %276 = arith.addf %215, %275 : vector<8x32xf32>
    %277 = vector.extract_strided_slice %154 {offsets = [2, 0], sizes = [1, 32], strides = [1, 1]} : vector<3x32xf32> to vector<1x32xf32>
    %278 = arith.mulf %276, %276 : vector<8x32xf32>
    %cst_115 = arith.constant dense<0.000000e+00> : vector<8xf32>
    %279 = vector.multi_reduction <add>, %278, %cst_115 [1] : vector<8x32xf32> to vector<8xf32>
    %280 = vector.shape_cast %279 : vector<8xf32> to vector<8x1xf32>
    %cst_116 = arith.constant 3.200000e+01 : f32
    %281 = vector.broadcast %cst_116 : f32 to vector<8x1xf32>
    %282 = arith.divf %280, %281 : vector<8x1xf32>
    %cst_117 = arith.constant 9.99999997E-7 : f32
    %283 = vector.broadcast %cst_117 : f32 to vector<8x1xf32>
    %284 = arith.addf %282, %283 : vector<8x1xf32>
    %285 = math.rsqrt %284 : vector<8x1xf32>
    %286 = vector.broadcast %285 : vector<8x1xf32> to vector<8x32xf32>
    %287 = arith.mulf %276, %286 : vector<8x32xf32>
    %288 = vector.broadcast %277 : vector<1x32xf32> to vector<8x32xf32>
    %289 = arith.mulf %287, %288 : vector<8x32xf32>
    %c1_118 = arith.constant 1 : index
    %c0_119 = arith.constant 0 : index
    %c0_120 = arith.constant 0 : index
    %290 = vector.load %arg10[%c1_118, %c0_119, %c0_120] : memref<2x32x64xf32, #tpu.memory_space<vmem>>, vector<1x32x64xf32>
    %291 = vector.shape_cast %290 : vector<1x32x64xf32> to vector<32x64xf32>
    %cst_121 = arith.constant dense<0.000000e+00> : vector<8x64xf32>
    %292 = tpu.matmul %289, %291, %cst_121 {dimension_numbers = #tpu.dot_dimension_numbers<[1], [0], [0], [1], [0, 0, 1, 1], [], []>} : vector<8x32xf32>, vector<32x64xf32>, vector<8x64xf32> -> vector<8x64xf32>
    %cst_122 = arith.constant 0.000000e+00 : f32
    %293 = vector.broadcast %cst_122 : f32 to vector<8x64xf32>
    %294 = arith.maximumf %292, %293 : vector<8x64xf32>
    %c1_123 = arith.constant 1 : index
    %c0_124 = arith.constant 0 : index
    %c0_125 = arith.constant 0 : index
    %295 = vector.load %arg11[%c1_123, %c0_124, %c0_125] : memref<2x64x32xf32, #tpu.memory_space<vmem>>, vector<1x64x32xf32>
    %296 = vector.shape_cast %295 : vector<1x64x32xf32> to vector<64x32xf32>
    %cst_126 = arith.constant dense<0.000000e+00> : vector<8x32xf32>
    %297 = tpu.matmul %294, %296, %cst_126 {dimension_numbers = #tpu.dot_dimension_numbers<[1], [0], [0], [1], [0, 0, 1, 1], [], []>} : vector<8x64xf32>, vector<64x32xf32>, vector<8x32xf32> -> vector<8x32xf32>
    %298 = arith.addf %276, %297 : vector<8x32xf32>
    %c0_127 = arith.constant 0 : index
    %c0_128 = arith.constant 0 : index
    %299 = vector.load %arg13[%c0_127, %c0_128] : memref<1x32xf32, #tpu.memory_space<vmem>>, vector<1x32xf32>
    %300 = arith.mulf %298, %298 : vector<8x32xf32>
    %cst_129 = arith.constant dense<0.000000e+00> : vector<8xf32>
    %301 = vector.multi_reduction <add>, %300, %cst_129 [1] : vector<8x32xf32> to vector<8xf32>
    %302 = vector.shape_cast %301 : vector<8xf32> to vector<8x1xf32>
    %cst_130 = arith.constant 3.200000e+01 : f32
    %303 = vector.broadcast %cst_130 : f32 to vector<8x1xf32>
    %304 = arith.divf %302, %303 : vector<8x1xf32>
    %cst_131 = arith.constant 9.99999997E-7 : f32
    %305 = vector.broadcast %cst_131 : f32 to vector<8x1xf32>
    %306 = arith.addf %304, %305 : vector<8x1xf32>
    %307 = math.rsqrt %306 : vector<8x1xf32>
    %308 = vector.broadcast %307 : vector<8x1xf32> to vector<8x32xf32>
    %309 = arith.mulf %298, %308 : vector<8x32xf32>
    %310 = vector.broadcast %299 : vector<1x32xf32> to vector<8x32xf32>
    %311 = arith.mulf %309, %310 : vector<8x32xf32>
    %c0_132 = arith.constant 0 : index
    %c0_133 = arith.constant 0 : index
    %c0_134 = arith.constant 0 : index
    %312 = vector.load %arg14[%c0_132, %c0_133, %c0_134] : memref<1x8x32xf32, #tpu.memory_space<vmem>>, vector<1x8x32xf32>
    %313 = vector.shape_cast %312 : vector<1x8x32xf32> to vector<8x32xf32>
    %314 = vector.shape_cast %311 : vector<8x32xf32> to vector<1x8x32xf32>
    tpu.vector_store %arg14[%c0_132, %c0_133, %c0_134], %314 {strides = array<i32>} : memref<1x8x32xf32, #tpu.memory_space<vmem>>, vector<1x8x32xf32>,
    return
  }
  func.func @transform_0(%arg0: i32) -> (i32, i32, i32) {
    %c0_i32 = arith.constant 0 : i32
    %c0_i32_0 = arith.constant 0 : i32
    %c0_i32_1 = arith.constant 0 : i32
    return %arg0, %c0_i32, %c0_i32_0 : i32, i32, i32
  }
  func.func @transform_1(%arg0: i32) -> (i32, i32, i32) {
    %c0_i32 = arith.constant 0 : i32
    %c0_i32_0 = arith.constant 0 : i32
    %c0_i32_1 = arith.constant 0 : i32
    return %arg0, %c0_i32, %c0_i32_0 : i32, i32, i32
  }
  func.func @transform_2(%arg0: i32) -> (i32, i32, i32) {
    %c0_i32 = arith.constant 0 : i32
    %c0_i32_0 = arith.constant 0 : i32
    %c0_i32_1 = arith.constant 0 : i32
    return %arg0, %c0_i32, %c0_i32_0 : i32, i32, i32
  }
  func.func @transform_3(%arg0: i32) -> (i32, i32, i32) {
    %c0_i32 = arith.constant 0 : i32
    %c0_i32_0 = arith.constant 0 : i32
    %c0_i32_1 = arith.constant 0 : i32
    %c0_i32_2 = arith.constant 0 : i32
    return %c0_i32, %c0_i32_0, %c0_i32_1 : i32, i32, i32
  }
  func.func @transform_4(%arg0: i32) -> (i32, i32, i32) {
    %c0_i32 = arith.constant 0 : i32
    %c0_i32_0 = arith.constant 0 : i32
    %c0_i32_1 = arith.constant 0 : i32
    %c0_i32_2 = arith.constant 0 : i32
    return %c0_i32, %c0_i32_0, %c0_i32_1 : i32, i32, i32
  }
  func.func @transform_5(%arg0: i32) -> (i32, i32, i32) {
    %c0_i32 = arith.constant 0 : i32
    %c0_i32_0 = arith.constant 0 : i32
    %c0_i32_1 = arith.constant 0 : i32
    %c0_i32_2 = arith.constant 0 : i32
    return %c0_i32, %c0_i32_0, %c0_i32_1 : i32, i32, i32
  }
  func.func @transform_6(%arg0: i32) -> (i32, i32, i32) {
    %c0_i32 = arith.constant 0 : i32
    %c0_i32_0 = arith.constant 0 : i32
    %c0_i32_1 = arith.constant 0 : i32
    %c0_i32_2 = arith.constant 0 : i32
    return %c0_i32, %c0_i32_0, %c0_i32_1 : i32, i32, i32
  }
  func.func @transform_7(%arg0: i32) -> (i32, i32, i32) {
    %c0_i32 = arith.constant 0 : i32
    %c0_i32_0 = arith.constant 0 : i32
    %c0_i32_1 = arith.constant 0 : i32
    %c0_i32_2 = arith.constant 0 : i32
    return %c0_i32, %c0_i32_0, %c0_i32_1 : i32, i32, i32
  }
  func.func @transform_8(%arg0: i32) -> (i32, i32, i32) {
    %c0_i32 = arith.constant 0 : i32
    %c0_i32_0 = arith.constant 0 : i32
    %c0_i32_1 = arith.constant 0 : i32
    %c0_i32_2 = arith.constant 0 : i32
    return %c0_i32, %c0_i32_0, %c0_i32_1 : i32, i32, i32
  }
  func.func @transform_9(%arg0: i32) -> (i32, i32, i32) {
    %c0_i32 = arith.constant 0 : i32
    %c0_i32_0 = arith.constant 0 : i32
    %c0_i32_1 = arith.constant 0 : i32
    %c0_i32_2 = arith.constant 0 : i32
    return %c0_i32, %c0_i32_0, %c0_i32_1 : i32, i32, i32
  }
  func.func @transform_10(%arg0: i32) -> (i32, i32, i32) {
    %c0_i32 = arith.constant 0 : i32
    %c0_i32_0 = arith.constant 0 : i32
    %c0_i32_1 = arith.constant 0 : i32
    %c0_i32_2 = arith.constant 0 : i32
    return %c0_i32, %c0_i32_0, %c0_i32_1 : i32, i32, i32
  }
  func.func @transform_11(%arg0: i32) -> (i32, i32, i32) {
    %c0_i32 = arith.constant 0 : i32
    %c0_i32_0 = arith.constant 0 : i32
    %c0_i32_1 = arith.constant 0 : i32
    %c0_i32_2 = arith.constant 0 : i32
    return %c0_i32, %c0_i32_0, %c0_i32_1 : i32, i32, i32
  }
  func.func @transform_12(%arg0: i32) -> (i32, i32) {
    %c0_i32 = arith.constant 0 : i32
    %c0_i32_0 = arith.constant 0 : i32
    %c0_i32_1 = arith.constant 0 : i32
    return %c0_i32, %c0_i32_0 : i32, i32
  }
  func.func @transform_13(%arg0: i32) -> (i32, i32, i32) {
    %c0_i32 = arith.constant 0 : i32
    %c0_i32_0 = arith.constant 0 : i32
    %c0_i32_1 = arith.constant 0 : i32
    return %arg0, %c0_i32, %c0_i32_0 : i32, i32, i32
  }
}

module attributes {stable_mosaic.version = 11 : i64} {
  func.func @_encoder_kernel(%arg0: i32, %arg1: memref<1x8x32xf32, #tpu.memory_space<vmem>>, %arg2: memref<1x1x8xf32, #tpu.memory_space<vmem>>, %arg3: memref<2x8x8xf32, #tpu.memory_space<vmem>>, %arg4: memref<2x32x96xf32, #tpu.memory_space<vmem>>, %arg5: memref<2x32x32xf32, #tpu.memory_space<vmem>>, %arg6: memref<2x32x64xf32, #tpu.memory_space<vmem>>, %arg7: memref<2x64x32xf32, #tpu.memory_space<vmem>>, %arg8: memref<2x2x32xf32, #tpu.memory_space<vmem>>, %arg9: memref<1x32xf32, #tpu.memory_space<vmem>>, %arg10: memref<1x8x32xf32, #tpu.memory_space<vmem>>) attributes {dimension_semantics = [#tpu.dimension_semantics<parallel>], iteration_bounds = array<i64: 2>, scalar_prefetch = 0 : i64, scratch_operands = 0 : i64, tpu.core_type = #tpu.core_type<tc>, window_params = [{transform_indices = @transform_0, window_bounds = array<i64: 1, 8, 32>}, {transform_indices = @transform_1, window_bounds = array<i64: 1, 1, 8>}, {pipeline_mode = #tpu.pipeline_mode<synchronous>, transform_indices = @transform_2, window_bounds = array<i64: 2, 8, 8>}, {pipeline_mode = #tpu.pipeline_mode<synchronous>, transform_indices = @transform_3, window_bounds = array<i64: 2, 32, 96>}, {pipeline_mode = #tpu.pipeline_mode<synchronous>, transform_indices = @transform_4, window_bounds = array<i64: 2, 32, 32>}, {pipeline_mode = #tpu.pipeline_mode<synchronous>, transform_indices = @transform_5, window_bounds = array<i64: 2, 32, 64>}, {pipeline_mode = #tpu.pipeline_mode<synchronous>, transform_indices = @transform_6, window_bounds = array<i64: 2, 64, 32>}, {pipeline_mode = #tpu.pipeline_mode<synchronous>, transform_indices = @transform_7, window_bounds = array<i64: 2, 2, 32>}, {pipeline_mode = #tpu.pipeline_mode<synchronous>, transform_indices = @transform_8, window_bounds = array<i64: 1, 32>}, {transform_indices = @transform_9, window_bounds = array<i64: 1, 8, 32>}]} {
    %c0 = arith.constant 0 : index
    %c0_0 = arith.constant 0 : index
    %c0_1 = arith.constant 0 : index
    %0 = vector.load %arg1[%c0, %c0_0, %c0_1] : memref<1x8x32xf32, #tpu.memory_space<vmem>>, vector<1x8x32xf32>
    %1 = vector.shape_cast %0 : vector<1x8x32xf32> to vector<8x32xf32>
    %c0_2 = arith.constant 0 : index
    %c0_3 = arith.constant 0 : index
    %c0_4 = arith.constant 0 : index
    %2 = vector.load %arg2[%c0_2, %c0_3, %c0_4] : memref<1x1x8xf32, #tpu.memory_space<vmem>>, vector<1x1x8xf32>
    %3 = vector.shape_cast %2 : vector<1x1x8xf32> to vector<1x8xf32>
    %c0_5 = arith.constant 0 : index
    %c0_6 = arith.constant 0 : index
    %c0_7 = arith.constant 0 : index
    %4 = vector.load %arg3[%c0_5, %c0_6, %c0_7] : memref<2x8x8xf32, #tpu.memory_space<vmem>>, vector<2x8x8xf32>
    %c0_8 = arith.constant 0 : index
    %c0_9 = arith.constant 0 : index
    %c0_10 = arith.constant 0 : index
    %5 = vector.load %arg8[%c0_8, %c0_9, %c0_10] : memref<2x2x32xf32, #tpu.memory_space<vmem>>, vector<1x2x32xf32>
    %6 = vector.shape_cast %5 : vector<1x2x32xf32> to vector<2x32xf32>
    %7 = vector.extract_strided_slice %6 {offsets = [0, 0], sizes = [1, 32], strides = [1, 1]} : vector<2x32xf32> to vector<1x32xf32>
    %8 = arith.mulf %1, %1 : vector<8x32xf32>
    %cst = arith.constant dense<0.000000e+00> : vector<8xf32>
    %9 = vector.multi_reduction <add>, %8, %cst [1] : vector<8x32xf32> to vector<8xf32>
    %10 = vector.shape_cast %9 : vector<8xf32> to vector<8x1xf32>
    %cst_11 = arith.constant 3.200000e+01 : f32
    %11 = vector.broadcast %cst_11 : f32 to vector<8x1xf32>
    %12 = arith.divf %10, %11 : vector<8x1xf32>
    %cst_12 = arith.constant 9.99999997E-7 : f32
    %13 = vector.broadcast %cst_12 : f32 to vector<8x1xf32>
    %14 = arith.addf %12, %13 : vector<8x1xf32>
    %15 = math.rsqrt %14 : vector<8x1xf32>
    %16 = vector.broadcast %15 : vector<8x1xf32> to vector<8x32xf32>
    %17 = arith.mulf %1, %16 : vector<8x32xf32>
    %18 = vector.broadcast %7 : vector<1x32xf32> to vector<8x32xf32>
    %19 = arith.mulf %17, %18 : vector<8x32xf32>
    %c0_13 = arith.constant 0 : index
    %c0_14 = arith.constant 0 : index
    %c0_15 = arith.constant 0 : index
    %20 = vector.load %arg4[%c0_13, %c0_14, %c0_15] : memref<2x32x96xf32, #tpu.memory_space<vmem>>, vector<1x32x96xf32>
    %21 = vector.shape_cast %20 : vector<1x32x96xf32> to vector<32x96xf32>
    %cst_16 = arith.constant dense<0.000000e+00> : vector<8x96xf32>
    %22 = tpu.matmul %19, %21, %cst_16 {dimension_numbers = #tpu.dot_dimension_numbers<[1], [0], [0], [1], [0, 0, 1, 1], [], []>} : vector<8x32xf32>, vector<32x96xf32>, vector<8x96xf32> -> vector<8x96xf32>
    %23 = vector.extract_strided_slice %22 {offsets = [0, 0], sizes = [8, 32], strides = [1, 1]} : vector<8x96xf32> to vector<8x32xf32>
    %24 = vector.extract_strided_slice %22 {offsets = [0, 32], sizes = [8, 32], strides = [1, 1]} : vector<8x96xf32> to vector<8x32xf32>
    %25 = vector.extract_strided_slice %22 {offsets = [0, 64], sizes = [8, 32], strides = [1, 1]} : vector<8x96xf32> to vector<8x32xf32>
    %c0_17 = arith.constant 0 : index
    %c0_18 = arith.constant 0 : index
    %c0_19 = arith.constant 0 : index
    %26 = vector.load %arg5[%c0_17, %c0_18, %c0_19] : memref<2x32x32xf32, #tpu.memory_space<vmem>>, vector<1x32x32xf32>
    %27 = vector.shape_cast %26 : vector<1x32x32xf32> to vector<32x32xf32>
    %28 = vector.extract_strided_slice %23 {offsets = [0, 0], sizes = [8, 16], strides = [1, 1]} : vector<8x32xf32> to vector<8x16xf32>
    %29 = vector.extract_strided_slice %24 {offsets = [0, 0], sizes = [8, 16], strides = [1, 1]} : vector<8x32xf32> to vector<8x16xf32>
    %30 = vector.extract_strided_slice %25 {offsets = [0, 0], sizes = [8, 16], strides = [1, 1]} : vector<8x32xf32> to vector<8x16xf32>
    %cst_20 = arith.constant dense<0.000000e+00> : vector<8x8xf32>
    %31 = tpu.matmul %28, %29, %cst_20 {dimension_numbers = #tpu.dot_dimension_numbers<[1], [1], [0], [0], [0, 0, 1, 0], [], []>} : vector<8x16xf32>, vector<8x16xf32>, vector<8x8xf32> -> vector<8x8xf32>
    %32 = vector.extract_strided_slice %4 {offsets = [0, 0, 0], sizes = [1, 8, 8], strides = [1, 1, 1]} : vector<2x8x8xf32> to vector<1x8x8xf32>
    %33 = vector.shape_cast %32 : vector<1x8x8xf32> to vector<8x8xf32>
    %34 = arith.addf %31, %33 : vector<8x8xf32>
    %35 = vector.broadcast %3 : vector<1x8xf32> to vector<8x8xf32>
    %36 = arith.addf %34, %35 : vector<8x8xf32>
    %cst_21 = arith.constant dense<0xFF800000> : vector<8xf32>
    %37 = vector.multi_reduction <maximumf>, %36, %cst_21 [1] : vector<8x8xf32> to vector<8xf32>
    %38 = vector.shape_cast %37 : vector<8xf32> to vector<8x1xf32>
    %39 = vector.broadcast %38 : vector<8x1xf32> to vector<8x8xf32>
    %40 = arith.subf %36, %39 : vector<8x8xf32>
    %41 = math.exp %40 : vector<8x8xf32>
    %cst_22 = arith.constant dense<0.000000e+00> : vector<8xf32>
    %42 = vector.multi_reduction <add>, %41, %cst_22 [1] : vector<8x8xf32> to vector<8xf32>
    %43 = vector.shape_cast %42 : vector<8xf32> to vector<8x1xf32>
    %44 = vector.broadcast %43 : vector<8x1xf32> to vector<8x8xf32>
    %45 = arith.divf %41, %44 : vector<8x8xf32>
    %cst_23 = arith.constant dense<0.000000e+00> : vector<8x16xf32>
    %46 = tpu.matmul %45, %30, %cst_23 {dimension_numbers = #tpu.dot_dimension_numbers<[1], [0], [0], [1], [0, 0, 1, 1], [], []>} : vector<8x8xf32>, vector<8x16xf32>, vector<8x16xf32> -> vector<8x16xf32>
    %47 = vector.extract_strided_slice %27 {offsets = [0, 0], sizes = [16, 32], strides = [1, 1]} : vector<32x32xf32> to vector<16x32xf32>
    %cst_24 = arith.constant dense<0.000000e+00> : vector<8x32xf32>
    %48 = tpu.matmul %46, %47, %cst_24 {dimension_numbers = #tpu.dot_dimension_numbers<[1], [0], [0], [1], [0, 0, 1, 1], [], []>} : vector<8x16xf32>, vector<16x32xf32>, vector<8x32xf32> -> vector<8x32xf32>
    %49 = vector.extract_strided_slice %23 {offsets = [0, 16], sizes = [8, 16], strides = [1, 1]} : vector<8x32xf32> to vector<8x16xf32>
    %50 = vector.extract_strided_slice %24 {offsets = [0, 16], sizes = [8, 16], strides = [1, 1]} : vector<8x32xf32> to vector<8x16xf32>
    %51 = vector.extract_strided_slice %25 {offsets = [0, 16], sizes = [8, 16], strides = [1, 1]} : vector<8x32xf32> to vector<8x16xf32>
    %cst_25 = arith.constant dense<0.000000e+00> : vector<8x8xf32>
    %52 = tpu.matmul %49, %50, %cst_25 {dimension_numbers = #tpu.dot_dimension_numbers<[1], [1], [0], [0], [0, 0, 1, 0], [], []>} : vector<8x16xf32>, vector<8x16xf32>, vector<8x8xf32> -> vector<8x8xf32>
    %53 = vector.extract_strided_slice %4 {offsets = [1, 0, 0], sizes = [1, 8, 8], strides = [1, 1, 1]} : vector<2x8x8xf32> to vector<1x8x8xf32>
    %54 = vector.shape_cast %53 : vector<1x8x8xf32> to vector<8x8xf32>
    %55 = arith.addf %52, %54 : vector<8x8xf32>
    %56 = vector.broadcast %3 : vector<1x8xf32> to vector<8x8xf32>
    %57 = arith.addf %55, %56 : vector<8x8xf32>
    %cst_26 = arith.constant dense<0xFF800000> : vector<8xf32>
    %58 = vector.multi_reduction <maximumf>, %57, %cst_26 [1] : vector<8x8xf32> to vector<8xf32>
    %59 = vector.shape_cast %58 : vector<8xf32> to vector<8x1xf32>
    %60 = vector.broadcast %59 : vector<8x1xf32> to vector<8x8xf32>
    %61 = arith.subf %57, %60 : vector<8x8xf32>
    %62 = math.exp %61 : vector<8x8xf32>
    %cst_27 = arith.constant dense<0.000000e+00> : vector<8xf32>
    %63 = vector.multi_reduction <add>, %62, %cst_27 [1] : vector<8x8xf32> to vector<8xf32>
    %64 = vector.shape_cast %63 : vector<8xf32> to vector<8x1xf32>
    %65 = vector.broadcast %64 : vector<8x1xf32> to vector<8x8xf32>
    %66 = arith.divf %62, %65 : vector<8x8xf32>
    %cst_28 = arith.constant dense<0.000000e+00> : vector<8x16xf32>
    %67 = tpu.matmul %66, %51, %cst_28 {dimension_numbers = #tpu.dot_dimension_numbers<[1], [0], [0], [1], [0, 0, 1, 1], [], []>} : vector<8x8xf32>, vector<8x16xf32>, vector<8x16xf32> -> vector<8x16xf32>
    %68 = vector.extract_strided_slice %27 {offsets = [16, 0], sizes = [16, 32], strides = [1, 1]} : vector<32x32xf32> to vector<16x32xf32>
    %cst_29 = arith.constant dense<0.000000e+00> : vector<8x32xf32>
    %69 = tpu.matmul %67, %68, %cst_29 {dimension_numbers = #tpu.dot_dimension_numbers<[1], [0], [0], [1], [0, 0, 1, 1], [], []>} : vector<8x16xf32>, vector<16x32xf32>, vector<8x32xf32> -> vector<8x32xf32>
    %70 = arith.addf %48, %69 : vector<8x32xf32>
    %71 = arith.addf %1, %70 : vector<8x32xf32>
    %72 = vector.extract_strided_slice %6 {offsets = [1, 0], sizes = [1, 32], strides = [1, 1]} : vector<2x32xf32> to vector<1x32xf32>
    %73 = arith.mulf %71, %71 : vector<8x32xf32>
    %cst_30 = arith.constant dense<0.000000e+00> : vector<8xf32>
    %74 = vector.multi_reduction <add>, %73, %cst_30 [1] : vector<8x32xf32> to vector<8xf32>
    %75 = vector.shape_cast %74 : vector<8xf32> to vector<8x1xf32>
    %cst_31 = arith.constant 3.200000e+01 : f32
    %76 = vector.broadcast %cst_31 : f32 to vector<8x1xf32>
    %77 = arith.divf %75, %76 : vector<8x1xf32>
    %cst_32 = arith.constant 9.99999997E-7 : f32
    %78 = vector.broadcast %cst_32 : f32 to vector<8x1xf32>
    %79 = arith.addf %77, %78 : vector<8x1xf32>
    %80 = math.rsqrt %79 : vector<8x1xf32>
    %81 = vector.broadcast %80 : vector<8x1xf32> to vector<8x32xf32>
    %82 = arith.mulf %71, %81 : vector<8x32xf32>
    %83 = vector.broadcast %72 : vector<1x32xf32> to vector<8x32xf32>
    %84 = arith.mulf %82, %83 : vector<8x32xf32>
    %c0_33 = arith.constant 0 : index
    %c0_34 = arith.constant 0 : index
    %c0_35 = arith.constant 0 : index
    %85 = vector.load %arg6[%c0_33, %c0_34, %c0_35] : memref<2x32x64xf32, #tpu.memory_space<vmem>>, vector<1x32x64xf32>
    %86 = vector.shape_cast %85 : vector<1x32x64xf32> to vector<32x64xf32>
    %cst_36 = arith.constant dense<0.000000e+00> : vector<8x64xf32>
    %87 = tpu.matmul %84, %86, %cst_36 {dimension_numbers = #tpu.dot_dimension_numbers<[1], [0], [0], [1], [0, 0, 1, 1], [], []>} : vector<8x32xf32>, vector<32x64xf32>, vector<8x64xf32> -> vector<8x64xf32>
    %cst_37 = arith.constant 0.000000e+00 : f32
    %88 = vector.broadcast %cst_37 : f32 to vector<8x64xf32>
    %89 = arith.maximumf %87, %88 : vector<8x64xf32>
    %c0_38 = arith.constant 0 : index
    %c0_39 = arith.constant 0 : index
    %c0_40 = arith.constant 0 : index
    %90 = vector.load %arg7[%c0_38, %c0_39, %c0_40] : memref<2x64x32xf32, #tpu.memory_space<vmem>>, vector<1x64x32xf32>
    %91 = vector.shape_cast %90 : vector<1x64x32xf32> to vector<64x32xf32>
    %cst_41 = arith.constant dense<0.000000e+00> : vector<8x32xf32>
    %92 = tpu.matmul %89, %91, %cst_41 {dimension_numbers = #tpu.dot_dimension_numbers<[1], [0], [0], [1], [0, 0, 1, 1], [], []>} : vector<8x64xf32>, vector<64x32xf32>, vector<8x32xf32> -> vector<8x32xf32>
    %93 = arith.addf %71, %92 : vector<8x32xf32>
    %c1 = arith.constant 1 : index
    %c0_42 = arith.constant 0 : index
    %c0_43 = arith.constant 0 : index
    %94 = vector.load %arg8[%c1, %c0_42, %c0_43] : memref<2x2x32xf32, #tpu.memory_space<vmem>>, vector<1x2x32xf32>
    %95 = vector.shape_cast %94 : vector<1x2x32xf32> to vector<2x32xf32>
    %96 = vector.extract_strided_slice %95 {offsets = [0, 0], sizes = [1, 32], strides = [1, 1]} : vector<2x32xf32> to vector<1x32xf32>
    %97 = arith.mulf %93, %93 : vector<8x32xf32>
    %cst_44 = arith.constant dense<0.000000e+00> : vector<8xf32>
    %98 = vector.multi_reduction <add>, %97, %cst_44 [1] : vector<8x32xf32> to vector<8xf32>
    %99 = vector.shape_cast %98 : vector<8xf32> to vector<8x1xf32>
    %cst_45 = arith.constant 3.200000e+01 : f32
    %100 = vector.broadcast %cst_45 : f32 to vector<8x1xf32>
    %101 = arith.divf %99, %100 : vector<8x1xf32>
    %cst_46 = arith.constant 9.99999997E-7 : f32
    %102 = vector.broadcast %cst_46 : f32 to vector<8x1xf32>
    %103 = arith.addf %101, %102 : vector<8x1xf32>
    %104 = math.rsqrt %103 : vector<8x1xf32>
    %105 = vector.broadcast %104 : vector<8x1xf32> to vector<8x32xf32>
    %106 = arith.mulf %93, %105 : vector<8x32xf32>
    %107 = vector.broadcast %96 : vector<1x32xf32> to vector<8x32xf32>
    %108 = arith.mulf %106, %107 : vector<8x32xf32>
    %c1_47 = arith.constant 1 : index
    %c0_48 = arith.constant 0 : index
    %c0_49 = arith.constant 0 : index
    %109 = vector.load %arg4[%c1_47, %c0_48, %c0_49] : memref<2x32x96xf32, #tpu.memory_space<vmem>>, vector<1x32x96xf32>
    %110 = vector.shape_cast %109 : vector<1x32x96xf32> to vector<32x96xf32>
    %cst_50 = arith.constant dense<0.000000e+00> : vector<8x96xf32>
    %111 = tpu.matmul %108, %110, %cst_50 {dimension_numbers = #tpu.dot_dimension_numbers<[1], [0], [0], [1], [0, 0, 1, 1], [], []>} : vector<8x32xf32>, vector<32x96xf32>, vector<8x96xf32> -> vector<8x96xf32>
    %112 = vector.extract_strided_slice %111 {offsets = [0, 0], sizes = [8, 32], strides = [1, 1]} : vector<8x96xf32> to vector<8x32xf32>
    %113 = vector.extract_strided_slice %111 {offsets = [0, 32], sizes = [8, 32], strides = [1, 1]} : vector<8x96xf32> to vector<8x32xf32>
    %114 = vector.extract_strided_slice %111 {offsets = [0, 64], sizes = [8, 32], strides = [1, 1]} : vector<8x96xf32> to vector<8x32xf32>
    %c1_51 = arith.constant 1 : index
    %c0_52 = arith.constant 0 : index
    %c0_53 = arith.constant 0 : index
    %115 = vector.load %arg5[%c1_51, %c0_52, %c0_53] : memref<2x32x32xf32, #tpu.memory_space<vmem>>, vector<1x32x32xf32>
    %116 = vector.shape_cast %115 : vector<1x32x32xf32> to vector<32x32xf32>
    %117 = vector.extract_strided_slice %112 {offsets = [0, 0], sizes = [8, 16], strides = [1, 1]} : vector<8x32xf32> to vector<8x16xf32>
    %118 = vector.extract_strided_slice %113 {offsets = [0, 0], sizes = [8, 16], strides = [1, 1]} : vector<8x32xf32> to vector<8x16xf32>
    %119 = vector.extract_strided_slice %114 {offsets = [0, 0], sizes = [8, 16], strides = [1, 1]} : vector<8x32xf32> to vector<8x16xf32>
    %cst_54 = arith.constant dense<0.000000e+00> : vector<8x8xf32>
    %120 = tpu.matmul %117, %118, %cst_54 {dimension_numbers = #tpu.dot_dimension_numbers<[1], [1], [0], [0], [0, 0, 1, 0], [], []>} : vector<8x16xf32>, vector<8x16xf32>, vector<8x8xf32> -> vector<8x8xf32>
    %121 = vector.extract_strided_slice %4 {offsets = [0, 0, 0], sizes = [1, 8, 8], strides = [1, 1, 1]} : vector<2x8x8xf32> to vector<1x8x8xf32>
    %122 = vector.shape_cast %121 : vector<1x8x8xf32> to vector<8x8xf32>
    %123 = arith.addf %120, %122 : vector<8x8xf32>
    %124 = vector.broadcast %3 : vector<1x8xf32> to vector<8x8xf32>
    %125 = arith.addf %123, %124 : vector<8x8xf32>
    %cst_55 = arith.constant dense<0xFF800000> : vector<8xf32>
    %126 = vector.multi_reduction <maximumf>, %125, %cst_55 [1] : vector<8x8xf32> to vector<8xf32>
    %127 = vector.shape_cast %126 : vector<8xf32> to vector<8x1xf32>
    %128 = vector.broadcast %127 : vector<8x1xf32> to vector<8x8xf32>
    %129 = arith.subf %125, %128 : vector<8x8xf32>
    %130 = math.exp %129 : vector<8x8xf32>
    %cst_56 = arith.constant dense<0.000000e+00> : vector<8xf32>
    %131 = vector.multi_reduction <add>, %130, %cst_56 [1] : vector<8x8xf32> to vector<8xf32>
    %132 = vector.shape_cast %131 : vector<8xf32> to vector<8x1xf32>
    %133 = vector.broadcast %132 : vector<8x1xf32> to vector<8x8xf32>
    %134 = arith.divf %130, %133 : vector<8x8xf32>
    %cst_57 = arith.constant dense<0.000000e+00> : vector<8x16xf32>
    %135 = tpu.matmul %134, %119, %cst_57 {dimension_numbers = #tpu.dot_dimension_numbers<[1], [0], [0], [1], [0, 0, 1, 1], [], []>} : vector<8x8xf32>, vector<8x16xf32>, vector<8x16xf32> -> vector<8x16xf32>
    %136 = vector.extract_strided_slice %116 {offsets = [0, 0], sizes = [16, 32], strides = [1, 1]} : vector<32x32xf32> to vector<16x32xf32>
    %cst_58 = arith.constant dense<0.000000e+00> : vector<8x32xf32>
    %137 = tpu.matmul %135, %136, %cst_58 {dimension_numbers = #tpu.dot_dimension_numbers<[1], [0], [0], [1], [0, 0, 1, 1], [], []>} : vector<8x16xf32>, vector<16x32xf32>, vector<8x32xf32> -> vector<8x32xf32>
    %138 = vector.extract_strided_slice %112 {offsets = [0, 16], sizes = [8, 16], strides = [1, 1]} : vector<8x32xf32> to vector<8x16xf32>
    %139 = vector.extract_strided_slice %113 {offsets = [0, 16], sizes = [8, 16], strides = [1, 1]} : vector<8x32xf32> to vector<8x16xf32>
    %140 = vector.extract_strided_slice %114 {offsets = [0, 16], sizes = [8, 16], strides = [1, 1]} : vector<8x32xf32> to vector<8x16xf32>
    %cst_59 = arith.constant dense<0.000000e+00> : vector<8x8xf32>
    %141 = tpu.matmul %138, %139, %cst_59 {dimension_numbers = #tpu.dot_dimension_numbers<[1], [1], [0], [0], [0, 0, 1, 0], [], []>} : vector<8x16xf32>, vector<8x16xf32>, vector<8x8xf32> -> vector<8x8xf32>
    %142 = vector.extract_strided_slice %4 {offsets = [1, 0, 0], sizes = [1, 8, 8], strides = [1, 1, 1]} : vector<2x8x8xf32> to vector<1x8x8xf32>
    %143 = vector.shape_cast %142 : vector<1x8x8xf32> to vector<8x8xf32>
    %144 = arith.addf %141, %143 : vector<8x8xf32>
    %145 = vector.broadcast %3 : vector<1x8xf32> to vector<8x8xf32>
    %146 = arith.addf %144, %145 : vector<8x8xf32>
    %cst_60 = arith.constant dense<0xFF800000> : vector<8xf32>
    %147 = vector.multi_reduction <maximumf>, %146, %cst_60 [1] : vector<8x8xf32> to vector<8xf32>
    %148 = vector.shape_cast %147 : vector<8xf32> to vector<8x1xf32>
    %149 = vector.broadcast %148 : vector<8x1xf32> to vector<8x8xf32>
    %150 = arith.subf %146, %149 : vector<8x8xf32>
    %151 = math.exp %150 : vector<8x8xf32>
    %cst_61 = arith.constant dense<0.000000e+00> : vector<8xf32>
    %152 = vector.multi_reduction <add>, %151, %cst_61 [1] : vector<8x8xf32> to vector<8xf32>
    %153 = vector.shape_cast %152 : vector<8xf32> to vector<8x1xf32>
    %154 = vector.broadcast %153 : vector<8x1xf32> to vector<8x8xf32>
    %155 = arith.divf %151, %154 : vector<8x8xf32>
    %cst_62 = arith.constant dense<0.000000e+00> : vector<8x16xf32>
    %156 = tpu.matmul %155, %140, %cst_62 {dimension_numbers = #tpu.dot_dimension_numbers<[1], [0], [0], [1], [0, 0, 1, 1], [], []>} : vector<8x8xf32>, vector<8x16xf32>, vector<8x16xf32> -> vector<8x16xf32>
    %157 = vector.extract_strided_slice %116 {offsets = [16, 0], sizes = [16, 32], strides = [1, 1]} : vector<32x32xf32> to vector<16x32xf32>
    %cst_63 = arith.constant dense<0.000000e+00> : vector<8x32xf32>
    %158 = tpu.matmul %156, %157, %cst_63 {dimension_numbers = #tpu.dot_dimension_numbers<[1], [0], [0], [1], [0, 0, 1, 1], [], []>} : vector<8x16xf32>, vector<16x32xf32>, vector<8x32xf32> -> vector<8x32xf32>
    %159 = arith.addf %137, %158 : vector<8x32xf32>
    %160 = arith.addf %93, %159 : vector<8x32xf32>
    %161 = vector.extract_strided_slice %95 {offsets = [1, 0], sizes = [1, 32], strides = [1, 1]} : vector<2x32xf32> to vector<1x32xf32>
    %162 = arith.mulf %160, %160 : vector<8x32xf32>
    %cst_64 = arith.constant dense<0.000000e+00> : vector<8xf32>
    %163 = vector.multi_reduction <add>, %162, %cst_64 [1] : vector<8x32xf32> to vector<8xf32>
    %164 = vector.shape_cast %163 : vector<8xf32> to vector<8x1xf32>
    %cst_65 = arith.constant 3.200000e+01 : f32
    %165 = vector.broadcast %cst_65 : f32 to vector<8x1xf32>
    %166 = arith.divf %164, %165 : vector<8x1xf32>
    %cst_66 = arith.constant 9.99999997E-7 : f32
    %167 = vector.broadcast %cst_66 : f32 to vector<8x1xf32>
    %168 = arith.addf %166, %167 : vector<8x1xf32>
    %169 = math.rsqrt %168 : vector<8x1xf32>
    %170 = vector.broadcast %169 : vector<8x1xf32> to vector<8x32xf32>
    %171 = arith.mulf %160, %170 : vector<8x32xf32>
    %172 = vector.broadcast %161 : vector<1x32xf32> to vector<8x32xf32>
    %173 = arith.mulf %171, %172 : vector<8x32xf32>
    %c1_67 = arith.constant 1 : index
    %c0_68 = arith.constant 0 : index
    %c0_69 = arith.constant 0 : index
    %174 = vector.load %arg6[%c1_67, %c0_68, %c0_69] : memref<2x32x64xf32, #tpu.memory_space<vmem>>, vector<1x32x64xf32>
    %175 = vector.shape_cast %174 : vector<1x32x64xf32> to vector<32x64xf32>
    %cst_70 = arith.constant dense<0.000000e+00> : vector<8x64xf32>
    %176 = tpu.matmul %173, %175, %cst_70 {dimension_numbers = #tpu.dot_dimension_numbers<[1], [0], [0], [1], [0, 0, 1, 1], [], []>} : vector<8x32xf32>, vector<32x64xf32>, vector<8x64xf32> -> vector<8x64xf32>
    %cst_71 = arith.constant 0.000000e+00 : f32
    %177 = vector.broadcast %cst_71 : f32 to vector<8x64xf32>
    %178 = arith.maximumf %176, %177 : vector<8x64xf32>
    %c1_72 = arith.constant 1 : index
    %c0_73 = arith.constant 0 : index
    %c0_74 = arith.constant 0 : index
    %179 = vector.load %arg7[%c1_72, %c0_73, %c0_74] : memref<2x64x32xf32, #tpu.memory_space<vmem>>, vector<1x64x32xf32>
    %180 = vector.shape_cast %179 : vector<1x64x32xf32> to vector<64x32xf32>
    %cst_75 = arith.constant dense<0.000000e+00> : vector<8x32xf32>
    %181 = tpu.matmul %178, %180, %cst_75 {dimension_numbers = #tpu.dot_dimension_numbers<[1], [0], [0], [1], [0, 0, 1, 1], [], []>} : vector<8x64xf32>, vector<64x32xf32>, vector<8x32xf32> -> vector<8x32xf32>
    %182 = arith.addf %160, %181 : vector<8x32xf32>
    %c0_76 = arith.constant 0 : index
    %c0_77 = arith.constant 0 : index
    %183 = vector.load %arg9[%c0_76, %c0_77] : memref<1x32xf32, #tpu.memory_space<vmem>>, vector<1x32xf32>
    %184 = arith.mulf %182, %182 : vector<8x32xf32>
    %cst_78 = arith.constant dense<0.000000e+00> : vector<8xf32>
    %185 = vector.multi_reduction <add>, %184, %cst_78 [1] : vector<8x32xf32> to vector<8xf32>
    %186 = vector.shape_cast %185 : vector<8xf32> to vector<8x1xf32>
    %cst_79 = arith.constant 3.200000e+01 : f32
    %187 = vector.broadcast %cst_79 : f32 to vector<8x1xf32>
    %188 = arith.divf %186, %187 : vector<8x1xf32>
    %cst_80 = arith.constant 9.99999997E-7 : f32
    %189 = vector.broadcast %cst_80 : f32 to vector<8x1xf32>
    %190 = arith.addf %188, %189 : vector<8x1xf32>
    %191 = math.rsqrt %190 : vector<8x1xf32>
    %192 = vector.broadcast %191 : vector<8x1xf32> to vector<8x32xf32>
    %193 = arith.mulf %182, %192 : vector<8x32xf32>
    %194 = vector.broadcast %183 : vector<1x32xf32> to vector<8x32xf32>
    %195 = arith.mulf %193, %194 : vector<8x32xf32>
    %c0_81 = arith.constant 0 : index
    %c0_82 = arith.constant 0 : index
    %c0_83 = arith.constant 0 : index
    %196 = vector.load %arg10[%c0_81, %c0_82, %c0_83] : memref<1x8x32xf32, #tpu.memory_space<vmem>>, vector<1x8x32xf32>
    %197 = vector.shape_cast %196 : vector<1x8x32xf32> to vector<8x32xf32>
    %198 = vector.shape_cast %195 : vector<8x32xf32> to vector<1x8x32xf32>
    tpu.vector_store %arg10[%c0_81, %c0_82, %c0_83], %198 {strides = array<i32>} : memref<1x8x32xf32, #tpu.memory_space<vmem>>, vector<1x8x32xf32>,
    return
  }
  func.func @transform_0(%arg0: i32) -> (i32, i32, i32) {
    %c0_i32 = arith.constant 0 : i32
    %c0_i32_0 = arith.constant 0 : i32
    %c0_i32_1 = arith.constant 0 : i32
    return %arg0, %c0_i32, %c0_i32_0 : i32, i32, i32
  }
  func.func @transform_1(%arg0: i32) -> (i32, i32, i32) {
    %c0_i32 = arith.constant 0 : i32
    %c0_i32_0 = arith.constant 0 : i32
    %c0_i32_1 = arith.constant 0 : i32
    return %arg0, %c0_i32, %c0_i32_0 : i32, i32, i32
  }
  func.func @transform_2(%arg0: i32) -> (i32, i32, i32) {
    %c0_i32 = arith.constant 0 : i32
    %c0_i32_0 = arith.constant 0 : i32
    %c0_i32_1 = arith.constant 0 : i32
    %c0_i32_2 = arith.constant 0 : i32
    return %c0_i32, %c0_i32_0, %c0_i32_1 : i32, i32, i32
  }
  func.func @transform_3(%arg0: i32) -> (i32, i32, i32) {
    %c0_i32 = arith.constant 0 : i32
    %c0_i32_0 = arith.constant 0 : i32
    %c0_i32_1 = arith.constant 0 : i32
    %c0_i32_2 = arith.constant 0 : i32
    return %c0_i32, %c0_i32_0, %c0_i32_1 : i32, i32, i32
  }
  func.func @transform_4(%arg0: i32) -> (i32, i32, i32) {
    %c0_i32 = arith.constant 0 : i32
    %c0_i32_0 = arith.constant 0 : i32
    %c0_i32_1 = arith.constant 0 : i32
    %c0_i32_2 = arith.constant 0 : i32
    return %c0_i32, %c0_i32_0, %c0_i32_1 : i32, i32, i32
  }
  func.func @transform_5(%arg0: i32) -> (i32, i32, i32) {
    %c0_i32 = arith.constant 0 : i32
    %c0_i32_0 = arith.constant 0 : i32
    %c0_i32_1 = arith.constant 0 : i32
    %c0_i32_2 = arith.constant 0 : i32
    return %c0_i32, %c0_i32_0, %c0_i32_1 : i32, i32, i32
  }
  func.func @transform_6(%arg0: i32) -> (i32, i32, i32) {
    %c0_i32 = arith.constant 0 : i32
    %c0_i32_0 = arith.constant 0 : i32
    %c0_i32_1 = arith.constant 0 : i32
    %c0_i32_2 = arith.constant 0 : i32
    return %c0_i32, %c0_i32_0, %c0_i32_1 : i32, i32, i32
  }
  func.func @transform_7(%arg0: i32) -> (i32, i32, i32) {
    %c0_i32 = arith.constant 0 : i32
    %c0_i32_0 = arith.constant 0 : i32
    %c0_i32_1 = arith.constant 0 : i32
    %c0_i32_2 = arith.constant 0 : i32
    return %c0_i32, %c0_i32_0, %c0_i32_1 : i32, i32, i32
  }
  func.func @transform_8(%arg0: i32) -> (i32, i32) {
    %c0_i32 = arith.constant 0 : i32
    %c0_i32_0 = arith.constant 0 : i32
    %c0_i32_1 = arith.constant 0 : i32
    return %c0_i32, %c0_i32_0 : i32, i32
  }
  func.func @transform_9(%arg0: i32) -> (i32, i32, i32) {
    %c0_i32 = arith.constant 0 : i32
    %c0_i32_0 = arith.constant 0 : i32
    %c0_i32_1 = arith.constant 0 : i32
    return %arg0, %c0_i32, %c0_i32_0 : i32, i32, i32
  }
}

</mosaic_0001>

<llo_original>
// kernel: t5_generation_loss.5
$region0: #{t5_generation_loss.5}
  #allocation0 [shape = 'u32[]', space=smem, size = 0x4, offset = 0x4, fixed_abs, tag = 'smem constant byte address 0x4 - core index']
  #allocation1 [shape = 'u32[144,128]{1,0:T(1,128)}', space=vmem, size = 0x12000, scoped, tag = 'internal scratch']
  %s0 = inlined_call_operand.vmem [shape: f32[16,32], index: 0, kind: input, shape index: {}]
  %s1 = inlined_call_operand.vmem [shape: f32[64,32], index: 1, kind: input, shape index: {}]
  %s2 = inlined_call_operand.vmem [shape: s32[16,1], index: 2, kind: input, shape index: {}]
  %s3 = inlined_call_operand.hbm [shape: f32[1,1], index: 3, kind: output, shape index: {}]
  %s4 = sld [smem:[#allocation0]]
  $region22: #{t5_generation_loss.5} parent=0
    _
  %s6 = ssub.s32 1, %s4
  %s7 = scalar_select 0, %s6, %s4
  $region1: #{t5_generation_loss.5} parent=0
    #allocation2 [shape = 'u8[512]{0}', space=vmem, size = 0x400, scoped, tag = 'output window, operand 0, single buffered']
    #allocation3 [shape = 's32[1]{0}', space=sflag, size = 0x4, scoped, tag = 'scoped memory for t5_generation_loss.5']
    %8 = vsyncpa [#allocation3], 0
    // Predicated region
    $region2: #{t5_generation_loss.5} parent=1 // pred_check
      _
    $region3: #{t5_generation_loss.5} parent=1 // pred_check_branch
      %10 = sbr.rel (0) target = $region5
    $region4: #{t5_generation_loss.5} parent=1 // pred_region
      _
    $region5: #{t5_generation_loss.5} parent=1 // pred_fallthru
      _
    // Predicated region
    $region6: #{t5_generation_loss.5} parent=1 // pred_check
      _
    $region7: #{t5_generation_loss.5} parent=1 // pred_check_branch
      %12 = sbr.rel (0) target = $region9
    $region8: #{t5_generation_loss.5} parent=1 // pred_region
      _
    $region9: #{t5_generation_loss.5} parent=1 // pred_fallthru
      _
    // Predicated region
    $region10: #{t5_generation_loss.5} parent=1 // pred_check
      _
    $region11: #{t5_generation_loss.5} parent=1 // pred_check_branch
      %14 = sbr.rel (0) target = $region13
    $region12: #{t5_generation_loss.5} parent=1 // pred_region
      _
    $region13: #{t5_generation_loss.5} parent=1 // pred_fallthru
      _
    %v15 = vld [vmem:[%s0] sm:$0xff]
    %v16 = vld [vmem:[%s0 + $0x8] sm:$0xff]
    %v17 = vmul.f32 %v15, 0.17677669
    %v18 = vmul.f32 %v16, 0.17677669
    %v19 = vld [vmem:[%s1] sm:$0xff]
    %v20 = vld [vmem:[%s1 + $0x8] sm:$0xff]
    %v21 = vld [vmem:[%s1 + $0x10] sm:$0xff]
    %v22 = vld [vmem:[%s1 + $0x18] sm:$0xff]
    %v23 = vld [vmem:[%s1 + $0x20] sm:$0xff]
    %v24 = vld [vmem:[%s1 + $0x28] sm:$0xff]
    %v25 = vld [vmem:[%s1 + $0x30] sm:$0xff]
    %v26 = vld [vmem:[%s1 + $0x38] sm:$0xff]
    %vm27 = vcmask 261120
    %v29 = vsel %vm27, %v17, 0
    %v32 = vsel %vm27, %v18, 0
    %v35 = vsel %vm27, %v19, 0
    %v38 = vsel %vm27, %v20, 0
    %v41 = vsel %vm27, %v21, 0
    %v44 = vsel %vm27, %v22, 0
    %v47 = vsel %vm27, %v23, 0
    %v50 = vsel %vm27, %v24, 0
    %v53 = vsel %vm27, %v25, 0
    %v56 = vsel %vm27, %v26, 0
    %58 = vmatprep.subr.mxu0 0.0
    %59 = vmatpush1.xpose.msra.mxu0 %v35
    %60 = vmatprep.subr.mxu0 0.0
    %61 = vmatpush1.xpose.msra.mxu0 %v38
    %62 = vmatprep.subr.mxu0 0.0
    %63 = vmatpush1.xpose.msra.mxu0 %v41
    %64 = vmatprep.subr.mxu0 0.0
    %65 = vmatpush1.xpose.msra.mxu0 %v44
    %66 = vmatprep.subr.mxu0 0.0
    %67 = vmatpush1.xpose.msra.mxu0 %v47
    %68 = vmatprep.subr.mxu0 0.0
    %69 = vmatpush1.xpose.msra.mxu0 %v50
    %70 = vmatprep.subr.mxu0 0.0
    %71 = vmatpush1.xpose.msra.mxu0 %v53
    %72 = vmatprep.subr.mxu0 0.0
    %73 = vmatpush1.xpose.msra.mxu0 %v56
    %74 = vmatprep.subr.mxu0 0.0
    %75 = vmatpush1.xpose.msra.mxu0 0.0
    %76 = vmatprep.subr.mxu0 0.0
    %77 = vmatpush1.xpose.msra.mxu0 0.0
    %78 = vmatprep.subr.mxu0 0.0
    %79 = vmatpush1.xpose.msra.mxu0 0.0
    %80 = vmatprep.subr.mxu0 0.0
    %81 = vmatpush1.xpose.msra.mxu0 0.0
    %82 = vmatprep.subr.mxu0 0.0
    %83 = vmatpush1.xpose.msra.mxu0 0.0
    %84 = vmatprep.subr.mxu0 0.0
    %85 = vmatpush1.xpose.msra.mxu0 0.0
    %86 = vmatprep.subr.mxu0 0.0
    %87 = vmatpush1.xpose.msra.mxu0 0.0
    %88 = vmatprep.subr.mxu0 0.0
    %89 = vmatpush1.xpose.msra.mxu0 0.0
    %90 = vmatprep.subr.mxu0 0.0
    %91 = vmatpush1.xpose.msra.mxu0 0.0
    %92 = vmatprep.subr.mxu0 0.0
    %93 = vmatpush1.xpose.msra.mxu0 0.0
    %94 = vmatprep.subr.mxu0 0.0
    %95 = vmatpush1.xpose.msra.mxu0 0.0
    %96 = vmatprep.subr.mxu0 0.0
    %97 = vmatpush1.xpose.msra.mxu0 0.0
    %98 = vmatprep.subr.mxu0 0.0
    %99 = vmatpush1.xpose.msra.mxu0 0.0
    %100 = vmatprep.subr.mxu0 0.0
    %101 = vmatpush1.xpose.msra.mxu0 0.0
    %102 = vmatprep.subr.mxu0 0.0
    %103 = vmatpush1.xpose.msra.mxu0 0.0
    %104 = vmatprep.subr.mxu0 0.0
    %105 = vmatpush1.xpose.msra.mxu0 0.0
    %106 = vmatprep.subr.mxu0 0.0
    %107 = vmatpush1.xpose.msra.mxu0 0.0
    %108 = vmatprep.subr.mxu0 0.0
    %109 = vmatpush1.xpose.msra.mxu0 0.0
    %110 = vmatprep.subr.mxu0 0.0
    %111 = vmatpush1.xpose.msra.mxu0 0.0
    %112 = vmatprep.subr.mxu0 0.0
    %113 = vmatpush1.xpose.msra.mxu0 0.0
    %114 = vmatprep.subr.mxu0 0.0
    %115 = vmatpush1.xpose.msra.mxu0 0.0
    %116 = vmatprep.subr.mxu0 0.0
    %117 = vmatpush1.xpose.msra.mxu0 0.0
    %118 = vmatprep.subr.mxu0 0.0
    %119 = vmatpush1.xpose.msra.mxu0 0.0
    %120 = vmatprep.subr.mxu0 0.0
    %121 = vmatpush1.xpose.msra.mxu0 0.0
    %122 = vmatprep.mubr.f32.mxu0 0.0
    %123 = vmatmul.mubr.f32.gmra.mrb[0].mxu0 %v29
    %v124 = vpop.f32.mrb[0].mxu0
    %v125 = vadd.f32 0.0, %v124
    %v126 = vpop.f32.mrb[0].mxu0
    %127 = vmatprep.mubr.f32.mxu0 0.0
    %128 = vmatmul.mubr.f32.gmra.mrb[0].mxu0 %v32
    %v129 = vpop.f32.mrb[0].mxu0
    %v130 = vadd.f32 0.0, %v129
    %v131 = vpop.f32.mrb[0].mxu0
    %132 = vdwg.mxu0
    %v133 = vld [vmem:[%s2] sm:$0xff]
    %v134 = vld [vmem:[%s2 + $0x8] sm:$0xff]
    %vm135 = vcmask 523264
    %v136 = vsel %vm135, %v125, -inf
    %137 = vmax.xlane.f32.xlu0 %v136
    %v138 = vpop.xlane.xlu0 %137
    %v139 = vsel %vm135, %v130, -inf
    %140 = vmax.xlane.f32.xlu0 %v139
    %v141 = vpop.xlane.xlu0 %140
    %v142 = vsub.f32 %v125, %v138
    %v143 = vsub.f32 %v130, %v141
    %v144 = vmul.f32 %v142, 1.442695
    %v145 = vpow.pop %v144
    %v146 = vmul.f32 %v143, 1.442695
    %v147 = vpow.pop %v146
    %v148 = vsel %vm135, %v145, 0.0
    %149 = vadd.xlane.f32.xlu0 %v148
    %v150 = vpop.xlane.xlu0 %149
    %v151 = vsel %vm135, %v147, 0.0
    %152 = vadd.xlane.f32.xlu0 %v151
    %v153 = vpop.xlane.xlu0 %152
    %v154 = vlog2.pop %v150
    %v155 = vmul.f32 %v154, 0.6931472
    %v156 = vlog2.pop %v153
    %v157 = vmul.f32 %v156, 0.6931472
    %v158 = vadd.f32 %v155, %v138
    %v159 = vadd.f32 %v157, %v141
    %v160 = vlaneseq
    %v161 = vand.u32 %v160, 127
    %162 = vset.pattern.permute.xlu0 0
    %163 = vperm.xlu0 %162, %v133
    %v164 = vpop.permute.xlu0 %163
    %165 = vset.pattern.permute.xlu0 0
    %166 = vperm.xlu0 %165, %v134
    %v167 = vpop.permute.xlu0 %166
    %vm168 = vcmp.eq.s32.totalorder %v161, %v164
    %vm169 = vcmp.eq.s32.totalorder %v161, %v167
    %v170 = vsel %vm168, 1, 0
    %v171 = vsel %vm169, 1, 0
    %v172 = vcvt.s32.f32 %v170
    %v173 = vcvt.s32.f32 %v171
    %v174 = vmul.f32 %v172, %v125
    %v175 = vmul.f32 %v173, %v130
    %v176 = vsel %vm135, %v174, 0.0
    %177 = vadd.xlane.f32.xlu0 %v176
    %v178 = vpop.xlane.xlu0 %177
    %v179 = vsel %vm135, %v175, 0.0
    %180 = vadd.xlane.f32.xlu0 %v179
    %v181 = vpop.xlane.xlu0 %180
    %v182 = vsub.f32 %v158, %v178
    %v183 = vsub.f32 %v159, %v181
    %vm184 = vcmp.ne.s32.totalorder %v133, 4294967196
    %vm185 = vcmp.ne.s32.totalorder %v134, 4294967196
    %v186 = vsel %vm184, 1, 0
    %v187 = vsel %vm185, 1, 0
    %v188 = vcvt.s32.f32 %v186
    %v189 = vcvt.s32.f32 %v187
    %v190 = vmul.f32 %v182, %v188
    %v191 = vmul.f32 %v183, %v189
    %vm192 = vcmask 7168
    %v193 = vsel %vm192, %v190, 0.0
    %v194 = vsel %vm192, %v191, 0.0
    %v195 = vadd.f32 %v193, %v194
    %196 = vadd.xlane.f32.xlu0 %v195
    %v197 = vpop.xlane.xlu0 %196
    %v198 = vrot.slane %v197, 4
    %v199 = vadd.f32 %v197, %v198
    %v200 = vrot.slane %v199, 2
    %v201 = vadd.f32 %v199, %v200
    %v202 = vrot.slane %v201, 1
    %v203 = vadd.f32 %v201, %v202
    %s204 = vtos %v203
    %v205 = vsel %vm192, %v188, 0.0
    %v206 = vsel %vm192, %v189, 0.0
    %v207 = vadd.f32 %v205, %v206
    %208 = vadd.xlane.f32.xlu0 %v207
    %v209 = vpop.xlane.xlu0 %208
    %v210 = vrot.slane %v209, 4
    %v211 = vadd.f32 %v209, %v210
    %v212 = vrot.slane %v211, 2
    %v213 = vadd.f32 %v211, %v212
    %v214 = vrot.slane %v213, 1
    %v215 = vadd.f32 %v213, %v214
    %s216 = vtos %v215
    %s217 = smax.f32 %s216, 1.0
    %v218 = vstv %s217
    %v219 = vrcp.pop %v218
    %s220 = vtos %v219
    %s221 = smul.f32 %s204, %s220
    %v222 = vstv %s221
    %vm223 = vcmask 0
    %224 = vst.msk [vmem:[#allocation2] sm:$0x1] %vm223, %v222
    // Predicated region
    $region14: #{t5_generation_loss.5} parent=1 // pred_check
      _
    $region15: #{t5_generation_loss.5} parent=1 // pred_check_branch
      %226 = sbr.rel (0) target = $region17
    $region16: #{t5_generation_loss.5} parent=1 // pred_region
      %s228 = ssub.s32 16, 16
      %229 = vsyncadd [#allocation3], %s228
      %s231 = sshll.u32 [#allocation2], 4
      %s232 = int_to_ptr.vmem [resolvable:$true] %s231
      %234 = dma.vmem_to_hbm [thread:$0]  %s232, 16, %s3, [#allocation3]
    $region17: #{t5_generation_loss.5} parent=1 // pred_fallthru
      _
    // Predicated region
    $region18: #{t5_generation_loss.5} parent=1 // pred_check
      _
    $region19: #{t5_generation_loss.5} parent=1 // pred_check_branch
      %236 = sbr.rel (0) target = $region21
    $region20: #{t5_generation_loss.5} parent=1 // pred_region
      %237 = dma.done [#allocation3], 16
    $region21: #{t5_generation_loss.5} parent=1 // pred_fallthru
      _
    %238 = vsyncpa [#allocation3], 1

// kernel: t5_generation_loss.3
$region0: #{t5_generation_loss.3}
  #allocation0 [shape = 'u32[]', space=smem, size = 0x4, offset = 0x4, fixed_abs, tag = 'smem constant byte address 0x4 - core index']
  #allocation1 [shape = 'u32[144,128]{1,0:T(1,128)}', space=vmem, size = 0x12000, scoped, tag = 'internal scratch']
  %s0 = inlined_call_operand.vmem [shape: f32[2,8,32], index: 0, kind: input, shape index: {}]
  %s1 = inlined_call_operand.vmem [shape: f32[2,1,8], index: 1, kind: input, shape index: {}]
  %s2 = inlined_call_operand.vmem [shape: f32[2,8,8], index: 2, kind: input, shape index: {}]
  %s3 = inlined_call_operand.vmem [shape: f32[2,32,96], index: 3, kind: input, shape index: {}]
  %s4 = inlined_call_operand.vmem [shape: f32[2,32,32], index: 4, kind: input, shape index: {}]
  %s5 = inlined_call_operand.vmem [shape: f32[2,32,64], index: 5, kind: input, shape index: {}]
  %s6 = inlined_call_operand.vmem [shape: f32[2,64,32], index: 6, kind: input, shape index: {}]
  %s7 = inlined_call_operand.vmem [shape: f32[2,2,32], index: 7, kind: input, shape index: {}]
  %s8 = inlined_call_operand.vmem [shape: f32[1,32], index: 8, kind: input, shape index: {}]
  %s9 = inlined_call_operand.vmem [shape: f32[2,8,32], index: 9, kind: output, shape index: {}]
  %s10 = sld [smem:[#allocation0]]
  $region69: #{t5_generation_loss.3} parent=0
    _
  %s12 = ssub.s32 1, %s10
  %s13 = scalar_select 0, %s12, %s10
  loop: start=0, step=1, limit=4
  $region2: #{t5_generation_loss.3} parent=0 // loop_pre_header
    _
  $region3: #{t5_generation_loss.3} parent=0 // loop_header
    %s15 = sphi 0, %s19
    %p16 = scmp.ge.s32.totalorder %s15, 4
    %s25 = sphi 0, %s27
    %s28 = sphi 0, %s25
    %s29 = sphi 0, %s28
    %s45 = sphi 0, %s29
    %s51 = sphi 0, %s53
    %s54 = sphi 0, %s51
    %s55 = sphi 0, %s54
    %s71 = sphi 0, %s55
    %s75 = sphi 0, %s75
    %s77 = sphi 0, %s75
    %s78 = sphi 0, %s77
    %s92 = sphi 0, %s78
    %s96 = sphi 0, %s96
    %s98 = sphi 0, %s96
    %s99 = sphi 0, %s98
    %s113 = sphi 0, %s99
    %s117 = sphi 0, %s117
    %s119 = sphi 0, %s117
    %s120 = sphi 0, %s119
    %s134 = sphi 0, %s120
    %s138 = sphi 0, %s138
    %s140 = sphi 0, %s138
    %s141 = sphi 0, %s140
    %s155 = sphi 0, %s141
    %s159 = sphi 0, %s159
    %s161 = sphi 0, %s159
    %s162 = sphi 0, %s161
    %s176 = sphi 0, %s162
    %s180 = sphi 0, %s180
    %s182 = sphi 0, %s180
    %s183 = sphi 0, %s182
    %s197 = sphi 0, %s183
    %s201 = sphi 0, %s201
    %s203 = sphi 0, %s201
    %s204 = sphi 0, %s203
    %s218 = sphi 0, %s204
    %s224 = sphi 0, %s226
    %s227 = sphi 0, %s224
    %s228 = sphi 0, %s227
    %s244 = sphi 0, %s228
  $region4: #{t5_generation_loss.3} parent=0 // loop_header_branch
    %18 = sbr.rel (%p16) target = $region8
  $region5: #{t5_generation_loss.3} parent=0 // loop_body
    %s20 = ssub.s32 %s15, 1
    %s21 = ssub.s32 %s15, 2
    %s22 = sadd.s32 %s15, 1
    %s23 = ssub.s32 %s15, %s22
    %p24 = scmp.eq.s32.totalorder %s23, 0
    %s26 = sadd.s32 %s25, 1
    %s27 = scalar_select %p24, %s25, %s26
    %p30 = pneg %p24
    %p31 = scmp.eq.s32.totalorder %s15, 1
    %p32 = por %p30, %p31
    %p33 = scmp.ne.s32.totalorder %s25, %s28
    %p34 = scmp.eq.s32.totalorder %s15, 0
    %p35 = por %p33, %p34
    %p36 = scmp.ne.s32.totalorder %s25, %s28
    %p37 = scmp.eq.s32.totalorder %s20, 1
    %p38 = por %p36, %p37
    %p39 = scmp.ne.s32.totalorder %s28, %s29
    %p40 = scmp.eq.s32.totalorder %s20, 0
    %p41 = por %p39, %p40
    %p42 = scmp.ne.s32.totalorder %s28, %s29
    %p43 = scmp.eq.s32.totalorder %s21, 1
    %p44 = por %p42, %p43
    %p46 = scmp.ne.s32.totalorder %s29, %s45
    %p47 = scmp.eq.s32.totalorder %s21, 0
    %p48 = por %p46, %p47
    %s49 = ssub.s32 %s15, %s22
    %p50 = scmp.eq.s32.totalorder %s49, 0
    %s52 = sadd.s32 %s51, 1
    %s53 = scalar_select %p50, %s51, %s52
    %p56 = pneg %p50
    %p57 = scmp.eq.s32.totalorder %s15, 1
    %p58 = por %p56, %p57
    %p59 = scmp.ne.s32.totalorder %s51, %s54
    %p60 = scmp.eq.s32.totalorder %s15, 0
    %p61 = por %p59, %p60
    %p62 = scmp.ne.s32.totalorder %s51, %s54
    %p63 = scmp.eq.s32.totalorder %s20, 1
    %p64 = por %p62, %p63
    %p65 = scmp.ne.s32.totalorder %s54, %s55
    %p66 = scmp.eq.s32.totalorder %s20, 0
    %p67 = por %p65, %p66
    %p68 = scmp.ne.s32.totalorder %s54, %s55
    %p69 = scmp.eq.s32.totalorder %s21, 1
    %p70 = por %p68, %p69
    %p72 = scmp.ne.s32.totalorder %s55, %s71
    %p73 = scmp.eq.s32.totalorder %s21, 0
    %p74 = por %p72, %p73
    %s76 = sadd.s32 %s75, 1
    %p79 = scmp.eq.s32.totalorder %s15, 1
    %p80 = scmp.ne.s32.totalorder %s75, %s77
    %p81 = scmp.eq.s32.totalorder %s15, 0
    %p82 = por %p80, %p81
    %p83 = scmp.ne.s32.totalorder %s75, %s77
    %p84 = scmp.eq.s32.totalorder %s20, 1
    %p85 = por %p83, %p84
    %p86 = scmp.ne.s32.totalorder %s77, %s78
    %p87 = scmp.eq.s32.totalorder %s20, 0
    %p88 = por %p86, %p87
    %p89 = scmp.ne.s32.totalorder %s77, %s78
    %p90 = scmp.eq.s32.totalorder %s21, 1
    %p91 = por %p89, %p90
    %p93 = scmp.ne.s32.totalorder %s78, %s92
    %p94 = scmp.eq.s32.totalorder %s21, 0
    %p95 = por %p93, %p94
    %s97 = sadd.s32 %s96, 1
    %p100 = scmp.eq.s32.totalorder %s15, 1
    %p101 = scmp.ne.s32.totalorder %s96, %s98
    %p102 = scmp.eq.s32.totalorder %s15, 0
    %p103 = por %p101, %p102
    %p104 = scmp.ne.s32.totalorder %s96, %s98
    %p105 = scmp.eq.s32.totalorder %s20, 1
    %p106 = por %p104, %p105
    %p107 = scmp.ne.s32.totalorder %s98, %s99
    %p108 = scmp.eq.s32.totalorder %s20, 0
    %p109 = por %p107, %p108
    %p110 = scmp.ne.s32.totalorder %s98, %s99
    %p111 = scmp.eq.s32.totalorder %s21, 1
    %p112 = por %p110, %p111
    %p114 = scmp.ne.s32.totalorder %s99, %s113
    %p115 = scmp.eq.s32.totalorder %s21, 0
    %p116 = por %p114, %p115
    %s118 = sadd.s32 %s117, 1
    %p121 = scmp.eq.s32.totalorder %s15, 1
    %p122 = scmp.ne.s32.totalorder %s117, %s119
    %p123 = scmp.eq.s32.totalorder %s15, 0
    %p124 = por %p122, %p123
    %p125 = scmp.ne.s32.totalorder %s117, %s119
    %p126 = scmp.eq.s32.totalorder %s20, 1
    %p127 = por %p125, %p126
    %p128 = scmp.ne.s32.totalorder %s119, %s120
    %p129 = scmp.eq.s32.totalorder %s20, 0
    %p130 = por %p128, %p129
    %p131 = scmp.ne.s32.totalorder %s119, %s120
    %p132 = scmp.eq.s32.totalorder %s21, 1
    %p133 = por %p131, %p132
    %p135 = scmp.ne.s32.totalorder %s120, %s134
    %p136 = scmp.eq.s32.totalorder %s21, 0
    %p137 = por %p135, %p136
    %s139 = sadd.s32 %s138, 1
    %p142 = scmp.eq.s32.totalorder %s15, 1
    %p143 = scmp.ne.s32.totalorder %s138, %s140
    %p144 = scmp.eq.s32.totalorder %s15, 0
    %p145 = por %p143, %p144
    %p146 = scmp.ne.s32.totalorder %s138, %s140
    %p147 = scmp.eq.s32.totalorder %s20, 1
    %p148 = por %p146, %p147
    %p149 = scmp.ne.s32.totalorder %s140, %s141
    %p150 = scmp.eq.s32.totalorder %s20, 0
    %p151 = por %p149, %p150
    %p152 = scmp.ne.s32.totalorder %s140, %s141
    %p153 = scmp.eq.s32.totalorder %s21, 1
    %p154 = por %p152, %p153
    %p156 = scmp.ne.s32.totalorder %s141, %s155
    %p157 = scmp.eq.s32.totalorder %s21, 0
    %p158 = por %p156, %p157
    %s160 = sadd.s32 %s159, 1
    %p163 = scmp.eq.s32.totalorder %s15, 1
    %p164 = scmp.ne.s32.totalorder %s159, %s161
    %p165 = scmp.eq.s32.totalorder %s15, 0
    %p166 = por %p164, %p165
    %p167 = scmp.ne.s32.totalorder %s159, %s161
    %p168 = scmp.eq.s32.totalorder %s20, 1
    %p169 = por %p167, %p168
    %p170 = scmp.ne.s32.totalorder %s161, %s162
    %p171 = scmp.eq.s32.totalorder %s20, 0
    %p172 = por %p170, %p171
    %p173 = scmp.ne.s32.totalorder %s161, %s162
    %p174 = scmp.eq.s32.totalorder %s21, 1
    %p175 = por %p173, %p174
    %p177 = scmp.ne.s32.totalorder %s162, %s176
    %p178 = scmp.eq.s32.totalorder %s21, 0
    %p179 = por %p177, %p178
    %s181 = sadd.s32 %s180, 1
    %p184 = scmp.eq.s32.totalorder %s15, 1
    %p185 = scmp.ne.s32.totalorder %s180, %s182
    %p186 = scmp.eq.s32.totalorder %s15, 0
    %p187 = por %p185, %p186
    %p188 = scmp.ne.s32.totalorder %s180, %s182
    %p189 = scmp.eq.s32.totalorder %s20, 1
    %p190 = por %p188, %p189
    %p191 = scmp.ne.s32.totalorder %s182, %s183
    %p192 = scmp.eq.s32.totalorder %s20, 0
    %p193 = por %p191, %p192
    %p194 = scmp.ne.s32.totalorder %s182, %s183
    %p195 = scmp.eq.s32.totalorder %s21, 1
    %p196 = por %p194, %p195
    %p198 = scmp.ne.s32.totalorder %s183, %s197
    %p199 = scmp.eq.s32.totalorder %s21, 0
    %p200 = por %p198, %p199
    %s202 = sadd.s32 %s201, 1
    %p205 = scmp.eq.s32.totalorder %s15, 1
    %p206 = scmp.ne.s32.totalorder %s201, %s203
    %p207 = scmp.eq.s32.totalorder %s15, 0
    %p208 = por %p206, %p207
    %p209 = scmp.ne.s32.totalorder %s201, %s203
    %p210 = scmp.eq.s32.totalorder %s20, 1
    %p211 = por %p209, %p210
    %p212 = scmp.ne.s32.totalorder %s203, %s204
    %p213 = scmp.eq.s32.totalorder %s20, 0
    %p214 = por %p212, %p213
    %p215 = scmp.ne.s32.totalorder %s203, %s204
    %p216 = scmp.eq.s32.totalorder %s21, 1
    %p217 = por %p215, %p216
    %p219 = scmp.ne.s32.totalorder %s204, %s218
    %p220 = scmp.eq.s32.totalorder %s21, 0
    %p221 = por %p219, %p220
    %s222 = ssub.s32 %s15, %s22
    %p223 = scmp.eq.s32.totalorder %s222, 0
    %s225 = sadd.s32 %s224, 1
    %s226 = scalar_select %p223, %s224, %s225
    %p229 = pneg %p223
    %p230 = scmp.eq.s32.totalorder %s15, 1
    %p231 = por %p229, %p230
    %p232 = scmp.ne.s32.totalorder %s224, %s227
    %p233 = scmp.eq.s32.totalorder %s15, 0
    %p234 = por %p232, %p233
    %p235 = scmp.ne.s32.totalorder %s224, %s227
    %p236 = scmp.eq.s32.totalorder %s20, 1
    %p237 = por %p235, %p236
    %p238 = scmp.ne.s32.totalorder %s227, %s228
    %p239 = scmp.eq.s32.totalorder %s20, 0
    %p240 = por %p238, %p239
    %p241 = scmp.ne.s32.totalorder %s227, %s228
    %p242 = scmp.eq.s32.totalorder %s21, 1
    %p243 = por %p241, %p242
    %p245 = scmp.ne.s32.totalorder %s228, %s244
    %p246 = scmp.eq.s32.totalorder %s21, 0
    %p247 = por %p245, %p246
    %p248 = scmp.le.s32.totalorder 1, %s15
    %p249 = scmp.lt.s32.totalorder %s15, 3
    %p250 = pnand %p248, %p249
    %p251 = pneg %p250
    // Predicated region
    $region9: #{t5_generation_loss.3} parent=5 // pred_check
      _
    $region10: #{t5_generation_loss.3} parent=5 // pred_check_branch
      %253 = sbr.rel (%p250) target = $region12
    $region11: #{t5_generation_loss.3} parent=5 // pred_region
      %s254 = ssub.s32 %s15, 1
      // Predicated region
      $region13: #{t5_generation_loss.3} parent=11 // pred_check
        %p255 = pneg %p88
      $region14: #{t5_generation_loss.3} parent=11 // pred_check_branch
        %257 = sbr.rel (%p255) target = $region16
      $region15: #{t5_generation_loss.3} parent=11 // pred_region
        _
      $region16: #{t5_generation_loss.3} parent=11 // pred_fallthru
        _
      // Predicated region
      $region17: #{t5_generation_loss.3} parent=11 // pred_check
        %p258 = pneg %p109
      $region18: #{t5_generation_loss.3} parent=11 // pred_check_branch
        %260 = sbr.rel (%p258) target = $region20
      $region19: #{t5_generation_loss.3} parent=11 // pred_region
        _
      $region20: #{t5_generation_loss.3} parent=11 // pred_fallthru
        _
      // Predicated region
      $region21: #{t5_generation_loss.3} parent=11 // pred_check
        %p261 = pneg %p130
      $region22: #{t5_generation_loss.3} parent=11 // pred_check_branch
        %263 = sbr.rel (%p261) target = $region24
      $region23: #{t5_generation_loss.3} parent=11 // pred_region
        _
      $region24: #{t5_generation_loss.3} parent=11 // pred_fallthru
        _
      // Predicated region
      $region25: #{t5_generation_loss.3} parent=11 // pred_check
        %p264 = pneg %p151
      $region26: #{t5_generation_loss.3} parent=11 // pred_check_branch
        %266 = sbr.rel (%p264) target = $region28
      $region27: #{t5_generation_loss.3} parent=11 // pred_region
        _
      $region28: #{t5_generation_loss.3} parent=11 // pred_fallthru
        _
      // Predicated region
      $region29: #{t5_generation_loss.3} parent=11 // pred_check
        %p267 = pneg %p172
      $region30: #{t5_generation_loss.3} parent=11 // pred_check_branch
        %269 = sbr.rel (%p267) target = $region32
      $region31: #{t5_generation_loss.3} parent=11 // pred_region
        _
      $region32: #{t5_generation_loss.3} parent=11 // pred_fallthru
        _
      // Predicated region
      $region33: #{t5_generation_loss.3} parent=11 // pred_check
        %p270 = pneg %p193
      $region34: #{t5_generation_loss.3} parent=11 // pred_check_branch
        %272 = sbr.rel (%p270) target = $region36
      $region35: #{t5_generation_loss.3} parent=11 // pred_region
        _
      $region36: #{t5_generation_loss.3} parent=11 // pred_fallthru
        _
      // Predicated region
      $region37: #{t5_generation_loss.3} parent=11 // pred_check
        %p273 = pneg %p214
      $region38: #{t5_generation_loss.3} parent=11 // pred_check_branch
        %275 = sbr.rel (%p273) target = $region40
      $region39: #{t5_generation_loss.3} parent=11 // pred_region
        _
      $region40: #{t5_generation_loss.3} parent=11 // pred_fallthru
        _
    $region12: #{t5_generation_loss.3} parent=5 // pred_fallthru
      _
    %p276 = scmp.lt.s32.totalorder %s15, 2
    // Predicated region
    $region41: #{t5_generation_loss.3} parent=5 // pred_check
      %p277 = pneg %p276
    $region42: #{t5_generation_loss.3} parent=5 // pred_check_branch
      %279 = sbr.rel (%p277) target = $region44
    $region43: #{t5_generation_loss.3} parent=5 // pred_region
      // Predicated region
      $region45: #{t5_generation_loss.3} parent=43 // pred_check
        %p280 = pneg %p35
      $region46: #{t5_generation_loss.3} parent=43 // pred_check_branch
        %282 = sbr.rel (%p280) target = $region48
      $region47: #{t5_generation_loss.3} parent=43 // pred_region
        %p283 = scmp.lt.s32.totalorder %s15, 1
        %s284 = scalar_select %p283, %s15, 1
        %s285 = smul.addr %s284, 8
        %s286 = scalar_lea.vmem %s0, %s285
      $region48: #{t5_generation_loss.3} parent=43 // pred_fallthru
        _
      // Predicated region
      $region49: #{t5_generation_loss.3} parent=43 // pred_check
        %p287 = pneg %p61
      $region50: #{t5_generation_loss.3} parent=43 // pred_check_branch
        %289 = sbr.rel (%p287) target = $region52
      $region51: #{t5_generation_loss.3} parent=43 // pred_region
        %p290 = scmp.lt.s32.totalorder %s15, 1
        %s291 = scalar_select %p290, %s15, 1
        %s292 = scalar_lea.vmem %s1, %s291
      $region52: #{t5_generation_loss.3} parent=43 // pred_fallthru
        _
    $region44: #{t5_generation_loss.3} parent=5 // pred_fallthru
      _
    %p293 = scmp.le.s32.totalorder 1, %s15
    %p294 = scmp.lt.s32.totalorder %s15, 3
    %p295 = pnand %p293, %p294
    %p296 = pneg %p295
    // Predicated region
    $region53: #{t5_generation_loss.3} parent=5 // pred_check
      _
    $region54: #{t5_generation_loss.3} parent=5 // pred_check_branch
      %298 = sbr.rel (%p295) target = $region56
    $region55: #{t5_generation_loss.3} parent=5 // pred_region
      %s299 = ssub.s32 %s15, 1
      %p300 = scmp.lt.s32.totalorder %s20, 1
      %s301 = scalar_select %p300, %s20, 1
      %s302 = smul.addr %s301, 8
      %s303 = scalar_lea.vmem %s0, %s302
      %p304 = pneg %p41
      %p305 = pneg %p38
      %p306 = scmp.lt.s32.totalorder %s20, 1
      %s307 = scalar_select %p306, %s20, 1
      %s308 = scalar_lea.vmem %s1, %s307
      %p309 = pneg %p67
      %p310 = pneg %p64
      %p311 = pneg %p88
      %p312 = pneg %p85
      %p313 = pneg %p109
      %p314 = pneg %p106
      %p315 = pneg %p130
      %p316 = pneg %p127
      %p317 = pneg %p151
      %p318 = pneg %p148
      %p319 = pneg %p172
      %p320 = pneg %p169
      %p321 = pneg %p193
      %p322 = pneg %p190
      %p323 = pneg %p214
      %p324 = pneg %p211
      %p325 = pneg %p240
      %p326 = pneg %p237
      %p327 = scmp.lt.s32.totalorder %s20, 1
      %s328 = scalar_select %p327, %s20, 1
      %s329 = smul.addr %s328, 8
      %s330 = scalar_lea.vmem %s9, %s329
      %p331 = scmp.lt.s32.totalorder %s20, 1
      %s332 = scalar_select %p331, %s20, 1
      %s333 = smul.addr %s332, 8
      %s334 = scalar_lea.vmem %s0, %s333
      %p335 = scmp.lt.s32.totalorder %s20, 1
      %s336 = scalar_select %p335, %s20, 1
      %s337 = scalar_lea.vmem %s1, %s336
      %p338 = scmp.lt.s32.totalorder %s20, 1
      %s339 = scalar_select %p338, %s20, 1
      %s340 = smul.addr %s339, 8
      %s341 = scalar_lea.vmem %s9, %s340
      %v342 = vld [vmem:[%s334] sm:$0xff]
      %v343 = vld [vmem:[%s337] sm:$0x1]
      %v344 = vld [vmem:[%s2] sm:$0xff]
      %v345 = vld [vmem:[%s2 + $0x8] sm:$0xff]
      %v346 = vld [vmem:[%s7] sm:$0x3]
      %v347 = vmul.f32 %v342, %v342
      %vm348 = vcmask 261120
      %v349 = vsel %vm348, %v347, 0.0
      %350 = vadd.xlane.f32.xlu0 %v349
      %v351 = vpop.xlane.xlu0 %350
      %v352 = vrcp.pop 32.0
      %v353 = vmul.f32 %v351, %v352
      %v354 = vadd.f32 %v353, 1e-06
      %v355 = vrsqrt.pop %v354
      %v356 = vmul.f32 %v342, %v355
      %v357 = vlaneseq
      %v358 = vshrl.u32 %v357, 7
      %v359 = vsub.s32 0, %v358
      %v360 = vrot.slane %v346, %v359
      %v361 = vmul.f32 %v356, %v360
      %v362 = vld [vmem:[%s3] sm:$0xff]
      %v363 = vld [vmem:[%s3 + $0x8] sm:$0xff]
      %v364 = vld [vmem:[%s3 + $0x10] sm:$0xff]
      %v365 = vld [vmem:[%s3 + $0x18] sm:$0xff]
      %v367 = vsel %vm348, %v361, 0
      %369 = vmatprep.subr.mxu0 0.0
      %370 = vmatpush1.msra.mxu0 %v362
      %371 = vmatprep.subr.mxu0 0.0
      %372 = vmatpush1.msra.mxu0 %v363
      %373 = vmatprep.subr.mxu0 0.0
      %374 = vmatpush1.msra.mxu0 %v364
      %375 = vmatprep.subr.mxu0 0.0
      %376 = vmatpush1.msra.mxu0 %v365
      %377 = vmatprep.subr.mxu0 0.0
      %378 = vmatpush1.msra.mxu0 0.0
      %379 = vmatprep.subr.mxu0 0.0
      %380 = vmatpush1.msra.mxu0 0.0
      %381 = vmatprep.subr.mxu0 0.0
      %382 = vmatpush1.msra.mxu0 0.0
      %383 = vmatprep.subr.mxu0 0.0
      %384 = vmatpush1.msra.mxu0 0.0
      %385 = vmatprep.subr.mxu0 0.0
      %386 = vmatpush1.msra.mxu0 0.0
      %387 = vmatprep.subr.mxu0 0.0
      %388 = vmatpush1.msra.mxu0 0.0
      %389 = vmatprep.subr.mxu0 0.0
      %390 = vmatpush1.msra.mxu0 0.0
      %391 = vmatprep.subr.mxu0 0.0
      %392 = vmatpush1.msra.mxu0 0.0
      %393 = vmatprep.subr.mxu0 0.0
      %394 = vmatpush1.msra.mxu0 0.0
      %395 = vmatprep.subr.mxu0 0.0
      %396 = vmatpush1.msra.mxu0 0.0
      %397 = vmatprep.subr.mxu0 0.0
      %398 = vmatpush1.msra.mxu0 0.0
      %399 = vmatprep.subr.mxu0 0.0
      %400 = vmatpush1.msra.mxu0 0.0
      %401 = vmatprep.subr.mxu0 0.0
      %402 = vmatpush1.msra.mxu0 0.0
      %403 = vmatprep.subr.mxu0 0.0
      %404 = vmatpush1.msra.mxu0 0.0
      %405 = vmatprep.subr.mxu0 0.0
      %406 = vmatpush1.msra.mxu0 0.0
      %407 = vmatprep.subr.mxu0 0.0
      %408 = vmatpush1.msra.mxu0 0.0
      %409 = vmatprep.subr.mxu0 0.0
      %410 = vmatpush1.msra.mxu0 0.0
      %411 = vmatprep.subr.mxu0 0.0
      %412 = vmatpush1.msra.mxu0 0.0
      %413 = vmatprep.subr.mxu0 0.0
      %414 = vmatpush1.msra.mxu0 0.0
      %415 = vmatprep.subr.mxu0 0.0
      %416 = vmatpush1.msra.mxu0 0.0
      %417 = vmatprep.subr.mxu0 0.0
      %418 = vmatpush1.msra.mxu0 0.0
      %419 = vmatprep.subr.mxu0 0.0
      %420 = vmatpush1.msra.mxu0 0.0
      %421 = vmatprep.subr.mxu0 0.0
      %422 = vmatpush1.msra.mxu0 0.0
      %423 = vmatprep.subr.mxu0 0.0
      %424 = vmatpush1.msra.mxu0 0.0
      %425 = vmatprep.subr.mxu0 0.0
      %426 = vmatpush1.msra.mxu0 0.0
      %427 = vmatprep.subr.mxu0 0.0
      %428 = vmatpush1.msra.mxu0 0.0
      %429 = vmatprep.subr.mxu0 0.0
      %430 = vmatpush1.msra.mxu0 0.0
      %431 = vmatprep.subr.mxu0 0.0
      %432 = vmatpush1.msra.mxu0 0.0
      %433 = vmatprep.mubr.f32.mxu0 0.0
      %434 = vmatmul.mubr.f32.gmra.mrb[0].mxu0 %v367
      %v435 = vpop.f32.mrb[0].mxu0
      %v436 = vadd.f32 0.0, %v435
      %v437 = vpop.f32.mrb[0].mxu0
      %438 = vdwg.mxu0
      %v439 = vld [vmem:[%s4] sm:$0xff]
      %v440 = vld [vmem:[%s4 + $0x8] sm:$0xff]
      %v441 = vld [vmem:[%s4 + $0x10] sm:$0xff]
      %v442 = vld [vmem:[%s4 + $0x18] sm:$0xff]
      %444 = vrot.lane.b32.xlu0 %v436, 96
      %v445 = vpop.permute.xlu0 %444
      %vm446 = vcmask 130048
      %v447 = vsel %vm446, %v436, 0
      %v449 = vsel %vm446, %v445, 0
      %451 = vmatprep.subr.mxu0 0.0
      %452 = vmatpush1.xpose.msra.mxu0 %v449
      %453 = vmatprep.subr.mxu0 0.0
      %454 = vmatpush1.xpose.msra.mxu0 0.0
      %455 = vmatprep.subr.mxu0 0.0
      %456 = vmatpush1.xpose.msra.mxu0 0.0
      %457 = vmatprep.subr.mxu0 0.0
      %458 = vmatpush1.xpose.msra.mxu0 0.0
      %459 = vmatprep.subr.mxu0 0.0
      %460 = vmatpush1.xpose.msra.mxu0 0.0
      %461 = vmatprep.subr.mxu0 0.0
      %462 = vmatpush1.xpose.msra.mxu0 0.0
      %463 = vmatprep.subr.mxu0 0.0
      %464 = vmatpush1.xpose.msra.mxu0 0.0
      %465 = vmatprep.subr.mxu0 0.0
      %466 = vmatpush1.xpose.msra.mxu0 0.0
      %467 = vmatprep.subr.mxu0 0.0
      %468 = vmatpush1.xpose.msra.mxu0 0.0
      %469 = vmatprep.subr.mxu0 0.0
      %470 = vmatpush1.xpose.msra.mxu0 0.0
      %471 = vmatprep.subr.mxu0 0.0
      %472 = vmatpush1.xpose.msra.mxu0 0.0
      %473 = vmatprep.subr.mxu0 0.0
      %474 = vmatpush1.xpose.msra.mxu0 0.0
      %475 = vmatprep.subr.mxu0 0.0
      %476 = vmatpush1.xpose.msra.mxu0 0.0
      %477 = vmatprep.subr.mxu0 0.0
      %478 = vmatpush1.xpose.msra.mxu0 0.0
      %479 = vmatprep.subr.mxu0 0.0
      %480 = vmatpush1.xpose.msra.mxu0 0.0
      %481 = vmatprep.subr.mxu0 0.0
      %482 = vmatpush1.xpose.msra.mxu0 0.0
      %483 = vmatprep.subr.mxu0 0.0
      %484 = vmatpush1.xpose.msra.mxu0 0.0
      %485 = vmatprep.subr.mxu0 0.0
      %486 = vmatpush1.xpose.msra.mxu0 0.0
      %487 = vmatprep.subr.mxu0 0.0
      %488 = vmatpush1.xpose.msra.mxu0 0.0
      %489 = vmatprep.subr.mxu0 0.0
      %490 = vmatpush1.xpose.msra.mxu0 0.0
      %491 = vmatprep.subr.mxu0 0.0
      %492 = vmatpush1.xpose.msra.mxu0 0.0
      %493 = vmatprep.subr.mxu0 0.0
      %494 = vmatpush1.xpose.msra.mxu0 0.0
      %495 = vmatprep.subr.mxu0 0.0
      %496 = vmatpush1.xpose.msra.mxu0 0.0
      %497 = vmatprep.subr.mxu0 0.0
      %498 = vmatpush1.xpose.msra.mxu0 0.0
      %499 = vmatprep.subr.mxu0 0.0
      %500 = vmatpush1.xpose.msra.mxu0 0.0
      %501 = vmatprep.subr.mxu0 0.0
      %502 = vmatpush1.xpose.msra.mxu0 0.0
      %503 = vmatprep.subr.mxu0 0.0
      %504 = vmatpush1.xpose.msra.mxu0 0.0
      %505 = vmatprep.subr.mxu0 0.0
      %506 = vmatpush1.xpose.msra.mxu0 0.0
      %507 = vmatprep.subr.mxu0 0.0
      %508 = vmatpush1.xpose.msra.mxu0 0.0
      %509 = vmatprep.subr.mxu0 0.0
      %510 = vmatpush1.xpose.msra.mxu0 0.0
      %511 = vmatprep.subr.mxu0 0.0
      %512 = vmatpush1.xpose.msra.mxu0 0.0
      %513 = vmatprep.subr.mxu0 0.0
      %514 = vmatpush1.xpose.msra.mxu0 0.0
      %515 = vmatprep.mubr.f32.mxu0 0.0
      %516 = vmatmul.mubr.f32.gmra.mrb[0].mxu0 %v447
      %v517 = vpop.f32.mrb[0].mxu0
      %v518 = vadd.f32 %v344, %v517
      %v519 = vpop.f32.mrb[0].mxu0
      %520 = vdwg.mxu0
      %v522 = vlaneseq
      %v523 = vshrl.u32 %v522, 7
      %v524 = vsub.s32 0, %v523
      %v525 = vrot.slane %v343, %v524
      %v527 = vadd.f32 %v518, %v525
      %vm528 = vcmask 64512
      %v529 = vsel %vm528, %v527, -inf
      %530 = vmax.xlane.f32.xlu0 %v529
      %v531 = vpop.xlane.xlu0 %530
      %v532 = vsub.f32 %v527, %v531
      %v533 = vmul.f32 %v532, 1.442695
      %v534 = vpow.pop %v533
      %v535 = vsel %vm528, %v534, 0.0
      %536 = vadd.xlane.f32.xlu0 %v535
      %v537 = vpop.xlane.xlu0 %536
      %v538 = vrcp.pop %v537
      %v539 = vmul.f32 %v534, %v538
      %540 = vrot.lane.b32.xlu0 %v436, 64
      %v541 = vpop.permute.xlu0 %540
      %v544 = vsel %vm528, %v539, 0
      %546 = vmatprep.subr.mxu0 0.0
      %547 = vmatpush1.msra.mxu0 %v541
      %548 = vmatprep.subr.mxu0 0.0
      %549 = vmatpush1.msra.mxu0 0.0
      %550 = vmatprep.subr.mxu0 0.0
      %551 = vmatpush1.msra.mxu0 0.0
      %552 = vmatprep.subr.mxu0 0.0
      %553 = vmatpush1.msra.mxu0 0.0
      %554 = vmatprep.subr.mxu0 0.0
      %555 = vmatpush1.msra.mxu0 0.0
      %556 = vmatprep.subr.mxu0 0.0
      %557 = vmatpush1.msra.mxu0 0.0
      %558 = vmatprep.subr.mxu0 0.0
      %559 = vmatpush1.msra.mxu0 0.0
      %560 = vmatprep.subr.mxu0 0.0
      %561 = vmatpush1.msra.mxu0 0.0
      %562 = vmatprep.subr.mxu0 0.0
      %563 = vmatpush1.msra.mxu0 0.0
      %564 = vmatprep.subr.mxu0 0.0
      %565 = vmatpush1.msra.mxu0 0.0
      %566 = vmatprep.subr.mxu0 0.0
      %567 = vmatpush1.msra.mxu0 0.0
      %568 = vmatprep.subr.mxu0 0.0
      %569 = vmatpush1.msra.mxu0 0.0
      %570 = vmatprep.subr.mxu0 0.0
      %571 = vmatpush1.msra.mxu0 0.0
      %572 = vmatprep.subr.mxu0 0.0
      %573 = vmatpush1.msra.mxu0 0.0
      %574 = vmatprep.subr.mxu0 0.0
      %575 = vmatpush1.msra.mxu0 0.0
      %576 = vmatprep.subr.mxu0 0.0
      %577 = vmatpush1.msra.mxu0 0.0
      %578 = vmatprep.subr.mxu0 0.0
      %579 = vmatpush1.msra.mxu0 0.0
      %580 = vmatprep.subr.mxu0 0.0
      %581 = vmatpush1.msra.mxu0 0.0
      %582 = vmatprep.subr.mxu0 0.0
      %583 = vmatpush1.msra.mxu0 0.0
      %584 = vmatprep.subr.mxu0 0.0
      %585 = vmatpush1.msra.mxu0 0.0
      %586 = vmatprep.subr.mxu0 0.0
      %587 = vmatpush1.msra.mxu0 0.0
      %588 = vmatprep.subr.mxu0 0.0
      %589 = vmatpush1.msra.mxu0 0.0
      %590 = vmatprep.subr.mxu0 0.0
      %591 = vmatpush1.msra.mxu0 0.0
      %592 = vmatprep.subr.mxu0 0.0
      %593 = vmatpush1.msra.mxu0 0.0
      %594 = vmatprep.subr.mxu0 0.0
      %595 = vmatpush1.msra.mxu0 0.0
      %596 = vmatprep.subr.mxu0 0.0
      %597 = vmatpush1.msra.mxu0 0.0
      %598 = vmatprep.subr.mxu0 0.0
      %599 = vmatpush1.msra.mxu0 0.0
      %600 = vmatprep.subr.mxu0 0.0
      %601 = vmatpush1.msra.mxu0 0.0
      %602 = vmatprep.subr.mxu0 0.0
      %603 = vmatpush1.msra.mxu0 0.0
      %604 = vmatprep.subr.mxu0 0.0
      %605 = vmatpush1.msra.mxu0 0.0
      %606 = vmatprep.subr.mxu0 0.0
      %607 = vmatpush1.msra.mxu0 0.0
      %608 = vmatprep.subr.mxu0 0.0
      %609 = vmatpush1.msra.mxu0 0.0
      %610 = vmatprep.mubr.f32.mxu0 0.0
      %611 = vmatmul.mubr.f32.gmra.mrb[0].mxu0 %v544
      %v612 = vpop.f32.mrb[0].mxu0
      %v613 = vadd.f32 0.0, %v612
      %v614 = vpop.f32.mrb[0].mxu0
      %615 = vdwg.mxu0
      %616 = vrot.lane.b32.xlu0 %v436, 112
      %v617 = vpop.permute.xlu0 %616
      %618 = vrot.lane.b32.xlu0 %v436, 80
      %v619 = vpop.permute.xlu0 %618
      %v620 = vsel %vm446, %v617, 0
      %v622 = vsel %vm446, %v619, 0
      %624 = vmatprep.subr.mxu0 0.0
      %625 = vmatpush1.xpose.msra.mxu0 %v622
      %626 = vmatprep.subr.mxu0 0.0
      %627 = vmatpush1.xpose.msra.mxu0 0.0
      %628 = vmatprep.subr.mxu0 0.0
      %629 = vmatpush1.xpose.msra.mxu0 0.0
      %630 = vmatprep.subr.mxu0 0.0
      %631 = vmatpush1.xpose.msra.mxu0 0.0
      %632 = vmatprep.subr.mxu0 0.0
      %633 = vmatpush1.xpose.msra.mxu0 0.0
      %634 = vmatprep.subr.mxu0 0.0
      %635 = vmatpush1.xpose.msra.mxu0 0.0
      %636 = vmatprep.subr.mxu0 0.0
      %637 = vmatpush1.xpose.msra.mxu0 0.0
      %638 = vmatprep.subr.mxu0 0.0
      %639 = vmatpush1.xpose.msra.mxu0 0.0
      %640 = vmatprep.subr.mxu0 0.0
      %641 = vmatpush1.xpose.msra.mxu0 0.0
      %642 = vmatprep.subr.mxu0 0.0
      %643 = vmatpush1.xpose.msra.mxu0 0.0
      %644 = vmatprep.subr.mxu0 0.0
      %645 = vmatpush1.xpose.msra.mxu0 0.0
      %646 = vmatprep.subr.mxu0 0.0
      %647 = vmatpush1.xpose.msra.mxu0 0.0
      %648 = vmatprep.subr.mxu0 0.0
      %649 = vmatpush1.xpose.msra.mxu0 0.0
      %650 = vmatprep.subr.mxu0 0.0
      %651 = vmatpush1.xpose.msra.mxu0 0.0
      %652 = vmatprep.subr.mxu0 0.0
      %653 = vmatpush1.xpose.msra.mxu0 0.0
      %654 = vmatprep.subr.mxu0 0.0
      %655 = vmatpush1.xpose.msra.mxu0 0.0
      %656 = vmatprep.subr.mxu0 0.0
      %657 = vmatpush1.xpose.msra.mxu0 0.0
      %658 = vmatprep.subr.mxu0 0.0
      %659 = vmatpush1.xpose.msra.mxu0 0.0
      %660 = vmatprep.subr.mxu0 0.0
      %661 = vmatpush1.xpose.msra.mxu0 0.0
      %662 = vmatprep.subr.mxu0 0.0
      %663 = vmatpush1.xpose.msra.mxu0 0.0
      %664 = vmatprep.subr.mxu0 0.0
      %665 = vmatpush1.xpose.msra.mxu0 0.0
      %666 = vmatprep.subr.mxu0 0.0
      %667 = vmatpush1.xpose.msra.mxu0 0.0
      %668 = vmatprep.subr.mxu0 0.0
      %669 = vmatpush1.xpose.msra.mxu0 0.0
      %670 = vmatprep.subr.mxu0 0.0
      %671 = vmatpush1.xpose.msra.mxu0 0.0
      %672 = vmatprep.subr.mxu0 0.0
      %673 = vmatpush1.xpose.msra.mxu0 0.0
      %674 = vmatprep.subr.mxu0 0.0
      %675 = vmatpush1.xpose.msra.mxu0 0.0
      %676 = vmatprep.subr.mxu0 0.0
      %677 = vmatpush1.xpose.msra.mxu0 0.0
      %678 = vmatprep.subr.mxu0 0.0
      %679 = vmatpush1.xpose.msra.mxu0 0.0
      %680 = vmatprep.subr.mxu0 0.0
      %681 = vmatpush1.xpose.msra.mxu0 0.0
      %682 = vmatprep.subr.mxu0 0.0
      %683 = vmatpush1.xpose.msra.mxu0 0.0
      %684 = vmatprep.subr.mxu0 0.0
      %685 = vmatpush1.xpose.msra.mxu0 0.0
      %686 = vmatprep.subr.mxu0 0.0
      %687 = vmatpush1.xpose.msra.mxu0 0.0
      %688 = vmatprep.mubr.f32.mxu0 0.0
      %689 = vmatmul.mubr.f32.gmra.mrb[0].mxu0 %v620
      %v690 = vpop.f32.mrb[0].mxu0
      %v691 = vadd.f32 %v345, %v690
      %v692 = vpop.f32.mrb[0].mxu0
      %693 = vdwg.mxu0
      %v694 = vadd.f32 %v691, %v525
      %v695 = vsel %vm528, %v694, -inf
      %696 = vmax.xlane.f32.xlu0 %v695
      %v697 = vpop.xlane.xlu0 %696
      %v698 = vsub.f32 %v694, %v697
      %v699 = vmul.f32 %v698, 1.442695
      %v700 = vpow.pop %v699
      %v701 = vsel %vm528, %v700, 0.0
      %702 = vadd.xlane.f32.xlu0 %v701
      %v703 = vpop.xlane.xlu0 %702
      %v704 = vrcp.pop %v703
      %v705 = vmul.f32 %v700, %v704
      %706 = vrot.lane.b32.xlu0 %v436, 48
      %v707 = vpop.permute.xlu0 %706
      %v710 = vsel %vm528, %v705, 0
      %712 = vmatprep.subr.mxu0 0.0
      %713 = vmatpush1.msra.mxu0 %v707
      %714 = vmatprep.subr.mxu0 0.0
      %715 = vmatpush1.msra.mxu0 0.0
      %716 = vmatprep.subr.mxu0 0.0
      %717 = vmatpush1.msra.mxu0 0.0
      %718 = vmatprep.subr.mxu0 0.0
      %719 = vmatpush1.msra.mxu0 0.0
      %720 = vmatprep.subr.mxu0 0.0
      %721 = vmatpush1.msra.mxu0 0.0
      %722 = vmatprep.subr.mxu0 0.0
      %723 = vmatpush1.msra.mxu0 0.0
      %724 = vmatprep.subr.mxu0 0.0
      %725 = vmatpush1.msra.mxu0 0.0
      %726 = vmatprep.subr.mxu0 0.0
      %727 = vmatpush1.msra.mxu0 0.0
      %728 = vmatprep.subr.mxu0 0.0
      %729 = vmatpush1.msra.mxu0 0.0
      %730 = vmatprep.subr.mxu0 0.0
      %731 = vmatpush1.msra.mxu0 0.0
      %732 = vmatprep.subr.mxu0 0.0
      %733 = vmatpush1.msra.mxu0 0.0
      %734 = vmatprep.subr.mxu0 0.0
      %735 = vmatpush1.msra.mxu0 0.0
      %736 = vmatprep.subr.mxu0 0.0
      %737 = vmatpush1.msra.mxu0 0.0
      %738 = vmatprep.subr.mxu0 0.0
      %739 = vmatpush1.msra.mxu0 0.0
      %740 = vmatprep.subr.mxu0 0.0
      %741 = vmatpush1.msra.mxu0 0.0
      %742 = vmatprep.subr.mxu0 0.0
      %743 = vmatpush1.msra.mxu0 0.0
      %744 = vmatprep.subr.mxu0 0.0
      %745 = vmatpush1.msra.mxu0 0.0
      %746 = vmatprep.subr.mxu0 0.0
      %747 = vmatpush1.msra.mxu0 0.0
      %748 = vmatprep.subr.mxu0 0.0
      %749 = vmatpush1.msra.mxu0 0.0
      %750 = vmatprep.subr.mxu0 0.0
      %751 = vmatpush1.msra.mxu0 0.0
      %752 = vmatprep.subr.mxu0 0.0
      %753 = vmatpush1.msra.mxu0 0.0
      %754 = vmatprep.subr.mxu0 0.0
      %755 = vmatpush1.msra.mxu0 0.0
      %756 = vmatprep.subr.mxu0 0.0
      %757 = vmatpush1.msra.mxu0 0.0
      %758 = vmatprep.subr.mxu0 0.0
      %759 = vmatpush1.msra.mxu0 0.0
      %760 = vmatprep.subr.mxu0 0.0
      %761 = vmatpush1.msra.mxu0 0.0
      %762 = vmatprep.subr.mxu0 0.0
      %763 = vmatpush1.msra.mxu0 0.0
      %764 = vmatprep.subr.mxu0 0.0
      %765 = vmatpush1.msra.mxu0 0.0
      %766 = vmatprep.subr.mxu0 0.0
      %767 = vmatpush1.msra.mxu0 0.0
      %768 = vmatprep.subr.mxu0 0.0
      %769 = vmatpush1.msra.mxu0 0.0
      %770 = vmatprep.subr.mxu0 0.0
      %771 = vmatpush1.msra.mxu0 0.0
      %772 = vmatprep.subr.mxu0 0.0
      %773 = vmatpush1.msra.mxu0 0.0
      %774 = vmatprep.subr.mxu0 0.0
      %775 = vmatpush1.msra.mxu0 0.0
      %776 = vmatprep.mubr.f32.mxu0 0.0
      %777 = vmatmul.mubr.f32.gmra.mrb[0].mxu0 %v710
      %v778 = vpop.f32.mrb[0].mxu0
      %v779 = vadd.f32 0.0, %v778
      %v780 = vpop.f32.mrb[0].mxu0
      %781 = vdwg.mxu0
      %v783 = vsel %vm446, %v779, 0
      %785 = vmatprep.subr.mxu0 0.0
      %786 = vmatpush1.msra.mxu0 %v441
      %787 = vmatprep.subr.mxu0 0.0
      %788 = vmatpush1.msra.mxu0 %v442
      %789 = vmatprep.subr.mxu0 0.0
      %790 = vmatpush1.msra.mxu0 0.0
      %791 = vmatprep.subr.mxu0 0.0
      %792 = vmatpush1.msra.mxu0 0.0
      %793 = vmatprep.subr.mxu0 0.0
      %794 = vmatpush1.msra.mxu0 0.0
      %795 = vmatprep.subr.mxu0 0.0
      %796 = vmatpush1.msra.mxu0 0.0
      %797 = vmatprep.subr.mxu0 0.0
      %798 = vmatpush1.msra.mxu0 0.0
      %799 = vmatprep.subr.mxu0 0.0
      %800 = vmatpush1.msra.mxu0 0.0
      %801 = vmatprep.subr.mxu0 0.0
      %802 = vmatpush1.msra.mxu0 0.0
      %803 = vmatprep.subr.mxu0 0.0
      %804 = vmatpush1.msra.mxu0 0.0
      %805 = vmatprep.subr.mxu0 0.0
      %806 = vmatpush1.msra.mxu0 0.0
      %807 = vmatprep.subr.mxu0 0.0
      %808 = vmatpush1.msra.mxu0 0.0
      %809 = vmatprep.subr.mxu0 0.0
      %810 = vmatpush1.msra.mxu0 0.0
      %811 = vmatprep.subr.mxu0 0.0
      %812 = vmatpush1.msra.mxu0 0.0
      %813 = vmatprep.subr.mxu0 0.0
      %814 = vmatpush1.msra.mxu0 0.0
      %815 = vmatprep.subr.mxu0 0.0
      %816 = vmatpush1.msra.mxu0 0.0
      %817 = vmatprep.subr.mxu0 0.0
      %818 = vmatpush1.msra.mxu0 0.0
      %819 = vmatprep.subr.mxu0 0.0
      %820 = vmatpush1.msra.mxu0 0.0
      %821 = vmatprep.subr.mxu0 0.0
      %822 = vmatpush1.msra.mxu0 0.0
      %823 = vmatprep.subr.mxu0 0.0
      %824 = vmatpush1.msra.mxu0 0.0
      %825 = vmatprep.subr.mxu0 0.0
      %826 = vmatpush1.msra.mxu0 0.0
      %827 = vmatprep.subr.mxu0 0.0
      %828 = vmatpush1.msra.mxu0 0.0
      %829 = vmatprep.subr.mxu0 0.0
      %830 = vmatpush1.msra.mxu0 0.0
      %831 = vmatprep.subr.mxu0 0.0
      %832 = vmatpush1.msra.mxu0 0.0
      %833 = vmatprep.subr.mxu0 0.0
      %834 = vmatpush1.msra.mxu0 0.0
      %835 = vmatprep.subr.mxu0 0.0
      %836 = vmatpush1.msra.mxu0 0.0
      %837 = vmatprep.subr.mxu0 0.0
      %838 = vmatpush1.msra.mxu0 0.0
      %839 = vmatprep.subr.mxu0 0.0
      %840 = vmatpush1.msra.mxu0 0.0
      %841 = vmatprep.subr.mxu0 0.0
      %842 = vmatpush1.msra.mxu0 0.0
      %843 = vmatprep.subr.mxu0 0.0
      %844 = vmatpush1.msra.mxu0 0.0
      %845 = vmatprep.subr.mxu0 0.0
      %846 = vmatpush1.msra.mxu0 0.0
      %847 = vmatprep.subr.mxu0 0.0
      %848 = vmatpush1.msra.mxu0 0.0
      %849 = vmatprep.mubr.f32.mxu0 0.0
      %850 = vmatmul.mubr.f32.gmra.mrb[0].mxu0 %v783
      %v851 = vpop.f32.mrb[0].mxu0
      %v852 = vadd.f32 0.0, %v851
      %v853 = vpop.f32.mrb[0].mxu0
      %854 = vdwg.mxu0
      %v856 = vsel %vm446, %v613, 0
      %858 = vmatprep.subr.mxu0 0.0
      %859 = vmatpush1.msra.mxu0 %v439
      %860 = vmatprep.subr.mxu0 0.0
      %861 = vmatpush1.msra.mxu0 %v440
      %862 = vmatprep.subr.mxu0 0.0
      %863 = vmatpush1.msra.mxu0 0.0
      %864 = vmatprep.subr.mxu0 0.0
      %865 = vmatpush1.msra.mxu0 0.0
      %866 = vmatprep.subr.mxu0 0.0
      %867 = vmatpush1.msra.mxu0 0.0
      %868 = vmatprep.subr.mxu0 0.0
      %869 = vmatpush1.msra.mxu0 0.0
      %870 = vmatprep.subr.mxu0 0.0
      %871 = vmatpush1.msra.mxu0 0.0
      %872 = vmatprep.subr.mxu0 0.0
      %873 = vmatpush1.msra.mxu0 0.0
      %874 = vmatprep.subr.mxu0 0.0
      %875 = vmatpush1.msra.mxu0 0.0
      %876 = vmatprep.subr.mxu0 0.0
      %877 = vmatpush1.msra.mxu0 0.0
      %878 = vmatprep.subr.mxu0 0.0
      %879 = vmatpush1.msra.mxu0 0.0
      %880 = vmatprep.subr.mxu0 0.0
      %881 = vmatpush1.msra.mxu0 0.0
      %882 = vmatprep.subr.mxu0 0.0
      %883 = vmatpush1.msra.mxu0 0.0
      %884 = vmatprep.subr.mxu0 0.0
      %885 = vmatpush1.msra.mxu0 0.0
      %886 = vmatprep.subr.mxu0 0.0
      %887 = vmatpush1.msra.mxu0 0.0
      %888 = vmatprep.subr.mxu0 0.0
      %889 = vmatpush1.msra.mxu0 0.0
      %890 = vmatprep.subr.mxu0 0.0
      %891 = vmatpush1.msra.mxu0 0.0
      %892 = vmatprep.subr.mxu0 0.0
      %893 = vmatpush1.msra.mxu0 0.0
      %894 = vmatprep.subr.mxu0 0.0
      %895 = vmatpush1.msra.mxu0 0.0
      %896 = vmatprep.subr.mxu0 0.0
      %897 = vmatpush1.msra.mxu0 0.0
      %898 = vmatprep.subr.mxu0 0.0
      %899 = vmatpush1.msra.mxu0 0.0
      %900 = vmatprep.subr.mxu0 0.0
      %901 = vmatpush1.msra.mxu0 0.0
      %902 = vmatprep.subr.mxu0 0.0
      %903 = vmatpush1.msra.mxu0 0.0
      %904 = vmatprep.subr.mxu0 0.0
      %905 = vmatpush1.msra.mxu0 0.0
      %906 = vmatprep.subr.mxu0 0.0
      %907 = vmatpush1.msra.mxu0 0.0
      %908 = vmatprep.subr.mxu0 0.0
      %909 = vmatpush1.msra.mxu0 0.0
      %910 = vmatprep.subr.mxu0 0.0
      %911 = vmatpush1.msra.mxu0 0.0
      %912 = vmatprep.subr.mxu0 0.0
      %913 = vmatpush1.msra.mxu0 0.0
      %914 = vmatprep.subr.mxu0 0.0
      %915 = vmatpush1.msra.mxu0 0.0
      %916 = vmatprep.subr.mxu0 0.0
      %917 = vmatpush1.msra.mxu0 0.0
      %918 = vmatprep.subr.mxu0 0.0
      %919 = vmatpush1.msra.mxu0 0.0
      %920 = vmatprep.subr.mxu0 0.0
      %921 = vmatpush1.msra.mxu0 0.0
      %922 = vmatprep.mubr.f32.mxu0 0.0
      %923 = vmatmul.mubr.f32.gmra.mrb[0].mxu0 %v856
      %v924 = vpop.f32.mrb[0].mxu0
      %v925 = vadd.f32 %v852, %v924
      %v926 = vpop.f32.mrb[0].mxu0
      %927 = vdwg.mxu0
      %v928 = vadd.f32 %v342, %v925
      %v929 = vmul.f32 %v928, %v928
      %v930 = vsel %vm348, %v929, 0.0
      %931 = vadd.xlane.f32.xlu0 %v930
      %v932 = vpop.xlane.xlu0 %931
      %v933 = vmul.f32 %v932, %v352
      %v934 = vadd.f32 %v933, 1e-06
      %v935 = vrsqrt.pop %v934
      %v936 = vmul.f32 %v928, %v935
      %v937 = vlaneseq
      %v938 = vshrl.u32 %v937, 7
      %v939 = vsub.s32 1, %v938
      %v940 = vrot.slane %v346, %v939
      %v941 = vmul.f32 %v936, %v940
      %v942 = vld [vmem:[%s5] sm:$0xff]
      %v943 = vld [vmem:[%s5 + $0x8] sm:$0xff]
      %v944 = vld [vmem:[%s5 + $0x10] sm:$0xff]
      %v945 = vld [vmem:[%s5 + $0x18] sm:$0xff]
      %v947 = vsel %vm348, %v941, 0
      %949 = vmatprep.subr.mxu0 0.0
      %950 = vmatpush1.msra.mxu0 %v942
      %951 = vmatprep.subr.mxu0 0.0
      %952 = vmatpush1.msra.mxu0 %v943
      %953 = vmatprep.subr.mxu0 0.0
      %954 = vmatpush1.msra.mxu0 %v944
      %955 = vmatprep.subr.mxu0 0.0
      %956 = vmatpush1.msra.mxu0 %v945
      %957 = vmatprep.subr.mxu0 0.0
      %958 = vmatpush1.msra.mxu0 0.0
      %959 = vmatprep.subr.mxu0 0.0
      %960 = vmatpush1.msra.mxu0 0.0
      %961 = vmatprep.subr.mxu0 0.0
      %962 = vmatpush1.msra.mxu0 0.0
      %963 = vmatprep.subr.mxu0 0.0
      %964 = vmatpush1.msra.mxu0 0.0
      %965 = vmatprep.subr.mxu0 0.0
      %966 = vmatpush1.msra.mxu0 0.0
      %967 = vmatprep.subr.mxu0 0.0
      %968 = vmatpush1.msra.mxu0 0.0
      %969 = vmatprep.subr.mxu0 0.0
      %970 = vmatpush1.msra.mxu0 0.0
      %971 = vmatprep.subr.mxu0 0.0
      %972 = vmatpush1.msra.mxu0 0.0
      %973 = vmatprep.subr.mxu0 0.0
      %974 = vmatpush1.msra.mxu0 0.0
      %975 = vmatprep.subr.mxu0 0.0
      %976 = vmatpush1.msra.mxu0 0.0
      %977 = vmatprep.subr.mxu0 0.0
      %978 = vmatpush1.msra.mxu0 0.0
      %979 = vmatprep.subr.mxu0 0.0
      %980 = vmatpush1.msra.mxu0 0.0
      %981 = vmatprep.subr.mxu0 0.0
      %982 = vmatpush1.msra.mxu0 0.0
      %983 = vmatprep.subr.mxu0 0.0
      %984 = vmatpush1.msra.mxu0 0.0
      %985 = vmatprep.subr.mxu0 0.0
      %986 = vmatpush1.msra.mxu0 0.0
      %987 = vmatprep.subr.mxu0 0.0
      %988 = vmatpush1.msra.mxu0 0.0
      %989 = vmatprep.subr.mxu0 0.0
      %990 = vmatpush1.msra.mxu0 0.0
      %991 = vmatprep.subr.mxu0 0.0
      %992 = vmatpush1.msra.mxu0 0.0
      %993 = vmatprep.subr.mxu0 0.0
      %994 = vmatpush1.msra.mxu0 0.0
      %995 = vmatprep.subr.mxu0 0.0
      %996 = vmatpush1.msra.mxu0 0.0
      %997 = vmatprep.subr.mxu0 0.0
      %998 = vmatpush1.msra.mxu0 0.0
      %999 = vmatprep.subr.mxu0 0.0
      %1000 = vmatpush1.msra.mxu0 0.0
      %1001 = vmatprep.subr.mxu0 0.0
      %1002 = vmatpush1.msra.mxu0 0.0
      %1003 = vmatprep.subr.mxu0 0.0
      %1004 = vmatpush1.msra.mxu0 0.0
      %1005 = vmatprep.subr.mxu0 0.0
      %1006 = vmatpush1.msra.mxu0 0.0
      %1007 = vmatprep.subr.mxu0 0.0
      %1008 = vmatpush1.msra.mxu0 0.0
      %1009 = vmatprep.subr.mxu0 0.0
      %1010 = vmatpush1.msra.mxu0 0.0
      %1011 = vmatprep.subr.mxu0 0.0
      %1012 = vmatpush1.msra.mxu0 0.0
      %1013 = vmatprep.mubr.f32.mxu0 0.0
      %1014 = vmatmul.mubr.f32.gmra.mrb[0].mxu0 %v947
      %v1015 = vpop.f32.mrb[0].mxu0
      %v1016 = vadd.f32 0.0, %v1015
      %v1017 = vpop.f32.mrb[0].mxu0
      %1018 = vdwg.mxu0
      %v1019 = vmax.f32 %v1016, 0.0
      %v1020 = vld [vmem:[%s6] sm:$0xff]
      %v1021 = vld [vmem:[%s6 + $0x8] sm:$0xff]
      %v1022 = vld [vmem:[%s6 + $0x10] sm:$0xff]
      %v1023 = vld [vmem:[%s6 + $0x18] sm:$0xff]
      %v1024 = vld [vmem:[%s6 + $0x20] sm:$0xff]
      %v1025 = vld [vmem:[%s6 + $0x28] sm:$0xff]
      %v1026 = vld [vmem:[%s6 + $0x30] sm:$0xff]
      %v1027 = vld [vmem:[%s6 + $0x38] sm:$0xff]
      %vm1028 = vcmask 523264
      %v1030 = vsel %vm1028, %v1019, 0
      %1032 = vmatprep.subr.mxu0 0.0
      %1033 = vmatpush1.msra.mxu0 %v1020
      %1034 = vmatprep.subr.mxu0 0.0
      %1035 = vmatpush1.msra.mxu0 %v1021
      %1036 = vmatprep.subr.mxu0 0.0
      %1037 = vmatpush1.msra.mxu0 %v1022
      %1038 = vmatprep.subr.mxu0 0.0
      %1039 = vmatpush1.msra.mxu0 %v1023
      %1040 = vmatprep.subr.mxu0 0.0
      %1041 = vmatpush1.msra.mxu0 %v1024
      %1042 = vmatprep.subr.mxu0 0.0
      %1043 = vmatpush1.msra.mxu0 %v1025
      %1044 = vmatprep.subr.mxu0 0.0
      %1045 = vmatpush1.msra.mxu0 %v1026
      %1046 = vmatprep.subr.mxu0 0.0
      %1047 = vmatpush1.msra.mxu0 %v1027
      %1048 = vmatprep.subr.mxu0 0.0
      %1049 = vmatpush1.msra.mxu0 0.0
      %1050 = vmatprep.subr.mxu0 0.0
      %1051 = vmatpush1.msra.mxu0 0.0
      %1052 = vmatprep.subr.mxu0 0.0
      %1053 = vmatpush1.msra.mxu0 0.0
      %1054 = vmatprep.subr.mxu0 0.0
      %1055 = vmatpush1.msra.mxu0 0.0
      %1056 = vmatprep.subr.mxu0 0.0
      %1057 = vmatpush1.msra.mxu0 0.0
      %1058 = vmatprep.subr.mxu0 0.0
      %1059 = vmatpush1.msra.mxu0 0.0
      %1060 = vmatprep.subr.mxu0 0.0
      %1061 = vmatpush1.msra.mxu0 0.0
      %1062 = vmatprep.subr.mxu0 0.0
      %1063 = vmatpush1.msra.mxu0 0.0
      %1064 = vmatprep.subr.mxu0 0.0
      %1065 = vmatpush1.msra.mxu0 0.0
      %1066 = vmatprep.subr.mxu0 0.0
      %1067 = vmatpush1.msra.mxu0 0.0
      %1068 = vmatprep.subr.mxu0 0.0
      %1069 = vmatpush1.msra.mxu0 0.0
      %1070 = vmatprep.subr.mxu0 0.0
      %1071 = vmatpush1.msra.mxu0 0.0
      %1072 = vmatprep.subr.mxu0 0.0
      %1073 = vmatpush1.msra.mxu0 0.0
      %1074 = vmatprep.subr.mxu0 0.0
      %1075 = vmatpush1.msra.mxu0 0.0
      %1076 = vmatprep.subr.mxu0 0.0
      %1077 = vmatpush1.msra.mxu0 0.0
      %1078 = vmatprep.subr.mxu0 0.0
      %1079 = vmatpush1.msra.mxu0 0.0
      %1080 = vmatprep.subr.mxu0 0.0
      %1081 = vmatpush1.msra.mxu0 0.0
      %1082 = vmatprep.subr.mxu0 0.0
      %1083 = vmatpush1.msra.mxu0 0.0
      %1084 = vmatprep.subr.mxu0 0.0
      %1085 = vmatpush1.msra.mxu0 0.0
      %1086 = vmatprep.subr.mxu0 0.0
      %1087 = vmatpush1.msra.mxu0 0.0
      %1088 = vmatprep.subr.mxu0 0.0
      %1089 = vmatpush1.msra.mxu0 0.0
      %1090 = vmatprep.subr.mxu0 0.0
      %1091 = vmatpush1.msra.mxu0 0.0
      %1092 = vmatprep.subr.mxu0 0.0
      %1093 = vmatpush1.msra.mxu0 0.0
      %1094 = vmatprep.subr.mxu0 0.0
      %1095 = vmatpush1.msra.mxu0 0.0
      %1096 = vmatprep.mubr.f32.mxu0 0.0
      %1097 = vmatmul.mubr.f32.gmra.mrb[0].mxu0 %v1030
      %v1098 = vpop.f32.mrb[0].mxu0
      %v1099 = vadd.f32 0.0, %v1098
      %v1100 = vpop.f32.mrb[0].mxu0
      %1101 = vdwg.mxu0
      %v1102 = vadd.f32 %v928, %v1099
      %s1103 = scalar_lea.vmem %s7, 2
      %v1104 = vld [vmem:[%s1103] sm:$0x3]
      %v1105 = vmul.f32 %v1102, %v1102
      %v1106 = vsel %vm348, %v1105, 0.0
      %1107 = vadd.xlane.f32.xlu0 %v1106
      %v1108 = vpop.xlane.xlu0 %1107
      %v1109 = vmul.f32 %v1108, %v352
      %v1110 = vadd.f32 %v1109, 1e-06
      %v1111 = vrsqrt.pop %v1110
      %v1112 = vmul.f32 %v1102, %v1111
      %v1113 = vlaneseq
      %v1114 = vshrl.u32 %v1113, 7
      %v1115 = vsub.s32 0, %v1114
      %v1116 = vrot.slane %v1104, %v1115
      %v1117 = vmul.f32 %v1112, %v1116
      %s1118 = scalar_lea.vmem %s3, 32
      %v1119 = vld [vmem:[%s1118] sm:$0xff]
      %v1120 = vld [vmem:[%s1118 + $0x8] sm:$0xff]
      %v1121 = vld [vmem:[%s1118 + $0x10] sm:$0xff]
      %v1122 = vld [vmem:[%s1118 + $0x18] sm:$0xff]
      %v1124 = vsel %vm348, %v1117, 0
      %1126 = vmatprep.subr.mxu0 0.0
      %1127 = vmatpush1.msra.mxu0 %v1119
      %1128 = vmatprep.subr.mxu0 0.0
      %1129 = vmatpush1.msra.mxu0 %v1120
      %1130 = vmatprep.subr.mxu0 0.0
      %1131 = vmatpush1.msra.mxu0 %v1121
      %1132 = vmatprep.subr.mxu0 0.0
      %1133 = vmatpush1.msra.mxu0 %v1122
      %1134 = vmatprep.subr.mxu0 0.0
      %1135 = vmatpush1.msra.mxu0 0.0
      %1136 = vmatprep.subr.mxu0 0.0
      %1137 = vmatpush1.msra.mxu0 0.0
      %1138 = vmatprep.subr.mxu0 0.0
      %1139 = vmatpush1.msra.mxu0 0.0
      %1140 = vmatprep.subr.mxu0 0.0
      %1141 = vmatpush1.msra.mxu0 0.0
      %1142 = vmatprep.subr.mxu0 0.0
      %1143 = vmatpush1.msra.mxu0 0.0
      %1144 = vmatprep.subr.mxu0 0.0
      %1145 = vmatpush1.msra.mxu0 0.0
      %1146 = vmatprep.subr.mxu0 0.0
      %1147 = vmatpush1.msra.mxu0 0.0
      %1148 = vmatprep.subr.mxu0 0.0
      %1149 = vmatpush1.msra.mxu0 0.0
      %1150 = vmatprep.subr.mxu0 0.0
      %1151 = vmatpush1.msra.mxu0 0.0
      %1152 = vmatprep.subr.mxu0 0.0
      %1153 = vmatpush1.msra.mxu0 0.0
      %1154 = vmatprep.subr.mxu0 0.0
      %1155 = vmatpush1.msra.mxu0 0.0
      %1156 = vmatprep.subr.mxu0 0.0
      %1157 = vmatpush1.msra.mxu0 0.0
      %1158 = vmatprep.subr.mxu0 0.0
      %1159 = vmatpush1.msra.mxu0 0.0
      %1160 = vmatprep.subr.mxu0 0.0
      %1161 = vmatpush1.msra.mxu0 0.0
      %1162 = vmatprep.subr.mxu0 0.0
      %1163 = vmatpush1.msra.mxu0 0.0
      %1164 = vmatprep.subr.mxu0 0.0
      %1165 = vmatpush1.msra.mxu0 0.0
      %1166 = vmatprep.subr.mxu0 0.0
      %1167 = vmatpush1.msra.mxu0 0.0
      %1168 = vmatprep.subr.mxu0 0.0
      %1169 = vmatpush1.msra.mxu0 0.0
      %1170 = vmatprep.subr.mxu0 0.0
      %1171 = vmatpush1.msra.mxu0 0.0
      %1172 = vmatprep.subr.mxu0 0.0
      %1173 = vmatpush1.msra.mxu0 0.0
      %1174 = vmatprep.subr.mxu0 0.0
      %1175 = vmatpush1.msra.mxu0 0.0
      %1176 = vmatprep.subr.mxu0 0.0
      %1177 = vmatpush1.msra.mxu0 0.0
      %1178 = vmatprep.subr.mxu0 0.0
      %1179 = vmatpush1.msra.mxu0 0.0
      %1180 = vmatprep.subr.mxu0 0.0
      %1181 = vmatpush1.msra.mxu0 0.0
      %1182 = vmatprep.subr.mxu0 0.0
      %1183 = vmatpush1.msra.mxu0 0.0
      %1184 = vmatprep.subr.mxu0 0.0
      %1185 = vmatpush1.msra.mxu0 0.0
      %1186 = vmatprep.subr.mxu0 0.0
      %1187 = vmatpush1.msra.mxu0 0.0
      %1188 = vmatprep.subr.mxu0 0.0
      %1189 = vmatpush1.msra.mxu0 0.0
      %1190 = vmatprep.mubr.f32.mxu0 0.0
      %1191 = vmatmul.mubr.f32.gmra.mrb[0].mxu0 %v1124
      %v1192 = vpop.f32.mrb[0].mxu0
      %v1193 = vadd.f32 0.0, %v1192
      %v1194 = vpop.f32.mrb[0].mxu0
      %1195 = vdwg.mxu0
      %s1196 = scalar_lea.vmem %s4, 32
      %v1197 = vld [vmem:[%s1196] sm:$0xff]
      %v1198 = vld [vmem:[%s1196 + $0x8] sm:$0xff]
      %v1199 = vld [vmem:[%s1196 + $0x10] sm:$0xff]
      %v1200 = vld [vmem:[%s1196 + $0x18] sm:$0xff]
      %1202 = vrot.lane.b32.xlu0 %v1193, 96
      %v1203 = vpop.permute.xlu0 %1202
      %v1204 = vsel %vm446, %v1193, 0
      %v1206 = vsel %vm446, %v1203, 0
      %1208 = vmatprep.subr.mxu0 0.0
      %1209 = vmatpush1.xpose.msra.mxu0 %v1206
      %1210 = vmatprep.subr.mxu0 0.0
      %1211 = vmatpush1.xpose.msra.mxu0 0.0
      %1212 = vmatprep.subr.mxu0 0.0
      %1213 = vmatpush1.xpose.msra.mxu0 0.0
      %1214 = vmatprep.subr.mxu0 0.0
      %1215 = vmatpush1.xpose.msra.mxu0 0.0
      %1216 = vmatprep.subr.mxu0 0.0
      %1217 = vmatpush1.xpose.msra.mxu0 0.0
      %1218 = vmatprep.subr.mxu0 0.0
      %1219 = vmatpush1.xpose.msra.mxu0 0.0
      %1220 = vmatprep.subr.mxu0 0.0
      %1221 = vmatpush1.xpose.msra.mxu0 0.0
      %1222 = vmatprep.subr.mxu0 0.0
      %1223 = vmatpush1.xpose.msra.mxu0 0.0
      %1224 = vmatprep.subr.mxu0 0.0
      %1225 = vmatpush1.xpose.msra.mxu0 0.0
      %1226 = vmatprep.subr.mxu0 0.0
      %1227 = vmatpush1.xpose.msra.mxu0 0.0
      %1228 = vmatprep.subr.mxu0 0.0
      %1229 = vmatpush1.xpose.msra.mxu0 0.0
      %1230 = vmatprep.subr.mxu0 0.0
      %1231 = vmatpush1.xpose.msra.mxu0 0.0
      %1232 = vmatprep.subr.mxu0 0.0
      %1233 = vmatpush1.xpose.msra.mxu0 0.0
      %1234 = vmatprep.subr.mxu0 0.0
      %1235 = vmatpush1.xpose.msra.mxu0 0.0
      %1236 = vmatprep.subr.mxu0 0.0
      %1237 = vmatpush1.xpose.msra.mxu0 0.0
      %1238 = vmatprep.subr.mxu0 0.0
      %1239 = vmatpush1.xpose.msra.mxu0 0.0
      %1240 = vmatprep.subr.mxu0 0.0
      %1241 = vmatpush1.xpose.msra.mxu0 0.0
      %1242 = vmatprep.subr.mxu0 0.0
      %1243 = vmatpush1.xpose.msra.mxu0 0.0
      %1244 = vmatprep.subr.mxu0 0.0
      %1245 = vmatpush1.xpose.msra.mxu0 0.0
      %1246 = vmatprep.subr.mxu0 0.0
      %1247 = vmatpush1.xpose.msra.mxu0 0.0
      %1248 = vmatprep.subr.mxu0 0.0
      %1249 = vmatpush1.xpose.msra.mxu0 0.0
      %1250 = vmatprep.subr.mxu0 0.0
      %1251 = vmatpush1.xpose.msra.mxu0 0.0
      %1252 = vmatprep.subr.mxu0 0.0
      %1253 = vmatpush1.xpose.msra.mxu0 0.0
      %1254 = vmatprep.subr.mxu0 0.0
      %1255 = vmatpush1.xpose.msra.mxu0 0.0
      %1256 = vmatprep.subr.mxu0 0.0
      %1257 = vmatpush1.xpose.msra.mxu0 0.0
      %1258 = vmatprep.subr.mxu0 0.0
      %1259 = vmatpush1.xpose.msra.mxu0 0.0
      %1260 = vmatprep.subr.mxu0 0.0
      %1261 = vmatpush1.xpose.msra.mxu0 0.0
      %1262 = vmatprep.subr.mxu0 0.0
      %1263 = vmatpush1.xpose.msra.mxu0 0.0
      %1264 = vmatprep.subr.mxu0 0.0
      %1265 = vmatpush1.xpose.msra.mxu0 0.0
      %1266 = vmatprep.subr.mxu0 0.0
      %1267 = vmatpush1.xpose.msra.mxu0 0.0
      %1268 = vmatprep.subr.mxu0 0.0
      %1269 = vmatpush1.xpose.msra.mxu0 0.0
      %1270 = vmatprep.subr.mxu0 0.0
      %1271 = vmatpush1.xpose.msra.mxu0 0.0
      %1272 = vmatprep.mubr.f32.mxu0 0.0
      %1273 = vmatmul.mubr.f32.gmra.mrb[0].mxu0 %v1204
      %v1274 = vpop.f32.mrb[0].mxu0
      %v1275 = vadd.f32 %v344, %v1274
      %v1276 = vpop.f32.mrb[0].mxu0
      %1277 = vdwg.mxu0
      %v1278 = vadd.f32 %v1275, %v525
      %v1279 = vsel %vm528, %v1278, -inf
      %1280 = vmax.xlane.f32.xlu0 %v1279
      %v1281 = vpop.xlane.xlu0 %1280
      %v1282 = vsub.f32 %v1278, %v1281
      %v1283 = vmul.f32 %v1282, 1.442695
      %v1284 = vpow.pop %v1283
      %v1285 = vsel %vm528, %v1284, 0.0
      %1286 = vadd.xlane.f32.xlu0 %v1285
      %v1287 = vpop.xlane.xlu0 %1286
      %v1288 = vrcp.pop %v1287
      %v1289 = vmul.f32 %v1284, %v1288
      %1290 = vrot.lane.b32.xlu0 %v1193, 64
      %v1291 = vpop.permute.xlu0 %1290
      %v1294 = vsel %vm528, %v1289, 0
      %1296 = vmatprep.subr.mxu0 0.0
      %1297 = vmatpush1.msra.mxu0 %v1291
      %1298 = vmatprep.subr.mxu0 0.0
      %1299 = vmatpush1.msra.mxu0 0.0
      %1300 = vmatprep.subr.mxu0 0.0
      %1301 = vmatpush1.msra.mxu0 0.0
      %1302 = vmatprep.subr.mxu0 0.0
      %1303 = vmatpush1.msra.mxu0 0.0
      %1304 = vmatprep.subr.mxu0 0.0
      %1305 = vmatpush1.msra.mxu0 0.0
      %1306 = vmatprep.subr.mxu0 0.0
      %1307 = vmatpush1.msra.mxu0 0.0
      %1308 = vmatprep.subr.mxu0 0.0
      %1309 = vmatpush1.msra.mxu0 0.0
      %1310 = vmatprep.subr.mxu0 0.0
      %1311 = vmatpush1.msra.mxu0 0.0
      %1312 = vmatprep.subr.mxu0 0.0
      %1313 = vmatpush1.msra.mxu0 0.0
      %1314 = vmatprep.subr.mxu0 0.0
      %1315 = vmatpush1.msra.mxu0 0.0
      %1316 = vmatprep.subr.mxu0 0.0
      %1317 = vmatpush1.msra.mxu0 0.0
      %1318 = vmatprep.subr.mxu0 0.0
      %1319 = vmatpush1.msra.mxu0 0.0
      %1320 = vmatprep.subr.mxu0 0.0
      %1321 = vmatpush1.msra.mxu0 0.0
      %1322 = vmatprep.subr.mxu0 0.0
      %1323 = vmatpush1.msra.mxu0 0.0
      %1324 = vmatprep.subr.mxu0 0.0
      %1325 = vmatpush1.msra.mxu0 0.0
      %1326 = vmatprep.subr.mxu0 0.0
      %1327 = vmatpush1.msra.mxu0 0.0
      %1328 = vmatprep.subr.mxu0 0.0
      %1329 = vmatpush1.msra.mxu0 0.0
      %1330 = vmatprep.subr.mxu0 0.0
      %1331 = vmatpush1.msra.mxu0 0.0
      %1332 = vmatprep.subr.mxu0 0.0
      %1333 = vmatpush1.msra.mxu0 0.0
      %1334 = vmatprep.subr.mxu0 0.0
      %1335 = vmatpush1.msra.mxu0 0.0
      %1336 = vmatprep.subr.mxu0 0.0
      %1337 = vmatpush1.msra.mxu0 0.0
      %1338 = vmatprep.subr.mxu0 0.0
      %1339 = vmatpush1.msra.mxu0 0.0
      %1340 = vmatprep.subr.mxu0 0.0
      %1341 = vmatpush1.msra.mxu0 0.0
      %1342 = vmatprep.subr.mxu0 0.0
      %1343 = vmatpush1.msra.mxu0 0.0
      %1344 = vmatprep.subr.mxu0 0.0
      %1345 = vmatpush1.msra.mxu0 0.0
      %1346 = vmatprep.subr.mxu0 0.0
      %1347 = vmatpush1.msra.mxu0 0.0
      %1348 = vmatprep.subr.mxu0 0.0
      %1349 = vmatpush1.msra.mxu0 0.0
      %1350 = vmatprep.subr.mxu0 0.0
      %1351 = vmatpush1.msra.mxu0 0.0
      %1352 = vmatprep.subr.mxu0 0.0
      %1353 = vmatpush1.msra.mxu0 0.0
      %1354 = vmatprep.subr.mxu0 0.0
      %1355 = vmatpush1.msra.mxu0 0.0
      %1356 = vmatprep.subr.mxu0 0.0
      %1357 = vmatpush1.msra.mxu0 0.0
      %1358 = vmatprep.subr.mxu0 0.0
      %1359 = vmatpush1.msra.mxu0 0.0
      %1360 = vmatprep.mubr.f32.mxu0 0.0
      %1361 = vmatmul.mubr.f32.gmra.mrb[0].mxu0 %v1294
      %v1362 = vpop.f32.mrb[0].mxu0
      %v1363 = vadd.f32 0.0, %v1362
      %v1364 = vpop.f32.mrb[0].mxu0
      %1365 = vdwg.mxu0
      %1366 = vrot.lane.b32.xlu0 %v1193, 112
      %v1367 = vpop.permute.xlu0 %1366
      %1368 = vrot.lane.b32.xlu0 %v1193, 80
      %v1369 = vpop.permute.xlu0 %1368
      %v1370 = vsel %vm446, %v1367, 0
      %v1372 = vsel %vm446, %v1369, 0
      %1374 = vmatprep.subr.mxu0 0.0
      %1375 = vmatpush1.xpose.msra.mxu0 %v1372
      %1376 = vmatprep.subr.mxu0 0.0
      %1377 = vmatpush1.xpose.msra.mxu0 0.0
      %1378 = vmatprep.subr.mxu0 0.0
      %1379 = vmatpush1.xpose.msra.mxu0 0.0
      %1380 = vmatprep.subr.mxu0 0.0
      %1381 = vmatpush1.xpose.msra.mxu0 0.0
      %1382 = vmatprep.subr.mxu0 0.0
      %1383 = vmatpush1.xpose.msra.mxu0 0.0
      %1384 = vmatprep.subr.mxu0 0.0
      %1385 = vmatpush1.xpose.msra.mxu0 0.0
      %1386 = vmatprep.subr.mxu0 0.0
      %1387 = vmatpush1.xpose.msra.mxu0 0.0
      %1388 = vmatprep.subr.mxu0 0.0
      %1389 = vmatpush1.xpose.msra.mxu0 0.0
      %1390 = vmatprep.subr.mxu0 0.0
      %1391 = vmatpush1.xpose.msra.mxu0 0.0
      %1392 = vmatprep.subr.mxu0 0.0
      %1393 = vmatpush1.xpose.msra.mxu0 0.0
      %1394 = vmatprep.subr.mxu0 0.0
      %1395 = vmatpush1.xpose.msra.mxu0 0.0
      %1396 = vmatprep.subr.mxu0 0.0
      %1397 = vmatpush1.xpose.msra.mxu0 0.0
      %1398 = vmatprep.subr.mxu0 0.0
      %1399 = vmatpush1.xpose.msra.mxu0 0.0
      %1400 = vmatprep.subr.mxu0 0.0
      %1401 = vmatpush1.xpose.msra.mxu0 0.0
      %1402 = vmatprep.subr.mxu0 0.0
      %1403 = vmatpush1.xpose.msra.mxu0 0.0
      %1404 = vmatprep.subr.mxu0 0.0
      %1405 = vmatpush1.xpose.msra.mxu0 0.0
      %1406 = vmatprep.subr.mxu0 0.0
      %1407 = vmatpush1.xpose.msra.mxu0 0.0
      %1408 = vmatprep.subr.mxu0 0.0
      %1409 = vmatpush1.xpose.msra.mxu0 0.0
      %1410 = vmatprep.subr.mxu0 0.0
      %1411 = vmatpush1.xpose.msra.mxu0 0.0
      %1412 = vmatprep.subr.mxu0 0.0
      %1413 = vmatpush1.xpose.msra.mxu0 0.0
      %1414 = vmatprep.subr.mxu0 0.0
      %1415 = vmatpush1.xpose.msra.mxu0 0.0
      %1416 = vmatprep.subr.mxu0 0.0
      %1417 = vmatpush1.xpose.msra.mxu0 0.0
      %1418 = vmatprep.subr.mxu0 0.0
      %1419 = vmatpush1.xpose.msra.mxu0 0.0
      %1420 = vmatprep.subr.mxu0 0.0
      %1421 = vmatpush1.xpose.msra.mxu0 0.0
      %1422 = vmatprep.subr.mxu0 0.0
      %1423 = vmatpush1.xpose.msra.mxu0 0.0
      %1424 = vmatprep.subr.mxu0 0.0
      %1425 = vmatpush1.xpose.msra.mxu0 0.0
      %1426 = vmatprep.subr.mxu0 0.0
      %1427 = vmatpush1.xpose.msra.mxu0 0.0
      %1428 = vmatprep.subr.mxu0 0.0
      %1429 = vmatpush1.xpose.msra.mxu0 0.0
      %1430 = vmatprep.subr.mxu0 0.0
      %1431 = vmatpush1.xpose.msra.mxu0 0.0
      %1432 = vmatprep.subr.mxu0 0.0
      %1433 = vmatpush1.xpose.msra.mxu0 0.0
      %1434 = vmatprep.subr.mxu0 0.0
      %1435 = vmatpush1.xpose.msra.mxu0 0.0
      %1436 = vmatprep.subr.mxu0 0.0
      %1437 = vmatpush1.xpose.msra.mxu0 0.0
      %1438 = vmatprep.mubr.f32.mxu0 0.0
      %1439 = vmatmul.mubr.f32.gmra.mrb[0].mxu0 %v1370
      %v1440 = vpop.f32.mrb[0].mxu0
      %v1441 = vadd.f32 %v345, %v1440
      %v1442 = vpop.f32.mrb[0].mxu0
      %1443 = vdwg.mxu0
      %v1444 = vadd.f32 %v1441, %v525
      %v1445 = vsel %vm528, %v1444, -inf
      %1446 = vmax.xlane.f32.xlu0 %v1445
      %v1447 = vpop.xlane.xlu0 %1446
      %v1448 = vsub.f32 %v1444, %v1447
      %v1449 = vmul.f32 %v1448, 1.442695
      %v1450 = vpow.pop %v1449
      %v1451 = vsel %vm528, %v1450, 0.0
      %1452 = vadd.xlane.f32.xlu0 %v1451
      %v1453 = vpop.xlane.xlu0 %1452
      %v1454 = vrcp.pop %v1453
      %v1455 = vmul.f32 %v1450, %v1454
      %1456 = vrot.lane.b32.xlu0 %v1193, 48
      %v1457 = vpop.permute.xlu0 %1456
      %v1460 = vsel %vm528, %v1455, 0
      %1462 = vmatprep.subr.mxu0 0.0
      %1463 = vmatpush1.msra.mxu0 %v1457
      %1464 = vmatprep.subr.mxu0 0.0
      %1465 = vmatpush1.msra.mxu0 0.0
      %1466 = vmatprep.subr.mxu0 0.0
      %1467 = vmatpush1.msra.mxu0 0.0
      %1468 = vmatprep.subr.mxu0 0.0
      %1469 = vmatpush1.msra.mxu0 0.0
      %1470 = vmatprep.subr.mxu0 0.0
      %1471 = vmatpush1.msra.mxu0 0.0
      %1472 = vmatprep.subr.mxu0 0.0
      %1473 = vmatpush1.msra.mxu0 0.0
      %1474 = vmatprep.subr.mxu0 0.0
      %1475 = vmatpush1.msra.mxu0 0.0
      %1476 = vmatprep.subr.mxu0 0.0
      %1477 = vmatpush1.msra.mxu0 0.0
      %1478 = vmatprep.subr.mxu0 0.0
      %1479 = vmatpush1.msra.mxu0 0.0
      %1480 = vmatprep.subr.mxu0 0.0
      %1481 = vmatpush1.msra.mxu0 0.0
      %1482 = vmatprep.subr.mxu0 0.0
      %1483 = vmatpush1.msra.mxu0 0.0
      %1484 = vmatprep.subr.mxu0 0.0
      %1485 = vmatpush1.msra.mxu0 0.0
      %1486 = vmatprep.subr.mxu0 0.0
      %1487 = vmatpush1.msra.mxu0 0.0
      %1488 = vmatprep.subr.mxu0 0.0
      %1489 = vmatpush1.msra.mxu0 0.0
      %1490 = vmatprep.subr.mxu0 0.0
      %1491 = vmatpush1.msra.mxu0 0.0
      %1492 = vmatprep.subr.mxu0 0.0
      %1493 = vmatpush1.msra.mxu0 0.0
      %1494 = vmatprep.subr.mxu0 0.0
      %1495 = vmatpush1.msra.mxu0 0.0
      %1496 = vmatprep.subr.mxu0 0.0
      %1497 = vmatpush1.msra.mxu0 0.0
      %1498 = vmatprep.subr.mxu0 0.0
      %1499 = vmatpush1.msra.mxu0 0.0
      %1500 = vmatprep.subr.mxu0 0.0
      %1501 = vmatpush1.msra.mxu0 0.0
      %1502 = vmatprep.subr.mxu0 0.0
      %1503 = vmatpush1.msra.mxu0 0.0
      %1504 = vmatprep.subr.mxu0 0.0
      %1505 = vmatpush1.msra.mxu0 0.0
      %1506 = vmatprep.subr.mxu0 0.0
      %1507 = vmatpush1.msra.mxu0 0.0
      %1508 = vmatprep.subr.mxu0 0.0
      %1509 = vmatpush1.msra.mxu0 0.0
      %1510 = vmatprep.subr.mxu0 0.0
      %1511 = vmatpush1.msra.mxu0 0.0
      %1512 = vmatprep.subr.mxu0 0.0
      %1513 = vmatpush1.msra.mxu0 0.0
      %1514 = vmatprep.subr.mxu0 0.0
      %1515 = vmatpush1.msra.mxu0 0.0
      %1516 = vmatprep.subr.mxu0 0.0
      %1517 = vmatpush1.msra.mxu0 0.0
      %1518 = vmatprep.subr.mxu0 0.0
      %1519 = vmatpush1.msra.mxu0 0.0
      %1520 = vmatprep.subr.mxu0 0.0
      %1521 = vmatpush1.msra.mxu0 0.0
      %1522 = vmatprep.subr.mxu0 0.0
      %1523 = vmatpush1.msra.mxu0 0.0
      %1524 = vmatprep.subr.mxu0 0.0
      %1525 = vmatpush1.msra.mxu0 0.0
      %1526 = vmatprep.mubr.f32.mxu0 0.0
      %1527 = vmatmul.mubr.f32.gmra.mrb[0].mxu0 %v1460
      %v1528 = vpop.f32.mrb[0].mxu0
      %v1529 = vadd.f32 0.0, %v1528
      %v1530 = vpop.f32.mrb[0].mxu0
      %1531 = vdwg.mxu0
      %v1533 = vsel %vm446, %v1529, 0
      %1535 = vmatprep.subr.mxu0 0.0
      %1536 = vmatpush1.msra.mxu0 %v1199
      %1537 = vmatprep.subr.mxu0 0.0
      %1538 = vmatpush1.msra.mxu0 %v1200
      %1539 = vmatprep.subr.mxu0 0.0
      %1540 = vmatpush1.msra.mxu0 0.0
      %1541 = vmatprep.subr.mxu0 0.0
      %1542 = vmatpush1.msra.mxu0 0.0
      %1543 = vmatprep.subr.mxu0 0.0
      %1544 = vmatpush1.msra.mxu0 0.0
      %1545 = vmatprep.subr.mxu0 0.0
      %1546 = vmatpush1.msra.mxu0 0.0
      %1547 = vmatprep.subr.mxu0 0.0
      %1548 = vmatpush1.msra.mxu0 0.0
      %1549 = vmatprep.subr.mxu0 0.0
      %1550 = vmatpush1.msra.mxu0 0.0
      %1551 = vmatprep.subr.mxu0 0.0
      %1552 = vmatpush1.msra.mxu0 0.0
      %1553 = vmatprep.subr.mxu0 0.0
      %1554 = vmatpush1.msra.mxu0 0.0
      %1555 = vmatprep.subr.mxu0 0.0
      %1556 = vmatpush1.msra.mxu0 0.0
      %1557 = vmatprep.subr.mxu0 0.0
      %1558 = vmatpush1.msra.mxu0 0.0
      %1559 = vmatprep.subr.mxu0 0.0
      %1560 = vmatpush1.msra.mxu0 0.0
      %1561 = vmatprep.subr.mxu0 0.0
      %1562 = vmatpush1.msra.mxu0 0.0
      %1563 = vmatprep.subr.mxu0 0.0
      %1564 = vmatpush1.msra.mxu0 0.0
      %1565 = vmatprep.subr.mxu0 0.0
      %1566 = vmatpush1.msra.mxu0 0.0
      %1567 = vmatprep.subr.mxu0 0.0
      %1568 = vmatpush1.msra.mxu0 0.0
      %1569 = vmatprep.subr.mxu0 0.0
      %1570 = vmatpush1.msra.mxu0 0.0
      %1571 = vmatprep.subr.mxu0 0.0
      %1572 = vmatpush1.msra.mxu0 0.0
      %1573 = vmatprep.subr.mxu0 0.0
      %1574 = vmatpush1.msra.mxu0 0.0
      %1575 = vmatprep.subr.mxu0 0.0
      %1576 = vmatpush1.msra.mxu0 0.0
      %1577 = vmatprep.subr.mxu0 0.0
      %1578 = vmatpush1.msra.mxu0 0.0
      %1579 = vmatprep.subr.mxu0 0.0
      %1580 = vmatpush1.msra.mxu0 0.0
      %1581 = vmatprep.subr.mxu0 0.0
      %1582 = vmatpush1.msra.mxu0 0.0
      %1583 = vmatprep.subr.mxu0 0.0
      %1584 = vmatpush1.msra.mxu0 0.0
      %1585 = vmatprep.subr.mxu0 0.0
      %1586 = vmatpush1.msra.mxu0 0.0
      %1587 = vmatprep.subr.mxu0 0.0
      %1588 = vmatpush1.msra.mxu0 0.0
      %1589 = vmatprep.subr.mxu0 0.0
      %1590 = vmatpush1.msra.mxu0 0.0
      %1591 = vmatprep.subr.mxu0 0.0
      %1592 = vmatpush1.msra.mxu0 0.0
      %1593 = vmatprep.subr.mxu0 0.0
      %1594 = vmatpush1.msra.mxu0 0.0
      %1595 = vmatprep.subr.mxu0 0.0
      %1596 = vmatpush1.msra.mxu0 0.0
      %1597 = vmatprep.subr.mxu0 0.0
      %1598 = vmatpush1.msra.mxu0 0.0
      %1599 = vmatprep.mubr.f32.mxu0 0.0
      %1600 = vmatmul.mubr.f32.gmra.mrb[0].mxu0 %v1533
      %v1601 = vpop.f32.mrb[0].mxu0
      %v1602 = vadd.f32 0.0, %v1601
      %v1603 = vpop.f32.mrb[0].mxu0
      %1604 = vdwg.mxu0
      %v1606 = vsel %vm446, %v1363, 0
      %1608 = vmatprep.subr.mxu0 0.0
      %1609 = vmatpush1.msra.mxu0 %v1197
      %1610 = vmatprep.subr.mxu0 0.0
      %1611 = vmatpush1.msra.mxu0 %v1198
      %1612 = vmatprep.subr.mxu0 0.0
      %1613 = vmatpush1.msra.mxu0 0.0
      %1614 = vmatprep.subr.mxu0 0.0
      %1615 = vmatpush1.msra.mxu0 0.0
      %1616 = vmatprep.subr.mxu0 0.0
      %1617 = vmatpush1.msra.mxu0 0.0
      %1618 = vmatprep.subr.mxu0 0.0
      %1619 = vmatpush1.msra.mxu0 0.0
      %1620 = vmatprep.subr.mxu0 0.0
      %1621 = vmatpush1.msra.mxu0 0.0
      %1622 = vmatprep.subr.mxu0 0.0
      %1623 = vmatpush1.msra.mxu0 0.0
      %1624 = vmatprep.subr.mxu0 0.0
      %1625 = vmatpush1.msra.mxu0 0.0
      %1626 = vmatprep.subr.mxu0 0.0
      %1627 = vmatpush1.msra.mxu0 0.0
      %1628 = vmatprep.subr.mxu0 0.0
      %1629 = vmatpush1.msra.mxu0 0.0
      %1630 = vmatprep.subr.mxu0 0.0
      %1631 = vmatpush1.msra.mxu0 0.0
      %1632 = vmatprep.subr.mxu0 0.0
      %1633 = vmatpush1.msra.mxu0 0.0
      %1634 = vmatprep.subr.mxu0 0.0
      %1635 = vmatpush1.msra.mxu0 0.0
      %1636 = vmatprep.subr.mxu0 0.0
      %1637 = vmatpush1.msra.mxu0 0.0
      %1638 = vmatprep.subr.mxu0 0.0
      %1639 = vmatpush1.msra.mxu0 0.0
      %1640 = vmatprep.subr.mxu0 0.0
      %1641 = vmatpush1.msra.mxu0 0.0
      %1642 = vmatprep.subr.mxu0 0.0
      %1643 = vmatpush1.msra.mxu0 0.0
      %1644 = vmatprep.subr.mxu0 0.0
      %1645 = vmatpush1.msra.mxu0 0.0
      %1646 = vmatprep.subr.mxu0 0.0
      %1647 = vmatpush1.msra.mxu0 0.0
      %1648 = vmatprep.subr.mxu0 0.0
      %1649 = vmatpush1.msra.mxu0 0.0
      %1650 = vmatprep.subr.mxu0 0.0
      %1651 = vmatpush1.msra.mxu0 0.0
      %1652 = vmatprep.subr.mxu0 0.0
      %1653 = vmatpush1.msra.mxu0 0.0
      %1654 = vmatprep.subr.mxu0 0.0
      %1655 = vmatpush1.msra.mxu0 0.0
      %1656 = vmatprep.subr.mxu0 0.0
      %1657 = vmatpush1.msra.mxu0 0.0
      %1658 = vmatprep.subr.mxu0 0.0
      %1659 = vmatpush1.msra.mxu0 0.0
      %1660 = vmatprep.subr.mxu0 0.0
      %1661 = vmatpush1.msra.mxu0 0.0
      %1662 = vmatprep.subr.mxu0 0.0
      %1663 = vmatpush1.msra.mxu0 0.0
      %1664 = vmatprep.subr.mxu0 0.0
      %1665 = vmatpush1.msra.mxu0 0.0
      %1666 = vmatprep.subr.mxu0 0.0
      %1667 = vmatpush1.msra.mxu0 0.0
      %1668 = vmatprep.subr.mxu0 0.0
      %1669 = vmatpush1.msra.mxu0 0.0
      %1670 = vmatprep.subr.mxu0 0.0
      %1671 = vmatpush1.msra.mxu0 0.0
      %1672 = vmatprep.mubr.f32.mxu0 0.0
      %1673 = vmatmul.mubr.f32.gmra.mrb[0].mxu0 %v1606
      %v1674 = vpop.f32.mrb[0].mxu0
      %v1675 = vadd.f32 %v1602, %v1674
      %v1676 = vpop.f32.mrb[0].mxu0
      %1677 = vdwg.mxu0
      %v1678 = vadd.f32 %v1102, %v1675
      %v1679 = vmul.f32 %v1678, %v1678
      %v1680 = vsel %vm348, %v1679, 0.0
      %1681 = vadd.xlane.f32.xlu0 %v1680
      %v1682 = vpop.xlane.xlu0 %1681
      %v1683 = vmul.f32 %v1682, %v352
      %v1684 = vadd.f32 %v1683, 1e-06
      %v1685 = vrsqrt.pop %v1684
      %v1686 = vmul.f32 %v1678, %v1685
      %v1687 = vlaneseq
      %v1688 = vshrl.u32 %v1687, 7
      %v1689 = vsub.s32 1, %v1688
      %v1690 = vrot.slane %v1104, %v1689
      %v1691 = vmul.f32 %v1686, %v1690
      %s1692 = scalar_lea.vmem %s5, 32
      %v1693 = vld [vmem:[%s1692] sm:$0xff]
      %v1694 = vld [vmem:[%s1692 + $0x8] sm:$0xff]
      %v1695 = vld [vmem:[%s1692 + $0x10] sm:$0xff]
      %v1696 = vld [vmem:[%s1692 + $0x18] sm:$0xff]
      %v1698 = vsel %vm348, %v1691, 0
      %1700 = vmatprep.subr.mxu0 0.0
      %1701 = vmatpush1.msra.mxu0 %v1693
      %1702 = vmatprep.subr.mxu0 0.0
      %1703 = vmatpush1.msra.mxu0 %v1694
      %1704 = vmatprep.subr.mxu0 0.0
      %1705 = vmatpush1.msra.mxu0 %v1695
      %1706 = vmatprep.subr.mxu0 0.0
      %1707 = vmatpush1.msra.mxu0 %v1696
      %1708 = vmatprep.subr.mxu0 0.0
      %1709 = vmatpush1.msra.mxu0 0.0
      %1710 = vmatprep.subr.mxu0 0.0
      %1711 = vmatpush1.msra.mxu0 0.0
      %1712 = vmatprep.subr.mxu0 0.0
      %1713 = vmatpush1.msra.mxu0 0.0
      %1714 = vmatprep.subr.mxu0 0.0
      %1715 = vmatpush1.msra.mxu0 0.0
      %1716 = vmatprep.subr.mxu0 0.0
      %1717 = vmatpush1.msra.mxu0 0.0
      %1718 = vmatprep.subr.mxu0 0.0
      %1719 = vmatpush1.msra.mxu0 0.0
      %1720 = vmatprep.subr.mxu0 0.0
      %1721 = vmatpush1.msra.mxu0 0.0
      %1722 = vmatprep.subr.mxu0 0.0
      %1723 = vmatpush1.msra.mxu0 0.0
      %1724 = vmatprep.subr.mxu0 0.0
      %1725 = vmatpush1.msra.mxu0 0.0
      %1726 = vmatprep.subr.mxu0 0.0
      %1727 = vmatpush1.msra.mxu0 0.0
      %1728 = vmatprep.subr.mxu0 0.0
      %1729 = vmatpush1.msra.mxu0 0.0
      %1730 = vmatprep.subr.mxu0 0.0
      %1731 = vmatpush1.msra.mxu0 0.0
      %1732 = vmatprep.subr.mxu0 0.0
      %1733 = vmatpush1.msra.mxu0 0.0
      %1734 = vmatprep.subr.mxu0 0.0
      %1735 = vmatpush1.msra.mxu0 0.0
      %1736 = vmatprep.subr.mxu0 0.0
      %1737 = vmatpush1.msra.mxu0 0.0
      %1738 = vmatprep.subr.mxu0 0.0
      %1739 = vmatpush1.msra.mxu0 0.0
      %1740 = vmatprep.subr.mxu0 0.0
      %1741 = vmatpush1.msra.mxu0 0.0
      %1742 = vmatprep.subr.mxu0 0.0
      %1743 = vmatpush1.msra.mxu0 0.0
      %1744 = vmatprep.subr.mxu0 0.0
      %1745 = vmatpush1.msra.mxu0 0.0
      %1746 = vmatprep.subr.mxu0 0.0
      %1747 = vmatpush1.msra.mxu0 0.0
      %1748 = vmatprep.subr.mxu0 0.0
      %1749 = vmatpush1.msra.mxu0 0.0
      %1750 = vmatprep.subr.mxu0 0.0
      %1751 = vmatpush1.msra.mxu0 0.0
      %1752 = vmatprep.subr.mxu0 0.0
      %1753 = vmatpush1.msra.mxu0 0.0
      %1754 = vmatprep.subr.mxu0 0.0
      %1755 = vmatpush1.msra.mxu0 0.0
      %1756 = vmatprep.subr.mxu0 0.0
      %1757 = vmatpush1.msra.mxu0 0.0
      %1758 = vmatprep.subr.mxu0 0.0
      %1759 = vmatpush1.msra.mxu0 0.0
      %1760 = vmatprep.subr.mxu0 0.0
      %1761 = vmatpush1.msra.mxu0 0.0
      %1762 = vmatprep.subr.mxu0 0.0
      %1763 = vmatpush1.msra.mxu0 0.0
      %1764 = vmatprep.mubr.f32.mxu0 0.0
      %1765 = vmatmul.mubr.f32.gmra.mrb[0].mxu0 %v1698
      %v1766 = vpop.f32.mrb[0].mxu0
      %v1767 = vadd.f32 0.0, %v1766
      %v1768 = vpop.f32.mrb[0].mxu0
      %1769 = vdwg.mxu0
      %v1770 = vmax.f32 %v1767, 0.0
      %s1771 = scalar_lea.vmem %s6, 64
      %v1772 = vld [vmem:[%s1771] sm:$0xff]
      %v1773 = vld [vmem:[%s1771 + $0x8] sm:$0xff]
      %v1774 = vld [vmem:[%s1771 + $0x10] sm:$0xff]
      %v1775 = vld [vmem:[%s1771 + $0x18] sm:$0xff]
      %v1776 = vld [vmem:[%s1771 + $0x20] sm:$0xff]
      %v1777 = vld [vmem:[%s1771 + $0x28] sm:$0xff]
      %v1778 = vld [vmem:[%s1771 + $0x30] sm:$0xff]
      %v1779 = vld [vmem:[%s1771 + $0x38] sm:$0xff]
      %v1781 = vsel %vm1028, %v1770, 0
      %1783 = vmatprep.subr.mxu0 0.0
      %1784 = vmatpush1.msra.mxu0 %v1772
      %1785 = vmatprep.subr.mxu0 0.0
      %1786 = vmatpush1.msra.mxu0 %v1773
      %1787 = vmatprep.subr.mxu0 0.0
      %1788 = vmatpush1.msra.mxu0 %v1774
      %1789 = vmatprep.subr.mxu0 0.0
      %1790 = vmatpush1.msra.mxu0 %v1775
      %1791 = vmatprep.subr.mxu0 0.0
      %1792 = vmatpush1.msra.mxu0 %v1776
      %1793 = vmatprep.subr.mxu0 0.0
      %1794 = vmatpush1.msra.mxu0 %v1777
      %1795 = vmatprep.subr.mxu0 0.0
      %1796 = vmatpush1.msra.mxu0 %v1778
      %1797 = vmatprep.subr.mxu0 0.0
      %1798 = vmatpush1.msra.mxu0 %v1779
      %1799 = vmatprep.subr.mxu0 0.0
      %1800 = vmatpush1.msra.mxu0 0.0
      %1801 = vmatprep.subr.mxu0 0.0
      %1802 = vmatpush1.msra.mxu0 0.0
      %1803 = vmatprep.subr.mxu0 0.0
      %1804 = vmatpush1.msra.mxu0 0.0
      %1805 = vmatprep.subr.mxu0 0.0
      %1806 = vmatpush1.msra.mxu0 0.0
      %1807 = vmatprep.subr.mxu0 0.0
      %1808 = vmatpush1.msra.mxu0 0.0
      %1809 = vmatprep.subr.mxu0 0.0
      %1810 = vmatpush1.msra.mxu0 0.0
      %1811 = vmatprep.subr.mxu0 0.0
      %1812 = vmatpush1.msra.mxu0 0.0
      %1813 = vmatprep.subr.mxu0 0.0
      %1814 = vmatpush1.msra.mxu0 0.0
      %1815 = vmatprep.subr.mxu0 0.0
      %1816 = vmatpush1.msra.mxu0 0.0
      %1817 = vmatprep.subr.mxu0 0.0
      %1818 = vmatpush1.msra.mxu0 0.0
      %1819 = vmatprep.subr.mxu0 0.0
      %1820 = vmatpush1.msra.mxu0 0.0
      %1821 = vmatprep.subr.mxu0 0.0
      %1822 = vmatpush1.msra.mxu0 0.0
      %1823 = vmatprep.subr.mxu0 0.0
      %1824 = vmatpush1.msra.mxu0 0.0
      %1825 = vmatprep.subr.mxu0 0.0
      %1826 = vmatpush1.msra.mxu0 0.0
      %1827 = vmatprep.subr.mxu0 0.0
      %1828 = vmatpush1.msra.mxu0 0.0
      %1829 = vmatprep.subr.mxu0 0.0
      %1830 = vmatpush1.msra.mxu0 0.0
      %1831 = vmatprep.subr.mxu0 0.0
      %1832 = vmatpush1.msra.mxu0 0.0
      %1833 = vmatprep.subr.mxu0 0.0
      %1834 = vmatpush1.msra.mxu0 0.0
      %1835 = vmatprep.subr.mxu0 0.0
      %1836 = vmatpush1.msra.mxu0 0.0
      %1837 = vmatprep.subr.mxu0 0.0
      %1838 = vmatpush1.msra.mxu0 0.0
      %1839 = vmatprep.subr.mxu0 0.0
      %1840 = vmatpush1.msra.mxu0 0.0
      %1841 = vmatprep.subr.mxu0 0.0
      %1842 = vmatpush1.msra.mxu0 0.0
      %1843 = vmatprep.subr.mxu0 0.0
      %1844 = vmatpush1.msra.mxu0 0.0
      %1845 = vmatprep.subr.mxu0 0.0
      %1846 = vmatpush1.msra.mxu0 0.0
      %1847 = vmatprep.mubr.f32.mxu0 0.0
      %1848 = vmatmul.mubr.f32.gmra.mrb[0].mxu0 %v1781
      %v1849 = vpop.f32.mrb[0].mxu0
      %v1850 = vadd.f32 0.0, %v1849
      %v1851 = vpop.f32.mrb[0].mxu0
      %1852 = vdwg.mxu0
      %v1853 = vadd.f32 %v1678, %v1850
      %v1854 = vld [vmem:[%s8] sm:$0x1]
      %v1855 = vmul.f32 %v1853, %v1853
      %v1856 = vsel %vm348, %v1855, 0.0
      %1857 = vadd.xlane.f32.xlu0 %v1856
      %v1858 = vpop.xlane.xlu0 %1857
      %v1859 = vmul.f32 %v1858, %v352
      %v1860 = vadd.f32 %v1859, 1e-06
      %v1861 = vrsqrt.pop %v1860
      %v1862 = vmul.f32 %v1853, %v1861
      %v1864 = vlaneseq
      %v1865 = vshrl.u32 %v1864, 7
      %v1866 = vsub.s32 0, %v1865
      %v1867 = vrot.slane %v1854, %v1866
      %v1869 = vmul.f32 %v1862, %v1867
      %1870 = vst.msk [vmem:[%s341] sm:$0xff] %vm348, %v1869
      %p1871 = scmp.lt.s32.totalorder %s20, 1
      %s1872 = scalar_select %p1871, %s20, 1
      %s1873 = smul.addr %s1872, 8
      %s1874 = scalar_lea.vmem %s9, %s1873
      // Predicated region
      $region57: #{t5_generation_loss.3} parent=55 // pred_check
        %p1875 = pneg %p237
      $region58: #{t5_generation_loss.3} parent=55 // pred_check_branch
        %1877 = sbr.rel (%p1875) target = $region60
      $region59: #{t5_generation_loss.3} parent=55 // pred_region
        _
      $region60: #{t5_generation_loss.3} parent=55 // pred_fallthru
        _
    $region56: #{t5_generation_loss.3} parent=5 // pred_fallthru
      _
    %p1878 = scmp.le.s32.totalorder 2, %s15
    // Predicated region
    $region61: #{t5_generation_loss.3} parent=5 // pred_check
      %p1879 = pneg %p1878
    $region62: #{t5_generation_loss.3} parent=5 // pred_check_branch
      %1881 = sbr.rel (%p1879) target = $region64
    $region63: #{t5_generation_loss.3} parent=5 // pred_region
      %s1882 = ssub.s32 %s15, 2
      // Predicated region
      $region65: #{t5_generation_loss.3} parent=63 // pred_check
        %p1883 = pneg %p243
      $region66: #{t5_generation_loss.3} parent=63 // pred_check_branch
        %1885 = sbr.rel (%p1883) target = $region68
      $region67: #{t5_generation_loss.3} parent=63 // pred_region
        %p1886 = scmp.lt.s32.totalorder %s21, 1
        %s1887 = scalar_select %p1886, %s21, 1
        %s1888 = smul.addr %s1887, 8
        %s1889 = scalar_lea.vmem %s9, %s1888
      $region68: #{t5_generation_loss.3} parent=63 // pred_fallthru
        _
    $region64: #{t5_generation_loss.3} parent=5 // pred_fallthru
      _
  $region6: #{t5_generation_loss.3} parent=0 // loop_footer
    %s19 = sadd.s32 1, %s15
  $region7: #{t5_generation_loss.3} parent=0 // loop_footer_branch
    %14 = sbr.rel target = $region3
  $region8: #{t5_generation_loss.3} parent=0 // loop_exit
    _

// kernel: t5_generation_loss.4
$region0: #{t5_generation_loss.4}
  #allocation0 [shape = 'u32[]', space=smem, size = 0x4, offset = 0x4, fixed_abs, tag = 'smem constant byte address 0x4 - core index']
  #allocation1 [shape = 'u32[144,128]{1,0:T(1,128)}', space=vmem, size = 0x12000, scoped, tag = 'internal scratch']
  %s0 = inlined_call_operand.vmem [shape: f32[2,8,32], index: 0, kind: input, shape index: {}]
  %s1 = inlined_call_operand.vmem [shape: f32[2,8,32], index: 1, kind: input, shape index: {}]
  %s2 = inlined_call_operand.vmem [shape: f32[2,1,8], index: 2, kind: input, shape index: {}]
  %s3 = inlined_call_operand.vmem [shape: f32[2,8,8], index: 3, kind: input, shape index: {}]
  %s4 = inlined_call_operand.vmem [shape: f32[2,32,96], index: 4, kind: input, shape index: {}]
  %s5 = inlined_call_operand.vmem [shape: f32[2,32,32], index: 5, kind: input, shape index: {}]
  %s6 = inlined_call_operand.vmem [shape: f32[2,32,32], index: 6, kind: input, shape index: {}]
  %s7 = inlined_call_operand.vmem [shape: f32[2,32,64], index: 7, kind: input, shape index: {}]
  %s8 = inlined_call_operand.vmem [shape: f32[2,32,32], index: 8, kind: input, shape index: {}]
  %s9 = inlined_call_operand.vmem [shape: f32[2,32,64], index: 9, kind: input, shape index: {}]
  %s10 = inlined_call_operand.vmem [shape: f32[2,64,32], index: 10, kind: input, shape index: {}]
  %s11 = inlined_call_operand.vmem [shape: f32[2,3,32], index: 11, kind: input, shape index: {}]
  %s12 = inlined_call_operand.vmem [shape: f32[1,32], index: 12, kind: input, shape index: {}]
  %s13 = inlined_call_operand.vmem [shape: f32[2,8,32], index: 13, kind: output, shape index: {}]
  %s14 = sld [smem:[#allocation0]]
  $region85: #{t5_generation_loss.4} parent=0
    _
  %s16 = ssub.s32 1, %s14
  %s17 = scalar_select 0, %s16, %s14
  loop: start=0, step=1, limit=4
  $region2: #{t5_generation_loss.4} parent=0 // loop_pre_header
    _
  $region3: #{t5_generation_loss.4} parent=0 // loop_header
    %s19 = sphi 0, %s23
    %p20 = scmp.ge.s32.totalorder %s19, 4
    %s29 = sphi 0, %s31
    %s32 = sphi 0, %s29
    %s33 = sphi 0, %s32
    %s49 = sphi 0, %s33
    %s55 = sphi 0, %s57
    %s58 = sphi 0, %s55
    %s59 = sphi 0, %s58
    %s75 = sphi 0, %s59
    %s81 = sphi 0, %s83
    %s84 = sphi 0, %s81
    %s85 = sphi 0, %s84
    %s101 = sphi 0, %s85
    %s105 = sphi 0, %s105
    %s107 = sphi 0, %s105
    %s108 = sphi 0, %s107
    %s122 = sphi 0, %s108
    %s126 = sphi 0, %s126
    %s128 = sphi 0, %s126
    %s129 = sphi 0, %s128
    %s143 = sphi 0, %s129
    %s147 = sphi 0, %s147
    %s149 = sphi 0, %s147
    %s150 = sphi 0, %s149
    %s164 = sphi 0, %s150
    %s168 = sphi 0, %s168
    %s170 = sphi 0, %s168
    %s171 = sphi 0, %s170
    %s185 = sphi 0, %s171
    %s189 = sphi 0, %s189
    %s191 = sphi 0, %s189
    %s192 = sphi 0, %s191
    %s206 = sphi 0, %s192
    %s210 = sphi 0, %s210
    %s212 = sphi 0, %s210
    %s213 = sphi 0, %s212
    %s227 = sphi 0, %s213
    %s231 = sphi 0, %s231
    %s233 = sphi 0, %s231
    %s234 = sphi 0, %s233
    %s248 = sphi 0, %s234
    %s252 = sphi 0, %s252
    %s254 = sphi 0, %s252
    %s255 = sphi 0, %s254
    %s269 = sphi 0, %s255
    %s273 = sphi 0, %s273
    %s275 = sphi 0, %s273
    %s276 = sphi 0, %s275
    %s290 = sphi 0, %s276
    %s294 = sphi 0, %s294
    %s296 = sphi 0, %s294
    %s297 = sphi 0, %s296
    %s311 = sphi 0, %s297
    %s317 = sphi 0, %s319
    %s320 = sphi 0, %s317
    %s321 = sphi 0, %s320
    %s337 = sphi 0, %s321
  $region4: #{t5_generation_loss.4} parent=0 // loop_header_branch
    %22 = sbr.rel (%p20) target = $region8
  $region5: #{t5_generation_loss.4} parent=0 // loop_body
    %s24 = ssub.s32 %s19, 1
    %s25 = ssub.s32 %s19, 2
    %s26 = sadd.s32 %s19, 1
    %s27 = ssub.s32 %s19, %s26
    %p28 = scmp.eq.s32.totalorder %s27, 0
    %s30 = sadd.s32 %s29, 1
    %s31 = scalar_select %p28, %s29, %s30
    %p34 = pneg %p28
    %p35 = scmp.eq.s32.totalorder %s19, 1
    %p36 = por %p34, %p35
    %p37 = scmp.ne.s32.totalorder %s29, %s32
    %p38 = scmp.eq.s32.totalorder %s19, 0
    %p39 = por %p37, %p38
    %p40 = scmp.ne.s32.totalorder %s29, %s32
    %p41 = scmp.eq.s32.totalorder %s24, 1
    %p42 = por %p40, %p41
    %p43 = scmp.ne.s32.totalorder %s32, %s33
    %p44 = scmp.eq.s32.totalorder %s24, 0
    %p45 = por %p43, %p44
    %p46 = scmp.ne.s32.totalorder %s32, %s33
    %p47 = scmp.eq.s32.totalorder %s25, 1
    %p48 = por %p46, %p47
    %p50 = scmp.ne.s32.totalorder %s33, %s49
    %p51 = scmp.eq.s32.totalorder %s25, 0
    %p52 = por %p50, %p51
    %s53 = ssub.s32 %s19, %s26
    %p54 = scmp.eq.s32.totalorder %s53, 0
    %s56 = sadd.s32 %s55, 1
    %s57 = scalar_select %p54, %s55, %s56
    %p60 = pneg %p54
    %p61 = scmp.eq.s32.totalorder %s19, 1
    %p62 = por %p60, %p61
    %p63 = scmp.ne.s32.totalorder %s55, %s58
    %p64 = scmp.eq.s32.totalorder %s19, 0
    %p65 = por %p63, %p64
    %p66 = scmp.ne.s32.totalorder %s55, %s58
    %p67 = scmp.eq.s32.totalorder %s24, 1
    %p68 = por %p66, %p67
    %p69 = scmp.ne.s32.totalorder %s58, %s59
    %p70 = scmp.eq.s32.totalorder %s24, 0
    %p71 = por %p69, %p70
    %p72 = scmp.ne.s32.totalorder %s58, %s59
    %p73 = scmp.eq.s32.totalorder %s25, 1
    %p74 = por %p72, %p73
    %p76 = scmp.ne.s32.totalorder %s59, %s75
    %p77 = scmp.eq.s32.totalorder %s25, 0
    %p78 = por %p76, %p77
    %s79 = ssub.s32 %s19, %s26
    %p80 = scmp.eq.s32.totalorder %s79, 0
    %s82 = sadd.s32 %s81, 1
    %s83 = scalar_select %p80, %s81, %s82
    %p86 = pneg %p80
    %p87 = scmp.eq.s32.totalorder %s19, 1
    %p88 = por %p86, %p87
    %p89 = scmp.ne.s32.totalorder %s81, %s84
    %p90 = scmp.eq.s32.totalorder %s19, 0
    %p91 = por %p89, %p90
    %p92 = scmp.ne.s32.totalorder %s81, %s84
    %p93 = scmp.eq.s32.totalorder %s24, 1
    %p94 = por %p92, %p93
    %p95 = scmp.ne.s32.totalorder %s84, %s85
    %p96 = scmp.eq.s32.totalorder %s24, 0
    %p97 = por %p95, %p96
    %p98 = scmp.ne.s32.totalorder %s84, %s85
    %p99 = scmp.eq.s32.totalorder %s25, 1
    %p100 = por %p98, %p99
    %p102 = scmp.ne.s32.totalorder %s85, %s101
    %p103 = scmp.eq.s32.totalorder %s25, 0
    %p104 = por %p102, %p103
    %s106 = sadd.s32 %s105, 1
    %p109 = scmp.eq.s32.totalorder %s19, 1
    %p110 = scmp.ne.s32.totalorder %s105, %s107
    %p111 = scmp.eq.s32.totalorder %s19, 0
    %p112 = por %p110, %p111
    %p113 = scmp.ne.s32.totalorder %s105, %s107
    %p114 = scmp.eq.s32.totalorder %s24, 1
    %p115 = por %p113, %p114
    %p116 = scmp.ne.s32.totalorder %s107, %s108
    %p117 = scmp.eq.s32.totalorder %s24, 0
    %p118 = por %p116, %p117
    %p119 = scmp.ne.s32.totalorder %s107, %s108
    %p120 = scmp.eq.s32.totalorder %s25, 1
    %p121 = por %p119, %p120
    %p123 = scmp.ne.s32.totalorder %s108, %s122
    %p124 = scmp.eq.s32.totalorder %s25, 0
    %p125 = por %p123, %p124
    %s127 = sadd.s32 %s126, 1
    %p130 = scmp.eq.s32.totalorder %s19, 1
    %p131 = scmp.ne.s32.totalorder %s126, %s128
    %p132 = scmp.eq.s32.totalorder %s19, 0
    %p133 = por %p131, %p132
    %p134 = scmp.ne.s32.totalorder %s126, %s128
    %p135 = scmp.eq.s32.totalorder %s24, 1
    %p136 = por %p134, %p135
    %p137 = scmp.ne.s32.totalorder %s128, %s129
    %p138 = scmp.eq.s32.totalorder %s24, 0
    %p139 = por %p137, %p138
    %p140 = scmp.ne.s32.totalorder %s128, %s129
    %p141 = scmp.eq.s32.totalorder %s25, 1
    %p142 = por %p140, %p141
    %p144 = scmp.ne.s32.totalorder %s129, %s143
    %p145 = scmp.eq.s32.totalorder %s25, 0
    %p146 = por %p144, %p145
    %s148 = sadd.s32 %s147, 1
    %p151 = scmp.eq.s32.totalorder %s19, 1
    %p152 = scmp.ne.s32.totalorder %s147, %s149
    %p153 = scmp.eq.s32.totalorder %s19, 0
    %p154 = por %p152, %p153
    %p155 = scmp.ne.s32.totalorder %s147, %s149
    %p156 = scmp.eq.s32.totalorder %s24, 1
    %p157 = por %p155, %p156
    %p158 = scmp.ne.s32.totalorder %s149, %s150
    %p159 = scmp.eq.s32.totalorder %s24, 0
    %p160 = por %p158, %p159
    %p161 = scmp.ne.s32.totalorder %s149, %s150
    %p162 = scmp.eq.s32.totalorder %s25, 1
    %p163 = por %p161, %p162
    %p165 = scmp.ne.s32.totalorder %s150, %s164
    %p166 = scmp.eq.s32.totalorder %s25, 0
    %p167 = por %p165, %p166
    %s169 = sadd.s32 %s168, 1
    %p172 = scmp.eq.s32.totalorder %s19, 1
    %p173 = scmp.ne.s32.totalorder %s168, %s170
    %p174 = scmp.eq.s32.totalorder %s19, 0
    %p175 = por %p173, %p174
    %p176 = scmp.ne.s32.totalorder %s168, %s170
    %p177 = scmp.eq.s32.totalorder %s24, 1
    %p178 = por %p176, %p177
    %p179 = scmp.ne.s32.totalorder %s170, %s171
    %p180 = scmp.eq.s32.totalorder %s24, 0
    %p181 = por %p179, %p180
    %p182 = scmp.ne.s32.totalorder %s170, %s171
    %p183 = scmp.eq.s32.totalorder %s25, 1
    %p184 = por %p182, %p183
    %p186 = scmp.ne.s32.totalorder %s171, %s185
    %p187 = scmp.eq.s32.totalorder %s25, 0
    %p188 = por %p186, %p187
    %s190 = sadd.s32 %s189, 1
    %p193 = scmp.eq.s32.totalorder %s19, 1
    %p194 = scmp.ne.s32.totalorder %s189, %s191
    %p195 = scmp.eq.s32.totalorder %s19, 0
    %p196 = por %p194, %p195
    %p197 = scmp.ne.s32.totalorder %s189, %s191
    %p198 = scmp.eq.s32.totalorder %s24, 1
    %p199 = por %p197, %p198
    %p200 = scmp.ne.s32.totalorder %s191, %s192
    %p201 = scmp.eq.s32.totalorder %s24, 0
    %p202 = por %p200, %p201
    %p203 = scmp.ne.s32.totalorder %s191, %s192
    %p204 = scmp.eq.s32.totalorder %s25, 1
    %p205 = por %p203, %p204
    %p207 = scmp.ne.s32.totalorder %s192, %s206
    %p208 = scmp.eq.s32.totalorder %s25, 0
    %p209 = por %p207, %p208
    %s211 = sadd.s32 %s210, 1
    %p214 = scmp.eq.s32.totalorder %s19, 1
    %p215 = scmp.ne.s32.totalorder %s210, %s212
    %p216 = scmp.eq.s32.totalorder %s19, 0
    %p217 = por %p215, %p216
    %p218 = scmp.ne.s32.totalorder %s210, %s212
    %p219 = scmp.eq.s32.totalorder %s24, 1
    %p220 = por %p218, %p219
    %p221 = scmp.ne.s32.totalorder %s212, %s213
    %p222 = scmp.eq.s32.totalorder %s24, 0
    %p223 = por %p221, %p222
    %p224 = scmp.ne.s32.totalorder %s212, %s213
    %p225 = scmp.eq.s32.totalorder %s25, 1
    %p226 = por %p224, %p225
    %p228 = scmp.ne.s32.totalorder %s213, %s227
    %p229 = scmp.eq.s32.totalorder %s25, 0
    %p230 = por %p228, %p229
    %s232 = sadd.s32 %s231, 1
    %p235 = scmp.eq.s32.totalorder %s19, 1
    %p236 = scmp.ne.s32.totalorder %s231, %s233
    %p237 = scmp.eq.s32.totalorder %s19, 0
    %p238 = por %p236, %p237
    %p239 = scmp.ne.s32.totalorder %s231, %s233
    %p240 = scmp.eq.s32.totalorder %s24, 1
    %p241 = por %p239, %p240
    %p242 = scmp.ne.s32.totalorder %s233, %s234
    %p243 = scmp.eq.s32.totalorder %s24, 0
    %p244 = por %p242, %p243
    %p245 = scmp.ne.s32.totalorder %s233, %s234
    %p246 = scmp.eq.s32.totalorder %s25, 1
    %p247 = por %p245, %p246
    %p249 = scmp.ne.s32.totalorder %s234, %s248
    %p250 = scmp.eq.s32.totalorder %s25, 0
    %p251 = por %p249, %p250
    %s253 = sadd.s32 %s252, 1
    %p256 = scmp.eq.s32.totalorder %s19, 1
    %p257 = scmp.ne.s32.totalorder %s252, %s254
    %p258 = scmp.eq.s32.totalorder %s19, 0
    %p259 = por %p257, %p258
    %p260 = scmp.ne.s32.totalorder %s252, %s254
    %p261 = scmp.eq.s32.totalorder %s24, 1
    %p262 = por %p260, %p261
    %p263 = scmp.ne.s32.totalorder %s254, %s255
    %p264 = scmp.eq.s32.totalorder %s24, 0
    %p265 = por %p263, %p264
    %p266 = scmp.ne.s32.totalorder %s254, %s255
    %p267 = scmp.eq.s32.totalorder %s25, 1
    %p268 = por %p266, %p267
    %p270 = scmp.ne.s32.totalorder %s255, %s269
    %p271 = scmp.eq.s32.totalorder %s25, 0
    %p272 = por %p270, %p271
    %s274 = sadd.s32 %s273, 1
    %p277 = scmp.eq.s32.totalorder %s19, 1
    %p278 = scmp.ne.s32.totalorder %s273, %s275
    %p279 = scmp.eq.s32.totalorder %s19, 0
    %p280 = por %p278, %p279
    %p281 = scmp.ne.s32.totalorder %s273, %s275
    %p282 = scmp.eq.s32.totalorder %s24, 1
    %p283 = por %p281, %p282
    %p284 = scmp.ne.s32.totalorder %s275, %s276
    %p285 = scmp.eq.s32.totalorder %s24, 0
    %p286 = por %p284, %p285
    %p287 = scmp.ne.s32.totalorder %s275, %s276
    %p288 = scmp.eq.s32.totalorder %s25, 1
    %p289 = por %p287, %p288
    %p291 = scmp.ne.s32.totalorder %s276, %s290
    %p292 = scmp.eq.s32.totalorder %s25, 0
    %p293 = por %p291, %p292
    %s295 = sadd.s32 %s294, 1
    %p298 = scmp.eq.s32.totalorder %s19, 1
    %p299 = scmp.ne.s32.totalorder %s294, %s296
    %p300 = scmp.eq.s32.totalorder %s19, 0
    %p301 = por %p299, %p300
    %p302 = scmp.ne.s32.totalorder %s294, %s296
    %p303 = scmp.eq.s32.totalorder %s24, 1
    %p304 = por %p302, %p303
    %p305 = scmp.ne.s32.totalorder %s296, %s297
    %p306 = scmp.eq.s32.totalorder %s24, 0
    %p307 = por %p305, %p306
    %p308 = scmp.ne.s32.totalorder %s296, %s297
    %p309 = scmp.eq.s32.totalorder %s25, 1
    %p310 = por %p308, %p309
    %p312 = scmp.ne.s32.totalorder %s297, %s311
    %p313 = scmp.eq.s32.totalorder %s25, 0
    %p314 = por %p312, %p313
    %s315 = ssub.s32 %s19, %s26
    %p316 = scmp.eq.s32.totalorder %s315, 0
    %s318 = sadd.s32 %s317, 1
    %s319 = scalar_select %p316, %s317, %s318
    %p322 = pneg %p316
    %p323 = scmp.eq.s32.totalorder %s19, 1
    %p324 = por %p322, %p323
    %p325 = scmp.ne.s32.totalorder %s317, %s320
    %p326 = scmp.eq.s32.totalorder %s19, 0
    %p327 = por %p325, %p326
    %p328 = scmp.ne.s32.totalorder %s317, %s320
    %p329 = scmp.eq.s32.totalorder %s24, 1
    %p330 = por %p328, %p329
    %p331 = scmp.ne.s32.totalorder %s320, %s321
    %p332 = scmp.eq.s32.totalorder %s24, 0
    %p333 = por %p331, %p332
    %p334 = scmp.ne.s32.totalorder %s320, %s321
    %p335 = scmp.eq.s32.totalorder %s25, 1
    %p336 = por %p334, %p335
    %p338 = scmp.ne.s32.totalorder %s321, %s337
    %p339 = scmp.eq.s32.totalorder %s25, 0
    %p340 = por %p338, %p339
    %p341 = scmp.le.s32.totalorder 1, %s19
    %p342 = scmp.lt.s32.totalorder %s19, 3
    %p343 = pnand %p341, %p342
    %p344 = pneg %p343
    // Predicated region
    $region9: #{t5_generation_loss.4} parent=5 // pred_check
      _
    $region10: #{t5_generation_loss.4} parent=5 // pred_check_branch
      %346 = sbr.rel (%p343) target = $region12
    $region11: #{t5_generation_loss.4} parent=5 // pred_region
      %s347 = ssub.s32 %s19, 1
      // Predicated region
      $region13: #{t5_generation_loss.4} parent=11 // pred_check
        %p348 = pneg %p118
      $region14: #{t5_generation_loss.4} parent=11 // pred_check_branch
        %350 = sbr.rel (%p348) target = $region16
      $region15: #{t5_generation_loss.4} parent=11 // pred_region
        _
      $region16: #{t5_generation_loss.4} parent=11 // pred_fallthru
        _
      // Predicated region
      $region17: #{t5_generation_loss.4} parent=11 // pred_check
        %p351 = pneg %p139
      $region18: #{t5_generation_loss.4} parent=11 // pred_check_branch
        %353 = sbr.rel (%p351) target = $region20
      $region19: #{t5_generation_loss.4} parent=11 // pred_region
        _
      $region20: #{t5_generation_loss.4} parent=11 // pred_fallthru
        _
      // Predicated region
      $region21: #{t5_generation_loss.4} parent=11 // pred_check
        %p354 = pneg %p160
      $region22: #{t5_generation_loss.4} parent=11 // pred_check_branch
        %356 = sbr.rel (%p354) target = $region24
      $region23: #{t5_generation_loss.4} parent=11 // pred_region
        _
      $region24: #{t5_generation_loss.4} parent=11 // pred_fallthru
        _
      // Predicated region
      $region25: #{t5_generation_loss.4} parent=11 // pred_check
        %p357 = pneg %p181
      $region26: #{t5_generation_loss.4} parent=11 // pred_check_branch
        %359 = sbr.rel (%p357) target = $region28
      $region27: #{t5_generation_loss.4} parent=11 // pred_region
        _
      $region28: #{t5_generation_loss.4} parent=11 // pred_fallthru
        _
      // Predicated region
      $region29: #{t5_generation_loss.4} parent=11 // pred_check
        %p360 = pneg %p202
      $region30: #{t5_generation_loss.4} parent=11 // pred_check_branch
        %362 = sbr.rel (%p360) target = $region32
      $region31: #{t5_generation_loss.4} parent=11 // pred_region
        _
      $region32: #{t5_generation_loss.4} parent=11 // pred_fallthru
        _
      // Predicated region
      $region33: #{t5_generation_loss.4} parent=11 // pred_check
        %p363 = pneg %p223
      $region34: #{t5_generation_loss.4} parent=11 // pred_check_branch
        %365 = sbr.rel (%p363) target = $region36
      $region35: #{t5_generation_loss.4} parent=11 // pred_region
        _
      $region36: #{t5_generation_loss.4} parent=11 // pred_fallthru
        _
      // Predicated region
      $region37: #{t5_generation_loss.4} parent=11 // pred_check
        %p366 = pneg %p244
      $region38: #{t5_generation_loss.4} parent=11 // pred_check_branch
        %368 = sbr.rel (%p366) target = $region40
      $region39: #{t5_generation_loss.4} parent=11 // pred_region
        _
      $region40: #{t5_generation_loss.4} parent=11 // pred_fallthru
        _
      // Predicated region
      $region41: #{t5_generation_loss.4} parent=11 // pred_check
        %p369 = pneg %p265
      $region42: #{t5_generation_loss.4} parent=11 // pred_check_branch
        %371 = sbr.rel (%p369) target = $region44
      $region43: #{t5_generation_loss.4} parent=11 // pred_region
        _
      $region44: #{t5_generation_loss.4} parent=11 // pred_fallthru
        _
      // Predicated region
      $region45: #{t5_generation_loss.4} parent=11 // pred_check
        %p372 = pneg %p286
      $region46: #{t5_generation_loss.4} parent=11 // pred_check_branch
        %374 = sbr.rel (%p372) target = $region48
      $region47: #{t5_generation_loss.4} parent=11 // pred_region
        _
      $region48: #{t5_generation_loss.4} parent=11 // pred_fallthru
        _
      // Predicated region
      $region49: #{t5_generation_loss.4} parent=11 // pred_check
        %p375 = pneg %p307
      $region50: #{t5_generation_loss.4} parent=11 // pred_check_branch
        %377 = sbr.rel (%p375) target = $region52
      $region51: #{t5_generation_loss.4} parent=11 // pred_region
        _
      $region52: #{t5_generation_loss.4} parent=11 // pred_fallthru
        _
    $region12: #{t5_generation_loss.4} parent=5 // pred_fallthru
      _
    %p378 = scmp.lt.s32.totalorder %s19, 2
    // Predicated region
    $region53: #{t5_generation_loss.4} parent=5 // pred_check
      %p379 = pneg %p378
    $region54: #{t5_generation_loss.4} parent=5 // pred_check_branch
      %381 = sbr.rel (%p379) target = $region56
    $region55: #{t5_generation_loss.4} parent=5 // pred_region
      // Predicated region
      $region57: #{t5_generation_loss.4} parent=55 // pred_check
        %p382 = pneg %p39
      $region58: #{t5_generation_loss.4} parent=55 // pred_check_branch
        %384 = sbr.rel (%p382) target = $region60
      $region59: #{t5_generation_loss.4} parent=55 // pred_region
        %p385 = scmp.lt.s32.totalorder %s19, 1
        %s386 = scalar_select %p385, %s19, 1
        %s387 = smul.addr %s386, 8
        %s388 = scalar_lea.vmem %s0, %s387
      $region60: #{t5_generation_loss.4} parent=55 // pred_fallthru
        _
      // Predicated region
      $region61: #{t5_generation_loss.4} parent=55 // pred_check
        %p389 = pneg %p65
      $region62: #{t5_generation_loss.4} parent=55 // pred_check_branch
        %391 = sbr.rel (%p389) target = $region64
      $region63: #{t5_generation_loss.4} parent=55 // pred_region
        %p392 = scmp.lt.s32.totalorder %s19, 1
        %s393 = scalar_select %p392, %s19, 1
        %s394 = smul.addr %s393, 8
        %s395 = scalar_lea.vmem %s1, %s394
      $region64: #{t5_generation_loss.4} parent=55 // pred_fallthru
        _
      // Predicated region
      $region65: #{t5_generation_loss.4} parent=55 // pred_check
        %p396 = pneg %p91
      $region66: #{t5_generation_loss.4} parent=55 // pred_check_branch
        %398 = sbr.rel (%p396) target = $region68
      $region67: #{t5_generation_loss.4} parent=55 // pred_region
        %p399 = scmp.lt.s32.totalorder %s19, 1
        %s400 = scalar_select %p399, %s19, 1
        %s401 = scalar_lea.vmem %s2, %s400
      $region68: #{t5_generation_loss.4} parent=55 // pred_fallthru
        _
    $region56: #{t5_generation_loss.4} parent=5 // pred_fallthru
      _
    %p402 = scmp.le.s32.totalorder 1, %s19
    %p403 = scmp.lt.s32.totalorder %s19, 3
    %p404 = pnand %p402, %p403
    %p405 = pneg %p404
    // Predicated region
    $region69: #{t5_generation_loss.4} parent=5 // pred_check
      _
    $region70: #{t5_generation_loss.4} parent=5 // pred_check_branch
      %407 = sbr.rel (%p404) target = $region72
    $region71: #{t5_generation_loss.4} parent=5 // pred_region
      %s408 = ssub.s32 %s19, 1
      %p409 = scmp.lt.s32.totalorder %s24, 1
      %s410 = scalar_select %p409, %s24, 1
      %s411 = smul.addr %s410, 8
      %s412 = scalar_lea.vmem %s0, %s411
      %p413 = pneg %p45
      %p414 = pneg %p42
      %p415 = scmp.lt.s32.totalorder %s24, 1
      %s416 = scalar_select %p415, %s24, 1
      %s417 = smul.addr %s416, 8
      %s418 = scalar_lea.vmem %s1, %s417
      %p419 = pneg %p71
      %p420 = pneg %p68
      %p421 = scmp.lt.s32.totalorder %s24, 1
      %s422 = scalar_select %p421, %s24, 1
      %s423 = scalar_lea.vmem %s2, %s422
      %p424 = pneg %p97
      %p425 = pneg %p94
      %p426 = pneg %p118
      %p427 = pneg %p115
      %p428 = pneg %p139
      %p429 = pneg %p136
      %p430 = pneg %p160
      %p431 = pneg %p157
      %p432 = pneg %p181
      %p433 = pneg %p178
      %p434 = pneg %p202
      %p435 = pneg %p199
      %p436 = pneg %p223
      %p437 = pneg %p220
      %p438 = pneg %p244
      %p439 = pneg %p241
      %p440 = pneg %p265
      %p441 = pneg %p262
      %p442 = pneg %p286
      %p443 = pneg %p283
      %p444 = pneg %p307
      %p445 = pneg %p304
      %p446 = pneg %p333
      %p447 = pneg %p330
      %p448 = scmp.lt.s32.totalorder %s24, 1
      %s449 = scalar_select %p448, %s24, 1
      %s450 = smul.addr %s449, 8
      %s451 = scalar_lea.vmem %s13, %s450
      %p452 = scmp.lt.s32.totalorder %s24, 1
      %s453 = scalar_select %p452, %s24, 1
      %s454 = smul.addr %s453, 8
      %s455 = scalar_lea.vmem %s0, %s454
      %p456 = scmp.lt.s32.totalorder %s24, 1
      %s457 = scalar_select %p456, %s24, 1
      %s458 = smul.addr %s457, 8
      %s459 = scalar_lea.vmem %s1, %s458
      %p460 = scmp.lt.s32.totalorder %s24, 1
      %s461 = scalar_select %p460, %s24, 1
      %s462 = scalar_lea.vmem %s2, %s461
      %p463 = scmp.lt.s32.totalorder %s24, 1
      %s464 = scalar_select %p463, %s24, 1
      %s465 = smul.addr %s464, 8
      %s466 = scalar_lea.vmem %s13, %s465
      %v467 = vld [vmem:[%s455] sm:$0xff]
      %v468 = vld [vmem:[%s459] sm:$0xff]
      %v469 = vld [vmem:[%s462] sm:$0x1]
      %v470 = vld [vmem:[%s3] sm:$0xff]
      %v471 = vld [vmem:[%s3 + $0x8] sm:$0xff]
      %v472 = vld [vmem:[%s11] sm:$0x7]
      %v473 = vmul.f32 %v467, %v467
      %vm474 = vcmask 261120
      %v475 = vsel %vm474, %v473, 0.0
      %476 = vadd.xlane.f32.xlu0 %v475
      %v477 = vpop.xlane.xlu0 %476
      %v478 = vrcp.pop 32.0
      %v479 = vmul.f32 %v477, %v478
      %v480 = vadd.f32 %v479, 1e-06
      %v481 = vrsqrt.pop %v480
      %v482 = vmul.f32 %v467, %v481
      %v483 = vlaneseq
      %v484 = vshrl.u32 %v483, 7
      %v485 = vsub.s32 0, %v484
      %v486 = vrot.slane %v472, %v485
      %v487 = vmul.f32 %v482, %v486
      %v488 = vld [vmem:[%s4] sm:$0xff]
      %v489 = vld [vmem:[%s4 + $0x8] sm:$0xff]
      %v490 = vld [vmem:[%s4 + $0x10] sm:$0xff]
      %v491 = vld [vmem:[%s4 + $0x18] sm:$0xff]
      %v493 = vsel %vm474, %v487, 0
      %495 = vmatprep.subr.mxu0 0.0
      %496 = vmatpush1.msra.mxu0 %v488
      %497 = vmatprep.subr.mxu0 0.0
      %498 = vmatpush1.msra.mxu0 %v489
      %499 = vmatprep.subr.mxu0 0.0
      %500 = vmatpush1.msra.mxu0 %v490
      %501 = vmatprep.subr.mxu0 0.0
      %502 = vmatpush1.msra.mxu0 %v491
      %503 = vmatprep.subr.mxu0 0.0
      %504 = vmatpush1.msra.mxu0 0.0
      %505 = vmatprep.subr.mxu0 0.0
      %506 = vmatpush1.msra.mxu0 0.0
      %507 = vmatprep.subr.mxu0 0.0
      %508 = vmatpush1.msra.mxu0 0.0
      %509 = vmatprep.subr.mxu0 0.0
      %510 = vmatpush1.msra.mxu0 0.0
      %511 = vmatprep.subr.mxu0 0.0
      %512 = vmatpush1.msra.mxu0 0.0
      %513 = vmatprep.subr.mxu0 0.0
      %514 = vmatpush1.msra.mxu0 0.0
      %515 = vmatprep.subr.mxu0 0.0
      %516 = vmatpush1.msra.mxu0 0.0
      %517 = vmatprep.subr.mxu0 0.0
      %518 = vmatpush1.msra.mxu0 0.0
      %519 = vmatprep.subr.mxu0 0.0
      %520 = vmatpush1.msra.mxu0 0.0
      %521 = vmatprep.subr.mxu0 0.0
      %522 = vmatpush1.msra.mxu0 0.0
      %523 = vmatprep.subr.mxu0 0.0
      %524 = vmatpush1.msra.mxu0 0.0
      %525 = vmatprep.subr.mxu0 0.0
      %526 = vmatpush1.msra.mxu0 0.0
      %527 = vmatprep.subr.mxu0 0.0
      %528 = vmatpush1.msra.mxu0 0.0
      %529 = vmatprep.subr.mxu0 0.0
      %530 = vmatpush1.msra.mxu0 0.0
      %531 = vmatprep.subr.mxu0 0.0
      %532 = vmatpush1.msra.mxu0 0.0
      %533 = vmatprep.subr.mxu0 0.0
      %534 = vmatpush1.msra.mxu0 0.0
      %535 = vmatprep.subr.mxu0 0.0
      %536 = vmatpush1.msra.mxu0 0.0
      %537 = vmatprep.subr.mxu0 0.0
      %538 = vmatpush1.msra.mxu0 0.0
      %539 = vmatprep.subr.mxu0 0.0
      %540 = vmatpush1.msra.mxu0 0.0
      %541 = vmatprep.subr.mxu0 0.0
      %542 = vmatpush1.msra.mxu0 0.0
      %543 = vmatprep.subr.mxu0 0.0
      %544 = vmatpush1.msra.mxu0 0.0
      %545 = vmatprep.subr.mxu0 0.0
      %546 = vmatpush1.msra.mxu0 0.0
      %547 = vmatprep.subr.mxu0 0.0
      %548 = vmatpush1.msra.mxu0 0.0
      %549 = vmatprep.subr.mxu0 0.0
      %550 = vmatpush1.msra.mxu0 0.0
      %551 = vmatprep.subr.mxu0 0.0
      %552 = vmatpush1.msra.mxu0 0.0
      %553 = vmatprep.subr.mxu0 0.0
      %554 = vmatpush1.msra.mxu0 0.0
      %555 = vmatprep.subr.mxu0 0.0
      %556 = vmatpush1.msra.mxu0 0.0
      %557 = vmatprep.subr.mxu0 0.0
      %558 = vmatpush1.msra.mxu0 0.0
      %559 = vmatprep.mubr.f32.mxu0 0.0
      %560 = vmatmul.mubr.f32.gmra.mrb[0].mxu0 %v493
      %v561 = vpop.f32.mrb[0].mxu0
      %v562 = vadd.f32 0.0, %v561
      %v563 = vpop.f32.mrb[0].mxu0
      %564 = vdwg.mxu0
      %v565 = vld [vmem:[%s5] sm:$0xff]
      %v566 = vld [vmem:[%s5 + $0x8] sm:$0xff]
      %v567 = vld [vmem:[%s5 + $0x10] sm:$0xff]
      %v568 = vld [vmem:[%s5 + $0x18] sm:$0xff]
      %570 = vrot.lane.b32.xlu0 %v562, 96
      %v571 = vpop.permute.xlu0 %570
      %vm572 = vcmask 130048
      %v573 = vsel %vm572, %v562, 0
      %v575 = vsel %vm572, %v571, 0
      %577 = vmatprep.subr.mxu0 0.0
      %578 = vmatpush1.xpose.msra.mxu0 %v575
      %579 = vmatprep.subr.mxu0 0.0
      %580 = vmatpush1.xpose.msra.mxu0 0.0
      %581 = vmatprep.subr.mxu0 0.0
      %582 = vmatpush1.xpose.msra.mxu0 0.0
      %583 = vmatprep.subr.mxu0 0.0
      %584 = vmatpush1.xpose.msra.mxu0 0.0
      %585 = vmatprep.subr.mxu0 0.0
      %586 = vmatpush1.xpose.msra.mxu0 0.0
      %587 = vmatprep.subr.mxu0 0.0
      %588 = vmatpush1.xpose.msra.mxu0 0.0
      %589 = vmatprep.subr.mxu0 0.0
      %590 = vmatpush1.xpose.msra.mxu0 0.0
      %591 = vmatprep.subr.mxu0 0.0
      %592 = vmatpush1.xpose.msra.mxu0 0.0
      %593 = vmatprep.subr.mxu0 0.0
      %594 = vmatpush1.xpose.msra.mxu0 0.0
      %595 = vmatprep.subr.mxu0 0.0
      %596 = vmatpush1.xpose.msra.mxu0 0.0
      %597 = vmatprep.subr.mxu0 0.0
      %598 = vmatpush1.xpose.msra.mxu0 0.0
      %599 = vmatprep.subr.mxu0 0.0
      %600 = vmatpush1.xpose.msra.mxu0 0.0
      %601 = vmatprep.subr.mxu0 0.0
      %602 = vmatpush1.xpose.msra.mxu0 0.0
      %603 = vmatprep.subr.mxu0 0.0
      %604 = vmatpush1.xpose.msra.mxu0 0.0
      %605 = vmatprep.subr.mxu0 0.0
      %606 = vmatpush1.xpose.msra.mxu0 0.0
      %607 = vmatprep.subr.mxu0 0.0
      %608 = vmatpush1.xpose.msra.mxu0 0.0
      %609 = vmatprep.subr.mxu0 0.0
      %610 = vmatpush1.xpose.msra.mxu0 0.0
      %611 = vmatprep.subr.mxu0 0.0
      %612 = vmatpush1.xpose.msra.mxu0 0.0
      %613 = vmatprep.subr.mxu0 0.0
      %614 = vmatpush1.xpose.msra.mxu0 0.0
      %615 = vmatprep.subr.mxu0 0.0
      %616 = vmatpush1.xpose.msra.mxu0 0.0
      %617 = vmatprep.subr.mxu0 0.0
      %618 = vmatpush1.xpose.msra.mxu0 0.0
      %619 = vmatprep.subr.mxu0 0.0
      %620 = vmatpush1.xpose.msra.mxu0 0.0
      %621 = vmatprep.subr.mxu0 0.0
      %622 = vmatpush1.xpose.msra.mxu0 0.0
      %623 = vmatprep.subr.mxu0 0.0
      %624 = vmatpush1.xpose.msra.mxu0 0.0
      %625 = vmatprep.subr.mxu0 0.0
      %626 = vmatpush1.xpose.msra.mxu0 0.0
      %627 = vmatprep.subr.mxu0 0.0
      %628 = vmatpush1.xpose.msra.mxu0 0.0
      %629 = vmatprep.subr.mxu0 0.0
      %630 = vmatpush1.xpose.msra.mxu0 0.0
      %631 = vmatprep.subr.mxu0 0.0
      %632 = vmatpush1.xpose.msra.mxu0 0.0
      %633 = vmatprep.subr.mxu0 0.0
      %634 = vmatpush1.xpose.msra.mxu0 0.0
      %635 = vmatprep.subr.mxu0 0.0
      %636 = vmatpush1.xpose.msra.mxu0 0.0
      %637 = vmatprep.subr.mxu0 0.0
      %638 = vmatpush1.xpose.msra.mxu0 0.0
      %639 = vmatprep.subr.mxu0 0.0
      %640 = vmatpush1.xpose.msra.mxu0 0.0
      %641 = vmatprep.mubr.f32.mxu0 0.0
      %642 = vmatmul.mubr.f32.gmra.mrb[0].mxu0 %v573
      %v643 = vpop.f32.mrb[0].mxu0
      %v644 = vadd.f32 %v470, %v643
      %v645 = vpop.f32.mrb[0].mxu0
      %646 = vdwg.mxu0
      %vm647 = vcmask 64512
      %v648 = vsel %vm647, %v644, -inf
      %649 = vmax.xlane.f32.xlu0 %v648
      %v650 = vpop.xlane.xlu0 %649
      %v651 = vsub.f32 %v644, %v650
      %v652 = vmul.f32 %v651, 1.442695
      %v653 = vpow.pop %v652
      %v654 = vsel %vm647, %v653, 0.0
      %655 = vadd.xlane.f32.xlu0 %v654
      %v656 = vpop.xlane.xlu0 %655
      %v657 = vrcp.pop %v656
      %v658 = vmul.f32 %v653, %v657
      %659 = vrot.lane.b32.xlu0 %v562, 64
      %v660 = vpop.permute.xlu0 %659
      %v663 = vsel %vm647, %v658, 0
      %665 = vmatprep.subr.mxu0 0.0
      %666 = vmatpush1.msra.mxu0 %v660
      %667 = vmatprep.subr.mxu0 0.0
      %668 = vmatpush1.msra.mxu0 0.0
      %669 = vmatprep.subr.mxu0 0.0
      %670 = vmatpush1.msra.mxu0 0.0
      %671 = vmatprep.subr.mxu0 0.0
      %672 = vmatpush1.msra.mxu0 0.0
      %673 = vmatprep.subr.mxu0 0.0
      %674 = vmatpush1.msra.mxu0 0.0
      %675 = vmatprep.subr.mxu0 0.0
      %676 = vmatpush1.msra.mxu0 0.0
      %677 = vmatprep.subr.mxu0 0.0
      %678 = vmatpush1.msra.mxu0 0.0
      %679 = vmatprep.subr.mxu0 0.0
      %680 = vmatpush1.msra.mxu0 0.0
      %681 = vmatprep.subr.mxu0 0.0
      %682 = vmatpush1.msra.mxu0 0.0
      %683 = vmatprep.subr.mxu0 0.0
      %684 = vmatpush1.msra.mxu0 0.0
      %685 = vmatprep.subr.mxu0 0.0
      %686 = vmatpush1.msra.mxu0 0.0
      %687 = vmatprep.subr.mxu0 0.0
      %688 = vmatpush1.msra.mxu0 0.0
      %689 = vmatprep.subr.mxu0 0.0
      %690 = vmatpush1.msra.mxu0 0.0
      %691 = vmatprep.subr.mxu0 0.0
      %692 = vmatpush1.msra.mxu0 0.0
      %693 = vmatprep.subr.mxu0 0.0
      %694 = vmatpush1.msra.mxu0 0.0
      %695 = vmatprep.subr.mxu0 0.0
      %696 = vmatpush1.msra.mxu0 0.0
      %697 = vmatprep.subr.mxu0 0.0
      %698 = vmatpush1.msra.mxu0 0.0
      %699 = vmatprep.subr.mxu0 0.0
      %700 = vmatpush1.msra.mxu0 0.0
      %701 = vmatprep.subr.mxu0 0.0
      %702 = vmatpush1.msra.mxu0 0.0
      %703 = vmatprep.subr.mxu0 0.0
      %704 = vmatpush1.msra.mxu0 0.0
      %705 = vmatprep.subr.mxu0 0.0
      %706 = vmatpush1.msra.mxu0 0.0
      %707 = vmatprep.subr.mxu0 0.0
      %708 = vmatpush1.msra.mxu0 0.0
      %709 = vmatprep.subr.mxu0 0.0
      %710 = vmatpush1.msra.mxu0 0.0
      %711 = vmatprep.subr.mxu0 0.0
      %712 = vmatpush1.msra.mxu0 0.0
      %713 = vmatprep.subr.mxu0 0.0
      %714 = vmatpush1.msra.mxu0 0.0
      %715 = vmatprep.subr.mxu0 0.0
      %716 = vmatpush1.msra.mxu0 0.0
      %717 = vmatprep.subr.mxu0 0.0
      %718 = vmatpush1.msra.mxu0 0.0
      %719 = vmatprep.subr.mxu0 0.0
      %720 = vmatpush1.msra.mxu0 0.0
      %721 = vmatprep.subr.mxu0 0.0
      %722 = vmatpush1.msra.mxu0 0.0
      %723 = vmatprep.subr.mxu0 0.0
      %724 = vmatpush1.msra.mxu0 0.0
      %725 = vmatprep.subr.mxu0 0.0
      %726 = vmatpush1.msra.mxu0 0.0
      %727 = vmatprep.subr.mxu0 0.0
      %728 = vmatpush1.msra.mxu0 0.0
      %729 = vmatprep.mubr.f32.mxu0 0.0
      %730 = vmatmul.mubr.f32.gmra.mrb[0].mxu0 %v663
      %v731 = vpop.f32.mrb[0].mxu0
      %v732 = vadd.f32 0.0, %v731
      %v733 = vpop.f32.mrb[0].mxu0
      %734 = vdwg.mxu0
      %735 = vrot.lane.b32.xlu0 %v562, 112
      %v736 = vpop.permute.xlu0 %735
      %737 = vrot.lane.b32.xlu0 %v562, 80
      %v738 = vpop.permute.xlu0 %737
      %v739 = vsel %vm572, %v736, 0
      %v741 = vsel %vm572, %v738, 0
      %743 = vmatprep.subr.mxu0 0.0
      %744 = vmatpush1.xpose.msra.mxu0 %v741
      %745 = vmatprep.subr.mxu0 0.0
      %746 = vmatpush1.xpose.msra.mxu0 0.0
      %747 = vmatprep.subr.mxu0 0.0
      %748 = vmatpush1.xpose.msra.mxu0 0.0
      %749 = vmatprep.subr.mxu0 0.0
      %750 = vmatpush1.xpose.msra.mxu0 0.0
      %751 = vmatprep.subr.mxu0 0.0
      %752 = vmatpush1.xpose.msra.mxu0 0.0
      %753 = vmatprep.subr.mxu0 0.0
      %754 = vmatpush1.xpose.msra.mxu0 0.0
      %755 = vmatprep.subr.mxu0 0.0
      %756 = vmatpush1.xpose.msra.mxu0 0.0
      %757 = vmatprep.subr.mxu0 0.0
      %758 = vmatpush1.xpose.msra.mxu0 0.0
      %759 = vmatprep.subr.mxu0 0.0
      %760 = vmatpush1.xpose.msra.mxu0 0.0
      %761 = vmatprep.subr.mxu0 0.0
      %762 = vmatpush1.xpose.msra.mxu0 0.0
      %763 = vmatprep.subr.mxu0 0.0
      %764 = vmatpush1.xpose.msra.mxu0 0.0
      %765 = vmatprep.subr.mxu0 0.0
      %766 = vmatpush1.xpose.msra.mxu0 0.0
      %767 = vmatprep.subr.mxu0 0.0
      %768 = vmatpush1.xpose.msra.mxu0 0.0
      %769 = vmatprep.subr.mxu0 0.0
      %770 = vmatpush1.xpose.msra.mxu0 0.0
      %771 = vmatprep.subr.mxu0 0.0
      %772 = vmatpush1.xpose.msra.mxu0 0.0
      %773 = vmatprep.subr.mxu0 0.0
      %774 = vmatpush1.xpose.msra.mxu0 0.0
      %775 = vmatprep.subr.mxu0 0.0
      %776 = vmatpush1.xpose.msra.mxu0 0.0
      %777 = vmatprep.subr.mxu0 0.0
      %778 = vmatpush1.xpose.msra.mxu0 0.0
      %779 = vmatprep.subr.mxu0 0.0
      %780 = vmatpush1.xpose.msra.mxu0 0.0
      %781 = vmatprep.subr.mxu0 0.0
      %782 = vmatpush1.xpose.msra.mxu0 0.0
      %783 = vmatprep.subr.mxu0 0.0
      %784 = vmatpush1.xpose.msra.mxu0 0.0
      %785 = vmatprep.subr.mxu0 0.0
      %786 = vmatpush1.xpose.msra.mxu0 0.0
      %787 = vmatprep.subr.mxu0 0.0
      %788 = vmatpush1.xpose.msra.mxu0 0.0
      %789 = vmatprep.subr.mxu0 0.0
      %790 = vmatpush1.xpose.msra.mxu0 0.0
      %791 = vmatprep.subr.mxu0 0.0
      %792 = vmatpush1.xpose.msra.mxu0 0.0
      %793 = vmatprep.subr.mxu0 0.0
      %794 = vmatpush1.xpose.msra.mxu0 0.0
      %795 = vmatprep.subr.mxu0 0.0
      %796 = vmatpush1.xpose.msra.mxu0 0.0
      %797 = vmatprep.subr.mxu0 0.0
      %798 = vmatpush1.xpose.msra.mxu0 0.0
      %799 = vmatprep.subr.mxu0 0.0
      %800 = vmatpush1.xpose.msra.mxu0 0.0
      %801 = vmatprep.subr.mxu0 0.0
      %802 = vmatpush1.xpose.msra.mxu0 0.0
      %803 = vmatprep.subr.mxu0 0.0
      %804 = vmatpush1.xpose.msra.mxu0 0.0
      %805 = vmatprep.subr.mxu0 0.0
      %806 = vmatpush1.xpose.msra.mxu0 0.0
      %807 = vmatprep.mubr.f32.mxu0 0.0
      %808 = vmatmul.mubr.f32.gmra.mrb[0].mxu0 %v739
      %v809 = vpop.f32.mrb[0].mxu0
      %v810 = vadd.f32 %v471, %v809
      %v811 = vpop.f32.mrb[0].mxu0
      %812 = vdwg.mxu0
      %v813 = vsel %vm647, %v810, -inf
      %814 = vmax.xlane.f32.xlu0 %v813
      %v815 = vpop.xlane.xlu0 %814
      %v816 = vsub.f32 %v810, %v815
      %v817 = vmul.f32 %v816, 1.442695
      %v818 = vpow.pop %v817
      %v819 = vsel %vm647, %v818, 0.0
      %820 = vadd.xlane.f32.xlu0 %v819
      %v821 = vpop.xlane.xlu0 %820
      %v822 = vrcp.pop %v821
      %v823 = vmul.f32 %v818, %v822
      %824 = vrot.lane.b32.xlu0 %v562, 48
      %v825 = vpop.permute.xlu0 %824
      %v828 = vsel %vm647, %v823, 0
      %830 = vmatprep.subr.mxu0 0.0
      %831 = vmatpush1.msra.mxu0 %v825
      %832 = vmatprep.subr.mxu0 0.0
      %833 = vmatpush1.msra.mxu0 0.0
      %834 = vmatprep.subr.mxu0 0.0
      %835 = vmatpush1.msra.mxu0 0.0
      %836 = vmatprep.subr.mxu0 0.0
      %837 = vmatpush1.msra.mxu0 0.0
      %838 = vmatprep.subr.mxu0 0.0
      %839 = vmatpush1.msra.mxu0 0.0
      %840 = vmatprep.subr.mxu0 0.0
      %841 = vmatpush1.msra.mxu0 0.0
      %842 = vmatprep.subr.mxu0 0.0
      %843 = vmatpush1.msra.mxu0 0.0
      %844 = vmatprep.subr.mxu0 0.0
      %845 = vmatpush1.msra.mxu0 0.0
      %846 = vmatprep.subr.mxu0 0.0
      %847 = vmatpush1.msra.mxu0 0.0
      %848 = vmatprep.subr.mxu0 0.0
      %849 = vmatpush1.msra.mxu0 0.0
      %850 = vmatprep.subr.mxu0 0.0
      %851 = vmatpush1.msra.mxu0 0.0
      %852 = vmatprep.subr.mxu0 0.0
      %853 = vmatpush1.msra.mxu0 0.0
      %854 = vmatprep.subr.mxu0 0.0
      %855 = vmatpush1.msra.mxu0 0.0
      %856 = vmatprep.subr.mxu0 0.0
      %857 = vmatpush1.msra.mxu0 0.0
      %858 = vmatprep.subr.mxu0 0.0
      %859 = vmatpush1.msra.mxu0 0.0
      %860 = vmatprep.subr.mxu0 0.0
      %861 = vmatpush1.msra.mxu0 0.0
      %862 = vmatprep.subr.mxu0 0.0
      %863 = vmatpush1.msra.mxu0 0.0
      %864 = vmatprep.subr.mxu0 0.0
      %865 = vmatpush1.msra.mxu0 0.0
      %866 = vmatprep.subr.mxu0 0.0
      %867 = vmatpush1.msra.mxu0 0.0
      %868 = vmatprep.subr.mxu0 0.0
      %869 = vmatpush1.msra.mxu0 0.0
      %870 = vmatprep.subr.mxu0 0.0
      %871 = vmatpush1.msra.mxu0 0.0
      %872 = vmatprep.subr.mxu0 0.0
      %873 = vmatpush1.msra.mxu0 0.0
      %874 = vmatprep.subr.mxu0 0.0
      %875 = vmatpush1.msra.mxu0 0.0
      %876 = vmatprep.subr.mxu0 0.0
      %877 = vmatpush1.msra.mxu0 0.0
      %878 = vmatprep.subr.mxu0 0.0
      %879 = vmatpush1.msra.mxu0 0.0
      %880 = vmatprep.subr.mxu0 0.0
      %881 = vmatpush1.msra.mxu0 0.0
      %882 = vmatprep.subr.mxu0 0.0
      %883 = vmatpush1.msra.mxu0 0.0
      %884 = vmatprep.subr.mxu0 0.0
      %885 = vmatpush1.msra.mxu0 0.0
      %886 = vmatprep.subr.mxu0 0.0
      %887 = vmatpush1.msra.mxu0 0.0
      %888 = vmatprep.subr.mxu0 0.0
      %889 = vmatpush1.msra.mxu0 0.0
      %890 = vmatprep.subr.mxu0 0.0
      %891 = vmatpush1.msra.mxu0 0.0
      %892 = vmatprep.subr.mxu0 0.0
      %893 = vmatpush1.msra.mxu0 0.0
      %894 = vmatprep.mubr.f32.mxu0 0.0
      %895 = vmatmul.mubr.f32.gmra.mrb[0].mxu0 %v828
      %v896 = vpop.f32.mrb[0].mxu0
      %v897 = vadd.f32 0.0, %v896
      %v898 = vpop.f32.mrb[0].mxu0
      %899 = vdwg.mxu0
      %v901 = vsel %vm572, %v897, 0
      %903 = vmatprep.subr.mxu0 0.0
      %904 = vmatpush1.msra.mxu0 %v567
      %905 = vmatprep.subr.mxu0 0.0
      %906 = vmatpush1.msra.mxu0 %v568
      %907 = vmatprep.subr.mxu0 0.0
      %908 = vmatpush1.msra.mxu0 0.0
      %909 = vmatprep.subr.mxu0 0.0
      %910 = vmatpush1.msra.mxu0 0.0
      %911 = vmatprep.subr.mxu0 0.0
      %912 = vmatpush1.msra.mxu0 0.0
      %913 = vmatprep.subr.mxu0 0.0
      %914 = vmatpush1.msra.mxu0 0.0
      %915 = vmatprep.subr.mxu0 0.0
      %916 = vmatpush1.msra.mxu0 0.0
      %917 = vmatprep.subr.mxu0 0.0
      %918 = vmatpush1.msra.mxu0 0.0
      %919 = vmatprep.subr.mxu0 0.0
      %920 = vmatpush1.msra.mxu0 0.0
      %921 = vmatprep.subr.mxu0 0.0
      %922 = vmatpush1.msra.mxu0 0.0
      %923 = vmatprep.subr.mxu0 0.0
      %924 = vmatpush1.msra.mxu0 0.0
      %925 = vmatprep.subr.mxu0 0.0
      %926 = vmatpush1.msra.mxu0 0.0
      %927 = vmatprep.subr.mxu0 0.0
      %928 = vmatpush1.msra.mxu0 0.0
      %929 = vmatprep.subr.mxu0 0.0
      %930 = vmatpush1.msra.mxu0 0.0
      %931 = vmatprep.subr.mxu0 0.0
      %932 = vmatpush1.msra.mxu0 0.0
      %933 = vmatprep.subr.mxu0 0.0
      %934 = vmatpush1.msra.mxu0 0.0
      %935 = vmatprep.subr.mxu0 0.0
      %936 = vmatpush1.msra.mxu0 0.0
      %937 = vmatprep.subr.mxu0 0.0
      %938 = vmatpush1.msra.mxu0 0.0
      %939 = vmatprep.subr.mxu0 0.0
      %940 = vmatpush1.msra.mxu0 0.0
      %941 = vmatprep.subr.mxu0 0.0
      %942 = vmatpush1.msra.mxu0 0.0
      %943 = vmatprep.subr.mxu0 0.0
      %944 = vmatpush1.msra.mxu0 0.0
      %945 = vmatprep.subr.mxu0 0.0
      %946 = vmatpush1.msra.mxu0 0.0
      %947 = vmatprep.subr.mxu0 0.0
      %948 = vmatpush1.msra.mxu0 0.0
      %949 = vmatprep.subr.mxu0 0.0
      %950 = vmatpush1.msra.mxu0 0.0
      %951 = vmatprep.subr.mxu0 0.0
      %952 = vmatpush1.msra.mxu0 0.0
      %953 = vmatprep.subr.mxu0 0.0
      %954 = vmatpush1.msra.mxu0 0.0
      %955 = vmatprep.subr.mxu0 0.0
      %956 = vmatpush1.msra.mxu0 0.0
      %957 = vmatprep.subr.mxu0 0.0
      %958 = vmatpush1.msra.mxu0 0.0
      %959 = vmatprep.subr.mxu0 0.0
      %960 = vmatpush1.msra.mxu0 0.0
      %961 = vmatprep.subr.mxu0 0.0
      %962 = vmatpush1.msra.mxu0 0.0
      %963 = vmatprep.subr.mxu0 0.0
      %964 = vmatpush1.msra.mxu0 0.0
      %965 = vmatprep.subr.mxu0 0.0
      %966 = vmatpush1.msra.mxu0 0.0
      %967 = vmatprep.mubr.f32.mxu0 0.0
      %968 = vmatmul.mubr.f32.gmra.mrb[0].mxu0 %v901
      %v969 = vpop.f32.mrb[0].mxu0
      %v970 = vadd.f32 0.0, %v969
      %v971 = vpop.f32.mrb[0].mxu0
      %972 = vdwg.mxu0
      %v974 = vsel %vm572, %v732, 0
      %976 = vmatprep.subr.mxu0 0.0
      %977 = vmatpush1.msra.mxu0 %v565
      %978 = vmatprep.subr.mxu0 0.0
      %979 = vmatpush1.msra.mxu0 %v566
      %980 = vmatprep.subr.mxu0 0.0
      %981 = vmatpush1.msra.mxu0 0.0
      %982 = vmatprep.subr.mxu0 0.0
      %983 = vmatpush1.msra.mxu0 0.0
      %984 = vmatprep.subr.mxu0 0.0
      %985 = vmatpush1.msra.mxu0 0.0
      %986 = vmatprep.subr.mxu0 0.0
      %987 = vmatpush1.msra.mxu0 0.0
      %988 = vmatprep.subr.mxu0 0.0
      %989 = vmatpush1.msra.mxu0 0.0
      %990 = vmatprep.subr.mxu0 0.0
      %991 = vmatpush1.msra.mxu0 0.0
      %992 = vmatprep.subr.mxu0 0.0
      %993 = vmatpush1.msra.mxu0 0.0
      %994 = vmatprep.subr.mxu0 0.0
      %995 = vmatpush1.msra.mxu0 0.0
      %996 = vmatprep.subr.mxu0 0.0
      %997 = vmatpush1.msra.mxu0 0.0
      %998 = vmatprep.subr.mxu0 0.0
      %999 = vmatpush1.msra.mxu0 0.0
      %1000 = vmatprep.subr.mxu0 0.0
      %1001 = vmatpush1.msra.mxu0 0.0
      %1002 = vmatprep.subr.mxu0 0.0
      %1003 = vmatpush1.msra.mxu0 0.0
      %1004 = vmatprep.subr.mxu0 0.0
      %1005 = vmatpush1.msra.mxu0 0.0
      %1006 = vmatprep.subr.mxu0 0.0
      %1007 = vmatpush1.msra.mxu0 0.0
      %1008 = vmatprep.subr.mxu0 0.0
      %1009 = vmatpush1.msra.mxu0 0.0
      %1010 = vmatprep.subr.mxu0 0.0
      %1011 = vmatpush1.msra.mxu0 0.0
      %1012 = vmatprep.subr.mxu0 0.0
      %1013 = vmatpush1.msra.mxu0 0.0
      %1014 = vmatprep.subr.mxu0 0.0
      %1015 = vmatpush1.msra.mxu0 0.0
      %1016 = vmatprep.subr.mxu0 0.0
      %1017 = vmatpush1.msra.mxu0 0.0
      %1018 = vmatprep.subr.mxu0 0.0
      %1019 = vmatpush1.msra.mxu0 0.0
      %1020 = vmatprep.subr.mxu0 0.0
      %1021 = vmatpush1.msra.mxu0 0.0
      %1022 = vmatprep.subr.mxu0 0.0
      %1023 = vmatpush1.msra.mxu0 0.0
      %1024 = vmatprep.subr.mxu0 0.0
      %1025 = vmatpush1.msra.mxu0 0.0
      %1026 = vmatprep.subr.mxu0 0.0
      %1027 = vmatpush1.msra.mxu0 0.0
      %1028 = vmatprep.subr.mxu0 0.0
      %1029 = vmatpush1.msra.mxu0 0.0
      %1030 = vmatprep.subr.mxu0 0.0
      %1031 = vmatpush1.msra.mxu0 0.0
      %1032 = vmatprep.subr.mxu0 0.0
      %1033 = vmatpush1.msra.mxu0 0.0
      %1034 = vmatprep.subr.mxu0 0.0
      %1035 = vmatpush1.msra.mxu0 0.0
      %1036 = vmatprep.subr.mxu0 0.0
      %1037 = vmatpush1.msra.mxu0 0.0
      %1038 = vmatprep.subr.mxu0 0.0
      %1039 = vmatpush1.msra.mxu0 0.0
      %1040 = vmatprep.mubr.f32.mxu0 0.0
      %1041 = vmatmul.mubr.f32.gmra.mrb[0].mxu0 %v974
      %v1042 = vpop.f32.mrb[0].mxu0
      %v1043 = vadd.f32 %v970, %v1042
      %v1044 = vpop.f32.mrb[0].mxu0
      %1045 = vdwg.mxu0
      %v1046 = vadd.f32 %v467, %v1043
      %v1047 = vmul.f32 %v1046, %v1046
      %v1048 = vsel %vm474, %v1047, 0.0
      %1049 = vadd.xlane.f32.xlu0 %v1048
      %v1050 = vpop.xlane.xlu0 %1049
      %v1051 = vmul.f32 %v1050, %v478
      %v1052 = vadd.f32 %v1051, 1e-06
      %v1053 = vrsqrt.pop %v1052
      %v1054 = vmul.f32 %v1046, %v1053
      %v1055 = vlaneseq
      %v1056 = vshrl.u32 %v1055, 7
      %v1057 = vsub.s32 1, %v1056
      %v1058 = vrot.slane %v472, %v1057
      %v1059 = vmul.f32 %v1054, %v1058
      %v1060 = vld [vmem:[%s6] sm:$0xff]
      %v1061 = vld [vmem:[%s6 + $0x8] sm:$0xff]
      %v1062 = vld [vmem:[%s6 + $0x10] sm:$0xff]
      %v1063 = vld [vmem:[%s6 + $0x18] sm:$0xff]
      %v1065 = vsel %vm474, %v1059, 0
      %1067 = vmatprep.subr.mxu0 0.0
      %1068 = vmatpush1.msra.mxu0 %v1060
      %1069 = vmatprep.subr.mxu0 0.0
      %1070 = vmatpush1.msra.mxu0 %v1061
      %1071 = vmatprep.subr.mxu0 0.0
      %1072 = vmatpush1.msra.mxu0 %v1062
      %1073 = vmatprep.subr.mxu0 0.0
      %1074 = vmatpush1.msra.mxu0 %v1063
      %1075 = vmatprep.subr.mxu0 0.0
      %1076 = vmatpush1.msra.mxu0 0.0
      %1077 = vmatprep.subr.mxu0 0.0
      %1078 = vmatpush1.msra.mxu0 0.0
      %1079 = vmatprep.subr.mxu0 0.0
      %1080 = vmatpush1.msra.mxu0 0.0
      %1081 = vmatprep.subr.mxu0 0.0
      %1082 = vmatpush1.msra.mxu0 0.0
      %1083 = vmatprep.subr.mxu0 0.0
      %1084 = vmatpush1.msra.mxu0 0.0
      %1085 = vmatprep.subr.mxu0 0.0
      %1086 = vmatpush1.msra.mxu0 0.0
      %1087 = vmatprep.subr.mxu0 0.0
      %1088 = vmatpush1.msra.mxu0 0.0
      %1089 = vmatprep.subr.mxu0 0.0
      %1090 = vmatpush1.msra.mxu0 0.0
      %1091 = vmatprep.subr.mxu0 0.0
      %1092 = vmatpush1.msra.mxu0 0.0
      %1093 = vmatprep.subr.mxu0 0.0
      %1094 = vmatpush1.msra.mxu0 0.0
      %1095 = vmatprep.subr.mxu0 0.0
      %1096 = vmatpush1.msra.mxu0 0.0
      %1097 = vmatprep.subr.mxu0 0.0
      %1098 = vmatpush1.msra.mxu0 0.0
      %1099 = vmatprep.subr.mxu0 0.0
      %1100 = vmatpush1.msra.mxu0 0.0
      %1101 = vmatprep.subr.mxu0 0.0
      %1102 = vmatpush1.msra.mxu0 0.0
      %1103 = vmatprep.subr.mxu0 0.0
      %1104 = vmatpush1.msra.mxu0 0.0
      %1105 = vmatprep.subr.mxu0 0.0
      %1106 = vmatpush1.msra.mxu0 0.0
      %1107 = vmatprep.subr.mxu0 0.0
      %1108 = vmatpush1.msra.mxu0 0.0
      %1109 = vmatprep.subr.mxu0 0.0
      %1110 = vmatpush1.msra.mxu0 0.0
      %1111 = vmatprep.subr.mxu0 0.0
      %1112 = vmatpush1.msra.mxu0 0.0
      %1113 = vmatprep.subr.mxu0 0.0
      %1114 = vmatpush1.msra.mxu0 0.0
      %1115 = vmatprep.subr.mxu0 0.0
      %1116 = vmatpush1.msra.mxu0 0.0
      %1117 = vmatprep.subr.mxu0 0.0
      %1118 = vmatpush1.msra.mxu0 0.0
      %1119 = vmatprep.subr.mxu0 0.0
      %1120 = vmatpush1.msra.mxu0 0.0
      %1121 = vmatprep.subr.mxu0 0.0
      %1122 = vmatpush1.msra.mxu0 0.0
      %1123 = vmatprep.subr.mxu0 0.0
      %1124 = vmatpush1.msra.mxu0 0.0
      %1125 = vmatprep.subr.mxu0 0.0
      %1126 = vmatpush1.msra.mxu0 0.0
      %1127 = vmatprep.subr.mxu0 0.0
      %1128 = vmatpush1.msra.mxu0 0.0
      %1129 = vmatprep.subr.mxu0 0.0
      %1130 = vmatpush1.msra.mxu0 0.0
      %1131 = vmatprep.mubr.f32.mxu0 0.0
      %1132 = vmatmul.mubr.f32.gmra.mrb[0].mxu0 %v1065
      %v1133 = vpop.f32.mrb[0].mxu0
      %v1134 = vadd.f32 0.0, %v1133
      %v1135 = vpop.f32.mrb[0].mxu0
      %1136 = vdwg.mxu0
      %v1137 = vld [vmem:[%s7] sm:$0xff]
      %v1138 = vld [vmem:[%s7 + $0x8] sm:$0xff]
      %v1139 = vld [vmem:[%s7 + $0x10] sm:$0xff]
      %v1140 = vld [vmem:[%s7 + $0x18] sm:$0xff]
      %v1142 = vsel %vm474, %v468, 0
      %1144 = vmatprep.subr.mxu0 0.0
      %1145 = vmatpush1.msra.mxu0 %v1137
      %1146 = vmatprep.subr.mxu0 0.0
      %1147 = vmatpush1.msra.mxu0 %v1138
      %1148 = vmatprep.subr.mxu0 0.0
      %1149 = vmatpush1.msra.mxu0 %v1139
      %1150 = vmatprep.subr.mxu0 0.0
      %1151 = vmatpush1.msra.mxu0 %v1140
      %1152 = vmatprep.subr.mxu0 0.0
      %1153 = vmatpush1.msra.mxu0 0.0
      %1154 = vmatprep.subr.mxu0 0.0
      %1155 = vmatpush1.msra.mxu0 0.0
      %1156 = vmatprep.subr.mxu0 0.0
      %1157 = vmatpush1.msra.mxu0 0.0
      %1158 = vmatprep.subr.mxu0 0.0
      %1159 = vmatpush1.msra.mxu0 0.0
      %1160 = vmatprep.subr.mxu0 0.0
      %1161 = vmatpush1.msra.mxu0 0.0
      %1162 = vmatprep.subr.mxu0 0.0
      %1163 = vmatpush1.msra.mxu0 0.0
      %1164 = vmatprep.subr.mxu0 0.0
      %1165 = vmatpush1.msra.mxu0 0.0
      %1166 = vmatprep.subr.mxu0 0.0
      %1167 = vmatpush1.msra.mxu0 0.0
      %1168 = vmatprep.subr.mxu0 0.0
      %1169 = vmatpush1.msra.mxu0 0.0
      %1170 = vmatprep.subr.mxu0 0.0
      %1171 = vmatpush1.msra.mxu0 0.0
      %1172 = vmatprep.subr.mxu0 0.0
      %1173 = vmatpush1.msra.mxu0 0.0
      %1174 = vmatprep.subr.mxu0 0.0
      %1175 = vmatpush1.msra.mxu0 0.0
      %1176 = vmatprep.subr.mxu0 0.0
      %1177 = vmatpush1.msra.mxu0 0.0
      %1178 = vmatprep.subr.mxu0 0.0
      %1179 = vmatpush1.msra.mxu0 0.0
      %1180 = vmatprep.subr.mxu0 0.0
      %1181 = vmatpush1.msra.mxu0 0.0
      %1182 = vmatprep.subr.mxu0 0.0
      %1183 = vmatpush1.msra.mxu0 0.0
      %1184 = vmatprep.subr.mxu0 0.0
      %1185 = vmatpush1.msra.mxu0 0.0
      %1186 = vmatprep.subr.mxu0 0.0
      %1187 = vmatpush1.msra.mxu0 0.0
      %1188 = vmatprep.subr.mxu0 0.0
      %1189 = vmatpush1.msra.mxu0 0.0
      %1190 = vmatprep.subr.mxu0 0.0
      %1191 = vmatpush1.msra.mxu0 0.0
      %1192 = vmatprep.subr.mxu0 0.0
      %1193 = vmatpush1.msra.mxu0 0.0
      %1194 = vmatprep.subr.mxu0 0.0
      %1195 = vmatpush1.msra.mxu0 0.0
      %1196 = vmatprep.subr.mxu0 0.0
      %1197 = vmatpush1.msra.mxu0 0.0
      %1198 = vmatprep.subr.mxu0 0.0
      %1199 = vmatpush1.msra.mxu0 0.0
      %1200 = vmatprep.subr.mxu0 0.0
      %1201 = vmatpush1.msra.mxu0 0.0
      %1202 = vmatprep.subr.mxu0 0.0
      %1203 = vmatpush1.msra.mxu0 0.0
      %1204 = vmatprep.subr.mxu0 0.0
      %1205 = vmatpush1.msra.mxu0 0.0
      %1206 = vmatprep.subr.mxu0 0.0
      %1207 = vmatpush1.msra.mxu0 0.0
      %1208 = vmatprep.mubr.f32.mxu0 0.0
      %1209 = vmatmul.mubr.f32.gmra.mrb[0].mxu0 %v1142
      %v1210 = vpop.f32.mrb[0].mxu0
      %v1211 = vadd.f32 0.0, %v1210
      %v1212 = vpop.f32.mrb[0].mxu0
      %1213 = vdwg.mxu0
      %v1214 = vld [vmem:[%s8] sm:$0xff]
      %v1215 = vld [vmem:[%s8 + $0x8] sm:$0xff]
      %v1216 = vld [vmem:[%s8 + $0x10] sm:$0xff]
      %v1217 = vld [vmem:[%s8 + $0x18] sm:$0xff]
      %v1219 = vlaneseq
      %v1220 = vshrl.u32 %v1219, 7
      %v1221 = vsub.s32 0, %v1220
      %v1222 = vrot.slane %v469, %v1221
      %v1225 = vsel %vm572, %v1134, 0
      %v1228 = vsel %vm572, %v1211, 0
      %1230 = vmatprep.subr.mxu0 0.0
      %1231 = vmatpush1.xpose.msra.mxu0 %v1228
      %1232 = vmatprep.subr.mxu0 0.0
      %1233 = vmatpush1.xpose.msra.mxu0 0.0
      %1234 = vmatprep.subr.mxu0 0.0
      %1235 = vmatpush1.xpose.msra.mxu0 0.0
      %1236 = vmatprep.subr.mxu0 0.0
      %1237 = vmatpush1.xpose.msra.mxu0 0.0
      %1238 = vmatprep.subr.mxu0 0.0
      %1239 = vmatpush1.xpose.msra.mxu0 0.0
      %1240 = vmatprep.subr.mxu0 0.0
      %1241 = vmatpush1.xpose.msra.mxu0 0.0
      %1242 = vmatprep.subr.mxu0 0.0
      %1243 = vmatpush1.xpose.msra.mxu0 0.0
      %1244 = vmatprep.subr.mxu0 0.0
      %1245 = vmatpush1.xpose.msra.mxu0 0.0
      %1246 = vmatprep.subr.mxu0 0.0
      %1247 = vmatpush1.xpose.msra.mxu0 0.0
      %1248 = vmatprep.subr.mxu0 0.0
      %1249 = vmatpush1.xpose.msra.mxu0 0.0
      %1250 = vmatprep.subr.mxu0 0.0
      %1251 = vmatpush1.xpose.msra.mxu0 0.0
      %1252 = vmatprep.subr.mxu0 0.0
      %1253 = vmatpush1.xpose.msra.mxu0 0.0
      %1254 = vmatprep.subr.mxu0 0.0
      %1255 = vmatpush1.xpose.msra.mxu0 0.0
      %1256 = vmatprep.subr.mxu0 0.0
      %1257 = vmatpush1.xpose.msra.mxu0 0.0
      %1258 = vmatprep.subr.mxu0 0.0
      %1259 = vmatpush1.xpose.msra.mxu0 0.0
      %1260 = vmatprep.subr.mxu0 0.0
      %1261 = vmatpush1.xpose.msra.mxu0 0.0
      %1262 = vmatprep.subr.mxu0 0.0
      %1263 = vmatpush1.xpose.msra.mxu0 0.0
      %1264 = vmatprep.subr.mxu0 0.0
      %1265 = vmatpush1.xpose.msra.mxu0 0.0
      %1266 = vmatprep.subr.mxu0 0.0
      %1267 = vmatpush1.xpose.msra.mxu0 0.0
      %1268 = vmatprep.subr.mxu0 0.0
      %1269 = vmatpush1.xpose.msra.mxu0 0.0
      %1270 = vmatprep.subr.mxu0 0.0
      %1271 = vmatpush1.xpose.msra.mxu0 0.0
      %1272 = vmatprep.subr.mxu0 0.0
      %1273 = vmatpush1.xpose.msra.mxu0 0.0
      %1274 = vmatprep.subr.mxu0 0.0
      %1275 = vmatpush1.xpose.msra.mxu0 0.0
      %1276 = vmatprep.subr.mxu0 0.0
      %1277 = vmatpush1.xpose.msra.mxu0 0.0
      %1278 = vmatprep.subr.mxu0 0.0
      %1279 = vmatpush1.xpose.msra.mxu0 0.0
      %1280 = vmatprep.subr.mxu0 0.0
      %1281 = vmatpush1.xpose.msra.mxu0 0.0
      %1282 = vmatprep.subr.mxu0 0.0
      %1283 = vmatpush1.xpose.msra.mxu0 0.0
      %1284 = vmatprep.subr.mxu0 0.0
      %1285 = vmatpush1.xpose.msra.mxu0 0.0
      %1286 = vmatprep.subr.mxu0 0.0
      %1287 = vmatpush1.xpose.msra.mxu0 0.0
      %1288 = vmatprep.subr.mxu0 0.0
      %1289 = vmatpush1.xpose.msra.mxu0 0.0
      %1290 = vmatprep.subr.mxu0 0.0
      %1291 = vmatpush1.xpose.msra.mxu0 0.0
      %1292 = vmatprep.subr.mxu0 0.0
      %1293 = vmatpush1.xpose.msra.mxu0 0.0
      %1294 = vmatprep.mubr.f32.mxu0 0.0
      %1295 = vmatmul.mubr.f32.gmra.mrb[0].mxu0 %v1225
      %v1296 = vpop.f32.mrb[0].mxu0
      %v1297 = vadd.f32 %v1222, %v1296
      %v1298 = vpop.f32.mrb[0].mxu0
      %1299 = vdwg.mxu0
      %v1300 = vsel %vm647, %v1297, -inf
      %1301 = vmax.xlane.f32.xlu0 %v1300
      %v1302 = vpop.xlane.xlu0 %1301
      %v1303 = vsub.f32 %v1297, %v1302
      %v1304 = vmul.f32 %v1303, 1.442695
      %v1305 = vpow.pop %v1304
      %v1306 = vsel %vm647, %v1305, 0.0
      %1307 = vadd.xlane.f32.xlu0 %v1306
      %v1308 = vpop.xlane.xlu0 %1307
      %v1309 = vrcp.pop %v1308
      %v1310 = vmul.f32 %v1305, %v1309
      %1311 = vrot.lane.b32.xlu0 %v1211, 96
      %v1312 = vpop.permute.xlu0 %1311
      %v1315 = vsel %vm647, %v1310, 0
      %1317 = vmatprep.subr.mxu0 0.0
      %1318 = vmatpush1.msra.mxu0 %v1312
      %1319 = vmatprep.subr.mxu0 0.0
      %1320 = vmatpush1.msra.mxu0 0.0
      %1321 = vmatprep.subr.mxu0 0.0
      %1322 = vmatpush1.msra.mxu0 0.0
      %1323 = vmatprep.subr.mxu0 0.0
      %1324 = vmatpush1.msra.mxu0 0.0
      %1325 = vmatprep.subr.mxu0 0.0
      %1326 = vmatpush1.msra.mxu0 0.0
      %1327 = vmatprep.subr.mxu0 0.0
      %1328 = vmatpush1.msra.mxu0 0.0
      %1329 = vmatprep.subr.mxu0 0.0
      %1330 = vmatpush1.msra.mxu0 0.0
      %1331 = vmatprep.subr.mxu0 0.0
      %1332 = vmatpush1.msra.mxu0 0.0
      %1333 = vmatprep.subr.mxu0 0.0
      %1334 = vmatpush1.msra.mxu0 0.0
      %1335 = vmatprep.subr.mxu0 0.0
      %1336 = vmatpush1.msra.mxu0 0.0
      %1337 = vmatprep.subr.mxu0 0.0
      %1338 = vmatpush1.msra.mxu0 0.0
      %1339 = vmatprep.subr.mxu0 0.0
      %1340 = vmatpush1.msra.mxu0 0.0
      %1341 = vmatprep.subr.mxu0 0.0
      %1342 = vmatpush1.msra.mxu0 0.0
      %1343 = vmatprep.subr.mxu0 0.0
      %1344 = vmatpush1.msra.mxu0 0.0
      %1345 = vmatprep.subr.mxu0 0.0
      %1346 = vmatpush1.msra.mxu0 0.0
      %1347 = vmatprep.subr.mxu0 0.0
      %1348 = vmatpush1.msra.mxu0 0.0
      %1349 = vmatprep.subr.mxu0 0.0
      %1350 = vmatpush1.msra.mxu0 0.0
      %1351 = vmatprep.subr.mxu0 0.0
      %1352 = vmatpush1.msra.mxu0 0.0
      %1353 = vmatprep.subr.mxu0 0.0
      %1354 = vmatpush1.msra.mxu0 0.0
      %1355 = vmatprep.subr.mxu0 0.0
      %1356 = vmatpush1.msra.mxu0 0.0
      %1357 = vmatprep.subr.mxu0 0.0
      %1358 = vmatpush1.msra.mxu0 0.0
      %1359 = vmatprep.subr.mxu0 0.0
      %1360 = vmatpush1.msra.mxu0 0.0
      %1361 = vmatprep.subr.mxu0 0.0
      %1362 = vmatpush1.msra.mxu0 0.0
      %1363 = vmatprep.subr.mxu0 0.0
      %1364 = vmatpush1.msra.mxu0 0.0
      %1365 = vmatprep.subr.mxu0 0.0
      %1366 = vmatpush1.msra.mxu0 0.0
      %1367 = vmatprep.subr.mxu0 0.0
      %1368 = vmatpush1.msra.mxu0 0.0
      %1369 = vmatprep.subr.mxu0 0.0
      %1370 = vmatpush1.msra.mxu0 0.0
      %1371 = vmatprep.subr.mxu0 0.0
      %1372 = vmatpush1.msra.mxu0 0.0
      %1373 = vmatprep.subr.mxu0 0.0
      %1374 = vmatpush1.msra.mxu0 0.0
      %1375 = vmatprep.subr.mxu0 0.0
      %1376 = vmatpush1.msra.mxu0 0.0
      %1377 = vmatprep.subr.mxu0 0.0
      %1378 = vmatpush1.msra.mxu0 0.0
      %1379 = vmatprep.subr.mxu0 0.0
      %1380 = vmatpush1.msra.mxu0 0.0
      %1381 = vmatprep.mubr.f32.mxu0 0.0
      %1382 = vmatmul.mubr.f32.gmra.mrb[0].mxu0 %v1315
      %v1383 = vpop.f32.mrb[0].mxu0
      %v1384 = vadd.f32 0.0, %v1383
      %v1385 = vpop.f32.mrb[0].mxu0
      %1386 = vdwg.mxu0
      %1387 = vrot.lane.b32.xlu0 %v1134, 112
      %v1388 = vpop.permute.xlu0 %1387
      %1389 = vrot.lane.b32.xlu0 %v1211, 112
      %v1390 = vpop.permute.xlu0 %1389
      %v1391 = vsel %vm572, %v1388, 0
      %v1393 = vsel %vm572, %v1390, 0
      %1395 = vmatprep.subr.mxu0 0.0
      %1396 = vmatpush1.xpose.msra.mxu0 %v1393
      %1397 = vmatprep.subr.mxu0 0.0
      %1398 = vmatpush1.xpose.msra.mxu0 0.0
      %1399 = vmatprep.subr.mxu0 0.0
      %1400 = vmatpush1.xpose.msra.mxu0 0.0
      %1401 = vmatprep.subr.mxu0 0.0
      %1402 = vmatpush1.xpose.msra.mxu0 0.0
      %1403 = vmatprep.subr.mxu0 0.0
      %1404 = vmatpush1.xpose.msra.mxu0 0.0
      %1405 = vmatprep.subr.mxu0 0.0
      %1406 = vmatpush1.xpose.msra.mxu0 0.0
      %1407 = vmatprep.subr.mxu0 0.0
      %1408 = vmatpush1.xpose.msra.mxu0 0.0
      %1409 = vmatprep.subr.mxu0 0.0
      %1410 = vmatpush1.xpose.msra.mxu0 0.0
      %1411 = vmatprep.subr.mxu0 0.0
      %1412 = vmatpush1.xpose.msra.mxu0 0.0
      %1413 = vmatprep.subr.mxu0 0.0
      %1414 = vmatpush1.xpose.msra.mxu0 0.0
      %1415 = vmatprep.subr.mxu0 0.0
      %1416 = vmatpush1.xpose.msra.mxu0 0.0
      %1417 = vmatprep.subr.mxu0 0.0
      %1418 = vmatpush1.xpose.msra.mxu0 0.0
      %1419 = vmatprep.subr.mxu0 0.0
      %1420 = vmatpush1.xpose.msra.mxu0 0.0
      %1421 = vmatprep.subr.mxu0 0.0
      %1422 = vmatpush1.xpose.msra.mxu0 0.0
      %1423 = vmatprep.subr.mxu0 0.0
      %1424 = vmatpush1.xpose.msra.mxu0 0.0
      %1425 = vmatprep.subr.mxu0 0.0
      %1426 = vmatpush1.xpose.msra.mxu0 0.0
      %1427 = vmatprep.subr.mxu0 0.0
      %1428 = vmatpush1.xpose.msra.mxu0 0.0
      %1429 = vmatprep.subr.mxu0 0.0
      %1430 = vmatpush1.xpose.msra.mxu0 0.0
      %1431 = vmatprep.subr.mxu0 0.0
      %1432 = vmatpush1.xpose.msra.mxu0 0.0
      %1433 = vmatprep.subr.mxu0 0.0
      %1434 = vmatpush1.xpose.msra.mxu0 0.0
      %1435 = vmatprep.subr.mxu0 0.0
      %1436 = vmatpush1.xpose.msra.mxu0 0.0
      %1437 = vmatprep.subr.mxu0 0.0
      %1438 = vmatpush1.xpose.msra.mxu0 0.0
      %1439 = vmatprep.subr.mxu0 0.0
      %1440 = vmatpush1.xpose.msra.mxu0 0.0
      %1441 = vmatprep.subr.mxu0 0.0
      %1442 = vmatpush1.xpose.msra.mxu0 0.0
      %1443 = vmatprep.subr.mxu0 0.0
      %1444 = vmatpush1.xpose.msra.mxu0 0.0
      %1445 = vmatprep.subr.mxu0 0.0
      %1446 = vmatpush1.xpose.msra.mxu0 0.0
      %1447 = vmatprep.subr.mxu0 0.0
      %1448 = vmatpush1.xpose.msra.mxu0 0.0
      %1449 = vmatprep.subr.mxu0 0.0
      %1450 = vmatpush1.xpose.msra.mxu0 0.0
      %1451 = vmatprep.subr.mxu0 0.0
      %1452 = vmatpush1.xpose.msra.mxu0 0.0
      %1453 = vmatprep.subr.mxu0 0.0
      %1454 = vmatpush1.xpose.msra.mxu0 0.0
      %1455 = vmatprep.subr.mxu0 0.0
      %1456 = vmatpush1.xpose.msra.mxu0 0.0
      %1457 = vmatprep.subr.mxu0 0.0
      %1458 = vmatpush1.xpose.msra.mxu0 0.0
      %1459 = vmatprep.mubr.f32.mxu0 0.0
      %1460 = vmatmul.mubr.f32.gmra.mrb[0].mxu0 %v1391
      %v1461 = vpop.f32.mrb[0].mxu0
      %v1462 = vadd.f32 %v1222, %v1461
      %v1463 = vpop.f32.mrb[0].mxu0
      %1464 = vdwg.mxu0
      %v1465 = vsel %vm647, %v1462, -inf
      %1466 = vmax.xlane.f32.xlu0 %v1465
      %v1467 = vpop.xlane.xlu0 %1466
      %v1468 = vsub.f32 %v1462, %v1467
      %v1469 = vmul.f32 %v1468, 1.442695
      %v1470 = vpow.pop %v1469
      %v1471 = vsel %vm647, %v1470, 0.0
      %1472 = vadd.xlane.f32.xlu0 %v1471
      %v1473 = vpop.xlane.xlu0 %1472
      %v1474 = vrcp.pop %v1473
      %v1475 = vmul.f32 %v1470, %v1474
      %1476 = vrot.lane.b32.xlu0 %v1211, 80
      %v1477 = vpop.permute.xlu0 %1476
      %v1480 = vsel %vm647, %v1475, 0
      %1482 = vmatprep.subr.mxu0 0.0
      %1483 = vmatpush1.msra.mxu0 %v1477
      %1484 = vmatprep.subr.mxu0 0.0
      %1485 = vmatpush1.msra.mxu0 0.0
      %1486 = vmatprep.subr.mxu0 0.0
      %1487 = vmatpush1.msra.mxu0 0.0
      %1488 = vmatprep.subr.mxu0 0.0
      %1489 = vmatpush1.msra.mxu0 0.0
      %1490 = vmatprep.subr.mxu0 0.0
      %1491 = vmatpush1.msra.mxu0 0.0
      %1492 = vmatprep.subr.mxu0 0.0
      %1493 = vmatpush1.msra.mxu0 0.0
      %1494 = vmatprep.subr.mxu0 0.0
      %1495 = vmatpush1.msra.mxu0 0.0
      %1496 = vmatprep.subr.mxu0 0.0
      %1497 = vmatpush1.msra.mxu0 0.0
      %1498 = vmatprep.subr.mxu0 0.0
      %1499 = vmatpush1.msra.mxu0 0.0
      %1500 = vmatprep.subr.mxu0 0.0
      %1501 = vmatpush1.msra.mxu0 0.0
      %1502 = vmatprep.subr.mxu0 0.0
      %1503 = vmatpush1.msra.mxu0 0.0
      %1504 = vmatprep.subr.mxu0 0.0
      %1505 = vmatpush1.msra.mxu0 0.0
      %1506 = vmatprep.subr.mxu0 0.0
      %1507 = vmatpush1.msra.mxu0 0.0
      %1508 = vmatprep.subr.mxu0 0.0
      %1509 = vmatpush1.msra.mxu0 0.0
      %1510 = vmatprep.subr.mxu0 0.0
      %1511 = vmatpush1.msra.mxu0 0.0
      %1512 = vmatprep.subr.mxu0 0.0
      %1513 = vmatpush1.msra.mxu0 0.0
      %1514 = vmatprep.subr.mxu0 0.0
      %1515 = vmatpush1.msra.mxu0 0.0
      %1516 = vmatprep.subr.mxu0 0.0
      %1517 = vmatpush1.msra.mxu0 0.0
      %1518 = vmatprep.subr.mxu0 0.0
      %1519 = vmatpush1.msra.mxu0 0.0
      %1520 = vmatprep.subr.mxu0 0.0
      %1521 = vmatpush1.msra.mxu0 0.0
      %1522 = vmatprep.subr.mxu0 0.0
      %1523 = vmatpush1.msra.mxu0 0.0
      %1524 = vmatprep.subr.mxu0 0.0
      %1525 = vmatpush1.msra.mxu0 0.0
      %1526 = vmatprep.subr.mxu0 0.0
      %1527 = vmatpush1.msra.mxu0 0.0
      %1528 = vmatprep.subr.mxu0 0.0
      %1529 = vmatpush1.msra.mxu0 0.0
      %1530 = vmatprep.subr.mxu0 0.0
      %1531 = vmatpush1.msra.mxu0 0.0
      %1532 = vmatprep.subr.mxu0 0.0
      %1533 = vmatpush1.msra.mxu0 0.0
      %1534 = vmatprep.subr.mxu0 0.0
      %1535 = vmatpush1.msra.mxu0 0.0
      %1536 = vmatprep.subr.mxu0 0.0
      %1537 = vmatpush1.msra.mxu0 0.0
      %1538 = vmatprep.subr.mxu0 0.0
      %1539 = vmatpush1.msra.mxu0 0.0
      %1540 = vmatprep.subr.mxu0 0.0
      %1541 = vmatpush1.msra.mxu0 0.0
      %1542 = vmatprep.subr.mxu0 0.0
      %1543 = vmatpush1.msra.mxu0 0.0
      %1544 = vmatprep.subr.mxu0 0.0
      %1545 = vmatpush1.msra.mxu0 0.0
      %1546 = vmatprep.mubr.f32.mxu0 0.0
      %1547 = vmatmul.mubr.f32.gmra.mrb[0].mxu0 %v1480
      %v1548 = vpop.f32.mrb[0].mxu0
      %v1549 = vadd.f32 0.0, %v1548
      %v1550 = vpop.f32.mrb[0].mxu0
      %1551 = vdwg.mxu0
      %v1553 = vsel %vm572, %v1549, 0
      %1555 = vmatprep.subr.mxu0 0.0
      %1556 = vmatpush1.msra.mxu0 %v1216
      %1557 = vmatprep.subr.mxu0 0.0
      %1558 = vmatpush1.msra.mxu0 %v1217
      %1559 = vmatprep.subr.mxu0 0.0
      %1560 = vmatpush1.msra.mxu0 0.0
      %1561 = vmatprep.subr.mxu0 0.0
      %1562 = vmatpush1.msra.mxu0 0.0
      %1563 = vmatprep.subr.mxu0 0.0
      %1564 = vmatpush1.msra.mxu0 0.0
      %1565 = vmatprep.subr.mxu0 0.0
      %1566 = vmatpush1.msra.mxu0 0.0
      %1567 = vmatprep.subr.mxu0 0.0
      %1568 = vmatpush1.msra.mxu0 0.0
      %1569 = vmatprep.subr.mxu0 0.0
      %1570 = vmatpush1.msra.mxu0 0.0
      %1571 = vmatprep.subr.mxu0 0.0
      %1572 = vmatpush1.msra.mxu0 0.0
      %1573 = vmatprep.subr.mxu0 0.0
      %1574 = vmatpush1.msra.mxu0 0.0
      %1575 = vmatprep.subr.mxu0 0.0
      %1576 = vmatpush1.msra.mxu0 0.0
      %1577 = vmatprep.subr.mxu0 0.0
      %1578 = vmatpush1.msra.mxu0 0.0
      %1579 = vmatprep.subr.mxu0 0.0
      %1580 = vmatpush1.msra.mxu0 0.0
      %1581 = vmatprep.subr.mxu0 0.0
      %1582 = vmatpush1.msra.mxu0 0.0
      %1583 = vmatprep.subr.mxu0 0.0
      %1584 = vmatpush1.msra.mxu0 0.0
      %1585 = vmatprep.subr.mxu0 0.0
      %1586 = vmatpush1.msra.mxu0 0.0
      %1587 = vmatprep.subr.mxu0 0.0
      %1588 = vmatpush1.msra.mxu0 0.0
      %1589 = vmatprep.subr.mxu0 0.0
      %1590 = vmatpush1.msra.mxu0 0.0
      %1591 = vmatprep.subr.mxu0 0.0
      %1592 = vmatpush1.msra.mxu0 0.0
      %1593 = vmatprep.subr.mxu0 0.0
      %1594 = vmatpush1.msra.mxu0 0.0
      %1595 = vmatprep.subr.mxu0 0.0
      %1596 = vmatpush1.msra.mxu0 0.0
      %1597 = vmatprep.subr.mxu0 0.0
      %1598 = vmatpush1.msra.mxu0 0.0
      %1599 = vmatprep.subr.mxu0 0.0
      %1600 = vmatpush1.msra.mxu0 0.0
      %1601 = vmatprep.subr.mxu0 0.0
      %1602 = vmatpush1.msra.mxu0 0.0
      %1603 = vmatprep.subr.mxu0 0.0
      %1604 = vmatpush1.msra.mxu0 0.0
      %1605 = vmatprep.subr.mxu0 0.0
      %1606 = vmatpush1.msra.mxu0 0.0
      %1607 = vmatprep.subr.mxu0 0.0
      %1608 = vmatpush1.msra.mxu0 0.0
      %1609 = vmatprep.subr.mxu0 0.0
      %1610 = vmatpush1.msra.mxu0 0.0
      %1611 = vmatprep.subr.mxu0 0.0
      %1612 = vmatpush1.msra.mxu0 0.0
      %1613 = vmatprep.subr.mxu0 0.0
      %1614 = vmatpush1.msra.mxu0 0.0
      %1615 = vmatprep.subr.mxu0 0.0
      %1616 = vmatpush1.msra.mxu0 0.0
      %1617 = vmatprep.subr.mxu0 0.0
      %1618 = vmatpush1.msra.mxu0 0.0
      %1619 = vmatprep.mubr.f32.mxu0 0.0
      %1620 = vmatmul.mubr.f32.gmra.mrb[0].mxu0 %v1553
      %v1621 = vpop.f32.mrb[0].mxu0
      %v1622 = vadd.f32 0.0, %v1621
      %v1623 = vpop.f32.mrb[0].mxu0
      %1624 = vdwg.mxu0
      %v1626 = vsel %vm572, %v1384, 0
      %1628 = vmatprep.subr.mxu0 0.0
      %1629 = vmatpush1.msra.mxu0 %v1214
      %1630 = vmatprep.subr.mxu0 0.0
      %1631 = vmatpush1.msra.mxu0 %v1215
      %1632 = vmatprep.subr.mxu0 0.0
      %1633 = vmatpush1.msra.mxu0 0.0
      %1634 = vmatprep.subr.mxu0 0.0
      %1635 = vmatpush1.msra.mxu0 0.0
      %1636 = vmatprep.subr.mxu0 0.0
      %1637 = vmatpush1.msra.mxu0 0.0
      %1638 = vmatprep.subr.mxu0 0.0
      %1639 = vmatpush1.msra.mxu0 0.0
      %1640 = vmatprep.subr.mxu0 0.0
      %1641 = vmatpush1.msra.mxu0 0.0
      %1642 = vmatprep.subr.mxu0 0.0
      %1643 = vmatpush1.msra.mxu0 0.0
      %1644 = vmatprep.subr.mxu0 0.0
      %1645 = vmatpush1.msra.mxu0 0.0
      %1646 = vmatprep.subr.mxu0 0.0
      %1647 = vmatpush1.msra.mxu0 0.0
      %1648 = vmatprep.subr.mxu0 0.0
      %1649 = vmatpush1.msra.mxu0 0.0
      %1650 = vmatprep.subr.mxu0 0.0
      %1651 = vmatpush1.msra.mxu0 0.0
      %1652 = vmatprep.subr.mxu0 0.0
      %1653 = vmatpush1.msra.mxu0 0.0
      %1654 = vmatprep.subr.mxu0 0.0
      %1655 = vmatpush1.msra.mxu0 0.0
      %1656 = vmatprep.subr.mxu0 0.0
      %1657 = vmatpush1.msra.mxu0 0.0
      %1658 = vmatprep.subr.mxu0 0.0
      %1659 = vmatpush1.msra.mxu0 0.0
      %1660 = vmatprep.subr.mxu0 0.0
      %1661 = vmatpush1.msra.mxu0 0.0
      %1662 = vmatprep.subr.mxu0 0.0
      %1663 = vmatpush1.msra.mxu0 0.0
      %1664 = vmatprep.subr.mxu0 0.0
      %1665 = vmatpush1.msra.mxu0 0.0
      %1666 = vmatprep.subr.mxu0 0.0
      %1667 = vmatpush1.msra.mxu0 0.0
      %1668 = vmatprep.subr.mxu0 0.0
      %1669 = vmatpush1.msra.mxu0 0.0
      %1670 = vmatprep.subr.mxu0 0.0
      %1671 = vmatpush1.msra.mxu0 0.0
      %1672 = vmatprep.subr.mxu0 0.0
      %1673 = vmatpush1.msra.mxu0 0.0
      %1674 = vmatprep.subr.mxu0 0.0
      %1675 = vmatpush1.msra.mxu0 0.0
      %1676 = vmatprep.subr.mxu0 0.0
      %1677 = vmatpush1.msra.mxu0 0.0
      %1678 = vmatprep.subr.mxu0 0.0
      %1679 = vmatpush1.msra.mxu0 0.0
      %1680 = vmatprep.subr.mxu0 0.0
      %1681 = vmatpush1.msra.mxu0 0.0
      %1682 = vmatprep.subr.mxu0 0.0
      %1683 = vmatpush1.msra.mxu0 0.0
      %1684 = vmatprep.subr.mxu0 0.0
      %1685 = vmatpush1.msra.mxu0 0.0
      %1686 = vmatprep.subr.mxu0 0.0
      %1687 = vmatpush1.msra.mxu0 0.0
      %1688 = vmatprep.subr.mxu0 0.0
      %1689 = vmatpush1.msra.mxu0 0.0
      %1690 = vmatprep.subr.mxu0 0.0
      %1691 = vmatpush1.msra.mxu0 0.0
      %1692 = vmatprep.mubr.f32.mxu0 0.0
      %1693 = vmatmul.mubr.f32.gmra.mrb[0].mxu0 %v1626
      %v1694 = vpop.f32.mrb[0].mxu0
      %v1695 = vadd.f32 %v1622, %v1694
      %v1696 = vpop.f32.mrb[0].mxu0
      %1697 = vdwg.mxu0
      %v1698 = vadd.f32 %v1046, %v1695
      %v1699 = vmul.f32 %v1698, %v1698
      %v1700 = vsel %vm474, %v1699, 0.0
      %1701 = vadd.xlane.f32.xlu0 %v1700
      %v1702 = vpop.xlane.xlu0 %1701
      %v1703 = vmul.f32 %v1702, %v478
      %v1704 = vadd.f32 %v1703, 1e-06
      %v1705 = vrsqrt.pop %v1704
      %v1706 = vmul.f32 %v1698, %v1705
      %v1707 = vlaneseq
      %v1708 = vshrl.u32 %v1707, 7
      %v1709 = vsub.s32 2, %v1708
      %v1710 = vrot.slane %v472, %v1709
      %v1711 = vmul.f32 %v1706, %v1710
      %v1712 = vld [vmem:[%s9] sm:$0xff]
      %v1713 = vld [vmem:[%s9 + $0x8] sm:$0xff]
      %v1714 = vld [vmem:[%s9 + $0x10] sm:$0xff]
      %v1715 = vld [vmem:[%s9 + $0x18] sm:$0xff]
      %v1717 = vsel %vm474, %v1711, 0
      %1719 = vmatprep.subr.mxu0 0.0
      %1720 = vmatpush1.msra.mxu0 %v1712
      %1721 = vmatprep.subr.mxu0 0.0
      %1722 = vmatpush1.msra.mxu0 %v1713
      %1723 = vmatprep.subr.mxu0 0.0
      %1724 = vmatpush1.msra.mxu0 %v1714
      %1725 = vmatprep.subr.mxu0 0.0
      %1726 = vmatpush1.msra.mxu0 %v1715
      %1727 = vmatprep.subr.mxu0 0.0
      %1728 = vmatpush1.msra.mxu0 0.0
      %1729 = vmatprep.subr.mxu0 0.0
      %1730 = vmatpush1.msra.mxu0 0.0
      %1731 = vmatprep.subr.mxu0 0.0
      %1732 = vmatpush1.msra.mxu0 0.0
      %1733 = vmatprep.subr.mxu0 0.0
      %1734 = vmatpush1.msra.mxu0 0.0
      %1735 = vmatprep.subr.mxu0 0.0
      %1736 = vmatpush1.msra.mxu0 0.0
      %1737 = vmatprep.subr.mxu0 0.0
      %1738 = vmatpush1.msra.mxu0 0.0
      %1739 = vmatprep.subr.mxu0 0.0
      %1740 = vmatpush1.msra.mxu0 0.0
      %1741 = vmatprep.subr.mxu0 0.0
      %1742 = vmatpush1.msra.mxu0 0.0
      %1743 = vmatprep.subr.mxu0 0.0
      %1744 = vmatpush1.msra.mxu0 0.0
      %1745 = vmatprep.subr.mxu0 0.0
      %1746 = vmatpush1.msra.mxu0 0.0
      %1747 = vmatprep.subr.mxu0 0.0
      %1748 = vmatpush1.msra.mxu0 0.0
      %1749 = vmatprep.subr.mxu0 0.0
      %1750 = vmatpush1.msra.mxu0 0.0
      %1751 = vmatprep.subr.mxu0 0.0
      %1752 = vmatpush1.msra.mxu0 0.0
      %1753 = vmatprep.subr.mxu0 0.0
      %1754 = vmatpush1.msra.mxu0 0.0
      %1755 = vmatprep.subr.mxu0 0.0
      %1756 = vmatpush1.msra.mxu0 0.0
      %1757 = vmatprep.subr.mxu0 0.0
      %1758 = vmatpush1.msra.mxu0 0.0
      %1759 = vmatprep.subr.mxu0 0.0
      %1760 = vmatpush1.msra.mxu0 0.0
      %1761 = vmatprep.subr.mxu0 0.0
      %1762 = vmatpush1.msra.mxu0 0.0
      %1763 = vmatprep.subr.mxu0 0.0
      %1764 = vmatpush1.msra.mxu0 0.0
      %1765 = vmatprep.subr.mxu0 0.0
      %1766 = vmatpush1.msra.mxu0 0.0
      %1767 = vmatprep.subr.mxu0 0.0
      %1768 = vmatpush1.msra.mxu0 0.0
      %1769 = vmatprep.subr.mxu0 0.0
      %1770 = vmatpush1.msra.mxu0 0.0
      %1771 = vmatprep.subr.mxu0 0.0
      %1772 = vmatpush1.msra.mxu0 0.0
      %1773 = vmatprep.subr.mxu0 0.0
      %1774 = vmatpush1.msra.mxu0 0.0
      %1775 = vmatprep.subr.mxu0 0.0
      %1776 = vmatpush1.msra.mxu0 0.0
      %1777 = vmatprep.subr.mxu0 0.0
      %1778 = vmatpush1.msra.mxu0 0.0
      %1779 = vmatprep.subr.mxu0 0.0
      %1780 = vmatpush1.msra.mxu0 0.0
      %1781 = vmatprep.subr.mxu0 0.0
      %1782 = vmatpush1.msra.mxu0 0.0
      %1783 = vmatprep.mubr.f32.mxu0 0.0
      %1784 = vmatmul.mubr.f32.gmra.mrb[0].mxu0 %v1717
      %v1785 = vpop.f32.mrb[0].mxu0
      %v1786 = vadd.f32 0.0, %v1785
      %v1787 = vpop.f32.mrb[0].mxu0
      %1788 = vdwg.mxu0
      %v1789 = vmax.f32 %v1786, 0.0
      %v1790 = vld [vmem:[%s10] sm:$0xff]
      %v1791 = vld [vmem:[%s10 + $0x8] sm:$0xff]
      %v1792 = vld [vmem:[%s10 + $0x10] sm:$0xff]
      %v1793 = vld [vmem:[%s10 + $0x18] sm:$0xff]
      %v1794 = vld [vmem:[%s10 + $0x20] sm:$0xff]
      %v1795 = vld [vmem:[%s10 + $0x28] sm:$0xff]
      %v1796 = vld [vmem:[%s10 + $0x30] sm:$0xff]
      %v1797 = vld [vmem:[%s10 + $0x38] sm:$0xff]
      %vm1798 = vcmask 523264
      %v1800 = vsel %vm1798, %v1789, 0
      %1802 = vmatprep.subr.mxu0 0.0
      %1803 = vmatpush1.msra.mxu0 %v1790
      %1804 = vmatprep.subr.mxu0 0.0
      %1805 = vmatpush1.msra.mxu0 %v1791
      %1806 = vmatprep.subr.mxu0 0.0
      %1807 = vmatpush1.msra.mxu0 %v1792
      %1808 = vmatprep.subr.mxu0 0.0
      %1809 = vmatpush1.msra.mxu0 %v1793
      %1810 = vmatprep.subr.mxu0 0.0
      %1811 = vmatpush1.msra.mxu0 %v1794
      %1812 = vmatprep.subr.mxu0 0.0
      %1813 = vmatpush1.msra.mxu0 %v1795
      %1814 = vmatprep.subr.mxu0 0.0
      %1815 = vmatpush1.msra.mxu0 %v1796
      %1816 = vmatprep.subr.mxu0 0.0
      %1817 = vmatpush1.msra.mxu0 %v1797
      %1818 = vmatprep.subr.mxu0 0.0
      %1819 = vmatpush1.msra.mxu0 0.0
      %1820 = vmatprep.subr.mxu0 0.0
      %1821 = vmatpush1.msra.mxu0 0.0
      %1822 = vmatprep.subr.mxu0 0.0
      %1823 = vmatpush1.msra.mxu0 0.0
      %1824 = vmatprep.subr.mxu0 0.0
      %1825 = vmatpush1.msra.mxu0 0.0
      %1826 = vmatprep.subr.mxu0 0.0
      %1827 = vmatpush1.msra.mxu0 0.0
      %1828 = vmatprep.subr.mxu0 0.0
      %1829 = vmatpush1.msra.mxu0 0.0
      %1830 = vmatprep.subr.mxu0 0.0
      %1831 = vmatpush1.msra.mxu0 0.0
      %1832 = vmatprep.subr.mxu0 0.0
      %1833 = vmatpush1.msra.mxu0 0.0
      %1834 = vmatprep.subr.mxu0 0.0
      %1835 = vmatpush1.msra.mxu0 0.0
      %1836 = vmatprep.subr.mxu0 0.0
      %1837 = vmatpush1.msra.mxu0 0.0
      %1838 = vmatprep.subr.mxu0 0.0
      %1839 = vmatpush1.msra.mxu0 0.0
      %1840 = vmatprep.subr.mxu0 0.0
      %1841 = vmatpush1.msra.mxu0 0.0
      %1842 = vmatprep.subr.mxu0 0.0
      %1843 = vmatpush1.msra.mxu0 0.0
      %1844 = vmatprep.subr.mxu0 0.0
      %1845 = vmatpush1.msra.mxu0 0.0
      %1846 = vmatprep.subr.mxu0 0.0
      %1847 = vmatpush1.msra.mxu0 0.0
      %1848 = vmatprep.subr.mxu0 0.0
      %1849 = vmatpush1.msra.mxu0 0.0
      %1850 = vmatprep.subr.mxu0 0.0
      %1851 = vmatpush1.msra.mxu0 0.0
      %1852 = vmatprep.subr.mxu0 0.0
      %1853 = vmatpush1.msra.mxu0 0.0
      %1854 = vmatprep.subr.mxu0 0.0
      %1855 = vmatpush1.msra.mxu0 0.0
      %1856 = vmatprep.subr.mxu0 0.0
      %1857 = vmatpush1.msra.mxu0 0.0
      %1858 = vmatprep.subr.mxu0 0.0
      %1859 = vmatpush1.msra.mxu0 0.0
      %1860 = vmatprep.subr.mxu0 0.0
      %1861 = vmatpush1.msra.mxu0 0.0
      %1862 = vmatprep.subr.mxu0 0.0
      %1863 = vmatpush1.msra.mxu0 0.0
      %1864 = vmatprep.subr.mxu0 0.0
      %1865 = vmatpush1.msra.mxu0 0.0
      %1866 = vmatprep.mubr.f32.mxu0 0.0
      %1867 = vmatmul.mubr.f32.gmra.mrb[0].mxu0 %v1800
      %v1868 = vpop.f32.mrb[0].mxu0
      %v1869 = vadd.f32 0.0, %v1868
      %v1870 = vpop.f32.mrb[0].mxu0
      %1871 = vdwg.mxu0
      %v1872 = vadd.f32 %v1698, %v1869
      %s1873 = scalar_lea.vmem %s11, 4
      %v1874 = vld [vmem:[%s1873] sm:$0x7]
      %v1875 = vmul.f32 %v1872, %v1872
      %v1876 = vsel %vm474, %v1875, 0.0
      %1877 = vadd.xlane.f32.xlu0 %v1876
      %v1878 = vpop.xlane.xlu0 %1877
      %v1879 = vmul.f32 %v1878, %v478
      %v1880 = vadd.f32 %v1879, 1e-06
      %v1881 = vrsqrt.pop %v1880
      %v1882 = vmul.f32 %v1872, %v1881
      %v1883 = vlaneseq
      %v1884 = vshrl.u32 %v1883, 7
      %v1885 = vsub.s32 0, %v1884
      %v1886 = vrot.slane %v1874, %v1885
      %v1887 = vmul.f32 %v1882, %v1886
      %s1888 = scalar_lea.vmem %s4, 32
      %v1889 = vld [vmem:[%s1888] sm:$0xff]
      %v1890 = vld [vmem:[%s1888 + $0x8] sm:$0xff]
      %v1891 = vld [vmem:[%s1888 + $0x10] sm:$0xff]
      %v1892 = vld [vmem:[%s1888 + $0x18] sm:$0xff]
      %v1894 = vsel %vm474, %v1887, 0
      %1896 = vmatprep.subr.mxu0 0.0
      %1897 = vmatpush1.msra.mxu0 %v1889
      %1898 = vmatprep.subr.mxu0 0.0
      %1899 = vmatpush1.msra.mxu0 %v1890
      %1900 = vmatprep.subr.mxu0 0.0
      %1901 = vmatpush1.msra.mxu0 %v1891
      %1902 = vmatprep.subr.mxu0 0.0
      %1903 = vmatpush1.msra.mxu0 %v1892
      %1904 = vmatprep.subr.mxu0 0.0
      %1905 = vmatpush1.msra.mxu0 0.0
      %1906 = vmatprep.subr.mxu0 0.0
      %1907 = vmatpush1.msra.mxu0 0.0
      %1908 = vmatprep.subr.mxu0 0.0
      %1909 = vmatpush1.msra.mxu0 0.0
      %1910 = vmatprep.subr.mxu0 0.0
      %1911 = vmatpush1.msra.mxu0 0.0
      %1912 = vmatprep.subr.mxu0 0.0
      %1913 = vmatpush1.msra.mxu0 0.0
      %1914 = vmatprep.subr.mxu0 0.0
      %1915 = vmatpush1.msra.mxu0 0.0
      %1916 = vmatprep.subr.mxu0 0.0
      %1917 = vmatpush1.msra.mxu0 0.0
      %1918 = vmatprep.subr.mxu0 0.0
      %1919 = vmatpush1.msra.mxu0 0.0
      %1920 = vmatprep.subr.mxu0 0.0
      %1921 = vmatpush1.msra.mxu0 0.0
      %1922 = vmatprep.subr.mxu0 0.0
      %1923 = vmatpush1.msra.mxu0 0.0
      %1924 = vmatprep.subr.mxu0 0.0
      %1925 = vmatpush1.msra.mxu0 0.0
      %1926 = vmatprep.subr.mxu0 0.0
      %1927 = vmatpush1.msra.mxu0 0.0
      %1928 = vmatprep.subr.mxu0 0.0
      %1929 = vmatpush1.msra.mxu0 0.0
      %1930 = vmatprep.subr.mxu0 0.0
      %1931 = vmatpush1.msra.mxu0 0.0
      %1932 = vmatprep.subr.mxu0 0.0
      %1933 = vmatpush1.msra.mxu0 0.0
      %1934 = vmatprep.subr.mxu0 0.0
      %1935 = vmatpush1.msra.mxu0 0.0
      %1936 = vmatprep.subr.mxu0 0.0
      %1937 = vmatpush1.msra.mxu0 0.0
      %1938 = vmatprep.subr.mxu0 0.0
      %1939 = vmatpush1.msra.mxu0 0.0
      %1940 = vmatprep.subr.mxu0 0.0
      %1941 = vmatpush1.msra.mxu0 0.0
      %1942 = vmatprep.subr.mxu0 0.0
      %1943 = vmatpush1.msra.mxu0 0.0
      %1944 = vmatprep.subr.mxu0 0.0
      %1945 = vmatpush1.msra.mxu0 0.0
      %1946 = vmatprep.subr.mxu0 0.0
      %1947 = vmatpush1.msra.mxu0 0.0
      %1948 = vmatprep.subr.mxu0 0.0
      %1949 = vmatpush1.msra.mxu0 0.0
      %1950 = vmatprep.subr.mxu0 0.0
      %1951 = vmatpush1.msra.mxu0 0.0
      %1952 = vmatprep.subr.mxu0 0.0
      %1953 = vmatpush1.msra.mxu0 0.0
      %1954 = vmatprep.subr.mxu0 0.0
      %1955 = vmatpush1.msra.mxu0 0.0
      %1956 = vmatprep.subr.mxu0 0.0
      %1957 = vmatpush1.msra.mxu0 0.0
      %1958 = vmatprep.subr.mxu0 0.0
      %1959 = vmatpush1.msra.mxu0 0.0
      %1960 = vmatprep.mubr.f32.mxu0 0.0
      %1961 = vmatmul.mubr.f32.gmra.mrb[0].mxu0 %v1894
      %v1962 = vpop.f32.mrb[0].mxu0
      %v1963 = vadd.f32 0.0, %v1962
      %v1964 = vpop.f32.mrb[0].mxu0
      %1965 = vdwg.mxu0
      %s1966 = scalar_lea.vmem %s5, 32
      %v1967 = vld [vmem:[%s1966] sm:$0xff]
      %v1968 = vld [vmem:[%s1966 + $0x8] sm:$0xff]
      %v1969 = vld [vmem:[%s1966 + $0x10] sm:$0xff]
      %v1970 = vld [vmem:[%s1966 + $0x18] sm:$0xff]
      %1972 = vrot.lane.b32.xlu0 %v1963, 96
      %v1973 = vpop.permute.xlu0 %1972
      %v1974 = vsel %vm572, %v1963, 0
      %v1976 = vsel %vm572, %v1973, 0
      %1978 = vmatprep.subr.mxu0 0.0
      %1979 = vmatpush1.xpose.msra.mxu0 %v1976
      %1980 = vmatprep.subr.mxu0 0.0
      %1981 = vmatpush1.xpose.msra.mxu0 0.0
      %1982 = vmatprep.subr.mxu0 0.0
      %1983 = vmatpush1.xpose.msra.mxu0 0.0
      %1984 = vmatprep.subr.mxu0 0.0
      %1985 = vmatpush1.xpose.msra.mxu0 0.0
      %1986 = vmatprep.subr.mxu0 0.0
      %1987 = vmatpush1.xpose.msra.mxu0 0.0
      %1988 = vmatprep.subr.mxu0 0.0
      %1989 = vmatpush1.xpose.msra.mxu0 0.0
      %1990 = vmatprep.subr.mxu0 0.0
      %1991 = vmatpush1.xpose.msra.mxu0 0.0
      %1992 = vmatprep.subr.mxu0 0.0
      %1993 = vmatpush1.xpose.msra.mxu0 0.0
      %1994 = vmatprep.subr.mxu0 0.0
      %1995 = vmatpush1.xpose.msra.mxu0 0.0
      %1996 = vmatprep.subr.mxu0 0.0
      %1997 = vmatpush1.xpose.msra.mxu0 0.0
      %1998 = vmatprep.subr.mxu0 0.0
      %1999 = vmatpush1.xpose.msra.mxu0 0.0
      %2000 = vmatprep.subr.mxu0 0.0
      %2001 = vmatpush1.xpose.msra.mxu0 0.0
      %2002 = vmatprep.subr.mxu0 0.0
      %2003 = vmatpush1.xpose.msra.mxu0 0.0
      %2004 = vmatprep.subr.mxu0 0.0
      %2005 = vmatpush1.xpose.msra.mxu0 0.0
      %2006 = vmatprep.subr.mxu0 0.0
      %2007 = vmatpush1.xpose.msra.mxu0 0.0
      %2008 = vmatprep.subr.mxu0 0.0
      %2009 = vmatpush1.xpose.msra.mxu0 0.0
      %2010 = vmatprep.subr.mxu0 0.0
      %2011 = vmatpush1.xpose.msra.mxu0 0.0
      %2012 = vmatprep.subr.mxu0 0.0
      %2013 = vmatpush1.xpose.msra.mxu0 0.0
      %2014 = vmatprep.subr.mxu0 0.0
      %2015 = vmatpush1.xpose.msra.mxu0 0.0
      %2016 = vmatprep.subr.mxu0 0.0
      %2017 = vmatpush1.xpose.msra.mxu0 0.0
      %2018 = vmatprep.subr.mxu0 0.0
      %2019 = vmatpush1.xpose.msra.mxu0 0.0
      %2020 = vmatprep.subr.mxu0 0.0
      %2021 = vmatpush1.xpose.msra.mxu0 0.0
      %2022 = vmatprep.subr.mxu0 0.0
      %2023 = vmatpush1.xpose.msra.mxu0 0.0
      %2024 = vmatprep.subr.mxu0 0.0
      %2025 = vmatpush1.xpose.msra.mxu0 0.0
      %2026 = vmatprep.subr.mxu0 0.0
      %2027 = vmatpush1.xpose.msra.mxu0 0.0
      %2028 = vmatprep.subr.mxu0 0.0
      %2029 = vmatpush1.xpose.msra.mxu0 0.0
      %2030 = vmatprep.subr.mxu0 0.0
      %2031 = vmatpush1.xpose.msra.mxu0 0.0
      %2032 = vmatprep.subr.mxu0 0.0
      %2033 = vmatpush1.xpose.msra.mxu0 0.0
      %2034 = vmatprep.subr.mxu0 0.0
      %2035 = vmatpush1.xpose.msra.mxu0 0.0
      %2036 = vmatprep.subr.mxu0 0.0
      %2037 = vmatpush1.xpose.msra.mxu0 0.0
      %2038 = vmatprep.subr.mxu0 0.0
      %2039 = vmatpush1.xpose.msra.mxu0 0.0
      %2040 = vmatprep.subr.mxu0 0.0
      %2041 = vmatpush1.xpose.msra.mxu0 0.0
      %2042 = vmatprep.mubr.f32.mxu0 0.0
      %2043 = vmatmul.mubr.f32.gmra.mrb[0].mxu0 %v1974
      %v2044 = vpop.f32.mrb[0].mxu0
      %v2045 = vadd.f32 %v470, %v2044
      %v2046 = vpop.f32.mrb[0].mxu0
      %2047 = vdwg.mxu0
      %v2048 = vsel %vm647, %v2045, -inf
      %2049 = vmax.xlane.f32.xlu0 %v2048
      %v2050 = vpop.xlane.xlu0 %2049
      %v2051 = vsub.f32 %v2045, %v2050
      %v2052 = vmul.f32 %v2051, 1.442695
      %v2053 = vpow.pop %v2052
      %v2054 = vsel %vm647, %v2053, 0.0
      %2055 = vadd.xlane.f32.xlu0 %v2054
      %v2056 = vpop.xlane.xlu0 %2055
      %v2057 = vrcp.pop %v2056
      %v2058 = vmul.f32 %v2053, %v2057
      %2059 = vrot.lane.b32.xlu0 %v1963, 64
      %v2060 = vpop.permute.xlu0 %2059
      %v2063 = vsel %vm647, %v2058, 0
      %2065 = vmatprep.subr.mxu0 0.0
      %2066 = vmatpush1.msra.mxu0 %v2060
      %2067 = vmatprep.subr.mxu0 0.0
      %2068 = vmatpush1.msra.mxu0 0.0
      %2069 = vmatprep.subr.mxu0 0.0
      %2070 = vmatpush1.msra.mxu0 0.0
      %2071 = vmatprep.subr.mxu0 0.0
      %2072 = vmatpush1.msra.mxu0 0.0
      %2073 = vmatprep.subr.mxu0 0.0
      %2074 = vmatpush1.msra.mxu0 0.0
      %2075 = vmatprep.subr.mxu0 0.0
      %2076 = vmatpush1.msra.mxu0 0.0
      %2077 = vmatprep.subr.mxu0 0.0
      %2078 = vmatpush1.msra.mxu0 0.0
      %2079 = vmatprep.subr.mxu0 0.0
      %2080 = vmatpush1.msra.mxu0 0.0
      %2081 = vmatprep.subr.mxu0 0.0
      %2082 = vmatpush1.msra.mxu0 0.0
      %2083 = vmatprep.subr.mxu0 0.0
      %2084 = vmatpush1.msra.mxu0 0.0
      %2085 = vmatprep.subr.mxu0 0.0
      %2086 = vmatpush1.msra.mxu0 0.0
      %2087 = vmatprep.subr.mxu0 0.0
      %2088 = vmatpush1.msra.mxu0 0.0
      %2089 = vmatprep.subr.mxu0 0.0
      %2090 = vmatpush1.msra.mxu0 0.0
      %2091 = vmatprep.subr.mxu0 0.0
      %2092 = vmatpush1.msra.mxu0 0.0
      %2093 = vmatprep.subr.mxu0 0.0
      %2094 = vmatpush1.msra.mxu0 0.0
      %2095 = vmatprep.subr.mxu0 0.0
      %2096 = vmatpush1.msra.mxu0 0.0
      %2097 = vmatprep.subr.mxu0 0.0
      %2098 = vmatpush1.msra.mxu0 0.0
      %2099 = vmatprep.subr.mxu0 0.0
      %2100 = vmatpush1.msra.mxu0 0.0
      %2101 = vmatprep.subr.mxu0 0.0
      %2102 = vmatpush1.msra.mxu0 0.0
      %2103 = vmatprep.subr.mxu0 0.0
      %2104 = vmatpush1.msra.mxu0 0.0
      %2105 = vmatprep.subr.mxu0 0.0
      %2106 = vmatpush1.msra.mxu0 0.0
      %2107 = vmatprep.subr.mxu0 0.0
      %2108 = vmatpush1.msra.mxu0 0.0
      %2109 = vmatprep.subr.mxu0 0.0
      %2110 = vmatpush1.msra.mxu0 0.0
      %2111 = vmatprep.subr.mxu0 0.0
      %2112 = vmatpush1.msra.mxu0 0.0
      %2113 = vmatprep.subr.mxu0 0.0
      %2114 = vmatpush1.msra.mxu0 0.0
      %2115 = vmatprep.subr.mxu0 0.0
      %2116 = vmatpush1.msra.mxu0 0.0
      %2117 = vmatprep.subr.mxu0 0.0
      %2118 = vmatpush1.msra.mxu0 0.0
      %2119 = vmatprep.subr.mxu0 0.0
      %2120 = vmatpush1.msra.mxu0 0.0
      %2121 = vmatprep.subr.mxu0 0.0
      %2122 = vmatpush1.msra.mxu0 0.0
      %2123 = vmatprep.subr.mxu0 0.0
      %2124 = vmatpush1.msra.mxu0 0.0
      %2125 = vmatprep.subr.mxu0 0.0
      %2126 = vmatpush1.msra.mxu0 0.0
      %2127 = vmatprep.subr.mxu0 0.0
      %2128 = vmatpush1.msra.mxu0 0.0
      %2129 = vmatprep.mubr.f32.mxu0 0.0
      %2130 = vmatmul.mubr.f32.gmra.mrb[0].mxu0 %v2063
      %v2131 = vpop.f32.mrb[0].mxu0
      %v2132 = vadd.f32 0.0, %v2131
      %v2133 = vpop.f32.mrb[0].mxu0
      %2134 = vdwg.mxu0
      %2135 = vrot.lane.b32.xlu0 %v1963, 112
      %v2136 = vpop.permute.xlu0 %2135
      %2137 = vrot.lane.b32.xlu0 %v1963, 80
      %v2138 = vpop.permute.xlu0 %2137
      %v2139 = vsel %vm572, %v2136, 0
      %v2141 = vsel %vm572, %v2138, 0
      %2143 = vmatprep.subr.mxu0 0.0
      %2144 = vmatpush1.xpose.msra.mxu0 %v2141
      %2145 = vmatprep.subr.mxu0 0.0
      %2146 = vmatpush1.xpose.msra.mxu0 0.0
      %2147 = vmatprep.subr.mxu0 0.0
      %2148 = vmatpush1.xpose.msra.mxu0 0.0
      %2149 = vmatprep.subr.mxu0 0.0
      %2150 = vmatpush1.xpose.msra.mxu0 0.0
      %2151 = vmatprep.subr.mxu0 0.0
      %2152 = vmatpush1.xpose.msra.mxu0 0.0
      %2153 = vmatprep.subr.mxu0 0.0
      %2154 = vmatpush1.xpose.msra.mxu0 0.0
      %2155 = vmatprep.subr.mxu0 0.0
      %2156 = vmatpush1.xpose.msra.mxu0 0.0
      %2157 = vmatprep.subr.mxu0 0.0
      %2158 = vmatpush1.xpose.msra.mxu0 0.0
      %2159 = vmatprep.subr.mxu0 0.0
      %2160 = vmatpush1.xpose.msra.mxu0 0.0
      %2161 = vmatprep.subr.mxu0 0.0
      %2162 = vmatpush1.xpose.msra.mxu0 0.0
      %2163 = vmatprep.subr.mxu0 0.0
      %2164 = vmatpush1.xpose.msra.mxu0 0.0
      %2165 = vmatprep.subr.mxu0 0.0
      %2166 = vmatpush1.xpose.msra.mxu0 0.0
      %2167 = vmatprep.subr.mxu0 0.0
      %2168 = vmatpush1.xpose.msra.mxu0 0.0
      %2169 = vmatprep.subr.mxu0 0.0
      %2170 = vmatpush1.xpose.msra.mxu0 0.0
      %2171 = vmatprep.subr.mxu0 0.0
      %2172 = vmatpush1.xpose.msra.mxu0 0.0
      %2173 = vmatprep.subr.mxu0 0.0
      %2174 = vmatpush1.xpose.msra.mxu0 0.0
      %2175 = vmatprep.subr.mxu0 0.0
      %2176 = vmatpush1.xpose.msra.mxu0 0.0
      %2177 = vmatprep.subr.mxu0 0.0
      %2178 = vmatpush1.xpose.msra.mxu0 0.0
      %2179 = vmatprep.subr.mxu0 0.0
      %2180 = vmatpush1.xpose.msra.mxu0 0.0
      %2181 = vmatprep.subr.mxu0 0.0
      %2182 = vmatpush1.xpose.msra.mxu0 0.0
      %2183 = vmatprep.subr.mxu0 0.0
      %2184 = vmatpush1.xpose.msra.mxu0 0.0
      %2185 = vmatprep.subr.mxu0 0.0
      %2186 = vmatpush1.xpose.msra.mxu0 0.0
      %2187 = vmatprep.subr.mxu0 0.0
      %2188 = vmatpush1.xpose.msra.mxu0 0.0
      %2189 = vmatprep.subr.mxu0 0.0
      %2190 = vmatpush1.xpose.msra.mxu0 0.0
      %2191 = vmatprep.subr.mxu0 0.0
      %2192 = vmatpush1.xpose.msra.mxu0 0.0
      %2193 = vmatprep.subr.mxu0 0.0
      %2194 = vmatpush1.xpose.msra.mxu0 0.0
      %2195 = vmatprep.subr.mxu0 0.0
      %2196 = vmatpush1.xpose.msra.mxu0 0.0
      %2197 = vmatprep.subr.mxu0 0.0
      %2198 = vmatpush1.xpose.msra.mxu0 0.0
      %2199 = vmatprep.subr.mxu0 0.0
      %2200 = vmatpush1.xpose.msra.mxu0 0.0
      %2201 = vmatprep.subr.mxu0 0.0
      %2202 = vmatpush1.xpose.msra.mxu0 0.0
      %2203 = vmatprep.subr.mxu0 0.0
      %2204 = vmatpush1.xpose.msra.mxu0 0.0
      %2205 = vmatprep.subr.mxu0 0.0
      %2206 = vmatpush1.xpose.msra.mxu0 0.0
      %2207 = vmatprep.mubr.f32.mxu0 0.0
      %2208 = vmatmul.mubr.f32.gmra.mrb[0].mxu0 %v2139
      %v2209 = vpop.f32.mrb[0].mxu0
      %v2210 = vadd.f32 %v471, %v2209
      %v2211 = vpop.f32.mrb[0].mxu0
      %2212 = vdwg.mxu0
      %v2213 = vsel %vm647, %v2210, -inf
      %2214 = vmax.xlane.f32.xlu0 %v2213
      %v2215 = vpop.xlane.xlu0 %2214
      %v2216 = vsub.f32 %v2210, %v2215
      %v2217 = vmul.f32 %v2216, 1.442695
      %v2218 = vpow.pop %v2217
      %v2219 = vsel %vm647, %v2218, 0.0
      %2220 = vadd.xlane.f32.xlu0 %v2219
      %v2221 = vpop.xlane.xlu0 %2220
      %v2222 = vrcp.pop %v2221
      %v2223 = vmul.f32 %v2218, %v2222
      %2224 = vrot.lane.b32.xlu0 %v1963, 48
      %v2225 = vpop.permute.xlu0 %2224
      %v2228 = vsel %vm647, %v2223, 0
      %2230 = vmatprep.subr.mxu0 0.0
      %2231 = vmatpush1.msra.mxu0 %v2225
      %2232 = vmatprep.subr.mxu0 0.0
      %2233 = vmatpush1.msra.mxu0 0.0
      %2234 = vmatprep.subr.mxu0 0.0
      %2235 = vmatpush1.msra.mxu0 0.0
      %2236 = vmatprep.subr.mxu0 0.0
      %2237 = vmatpush1.msra.mxu0 0.0
      %2238 = vmatprep.subr.mxu0 0.0
      %2239 = vmatpush1.msra.mxu0 0.0
      %2240 = vmatprep.subr.mxu0 0.0
      %2241 = vmatpush1.msra.mxu0 0.0
      %2242 = vmatprep.subr.mxu0 0.0
      %2243 = vmatpush1.msra.mxu0 0.0
      %2244 = vmatprep.subr.mxu0 0.0
      %2245 = vmatpush1.msra.mxu0 0.0
      %2246 = vmatprep.subr.mxu0 0.0
      %2247 = vmatpush1.msra.mxu0 0.0
      %2248 = vmatprep.subr.mxu0 0.0
      %2249 = vmatpush1.msra.mxu0 0.0
      %2250 = vmatprep.subr.mxu0 0.0
      %2251 = vmatpush1.msra.mxu0 0.0
      %2252 = vmatprep.subr.mxu0 0.0
      %2253 = vmatpush1.msra.mxu0 0.0
      %2254 = vmatprep.subr.mxu0 0.0
      %2255 = vmatpush1.msra.mxu0 0.0
      %2256 = vmatprep.subr.mxu0 0.0
      %2257 = vmatpush1.msra.mxu0 0.0
      %2258 = vmatprep.subr.mxu0 0.0
      %2259 = vmatpush1.msra.mxu0 0.0
      %2260 = vmatprep.subr.mxu0 0.0
      %2261 = vmatpush1.msra.mxu0 0.0
      %2262 = vmatprep.subr.mxu0 0.0
      %2263 = vmatpush1.msra.mxu0 0.0
      %2264 = vmatprep.subr.mxu0 0.0
      %2265 = vmatpush1.msra.mxu0 0.0
      %2266 = vmatprep.subr.mxu0 0.0
      %2267 = vmatpush1.msra.mxu0 0.0
      %2268 = vmatprep.subr.mxu0 0.0
      %2269 = vmatpush1.msra.mxu0 0.0
      %2270 = vmatprep.subr.mxu0 0.0
      %2271 = vmatpush1.msra.mxu0 0.0
      %2272 = vmatprep.subr.mxu0 0.0
      %2273 = vmatpush1.msra.mxu0 0.0
      %2274 = vmatprep.subr.mxu0 0.0
      %2275 = vmatpush1.msra.mxu0 0.0
      %2276 = vmatprep.subr.mxu0 0.0
      %2277 = vmatpush1.msra.mxu0 0.0
      %2278 = vmatprep.subr.mxu0 0.0
      %2279 = vmatpush1.msra.mxu0 0.0
      %2280 = vmatprep.subr.mxu0 0.0
      %2281 = vmatpush1.msra.mxu0 0.0
      %2282 = vmatprep.subr.mxu0 0.0
      %2283 = vmatpush1.msra.mxu0 0.0
      %2284 = vmatprep.subr.mxu0 0.0
      %2285 = vmatpush1.msra.mxu0 0.0
      %2286 = vmatprep.subr.mxu0 0.0
      %2287 = vmatpush1.msra.mxu0 0.0
      %2288 = vmatprep.subr.mxu0 0.0
      %2289 = vmatpush1.msra.mxu0 0.0
      %2290 = vmatprep.subr.mxu0 0.0
      %2291 = vmatpush1.msra.mxu0 0.0
      %2292 = vmatprep.subr.mxu0 0.0
      %2293 = vmatpush1.msra.mxu0 0.0
      %2294 = vmatprep.mubr.f32.mxu0 0.0
      %2295 = vmatmul.mubr.f32.gmra.mrb[0].mxu0 %v2228
      %v2296 = vpop.f32.mrb[0].mxu0
      %v2297 = vadd.f32 0.0, %v2296
      %v2298 = vpop.f32.mrb[0].mxu0
      %2299 = vdwg.mxu0
      %v2301 = vsel %vm572, %v2297, 0
      %2303 = vmatprep.subr.mxu0 0.0
      %2304 = vmatpush1.msra.mxu0 %v1969
      %2305 = vmatprep.subr.mxu0 0.0
      %2306 = vmatpush1.msra.mxu0 %v1970
      %2307 = vmatprep.subr.mxu0 0.0
      %2308 = vmatpush1.msra.mxu0 0.0
      %2309 = vmatprep.subr.mxu0 0.0
      %2310 = vmatpush1.msra.mxu0 0.0
      %2311 = vmatprep.subr.mxu0 0.0
      %2312 = vmatpush1.msra.mxu0 0.0
      %2313 = vmatprep.subr.mxu0 0.0
      %2314 = vmatpush1.msra.mxu0 0.0
      %2315 = vmatprep.subr.mxu0 0.0
      %2316 = vmatpush1.msra.mxu0 0.0
      %2317 = vmatprep.subr.mxu0 0.0
      %2318 = vmatpush1.msra.mxu0 0.0
      %2319 = vmatprep.subr.mxu0 0.0
      %2320 = vmatpush1.msra.mxu0 0.0
      %2321 = vmatprep.subr.mxu0 0.0
      %2322 = vmatpush1.msra.mxu0 0.0
      %2323 = vmatprep.subr.mxu0 0.0
      %2324 = vmatpush1.msra.mxu0 0.0
      %2325 = vmatprep.subr.mxu0 0.0
      %2326 = vmatpush1.msra.mxu0 0.0
      %2327 = vmatprep.subr.mxu0 0.0
      %2328 = vmatpush1.msra.mxu0 0.0
      %2329 = vmatprep.subr.mxu0 0.0
      %2330 = vmatpush1.msra.mxu0 0.0
      %2331 = vmatprep.subr.mxu0 0.0
      %2332 = vmatpush1.msra.mxu0 0.0
      %2333 = vmatprep.subr.mxu0 0.0
      %2334 = vmatpush1.msra.mxu0 0.0
      %2335 = vmatprep.subr.mxu0 0.0
      %2336 = vmatpush1.msra.mxu0 0.0
      %2337 = vmatprep.subr.mxu0 0.0
      %2338 = vmatpush1.msra.mxu0 0.0
      %2339 = vmatprep.subr.mxu0 0.0
      %2340 = vmatpush1.msra.mxu0 0.0
      %2341 = vmatprep.subr.mxu0 0.0
      %2342 = vmatpush1.msra.mxu0 0.0
      %2343 = vmatprep.subr.mxu0 0.0
      %2344 = vmatpush1.msra.mxu0 0.0
      %2345 = vmatprep.subr.mxu0 0.0
      %2346 = vmatpush1.msra.mxu0 0.0
      %2347 = vmatprep.subr.mxu0 0.0
      %2348 = vmatpush1.msra.mxu0 0.0
      %2349 = vmatprep.subr.mxu0 0.0
      %2350 = vmatpush1.msra.mxu0 0.0
      %2351 = vmatprep.subr.mxu0 0.0
      %2352 = vmatpush1.msra.mxu0 0.0
      %2353 = vmatprep.subr.mxu0 0.0
      %2354 = vmatpush1.msra.mxu0 0.0
      %2355 = vmatprep.subr.mxu0 0.0
      %2356 = vmatpush1.msra.mxu0 0.0
      %2357 = vmatprep.subr.mxu0 0.0
      %2358 = vmatpush1.msra.mxu0 0.0
      %2359 = vmatprep.subr.mxu0 0.0
      %2360 = vmatpush1.msra.mxu0 0.0
      %2361 = vmatprep.subr.mxu0 0.0
      %2362 = vmatpush1.msra.mxu0 0.0
      %2363 = vmatprep.subr.mxu0 0.0
      %2364 = vmatpush1.msra.mxu0 0.0
      %2365 = vmatprep.subr.mxu0 0.0
      %2366 = vmatpush1.msra.mxu0 0.0
      %2367 = vmatprep.mubr.f32.mxu0 0.0
      %2368 = vmatmul.mubr.f32.gmra.mrb[0].mxu0 %v2301
      %v2369 = vpop.f32.mrb[0].mxu0
      %v2370 = vadd.f32 0.0, %v2369
      %v2371 = vpop.f32.mrb[0].mxu0
      %2372 = vdwg.mxu0
      %v2374 = vsel %vm572, %v2132, 0
      %2376 = vmatprep.subr.mxu0 0.0
      %2377 = vmatpush1.msra.mxu0 %v1967
      %2378 = vmatprep.subr.mxu0 0.0
      %2379 = vmatpush1.msra.mxu0 %v1968
      %2380 = vmatprep.subr.mxu0 0.0
      %2381 = vmatpush1.msra.mxu0 0.0
      %2382 = vmatprep.subr.mxu0 0.0
      %2383 = vmatpush1.msra.mxu0 0.0
      %2384 = vmatprep.subr.mxu0 0.0
      %2385 = vmatpush1.msra.mxu0 0.0
      %2386 = vmatprep.subr.mxu0 0.0
      %2387 = vmatpush1.msra.mxu0 0.0
      %2388 = vmatprep.subr.mxu0 0.0
      %2389 = vmatpush1.msra.mxu0 0.0
      %2390 = vmatprep.subr.mxu0 0.0
      %2391 = vmatpush1.msra.mxu0 0.0
      %2392 = vmatprep.subr.mxu0 0.0
      %2393 = vmatpush1.msra.mxu0 0.0
      %2394 = vmatprep.subr.mxu0 0.0
      %2395 = vmatpush1.msra.mxu0 0.0
      %2396 = vmatprep.subr.mxu0 0.0
      %2397 = vmatpush1.msra.mxu0 0.0
      %2398 = vmatprep.subr.mxu0 0.0
      %2399 = vmatpush1.msra.mxu0 0.0
      %2400 = vmatprep.subr.mxu0 0.0
      %2401 = vmatpush1.msra.mxu0 0.0
      %2402 = vmatprep.subr.mxu0 0.0
      %2403 = vmatpush1.msra.mxu0 0.0
      %2404 = vmatprep.subr.mxu0 0.0
      %2405 = vmatpush1.msra.mxu0 0.0
      %2406 = vmatprep.subr.mxu0 0.0
      %2407 = vmatpush1.msra.mxu0 0.0
      %2408 = vmatprep.subr.mxu0 0.0
      %2409 = vmatpush1.msra.mxu0 0.0
      %2410 = vmatprep.subr.mxu0 0.0
      %2411 = vmatpush1.msra.mxu0 0.0
      %2412 = vmatprep.subr.mxu0 0.0
      %2413 = vmatpush1.msra.mxu0 0.0
      %2414 = vmatprep.subr.mxu0 0.0
      %2415 = vmatpush1.msra.mxu0 0.0
      %2416 = vmatprep.subr.mxu0 0.0
      %2417 = vmatpush1.msra.mxu0 0.0
      %2418 = vmatprep.subr.mxu0 0.0
      %2419 = vmatpush1.msra.mxu0 0.0
      %2420 = vmatprep.subr.mxu0 0.0
      %2421 = vmatpush1.msra.mxu0 0.0
      %2422 = vmatprep.subr.mxu0 0.0
      %2423 = vmatpush1.msra.mxu0 0.0
      %2424 = vmatprep.subr.mxu0 0.0
      %2425 = vmatpush1.msra.mxu0 0.0
      %2426 = vmatprep.subr.mxu0 0.0
      %2427 = vmatpush1.msra.mxu0 0.0
      %2428 = vmatprep.subr.mxu0 0.0
      %2429 = vmatpush1.msra.mxu0 0.0
      %2430 = vmatprep.subr.mxu0 0.0
      %2431 = vmatpush1.msra.mxu0 0.0
      %2432 = vmatprep.subr.mxu0 0.0
      %2433 = vmatpush1.msra.mxu0 0.0
      %2434 = vmatprep.subr.mxu0 0.0
      %2435 = vmatpush1.msra.mxu0 0.0
      %2436 = vmatprep.subr.mxu0 0.0
      %2437 = vmatpush1.msra.mxu0 0.0
      %2438 = vmatprep.subr.mxu0 0.0
      %2439 = vmatpush1.msra.mxu0 0.0
      %2440 = vmatprep.mubr.f32.mxu0 0.0
      %2441 = vmatmul.mubr.f32.gmra.mrb[0].mxu0 %v2374
      %v2442 = vpop.f32.mrb[0].mxu0
      %v2443 = vadd.f32 %v2370, %v2442
      %v2444 = vpop.f32.mrb[0].mxu0
      %2445 = vdwg.mxu0
      %v2446 = vadd.f32 %v1872, %v2443
      %v2447 = vmul.f32 %v2446, %v2446
      %v2448 = vsel %vm474, %v2447, 0.0
      %2449 = vadd.xlane.f32.xlu0 %v2448
      %v2450 = vpop.xlane.xlu0 %2449
      %v2451 = vmul.f32 %v2450, %v478
      %v2452 = vadd.f32 %v2451, 1e-06
      %v2453 = vrsqrt.pop %v2452
      %v2454 = vmul.f32 %v2446, %v2453
      %v2455 = vlaneseq
      %v2456 = vshrl.u32 %v2455, 7
      %v2457 = vsub.s32 1, %v2456
      %v2458 = vrot.slane %v1874, %v2457
      %v2459 = vmul.f32 %v2454, %v2458
      %s2460 = scalar_lea.vmem %s6, 32
      %v2461 = vld [vmem:[%s2460] sm:$0xff]
      %v2462 = vld [vmem:[%s2460 + $0x8] sm:$0xff]
      %v2463 = vld [vmem:[%s2460 + $0x10] sm:$0xff]
      %v2464 = vld [vmem:[%s2460 + $0x18] sm:$0xff]
      %v2466 = vsel %vm474, %v2459, 0
      %2468 = vmatprep.subr.mxu0 0.0
      %2469 = vmatpush1.msra.mxu0 %v2461
      %2470 = vmatprep.subr.mxu0 0.0
      %2471 = vmatpush1.msra.mxu0 %v2462
      %2472 = vmatprep.subr.mxu0 0.0
      %2473 = vmatpush1.msra.mxu0 %v2463
      %2474 = vmatprep.subr.mxu0 0.0
      %2475 = vmatpush1.msra.mxu0 %v2464
      %2476 = vmatprep.subr.mxu0 0.0
      %2477 = vmatpush1.msra.mxu0 0.0
      %2478 = vmatprep.subr.mxu0 0.0
      %2479 = vmatpush1.msra.mxu0 0.0
      %2480 = vmatprep.subr.mxu0 0.0
      %2481 = vmatpush1.msra.mxu0 0.0
      %2482 = vmatprep.subr.mxu0 0.0
      %2483 = vmatpush1.msra.mxu0 0.0
      %2484 = vmatprep.subr.mxu0 0.0
      %2485 = vmatpush1.msra.mxu0 0.0
      %2486 = vmatprep.subr.mxu0 0.0
      %2487 = vmatpush1.msra.mxu0 0.0
      %2488 = vmatprep.subr.mxu0 0.0
      %2489 = vmatpush1.msra.mxu0 0.0
      %2490 = vmatprep.subr.mxu0 0.0
      %2491 = vmatpush1.msra.mxu0 0.0
      %2492 = vmatprep.subr.mxu0 0.0
      %2493 = vmatpush1.msra.mxu0 0.0
      %2494 = vmatprep.subr.mxu0 0.0
      %2495 = vmatpush1.msra.mxu0 0.0
      %2496 = vmatprep.subr.mxu0 0.0
      %2497 = vmatpush1.msra.mxu0 0.0
      %2498 = vmatprep.subr.mxu0 0.0
      %2499 = vmatpush1.msra.mxu0 0.0
      %2500 = vmatprep.subr.mxu0 0.0
      %2501 = vmatpush1.msra.mxu0 0.0
      %2502 = vmatprep.subr.mxu0 0.0
      %2503 = vmatpush1.msra.mxu0 0.0
      %2504 = vmatprep.subr.mxu0 0.0
      %2505 = vmatpush1.msra.mxu0 0.0
      %2506 = vmatprep.subr.mxu0 0.0
      %2507 = vmatpush1.msra.mxu0 0.0
      %2508 = vmatprep.subr.mxu0 0.0
      %2509 = vmatpush1.msra.mxu0 0.0
      %2510 = vmatprep.subr.mxu0 0.0
      %2511 = vmatpush1.msra.mxu0 0.0
      %2512 = vmatprep.subr.mxu0 0.0
      %2513 = vmatpush1.msra.mxu0 0.0
      %2514 = vmatprep.subr.mxu0 0.0
      %2515 = vmatpush1.msra.mxu0 0.0
      %2516 = vmatprep.subr.mxu0 0.0
      %2517 = vmatpush1.msra.mxu0 0.0
      %2518 = vmatprep.subr.mxu0 0.0
      %2519 = vmatpush1.msra.mxu0 0.0
      %2520 = vmatprep.subr.mxu0 0.0
      %2521 = vmatpush1.msra.mxu0 0.0
      %2522 = vmatprep.subr.mxu0 0.0
      %2523 = vmatpush1.msra.mxu0 0.0
      %2524 = vmatprep.subr.mxu0 0.0
      %2525 = vmatpush1.msra.mxu0 0.0
      %2526 = vmatprep.subr.mxu0 0.0
      %2527 = vmatpush1.msra.mxu0 0.0
      %2528 = vmatprep.subr.mxu0 0.0
      %2529 = vmatpush1.msra.mxu0 0.0
      %2530 = vmatprep.subr.mxu0 0.0
      %2531 = vmatpush1.msra.mxu0 0.0
      %2532 = vmatprep.mubr.f32.mxu0 0.0
      %2533 = vmatmul.mubr.f32.gmra.mrb[0].mxu0 %v2466
      %v2534 = vpop.f32.mrb[0].mxu0
      %v2535 = vadd.f32 0.0, %v2534
      %v2536 = vpop.f32.mrb[0].mxu0
      %2537 = vdwg.mxu0
      %s2538 = scalar_lea.vmem %s7, 32
      %v2539 = vld [vmem:[%s2538] sm:$0xff]
      %v2540 = vld [vmem:[%s2538 + $0x8] sm:$0xff]
      %v2541 = vld [vmem:[%s2538 + $0x10] sm:$0xff]
      %v2542 = vld [vmem:[%s2538 + $0x18] sm:$0xff]
      %2543 = vmatprep.subr.mxu0 0.0
      %2544 = vmatpush1.msra.mxu0 %v2539
      %2545 = vmatprep.subr.mxu0 0.0
      %2546 = vmatpush1.msra.mxu0 %v2540
      %2547 = vmatprep.subr.mxu0 0.0
      %2548 = vmatpush1.msra.mxu0 %v2541
      %2549 = vmatprep.subr.mxu0 0.0
      %2550 = vmatpush1.msra.mxu0 %v2542
      %2551 = vmatprep.subr.mxu0 0.0
      %2552 = vmatpush1.msra.mxu0 0.0
      %2553 = vmatprep.subr.mxu0 0.0
      %2554 = vmatpush1.msra.mxu0 0.0
      %2555 = vmatprep.subr.mxu0 0.0
      %2556 = vmatpush1.msra.mxu0 0.0
      %2557 = vmatprep.subr.mxu0 0.0
      %2558 = vmatpush1.msra.mxu0 0.0
      %2559 = vmatprep.subr.mxu0 0.0
      %2560 = vmatpush1.msra.mxu0 0.0
      %2561 = vmatprep.subr.mxu0 0.0
      %2562 = vmatpush1.msra.mxu0 0.0
      %2563 = vmatprep.subr.mxu0 0.0
      %2564 = vmatpush1.msra.mxu0 0.0
      %2565 = vmatprep.subr.mxu0 0.0
      %2566 = vmatpush1.msra.mxu0 0.0
      %2567 = vmatprep.subr.mxu0 0.0
      %2568 = vmatpush1.msra.mxu0 0.0
      %2569 = vmatprep.subr.mxu0 0.0
      %2570 = vmatpush1.msra.mxu0 0.0
      %2571 = vmatprep.subr.mxu0 0.0
      %2572 = vmatpush1.msra.mxu0 0.0
      %2573 = vmatprep.subr.mxu0 0.0
      %2574 = vmatpush1.msra.mxu0 0.0
      %2575 = vmatprep.subr.mxu0 0.0
      %2576 = vmatpush1.msra.mxu0 0.0
      %2577 = vmatprep.subr.mxu0 0.0
      %2578 = vmatpush1.msra.mxu0 0.0
      %2579 = vmatprep.subr.mxu0 0.0
      %2580 = vmatpush1.msra.mxu0 0.0
      %2581 = vmatprep.subr.mxu0 0.0
      %2582 = vmatpush1.msra.mxu0 0.0
      %2583 = vmatprep.subr.mxu0 0.0
      %2584 = vmatpush1.msra.mxu0 0.0
      %2585 = vmatprep.subr.mxu0 0.0
      %2586 = vmatpush1.msra.mxu0 0.0
      %2587 = vmatprep.subr.mxu0 0.0
      %2588 = vmatpush1.msra.mxu0 0.0
      %2589 = vmatprep.subr.mxu0 0.0
      %2590 = vmatpush1.msra.mxu0 0.0
      %2591 = vmatprep.subr.mxu0 0.0
      %2592 = vmatpush1.msra.mxu0 0.0
      %2593 = vmatprep.subr.mxu0 0.0
      %2594 = vmatpush1.msra.mxu0 0.0
      %2595 = vmatprep.subr.mxu0 0.0
      %2596 = vmatpush1.msra.mxu0 0.0
      %2597 = vmatprep.subr.mxu0 0.0
      %2598 = vmatpush1.msra.mxu0 0.0
      %2599 = vmatprep.subr.mxu0 0.0
      %2600 = vmatpush1.msra.mxu0 0.0
      %2601 = vmatprep.subr.mxu0 0.0
      %2602 = vmatpush1.msra.mxu0 0.0
      %2603 = vmatprep.subr.mxu0 0.0
      %2604 = vmatpush1.msra.mxu0 0.0
      %2605 = vmatprep.subr.mxu0 0.0
      %2606 = vmatpush1.msra.mxu0 0.0
      %2607 = vmatprep.mubr.f32.mxu0 0.0
      %2608 = vmatmul.mubr.f32.gmra.mrb[0].mxu0 %v1142
      %v2609 = vpop.f32.mrb[0].mxu0
      %v2610 = vadd.f32 0.0, %v2609
      %v2611 = vpop.f32.mrb[0].mxu0
      %2612 = vdwg.mxu0
      %s2613 = scalar_lea.vmem %s8, 32
      %v2614 = vld [vmem:[%s2613] sm:$0xff]
      %v2615 = vld [vmem:[%s2613 + $0x8] sm:$0xff]
      %v2616 = vld [vmem:[%s2613 + $0x10] sm:$0xff]
      %v2617 = vld [vmem:[%s2613 + $0x18] sm:$0xff]
      %v2619 = vsel %vm572, %v2535, 0
      %v2622 = vsel %vm572, %v2610, 0
      %2624 = vmatprep.subr.mxu0 0.0
      %2625 = vmatpush1.xpose.msra.mxu0 %v2622
      %2626 = vmatprep.subr.mxu0 0.0
      %2627 = vmatpush1.xpose.msra.mxu0 0.0
      %2628 = vmatprep.subr.mxu0 0.0
      %2629 = vmatpush1.xpose.msra.mxu0 0.0
      %2630 = vmatprep.subr.mxu0 0.0
      %2631 = vmatpush1.xpose.msra.mxu0 0.0
      %2632 = vmatprep.subr.mxu0 0.0
      %2633 = vmatpush1.xpose.msra.mxu0 0.0
      %2634 = vmatprep.subr.mxu0 0.0
      %2635 = vmatpush1.xpose.msra.mxu0 0.0
      %2636 = vmatprep.subr.mxu0 0.0
      %2637 = vmatpush1.xpose.msra.mxu0 0.0
      %2638 = vmatprep.subr.mxu0 0.0
      %2639 = vmatpush1.xpose.msra.mxu0 0.0
      %2640 = vmatprep.subr.mxu0 0.0
      %2641 = vmatpush1.xpose.msra.mxu0 0.0
      %2642 = vmatprep.subr.mxu0 0.0
      %2643 = vmatpush1.xpose.msra.mxu0 0.0
      %2644 = vmatprep.subr.mxu0 0.0
      %2645 = vmatpush1.xpose.msra.mxu0 0.0
      %2646 = vmatprep.subr.mxu0 0.0
      %2647 = vmatpush1.xpose.msra.mxu0 0.0
      %2648 = vmatprep.subr.mxu0 0.0
      %2649 = vmatpush1.xpose.msra.mxu0 0.0
      %2650 = vmatprep.subr.mxu0 0.0
      %2651 = vmatpush1.xpose.msra.mxu0 0.0
      %2652 = vmatprep.subr.mxu0 0.0
      %2653 = vmatpush1.xpose.msra.mxu0 0.0
      %2654 = vmatprep.subr.mxu0 0.0
      %2655 = vmatpush1.xpose.msra.mxu0 0.0
      %2656 = vmatprep.subr.mxu0 0.0
      %2657 = vmatpush1.xpose.msra.mxu0 0.0
      %2658 = vmatprep.subr.mxu0 0.0
      %2659 = vmatpush1.xpose.msra.mxu0 0.0
      %2660 = vmatprep.subr.mxu0 0.0
      %2661 = vmatpush1.xpose.msra.mxu0 0.0
      %2662 = vmatprep.subr.mxu0 0.0
      %2663 = vmatpush1.xpose.msra.mxu0 0.0
      %2664 = vmatprep.subr.mxu0 0.0
      %2665 = vmatpush1.xpose.msra.mxu0 0.0
      %2666 = vmatprep.subr.mxu0 0.0
      %2667 = vmatpush1.xpose.msra.mxu0 0.0
      %2668 = vmatprep.subr.mxu0 0.0
      %2669 = vmatpush1.xpose.msra.mxu0 0.0
      %2670 = vmatprep.subr.mxu0 0.0
      %2671 = vmatpush1.xpose.msra.mxu0 0.0
      %2672 = vmatprep.subr.mxu0 0.0
      %2673 = vmatpush1.xpose.msra.mxu0 0.0
      %2674 = vmatprep.subr.mxu0 0.0
      %2675 = vmatpush1.xpose.msra.mxu0 0.0
      %2676 = vmatprep.subr.mxu0 0.0
      %2677 = vmatpush1.xpose.msra.mxu0 0.0
      %2678 = vmatprep.subr.mxu0 0.0
      %2679 = vmatpush1.xpose.msra.mxu0 0.0
      %2680 = vmatprep.subr.mxu0 0.0
      %2681 = vmatpush1.xpose.msra.mxu0 0.0
      %2682 = vmatprep.subr.mxu0 0.0
      %2683 = vmatpush1.xpose.msra.mxu0 0.0
      %2684 = vmatprep.subr.mxu0 0.0
      %2685 = vmatpush1.xpose.msra.mxu0 0.0
      %2686 = vmatprep.subr.mxu0 0.0
      %2687 = vmatpush1.xpose.msra.mxu0 0.0
      %2688 = vmatprep.mubr.f32.mxu0 0.0
      %2689 = vmatmul.mubr.f32.gmra.mrb[0].mxu0 %v2619
      %v2690 = vpop.f32.mrb[0].mxu0
      %v2691 = vadd.f32 %v1222, %v2690
      %v2692 = vpop.f32.mrb[0].mxu0
      %2693 = vdwg.mxu0
      %v2694 = vsel %vm647, %v2691, -inf
      %2695 = vmax.xlane.f32.xlu0 %v2694
      %v2696 = vpop.xlane.xlu0 %2695
      %v2697 = vsub.f32 %v2691, %v2696
      %v2698 = vmul.f32 %v2697, 1.442695
      %v2699 = vpow.pop %v2698
      %v2700 = vsel %vm647, %v2699, 0.0
      %2701 = vadd.xlane.f32.xlu0 %v2700
      %v2702 = vpop.xlane.xlu0 %2701
      %v2703 = vrcp.pop %v2702
      %v2704 = vmul.f32 %v2699, %v2703
      %2705 = vrot.lane.b32.xlu0 %v2610, 96
      %v2706 = vpop.permute.xlu0 %2705
      %v2709 = vsel %vm647, %v2704, 0
      %2711 = vmatprep.subr.mxu0 0.0
      %2712 = vmatpush1.msra.mxu0 %v2706
      %2713 = vmatprep.subr.mxu0 0.0
      %2714 = vmatpush1.msra.mxu0 0.0
      %2715 = vmatprep.subr.mxu0 0.0
      %2716 = vmatpush1.msra.mxu0 0.0
      %2717 = vmatprep.subr.mxu0 0.0
      %2718 = vmatpush1.msra.mxu0 0.0
      %2719 = vmatprep.subr.mxu0 0.0
      %2720 = vmatpush1.msra.mxu0 0.0
      %2721 = vmatprep.subr.mxu0 0.0
      %2722 = vmatpush1.msra.mxu0 0.0
      %2723 = vmatprep.subr.mxu0 0.0
      %2724 = vmatpush1.msra.mxu0 0.0
      %2725 = vmatprep.subr.mxu0 0.0
      %2726 = vmatpush1.msra.mxu0 0.0
      %2727 = vmatprep.subr.mxu0 0.0
      %2728 = vmatpush1.msra.mxu0 0.0
      %2729 = vmatprep.subr.mxu0 0.0
      %2730 = vmatpush1.msra.mxu0 0.0
      %2731 = vmatprep.subr.mxu0 0.0
      %2732 = vmatpush1.msra.mxu0 0.0
      %2733 = vmatprep.subr.mxu0 0.0
      %2734 = vmatpush1.msra.mxu0 0.0
      %2735 = vmatprep.subr.mxu0 0.0
      %2736 = vmatpush1.msra.mxu0 0.0
      %2737 = vmatprep.subr.mxu0 0.0
      %2738 = vmatpush1.msra.mxu0 0.0
      %2739 = vmatprep.subr.mxu0 0.0
      %2740 = vmatpush1.msra.mxu0 0.0
      %2741 = vmatprep.subr.mxu0 0.0
      %2742 = vmatpush1.msra.mxu0 0.0
      %2743 = vmatprep.subr.mxu0 0.0
      %2744 = vmatpush1.msra.mxu0 0.0
      %2745 = vmatprep.subr.mxu0 0.0
      %2746 = vmatpush1.msra.mxu0 0.0
      %2747 = vmatprep.subr.mxu0 0.0
      %2748 = vmatpush1.msra.mxu0 0.0
      %2749 = vmatprep.subr.mxu0 0.0
      %2750 = vmatpush1.msra.mxu0 0.0
      %2751 = vmatprep.subr.mxu0 0.0
      %2752 = vmatpush1.msra.mxu0 0.0
      %2753 = vmatprep.subr.mxu0 0.0
      %2754 = vmatpush1.msra.mxu0 0.0
      %2755 = vmatprep.subr.mxu0 0.0
      %2756 = vmatpush1.msra.mxu0 0.0
      %2757 = vmatprep.subr.mxu0 0.0
      %2758 = vmatpush1.msra.mxu0 0.0
      %2759 = vmatprep.subr.mxu0 0.0
      %2760 = vmatpush1.msra.mxu0 0.0
      %2761 = vmatprep.subr.mxu0 0.0
      %2762 = vmatpush1.msra.mxu0 0.0
      %2763 = vmatprep.subr.mxu0 0.0
      %2764 = vmatpush1.msra.mxu0 0.0
      %2765 = vmatprep.subr.mxu0 0.0
      %2766 = vmatpush1.msra.mxu0 0.0
      %2767 = vmatprep.subr.mxu0 0.0
      %2768 = vmatpush1.msra.mxu0 0.0
      %2769 = vmatprep.subr.mxu0 0.0
      %2770 = vmatpush1.msra.mxu0 0.0
      %2771 = vmatprep.subr.mxu0 0.0
      %2772 = vmatpush1.msra.mxu0 0.0
      %2773 = vmatprep.subr.mxu0 0.0
      %2774 = vmatpush1.msra.mxu0 0.0
      %2775 = vmatprep.mubr.f32.mxu0 0.0
      %2776 = vmatmul.mubr.f32.gmra.mrb[0].mxu0 %v2709
      %v2777 = vpop.f32.mrb[0].mxu0
      %v2778 = vadd.f32 0.0, %v2777
      %v2779 = vpop.f32.mrb[0].mxu0
      %2780 = vdwg.mxu0
      %2781 = vrot.lane.b32.xlu0 %v2535, 112
      %v2782 = vpop.permute.xlu0 %2781
      %2783 = vrot.lane.b32.xlu0 %v2610, 112
      %v2784 = vpop.permute.xlu0 %2783
      %v2785 = vsel %vm572, %v2782, 0
      %v2787 = vsel %vm572, %v2784, 0
      %2789 = vmatprep.subr.mxu0 0.0
      %2790 = vmatpush1.xpose.msra.mxu0 %v2787
      %2791 = vmatprep.subr.mxu0 0.0
      %2792 = vmatpush1.xpose.msra.mxu0 0.0
      %2793 = vmatprep.subr.mxu0 0.0
      %2794 = vmatpush1.xpose.msra.mxu0 0.0
      %2795 = vmatprep.subr.mxu0 0.0
      %2796 = vmatpush1.xpose.msra.mxu0 0.0
      %2797 = vmatprep.subr.mxu0 0.0
      %2798 = vmatpush1.xpose.msra.mxu0 0.0
      %2799 = vmatprep.subr.mxu0 0.0
      %2800 = vmatpush1.xpose.msra.mxu0 0.0
      %2801 = vmatprep.subr.mxu0 0.0
      %2802 = vmatpush1.xpose.msra.mxu0 0.0
      %2803 = vmatprep.subr.mxu0 0.0
      %2804 = vmatpush1.xpose.msra.mxu0 0.0
      %2805 = vmatprep.subr.mxu0 0.0
      %2806 = vmatpush1.xpose.msra.mxu0 0.0
      %2807 = vmatprep.subr.mxu0 0.0
      %2808 = vmatpush1.xpose.msra.mxu0 0.0
      %2809 = vmatprep.subr.mxu0 0.0
      %2810 = vmatpush1.xpose.msra.mxu0 0.0
      %2811 = vmatprep.subr.mxu0 0.0
      %2812 = vmatpush1.xpose.msra.mxu0 0.0
      %2813 = vmatprep.subr.mxu0 0.0
      %2814 = vmatpush1.xpose.msra.mxu0 0.0
      %2815 = vmatprep.subr.mxu0 0.0
      %2816 = vmatpush1.xpose.msra.mxu0 0.0
      %2817 = vmatprep.subr.mxu0 0.0
      %2818 = vmatpush1.xpose.msra.mxu0 0.0
      %2819 = vmatprep.subr.mxu0 0.0
      %2820 = vmatpush1.xpose.msra.mxu0 0.0
      %2821 = vmatprep.subr.mxu0 0.0
      %2822 = vmatpush1.xpose.msra.mxu0 0.0
      %2823 = vmatprep.subr.mxu0 0.0
      %2824 = vmatpush1.xpose.msra.mxu0 0.0
      %2825 = vmatprep.subr.mxu0 0.0
      %2826 = vmatpush1.xpose.msra.mxu0 0.0
      %2827 = vmatprep.subr.mxu0 0.0
      %2828 = vmatpush1.xpose.msra.mxu0 0.0
      %2829 = vmatprep.subr.mxu0 0.0
      %2830 = vmatpush1.xpose.msra.mxu0 0.0
      %2831 = vmatprep.subr.mxu0 0.0
      %2832 = vmatpush1.xpose.msra.mxu0 0.0
      %2833 = vmatprep.subr.mxu0 0.0
      %2834 = vmatpush1.xpose.msra.mxu0 0.0
      %2835 = vmatprep.subr.mxu0 0.0
      %2836 = vmatpush1.xpose.msra.mxu0 0.0
      %2837 = vmatprep.subr.mxu0 0.0
      %2838 = vmatpush1.xpose.msra.mxu0 0.0
      %2839 = vmatprep.subr.mxu0 0.0
      %2840 = vmatpush1.xpose.msra.mxu0 0.0
      %2841 = vmatprep.subr.mxu0 0.0
      %2842 = vmatpush1.xpose.msra.mxu0 0.0
      %2843 = vmatprep.subr.mxu0 0.0
      %2844 = vmatpush1.xpose.msra.mxu0 0.0
      %2845 = vmatprep.subr.mxu0 0.0
      %2846 = vmatpush1.xpose.msra.mxu0 0.0
      %2847 = vmatprep.subr.mxu0 0.0
      %2848 = vmatpush1.xpose.msra.mxu0 0.0
      %2849 = vmatprep.subr.mxu0 0.0
      %2850 = vmatpush1.xpose.msra.mxu0 0.0
      %2851 = vmatprep.subr.mxu0 0.0
      %2852 = vmatpush1.xpose.msra.mxu0 0.0
      %2853 = vmatprep.mubr.f32.mxu0 0.0
      %2854 = vmatmul.mubr.f32.gmra.mrb[0].mxu0 %v2785
      %v2855 = vpop.f32.mrb[0].mxu0
      %v2856 = vadd.f32 %v1222, %v2855
      %v2857 = vpop.f32.mrb[0].mxu0
      %2858 = vdwg.mxu0
      %v2859 = vsel %vm647, %v2856, -inf
      %2860 = vmax.xlane.f32.xlu0 %v2859
      %v2861 = vpop.xlane.xlu0 %2860
      %v2862 = vsub.f32 %v2856, %v2861
      %v2863 = vmul.f32 %v2862, 1.442695
      %v2864 = vpow.pop %v2863
      %v2865 = vsel %vm647, %v2864, 0.0
      %2866 = vadd.xlane.f32.xlu0 %v2865
      %v2867 = vpop.xlane.xlu0 %2866
      %v2868 = vrcp.pop %v2867
      %v2869 = vmul.f32 %v2864, %v2868
      %2870 = vrot.lane.b32.xlu0 %v2610, 80
      %v2871 = vpop.permute.xlu0 %2870
      %v2874 = vsel %vm647, %v2869, 0
      %2876 = vmatprep.subr.mxu0 0.0
      %2877 = vmatpush1.msra.mxu0 %v2871
      %2878 = vmatprep.subr.mxu0 0.0
      %2879 = vmatpush1.msra.mxu0 0.0
      %2880 = vmatprep.subr.mxu0 0.0
      %2881 = vmatpush1.msra.mxu0 0.0
      %2882 = vmatprep.subr.mxu0 0.0
      %2883 = vmatpush1.msra.mxu0 0.0
      %2884 = vmatprep.subr.mxu0 0.0
      %2885 = vmatpush1.msra.mxu0 0.0
      %2886 = vmatprep.subr.mxu0 0.0
      %2887 = vmatpush1.msra.mxu0 0.0
      %2888 = vmatprep.subr.mxu0 0.0
      %2889 = vmatpush1.msra.mxu0 0.0
      %2890 = vmatprep.subr.mxu0 0.0
      %2891 = vmatpush1.msra.mxu0 0.0
      %2892 = vmatprep.subr.mxu0 0.0
      %2893 = vmatpush1.msra.mxu0 0.0
      %2894 = vmatprep.subr.mxu0 0.0
      %2895 = vmatpush1.msra.mxu0 0.0
      %2896 = vmatprep.subr.mxu0 0.0
      %2897 = vmatpush1.msra.mxu0 0.0
      %2898 = vmatprep.subr.mxu0 0.0
      %2899 = vmatpush1.msra.mxu0 0.0
      %2900 = vmatprep.subr.mxu0 0.0
      %2901 = vmatpush1.msra.mxu0 0.0
      %2902 = vmatprep.subr.mxu0 0.0
      %2903 = vmatpush1.msra.mxu0 0.0
      %2904 = vmatprep.subr.mxu0 0.0
      %2905 = vmatpush1.msra.mxu0 0.0
      %2906 = vmatprep.subr.mxu0 0.0
      %2907 = vmatpush1.msra.mxu0 0.0
      %2908 = vmatprep.subr.mxu0 0.0
      %2909 = vmatpush1.msra.mxu0 0.0
      %2910 = vmatprep.subr.mxu0 0.0
      %2911 = vmatpush1.msra.mxu0 0.0
      %2912 = vmatprep.subr.mxu0 0.0
      %2913 = vmatpush1.msra.mxu0 0.0
      %2914 = vmatprep.subr.mxu0 0.0
      %2915 = vmatpush1.msra.mxu0 0.0
      %2916 = vmatprep.subr.mxu0 0.0
      %2917 = vmatpush1.msra.mxu0 0.0
      %2918 = vmatprep.subr.mxu0 0.0
      %2919 = vmatpush1.msra.mxu0 0.0
      %2920 = vmatprep.subr.mxu0 0.0
      %2921 = vmatpush1.msra.mxu0 0.0
      %2922 = vmatprep.subr.mxu0 0.0
      %2923 = vmatpush1.msra.mxu0 0.0
      %2924 = vmatprep.subr.mxu0 0.0
      %2925 = vmatpush1.msra.mxu0 0.0
      %2926 = vmatprep.subr.mxu0 0.0
      %2927 = vmatpush1.msra.mxu0 0.0
      %2928 = vmatprep.subr.mxu0 0.0
      %2929 = vmatpush1.msra.mxu0 0.0
      %2930 = vmatprep.subr.mxu0 0.0
      %2931 = vmatpush1.msra.mxu0 0.0
      %2932 = vmatprep.subr.mxu0 0.0
      %2933 = vmatpush1.msra.mxu0 0.0
      %2934 = vmatprep.subr.mxu0 0.0
      %2935 = vmatpush1.msra.mxu0 0.0
      %2936 = vmatprep.subr.mxu0 0.0
      %2937 = vmatpush1.msra.mxu0 0.0
      %2938 = vmatprep.subr.mxu0 0.0
      %2939 = vmatpush1.msra.mxu0 0.0
      %2940 = vmatprep.mubr.f32.mxu0 0.0
      %2941 = vmatmul.mubr.f32.gmra.mrb[0].mxu0 %v2874
      %v2942 = vpop.f32.mrb[0].mxu0
      %v2943 = vadd.f32 0.0, %v2942
      %v2944 = vpop.f32.mrb[0].mxu0
      %2945 = vdwg.mxu0
      %v2947 = vsel %vm572, %v2943, 0
      %2949 = vmatprep.subr.mxu0 0.0
      %2950 = vmatpush1.msra.mxu0 %v2616
      %2951 = vmatprep.subr.mxu0 0.0
      %2952 = vmatpush1.msra.mxu0 %v2617
      %2953 = vmatprep.subr.mxu0 0.0
      %2954 = vmatpush1.msra.mxu0 0.0
      %2955 = vmatprep.subr.mxu0 0.0
      %2956 = vmatpush1.msra.mxu0 0.0
      %2957 = vmatprep.subr.mxu0 0.0
      %2958 = vmatpush1.msra.mxu0 0.0
      %2959 = vmatprep.subr.mxu0 0.0
      %2960 = vmatpush1.msra.mxu0 0.0
      %2961 = vmatprep.subr.mxu0 0.0
      %2962 = vmatpush1.msra.mxu0 0.0
      %2963 = vmatprep.subr.mxu0 0.0
      %2964 = vmatpush1.msra.mxu0 0.0
      %2965 = vmatprep.subr.mxu0 0.0
      %2966 = vmatpush1.msra.mxu0 0.0
      %2967 = vmatprep.subr.mxu0 0.0
      %2968 = vmatpush1.msra.mxu0 0.0
      %2969 = vmatprep.subr.mxu0 0.0
      %2970 = vmatpush1.msra.mxu0 0.0
      %2971 = vmatprep.subr.mxu0 0.0
      %2972 = vmatpush1.msra.mxu0 0.0
      %2973 = vmatprep.subr.mxu0 0.0
      %2974 = vmatpush1.msra.mxu0 0.0
      %2975 = vmatprep.subr.mxu0 0.0
      %2976 = vmatpush1.msra.mxu0 0.0
      %2977 = vmatprep.subr.mxu0 0.0
      %2978 = vmatpush1.msra.mxu0 0.0
      %2979 = vmatprep.subr.mxu0 0.0
      %2980 = vmatpush1.msra.mxu0 0.0
      %2981 = vmatprep.subr.mxu0 0.0
      %2982 = vmatpush1.msra.mxu0 0.0
      %2983 = vmatprep.subr.mxu0 0.0
      %2984 = vmatpush1.msra.mxu0 0.0
      %2985 = vmatprep.subr.mxu0 0.0
      %2986 = vmatpush1.msra.mxu0 0.0
      %2987 = vmatprep.subr.mxu0 0.0
      %2988 = vmatpush1.msra.mxu0 0.0
      %2989 = vmatprep.subr.mxu0 0.0
      %2990 = vmatpush1.msra.mxu0 0.0
      %2991 = vmatprep.subr.mxu0 0.0
      %2992 = vmatpush1.msra.mxu0 0.0
      %2993 = vmatprep.subr.mxu0 0.0
      %2994 = vmatpush1.msra.mxu0 0.0
      %2995 = vmatprep.subr.mxu0 0.0
      %2996 = vmatpush1.msra.mxu0 0.0
      %2997 = vmatprep.subr.mxu0 0.0
      %2998 = vmatpush1.msra.mxu0 0.0
      %2999 = vmatprep.subr.mxu0 0.0
      %3000 = vmatpush1.msra.mxu0 0.0
      %3001 = vmatprep.subr.mxu0 0.0
      %3002 = vmatpush1.msra.mxu0 0.0
      %3003 = vmatprep.subr.mxu0 0.0
      %3004 = vmatpush1.msra.mxu0 0.0
      %3005 = vmatprep.subr.mxu0 0.0
      %3006 = vmatpush1.msra.mxu0 0.0
      %3007 = vmatprep.subr.mxu0 0.0
      %3008 = vmatpush1.msra.mxu0 0.0
      %3009 = vmatprep.subr.mxu0 0.0
      %3010 = vmatpush1.msra.mxu0 0.0
      %3011 = vmatprep.subr.mxu0 0.0
      %3012 = vmatpush1.msra.mxu0 0.0
      %3013 = vmatprep.mubr.f32.mxu0 0.0
      %3014 = vmatmul.mubr.f32.gmra.mrb[0].mxu0 %v2947
      %v3015 = vpop.f32.mrb[0].mxu0
      %v3016 = vadd.f32 0.0, %v3015
      %v3017 = vpop.f32.mrb[0].mxu0
      %3018 = vdwg.mxu0
      %v3020 = vsel %vm572, %v2778, 0
      %3022 = vmatprep.subr.mxu0 0.0
      %3023 = vmatpush1.msra.mxu0 %v2614
      %3024 = vmatprep.subr.mxu0 0.0
      %3025 = vmatpush1.msra.mxu0 %v2615
      %3026 = vmatprep.subr.mxu0 0.0
      %3027 = vmatpush1.msra.mxu0 0.0
      %3028 = vmatprep.subr.mxu0 0.0
      %3029 = vmatpush1.msra.mxu0 0.0
      %3030 = vmatprep.subr.mxu0 0.0
      %3031 = vmatpush1.msra.mxu0 0.0
      %3032 = vmatprep.subr.mxu0 0.0
      %3033 = vmatpush1.msra.mxu0 0.0
      %3034 = vmatprep.subr.mxu0 0.0
      %3035 = vmatpush1.msra.mxu0 0.0
      %3036 = vmatprep.subr.mxu0 0.0
      %3037 = vmatpush1.msra.mxu0 0.0
      %3038 = vmatprep.subr.mxu0 0.0
      %3039 = vmatpush1.msra.mxu0 0.0
      %3040 = vmatprep.subr.mxu0 0.0
      %3041 = vmatpush1.msra.mxu0 0.0
      %3042 = vmatprep.subr.mxu0 0.0
      %3043 = vmatpush1.msra.mxu0 0.0
      %3044 = vmatprep.subr.mxu0 0.0
      %3045 = vmatpush1.msra.mxu0 0.0
      %3046 = vmatprep.subr.mxu0 0.0
      %3047 = vmatpush1.msra.mxu0 0.0
      %3048 = vmatprep.subr.mxu0 0.0
      %3049 = vmatpush1.msra.mxu0 0.0
      %3050 = vmatprep.subr.mxu0 0.0
      %3051 = vmatpush1.msra.mxu0 0.0
      %3052 = vmatprep.subr.mxu0 0.0
      %3053 = vmatpush1.msra.mxu0 0.0
      %3054 = vmatprep.subr.mxu0 0.0
      %3055 = vmatpush1.msra.mxu0 0.0
      %3056 = vmatprep.subr.mxu0 0.0
      %3057 = vmatpush1.msra.mxu0 0.0
      %3058 = vmatprep.subr.mxu0 0.0
      %3059 = vmatpush1.msra.mxu0 0.0
      %3060 = vmatprep.subr.mxu0 0.0
      %3061 = vmatpush1.msra.mxu0 0.0
      %3062 = vmatprep.subr.mxu0 0.0
      %3063 = vmatpush1.msra.mxu0 0.0
      %3064 = vmatprep.subr.mxu0 0.0
      %3065 = vmatpush1.msra.mxu0 0.0
      %3066 = vmatprep.subr.mxu0 0.0
      %3067 = vmatpush1.msra.mxu0 0.0
      %3068 = vmatprep.subr.mxu0 0.0
      %3069 = vmatpush1.msra.mxu0 0.0
      %3070 = vmatprep.subr.mxu0 0.0
      %3071 = vmatpush1.msra.mxu0 0.0
      %3072 = vmatprep.subr.mxu0 0.0
      %3073 = vmatpush1.msra.mxu0 0.0
      %3074 = vmatprep.subr.mxu0 0.0
      %3075 = vmatpush1.msra.mxu0 0.0
      %3076 = vmatprep.subr.mxu0 0.0
      %3077 = vmatpush1.msra.mxu0 0.0
      %3078 = vmatprep.subr.mxu0 0.0
      %3079 = vmatpush1.msra.mxu0 0.0
      %3080 = vmatprep.subr.mxu0 0.0
      %3081 = vmatpush1.msra.mxu0 0.0
      %3082 = vmatprep.subr.mxu0 0.0
      %3083 = vmatpush1.msra.mxu0 0.0
      %3084 = vmatprep.subr.mxu0 0.0
      %3085 = vmatpush1.msra.mxu0 0.0
      %3086 = vmatprep.mubr.f32.mxu0 0.0
      %3087 = vmatmul.mubr.f32.gmra.mrb[0].mxu0 %v3020
      %v3088 = vpop.f32.mrb[0].mxu0
      %v3089 = vadd.f32 %v3016, %v3088
      %v3090 = vpop.f32.mrb[0].mxu0
      %3091 = vdwg.mxu0
      %v3092 = vadd.f32 %v2446, %v3089
      %v3093 = vmul.f32 %v3092, %v3092
      %v3094 = vsel %vm474, %v3093, 0.0
      %3095 = vadd.xlane.f32.xlu0 %v3094
      %v3096 = vpop.xlane.xlu0 %3095
      %v3097 = vmul.f32 %v3096, %v478
      %v3098 = vadd.f32 %v3097, 1e-06
      %v3099 = vrsqrt.pop %v3098
      %v3100 = vmul.f32 %v3092, %v3099
      %v3101 = vlaneseq
      %v3102 = vshrl.u32 %v3101, 7
      %v3103 = vsub.s32 2, %v3102
      %v3104 = vrot.slane %v1874, %v3103
      %v3105 = vmul.f32 %v3100, %v3104
      %s3106 = scalar_lea.vmem %s9, 32
      %v3107 = vld [vmem:[%s3106] sm:$0xff]
      %v3108 = vld [vmem:[%s3106 + $0x8] sm:$0xff]
      %v3109 = vld [vmem:[%s3106 + $0x10] sm:$0xff]
      %v3110 = vld [vmem:[%s3106 + $0x18] sm:$0xff]
      %v3112 = vsel %vm474, %v3105, 0
      %3114 = vmatprep.subr.mxu0 0.0
      %3115 = vmatpush1.msra.mxu0 %v3107
      %3116 = vmatprep.subr.mxu0 0.0
      %3117 = vmatpush1.msra.mxu0 %v3108
      %3118 = vmatprep.subr.mxu0 0.0
      %3119 = vmatpush1.msra.mxu0 %v3109
      %3120 = vmatprep.subr.mxu0 0.0
      %3121 = vmatpush1.msra.mxu0 %v3110
      %3122 = vmatprep.subr.mxu0 0.0
      %3123 = vmatpush1.msra.mxu0 0.0
      %3124 = vmatprep.subr.mxu0 0.0
      %3125 = vmatpush1.msra.mxu0 0.0
      %3126 = vmatprep.subr.mxu0 0.0
      %3127 = vmatpush1.msra.mxu0 0.0
      %3128 = vmatprep.subr.mxu0 0.0
      %3129 = vmatpush1.msra.mxu0 0.0
      %3130 = vmatprep.subr.mxu0 0.0
      %3131 = vmatpush1.msra.mxu0 0.0
      %3132 = vmatprep.subr.mxu0 0.0
      %3133 = vmatpush1.msra.mxu0 0.0
      %3134 = vmatprep.subr.mxu0 0.0
      %3135 = vmatpush1.msra.mxu0 0.0
      %3136 = vmatprep.subr.mxu0 0.0
      %3137 = vmatpush1.msra.mxu0 0.0
      %3138 = vmatprep.subr.mxu0 0.0
      %3139 = vmatpush1.msra.mxu0 0.0
      %3140 = vmatprep.subr.mxu0 0.0
      %3141 = vmatpush1.msra.mxu0 0.0
      %3142 = vmatprep.subr.mxu0 0.0
      %3143 = vmatpush1.msra.mxu0 0.0
      %3144 = vmatprep.subr.mxu0 0.0
      %3145 = vmatpush1.msra.mxu0 0.0
      %3146 = vmatprep.subr.mxu0 0.0
      %3147 = vmatpush1.msra.mxu0 0.0
      %3148 = vmatprep.subr.mxu0 0.0
      %3149 = vmatpush1.msra.mxu0 0.0
      %3150 = vmatprep.subr.mxu0 0.0
      %3151 = vmatpush1.msra.mxu0 0.0
      %3152 = vmatprep.subr.mxu0 0.0
      %3153 = vmatpush1.msra.mxu0 0.0
      %3154 = vmatprep.subr.mxu0 0.0
      %3155 = vmatpush1.msra.mxu0 0.0
      %3156 = vmatprep.subr.mxu0 0.0
      %3157 = vmatpush1.msra.mxu0 0.0
      %3158 = vmatprep.subr.mxu0 0.0
      %3159 = vmatpush1.msra.mxu0 0.0
      %3160 = vmatprep.subr.mxu0 0.0
      %3161 = vmatpush1.msra.mxu0 0.0
      %3162 = vmatprep.subr.mxu0 0.0
      %3163 = vmatpush1.msra.mxu0 0.0
      %3164 = vmatprep.subr.mxu0 0.0
      %3165 = vmatpush1.msra.mxu0 0.0
      %3166 = vmatprep.subr.mxu0 0.0
      %3167 = vmatpush1.msra.mxu0 0.0
      %3168 = vmatprep.subr.mxu0 0.0
      %3169 = vmatpush1.msra.mxu0 0.0
      %3170 = vmatprep.subr.mxu0 0.0
      %3171 = vmatpush1.msra.mxu0 0.0
      %3172 = vmatprep.subr.mxu0 0.0
      %3173 = vmatpush1.msra.mxu0 0.0
      %3174 = vmatprep.subr.mxu0 0.0
      %3175 = vmatpush1.msra.mxu0 0.0
      %3176 = vmatprep.subr.mxu0 0.0
      %3177 = vmatpush1.msra.mxu0 0.0
      %3178 = vmatprep.mubr.f32.mxu0 0.0
      %3179 = vmatmul.mubr.f32.gmra.mrb[0].mxu0 %v3112
      %v3180 = vpop.f32.mrb[0].mxu0
      %v3181 = vadd.f32 0.0, %v3180
      %v3182 = vpop.f32.mrb[0].mxu0
      %3183 = vdwg.mxu0
      %v3184 = vmax.f32 %v3181, 0.0
      %s3185 = scalar_lea.vmem %s10, 64
      %v3186 = vld [vmem:[%s3185] sm:$0xff]
      %v3187 = vld [vmem:[%s3185 + $0x8] sm:$0xff]
      %v3188 = vld [vmem:[%s3185 + $0x10] sm:$0xff]
      %v3189 = vld [vmem:[%s3185 + $0x18] sm:$0xff]
      %v3190 = vld [vmem:[%s3185 + $0x20] sm:$0xff]
      %v3191 = vld [vmem:[%s3185 + $0x28] sm:$0xff]
      %v3192 = vld [vmem:[%s3185 + $0x30] sm:$0xff]
      %v3193 = vld [vmem:[%s3185 + $0x38] sm:$0xff]
      %v3195 = vsel %vm1798, %v3184, 0
      %3197 = vmatprep.subr.mxu0 0.0
      %3198 = vmatpush1.msra.mxu0 %v3186
      %3199 = vmatprep.subr.mxu0 0.0
      %3200 = vmatpush1.msra.mxu0 %v3187
      %3201 = vmatprep.subr.mxu0 0.0
      %3202 = vmatpush1.msra.mxu0 %v3188
      %3203 = vmatprep.subr.mxu0 0.0
      %3204 = vmatpush1.msra.mxu0 %v3189
      %3205 = vmatprep.subr.mxu0 0.0
      %3206 = vmatpush1.msra.mxu0 %v3190
      %3207 = vmatprep.subr.mxu0 0.0
      %3208 = vmatpush1.msra.mxu0 %v3191
      %3209 = vmatprep.subr.mxu0 0.0
      %3210 = vmatpush1.msra.mxu0 %v3192
      %3211 = vmatprep.subr.mxu0 0.0
      %3212 = vmatpush1.msra.mxu0 %v3193
      %3213 = vmatprep.subr.mxu0 0.0
      %3214 = vmatpush1.msra.mxu0 0.0
      %3215 = vmatprep.subr.mxu0 0.0
      %3216 = vmatpush1.msra.mxu0 0.0
      %3217 = vmatprep.subr.mxu0 0.0
      %3218 = vmatpush1.msra.mxu0 0.0
      %3219 = vmatprep.subr.mxu0 0.0
      %3220 = vmatpush1.msra.mxu0 0.0
      %3221 = vmatprep.subr.mxu0 0.0
      %3222 = vmatpush1.msra.mxu0 0.0
      %3223 = vmatprep.subr.mxu0 0.0
      %3224 = vmatpush1.msra.mxu0 0.0
      %3225 = vmatprep.subr.mxu0 0.0
      %3226 = vmatpush1.msra.mxu0 0.0
      %3227 = vmatprep.subr.mxu0 0.0
      %3228 = vmatpush1.msra.mxu0 0.0
      %3229 = vmatprep.subr.mxu0 0.0
      %3230 = vmatpush1.msra.mxu0 0.0
      %3231 = vmatprep.subr.mxu0 0.0
      %3232 = vmatpush1.msra.mxu0 0.0
      %3233 = vmatprep.subr.mxu0 0.0
      %3234 = vmatpush1.msra.mxu0 0.0
      %3235 = vmatprep.subr.mxu0 0.0
      %3236 = vmatpush1.msra.mxu0 0.0
      %3237 = vmatprep.subr.mxu0 0.0
      %3238 = vmatpush1.msra.mxu0 0.0
      %3239 = vmatprep.subr.mxu0 0.0
      %3240 = vmatpush1.msra.mxu0 0.0
      %3241 = vmatprep.subr.mxu0 0.0
      %3242 = vmatpush1.msra.mxu0 0.0
      %3243 = vmatprep.subr.mxu0 0.0
      %3244 = vmatpush1.msra.mxu0 0.0
      %3245 = vmatprep.subr.mxu0 0.0
      %3246 = vmatpush1.msra.mxu0 0.0
      %3247 = vmatprep.subr.mxu0 0.0
      %3248 = vmatpush1.msra.mxu0 0.0
      %3249 = vmatprep.subr.mxu0 0.0
      %3250 = vmatpush1.msra.mxu0 0.0
      %3251 = vmatprep.subr.mxu0 0.0
      %3252 = vmatpush1.msra.mxu0 0.0
      %3253 = vmatprep.subr.mxu0 0.0
      %3254 = vmatpush1.msra.mxu0 0.0
      %3255 = vmatprep.subr.mxu0 0.0
      %3256 = vmatpush1.msra.mxu0 0.0
      %3257 = vmatprep.subr.mxu0 0.0
      %3258 = vmatpush1.msra.mxu0 0.0
      %3259 = vmatprep.subr.mxu0 0.0
      %3260 = vmatpush1.msra.mxu0 0.0
      %3261 = vmatprep.mubr.f32.mxu0 0.0
      %3262 = vmatmul.mubr.f32.gmra.mrb[0].mxu0 %v3195
      %v3263 = vpop.f32.mrb[0].mxu0
      %v3264 = vadd.f32 0.0, %v3263
      %v3265 = vpop.f32.mrb[0].mxu0
      %3266 = vdwg.mxu0
      %v3267 = vadd.f32 %v3092, %v3264
      %v3268 = vld [vmem:[%s12] sm:$0x1]
      %v3269 = vmul.f32 %v3267, %v3267
      %v3270 = vsel %vm474, %v3269, 0.0
      %3271 = vadd.xlane.f32.xlu0 %v3270
      %v3272 = vpop.xlane.xlu0 %3271
      %v3273 = vmul.f32 %v3272, %v478
      %v3274 = vadd.f32 %v3273, 1e-06
      %v3275 = vrsqrt.pop %v3274
      %v3276 = vmul.f32 %v3267, %v3275
      %v3278 = vlaneseq
      %v3279 = vshrl.u32 %v3278, 7
      %v3280 = vsub.s32 0, %v3279
      %v3281 = vrot.slane %v3268, %v3280
      %v3283 = vmul.f32 %v3276, %v3281
      %3284 = vst.msk [vmem:[%s466] sm:$0xff] %vm474, %v3283
      %p3285 = scmp.lt.s32.totalorder %s24, 1
      %s3286 = scalar_select %p3285, %s24, 1
      %s3287 = smul.addr %s3286, 8
      %s3288 = scalar_lea.vmem %s13, %s3287
      // Predicated region
      $region73: #{t5_generation_loss.4} parent=71 // pred_check
        %p3289 = pneg %p330
      $region74: #{t5_generation_loss.4} parent=71 // pred_check_branch
        %3291 = sbr.rel (%p3289) target = $region76
      $region75: #{t5_generation_loss.4} parent=71 // pred_region
        _
      $region76: #{t5_generation_loss.4} parent=71 // pred_fallthru
        _
    $region72: #{t5_generation_loss.4} parent=5 // pred_fallthru
      _
    %p3292 = scmp.le.s32.totalorder 2, %s19
    // Predicated region
    $region77: #{t5_generation_loss.4} parent=5 // pred_check
      %p3293 = pneg %p3292
    $region78: #{t5_generation_loss.4} parent=5 // pred_check_branch
      %3295 = sbr.rel (%p3293) target = $region80
    $region79: #{t5_generation_loss.4} parent=5 // pred_region
      %s3296 = ssub.s32 %s19, 2
      // Predicated region
      $region81: #{t5_generation_loss.4} parent=79 // pred_check
        %p3297 = pneg %p336
      $region82: #{t5_generation_loss.4} parent=79 // pred_check_branch
        %3299 = sbr.rel (%p3297) target = $region84
      $region83: #{t5_generation_loss.4} parent=79 // pred_region
        %p3300 = scmp.lt.s32.totalorder %s25, 1
        %s3301 = scalar_select %p3300, %s25, 1
        %s3302 = smul.addr %s3301, 8
        %s3303 = scalar_lea.vmem %s13, %s3302
      $region84: #{t5_generation_loss.4} parent=79 // pred_fallthru
        _
    $region80: #{t5_generation_loss.4} parent=5 // pred_fallthru
      _
  $region6: #{t5_generation_loss.4} parent=0 // loop_footer
    %s23 = sadd.s32 1, %s19
  $region7: #{t5_generation_loss.4} parent=0 // loop_footer_branch
    %18 = sbr.rel target = $region3
  $region8: #{t5_generation_loss.4} parent=0 // loop_exit
    _

</llo_original>
